<compile_context>
chip_gen: v7x
topology: tpu7x:2x2x1
jax: 0.10.0
libtpu: 0.0.40
codegen_flags: <defaults>
</compile_context>

<pallas_src>
import jax
import jax.numpy as jnp
from jax.experimental import pallas as pl
from jax.experimental.pallas import tpu as pltpu

EPS = 1e-5


def _full_spec(shape):
    nd = len(shape)
    return pl.BlockSpec(shape, lambda *_, _nd=nd: (0,) * _nd)


def _bn(y, gamma, beta):
    # Training-mode BatchNorm over the flattened N*H*W row axis, all in f32.
    mean = jnp.mean(y, axis=0, keepdims=True)
    var = jnp.mean(jnp.square(y - mean), axis=0, keepdims=True)
    return (y - mean) * jax.lax.rsqrt(var + EPS) * gamma + beta


def _make_bottleneck_kernel(*, B, H, W, Cin, P, stride, has_downsample):
    Ho = (H + 2 - 3) // stride + 1
    Wo = (W + 2 - 3) // stride + 1
    Cout = 4 * P
    M2 = B * Ho * Wo
    needs_xds = has_downsample and stride != 1

    def kernel(*refs):
        it = iter(refs)
        x_ref = next(it)
        xds_ref = next(it) if needs_xds else None
        w1_ref = next(it)
        w2_ref = next(it)
        w3_ref = next(it)
        wd_ref = next(it) if has_downsample else None
        g1, b1 = next(it), next(it)
        g2, b2 = next(it), next(it)
        g3, b3 = next(it), next(it)
        if has_downsample:
            gd, bd = next(it), next(it)
        o_ref = next(it)
        pad_ref = next(it)

        x = x_ref[...]                                   # [B*H*W, Cin] f32
        x_bf = x.astype(jnp.bfloat16)

        # ---- conv1 (1x1) -> BN -> ReLU -------------------------------------
        y1 = jnp.dot(x_bf, w1_ref[...], preferred_element_type=jnp.float32)
        y1 = jnp.maximum(_bn(y1, g1[...], b1[...]), 0.0)  # [B*H*W, P] f32

        # ---- conv2 (3x3, stride, pad=1): im2col fused in VMEM ---------------
        pad_ref[...] = jnp.zeros_like(pad_ref)
        pad_ref[:, 1:H + 1, 1:W + 1, :] = y1.reshape(B, H, W, P)

        acc2 = jnp.zeros((M2, P), jnp.float32)
        for di in range(3):
            for dj in range(3):
                if stride == 1:
                    win = pad_ref[:, di:di + Ho, dj:dj + Wo, :]
                else:
                    # general strided path (not traced in the stride=1 demo)
                    win = pad_ref[:, pl.ds(di, Ho, stride),
                                  pl.ds(dj, Wo, stride), :]
                win = win.reshape(M2, P).astype(jnp.bfloat16)
                acc2 = acc2 + jnp.dot(win, w2_ref[di * 3 + dj],
                                      preferred_element_type=jnp.float32)
        y2 = jnp.maximum(_bn(acc2, g2[...], b2[...]), 0.0)  # [M2, P] f32

        # ---- conv3 (1x1) -> BN ----------------------------------------------
        y3 = jnp.dot(y2.astype(jnp.bfloat16), w3_ref[...],
                     preferred_element_type=jnp.float32)
        y3 = _bn(y3, g3[...], b3[...])                      # [M2, Cout] f32

        # ---- identity / downsample -> residual add -> ReLU -------------------
        if has_downsample:
            xd = xds_ref[...].astype(jnp.bfloat16) if needs_xds else x_bf
            idn = jnp.dot(xd, wd_ref[...], preferred_element_type=jnp.float32)
            idn = _bn(idn, gd[...], bd[...])
        else:
            idn = x  # requires stride == 1 and Cin == Cout (checked in wrapper)

        o_ref[...] = jnp.maximum(y3 + idn, 0.0)             # lane-dense [M2, 128]

    return kernel


def bottleneck_forward(params, x_nchw):
    stride = params["stride"]
    B, Cin, H, W = x_nchw.shape
    P = params["w1"].shape[1]
    Cout = 4 * P
    Ho = (H + 2 - 3) // stride + 1
    Wo = (W + 2 - 3) // stride + 1
    M1, M2 = B * H * W, B * Ho * Wo
    has_ds = "wd" in params
    needs_xds = has_ds and stride != 1
    if not has_ds:
        assert stride == 1 and Cin == Cout, "identity path needs matching shapes"

    x_nhwc = jnp.transpose(x_nchw, (0, 2, 3, 1)).astype(jnp.float32)
    x2 = x_nhwc.reshape(M1, Cin)

    def bn_vec(gname, bname, c):
        return (params[gname].reshape(1, c).astype(jnp.float32),
                params[bname].reshape(1, c).astype(jnp.float32))

    inputs = [x2]
    if needs_xds:
        inputs.append(x_nhwc[:, ::stride, ::stride, :].reshape(M2, Cin))
    inputs += [
        params["w1"].astype(jnp.bfloat16),                       # [Cin, P]
        params["w2"].reshape(9, P, P).astype(jnp.bfloat16),      # [9, P, P]
        params["w3"].astype(jnp.bfloat16),                       # [P, 4P]
    ]
    if has_ds:
        inputs.append(params["wd"].astype(jnp.bfloat16))         # [Cin, 4P]
    inputs += [*bn_vec("g1", "b1", P), *bn_vec("g2", "b2", P),
               *bn_vec("g3", "b3", Cout)]
    if has_ds:
        inputs += [*bn_vec("gd", "bd", Cout)]

    kernel = _make_bottleneck_kernel(
        B=B, H=H, W=W, Cin=Cin, P=P, stride=stride, has_downsample=has_ds)

    out = pl.pallas_call(
        kernel,
        out_shape=jax.ShapeDtypeStruct((M2, Cout), jnp.float32),
        grid=(1,),
        in_specs=[_full_spec(a.shape) for a in inputs],
        out_specs=_full_spec((M2, Cout)),
        scratch_shapes=[pltpu.VMEM((B, H + 2, W + 2, P), jnp.float32)],
        compiler_params=pltpu.CompilerParams(vmem_limit_bytes=32 * 1024 * 1024),
    )(*inputs)

    return jnp.transpose(out.reshape(B, Ho, Wo, Cout), (0, 3, 1, 2))  # NCHW


# ----------------------------------------------------------------------------
# Parameters (deterministic) and a pure-JAX reference for validation
# ----------------------------------------------------------------------------
def init_bottleneck_params(key, inplanes, planes, stride=1):
    outplanes = 4 * planes
    keys = jax.random.split(key, 4)

    def conv_w(k, kh, kw, cin, cout):
        std = (2.0 / (kh * kw * cout)) ** 0.5
        return std * jax.random.normal(k, (kh, kw, cin, cout), jnp.float32)

    p = {
        "stride": stride,
        "w1": conv_w(keys[0], 1, 1, inplanes, planes).reshape(inplanes, planes),
        "w2": conv_w(keys[1], 3, 3, planes, planes),
        "w3": conv_w(keys[2], 1, 1, planes, outplanes).reshape(planes, outplanes),
        "g1": jnp.ones((planes,), jnp.float32), "b1": jnp.zeros((planes,), jnp.float32),
        "g2": jnp.ones((planes,), jnp.float32), "b2": jnp.zeros((planes,), jnp.float32),
        "g3": jnp.ones((outplanes,), jnp.float32), "b3": jnp.zeros((outplanes,), jnp.float32),
    }
    if stride != 1 or inplanes != outplanes:
        p["wd"] = conv_w(keys[3], 1, 1, inplanes, outplanes).reshape(inplanes, outplanes)
        p["gd"] = jnp.ones((outplanes,), jnp.float32)
        p["bd"] = jnp.zeros((outplanes,), jnp.float32)
    return p


def _bn_ref(y, gamma, beta):
    mean = jnp.mean(y, axis=(0, 1, 2), keepdims=True)
    var = jnp.mean(jnp.square(y - mean), axis=(0, 1, 2), keepdims=True)
    return (y - mean) * jax.lax.rsqrt(var + EPS) * gamma + beta


def _conv_ref(x_nhwc, w_hwio, stride, pad):
    return jax.lax.conv_general_dilated(
        x_nhwc, w_hwio, (stride, stride), [(pad, pad), (pad, pad)],
        dimension_numbers=("NHWC", "HWIO", "NHWC"),
        precision=jax.lax.Precision.HIGHEST)


def bottleneck_reference(params, x_nchw):
    stride = params["stride"]
    x = jnp.transpose(x_nchw, (0, 2, 3, 1)).astype(jnp.float32)
    Cin = x.shape[-1]
    P = params["w1"].shape[1]
    out = _conv_ref(x, params["w1"].reshape(1, 1, Cin, P), 1, 0)
    out = jax.nn.relu(_bn_ref(out, params["g1"], params["b1"]))
    out = _conv_ref(out, params["w2"], stride, 1)
    out = jax.nn.relu(_bn_ref(out, params["g2"], params["b2"]))
    out = _conv_ref(out, params["w3"].reshape(1, 1, P, 4 * P), 1, 0)
    out = _bn_ref(out, params["g3"], params["b3"])
    if "wd" in params:
        idn = _conv_ref(x, params["wd"].reshape(1, 1, Cin, 4 * P), stride, 0)
        idn = _bn_ref(idn, params["gd"], params["bd"])
    else:
        idn = x
    return jnp.transpose(jax.nn.relu(out + idn), (0, 3, 1, 2))


if __name__ == "__main__":
    key = jax.random.PRNGKey(0)
    pkey, xkey = jax.random.split(key)

    # Small Bottleneck: inplanes=64, planes=32 -> out channels 128 (lane-dense),
    # stride=1 with a 1x1+BN downsample branch (since 64 != 128).
    inplanes, planes, stride = 64, 32, 1
    params = init_bottleneck_params(pkey, inplanes, planes, stride=stride)

    x = jax.random.normal(xkey, (2, inplanes, 16, 16), dtype=jnp.float32)

    out = jax.block_until_ready(bottleneck_forward(params, x))
    assert out.shape == (2, 4 * planes, 16, 16), out.shape
    assert bool(jnp.all(jnp.isfinite(out)))

    ref = bottleneck_reference(params, x)
    max_err = float(jnp.max(jnp.abs(out - ref)))
    assert max_err < 2e-1, f"max abs error vs reference: {max_err}"

    print("KERNEL_OK")
</pallas_src>

<mosaic_0001>
module attributes {stable_mosaic.version = 11 : i64} {
  func.func @kernel(%arg0: i32, %arg1: memref<512x64xf32, #tpu.memory_space<vmem>>, %arg2: memref<64x32xbf16, #tpu.memory_space<vmem>>, %arg3: memref<9x32x32xbf16, #tpu.memory_space<vmem>>, %arg4: memref<32x128xbf16, #tpu.memory_space<vmem>>, %arg5: memref<64x128xbf16, #tpu.memory_space<vmem>>, %arg6: memref<1x32xf32, #tpu.memory_space<vmem>>, %arg7: memref<1x32xf32, #tpu.memory_space<vmem>>, %arg8: memref<1x32xf32, #tpu.memory_space<vmem>>, %arg9: memref<1x32xf32, #tpu.memory_space<vmem>>, %arg10: memref<1x128xf32, #tpu.memory_space<vmem>>, %arg11: memref<1x128xf32, #tpu.memory_space<vmem>>, %arg12: memref<1x128xf32, #tpu.memory_space<vmem>>, %arg13: memref<1x128xf32, #tpu.memory_space<vmem>>, %arg14: memref<512x128xf32, #tpu.memory_space<vmem>>, %arg15: memref<2x18x18x32xf32, #tpu.memory_space<vmem>>) attributes {dimension_semantics = [#tpu.dimension_semantics<arbitrary>], iteration_bounds = array<i64: 1>, scalar_prefetch = 0 : i64, scratch_operands = 1 : i64, tpu.core_type = #tpu.core_type<tc>, window_params = [{pipeline_mode = #tpu.pipeline_mode<synchronous>, transform_indices = @transform_0, window_bounds = array<i64: 512, 64>}, {pipeline_mode = #tpu.pipeline_mode<synchronous>, transform_indices = @transform_1, window_bounds = array<i64: 64, 32>}, {pipeline_mode = #tpu.pipeline_mode<synchronous>, transform_indices = @transform_2, window_bounds = array<i64: 9, 32, 32>}, {pipeline_mode = #tpu.pipeline_mode<synchronous>, transform_indices = @transform_3, window_bounds = array<i64: 32, 128>}, {pipeline_mode = #tpu.pipeline_mode<synchronous>, transform_indices = @transform_4, window_bounds = array<i64: 64, 128>}, {pipeline_mode = #tpu.pipeline_mode<synchronous>, transform_indices = @transform_5, window_bounds = array<i64: 1, 32>}, {pipeline_mode = #tpu.pipeline_mode<synchronous>, transform_indices = @transform_6, window_bounds = array<i64: 1, 32>}, {pipeline_mode = #tpu.pipeline_mode<synchronous>, transform_indices = @transform_7, window_bounds = array<i64: 1, 32>}, {pipeline_mode = #tpu.pipeline_mode<synchronous>, transform_indices = @transform_8, window_bounds = array<i64: 1, 32>}, {pipeline_mode = #tpu.pipeline_mode<synchronous>, transform_indices = @transform_9, window_bounds = array<i64: 1, 128>}, {pipeline_mode = #tpu.pipeline_mode<synchronous>, transform_indices = @transform_10, window_bounds = array<i64: 1, 128>}, {pipeline_mode = #tpu.pipeline_mode<synchronous>, transform_indices = @transform_11, window_bounds = array<i64: 1, 128>}, {pipeline_mode = #tpu.pipeline_mode<synchronous>, transform_indices = @transform_12, window_bounds = array<i64: 1, 128>}, {pipeline_mode = #tpu.pipeline_mode<synchronous>, transform_indices = @transform_13, window_bounds = array<i64: 512, 128>}]} {
    %c0 = arith.constant 0 : index
    %c0_0 = arith.constant 0 : index
    %0 = vector.load %arg1[%c0, %c0_0] : memref<512x64xf32, #tpu.memory_space<vmem>>, vector<512x64xf32>
    %1 = arith.truncf %0 : vector<512x64xf32> to vector<512x64xbf16>
    %c0_1 = arith.constant 0 : index
    %c0_2 = arith.constant 0 : index
    %2 = vector.load %arg2[%c0_1, %c0_2] : memref<64x32xbf16, #tpu.memory_space<vmem>>, vector<64x32xbf16>
    %cst = arith.constant dense<0.000000e+00> : vector<512x32xf32>
    %3 = tpu.matmul %1, %2, %cst {dimension_numbers = #tpu.dot_dimension_numbers<[1], [0], [0], [1], [0, 0, 1, 1], [], []>} : vector<512x64xbf16>, vector<64x32xbf16>, vector<512x32xf32> -> vector<512x32xf32>
    %c0_3 = arith.constant 0 : index
    %c0_4 = arith.constant 0 : index
    %4 = vector.load %arg6[%c0_3, %c0_4] : memref<1x32xf32, #tpu.memory_space<vmem>>, vector<1x32xf32>
    %c0_5 = arith.constant 0 : index
    %c0_6 = arith.constant 0 : index
    %5 = vector.load %arg7[%c0_5, %c0_6] : memref<1x32xf32, #tpu.memory_space<vmem>>, vector<1x32xf32>
    %cst_7 = arith.constant dense<0.000000e+00> : vector<32xf32>
    %6 = vector.multi_reduction <add>, %3, %cst_7 [0] : vector<512x32xf32> to vector<32xf32>
    %7 = vector.shape_cast %6 : vector<32xf32> to vector<1x32xf32>
    %cst_8 = arith.constant 5.120000e+02 : f32
    %8 = vector.broadcast %cst_8 : f32 to vector<1x32xf32>
    %9 = arith.divf %7, %8 : vector<1x32xf32>
    %10 = vector.broadcast %9 : vector<1x32xf32> to vector<512x32xf32>
    %11 = arith.subf %3, %10 : vector<512x32xf32>
    %12 = arith.mulf %11, %11 : vector<512x32xf32>
    %cst_9 = arith.constant dense<0.000000e+00> : vector<32xf32>
    %13 = vector.multi_reduction <add>, %12, %cst_9 [0] : vector<512x32xf32> to vector<32xf32>
    %14 = vector.shape_cast %13 : vector<32xf32> to vector<1x32xf32>
    %cst_10 = arith.constant 5.120000e+02 : f32
    %15 = vector.broadcast %cst_10 : f32 to vector<1x32xf32>
    %16 = arith.divf %14, %15 : vector<1x32xf32>
    %17 = vector.broadcast %9 : vector<1x32xf32> to vector<512x32xf32>
    %18 = arith.subf %3, %17 : vector<512x32xf32>
    %cst_11 = arith.constant 9.99999974E-6 : f32
    %19 = vector.broadcast %cst_11 : f32 to vector<1x32xf32>
    %20 = arith.addf %16, %19 : vector<1x32xf32>
    %21 = math.rsqrt %20 : vector<1x32xf32>
    %22 = vector.broadcast %21 : vector<1x32xf32> to vector<512x32xf32>
    %23 = arith.mulf %18, %22 : vector<512x32xf32>
    %24 = vector.broadcast %4 : vector<1x32xf32> to vector<512x32xf32>
    %25 = arith.mulf %23, %24 : vector<512x32xf32>
    %26 = vector.broadcast %5 : vector<1x32xf32> to vector<512x32xf32>
    %27 = arith.addf %25, %26 : vector<512x32xf32>
    %cst_12 = arith.constant 0.000000e+00 : f32
    %28 = vector.broadcast %cst_12 : f32 to vector<512x32xf32>
    %29 = arith.maximumf %27, %28 : vector<512x32xf32>
    %cst_13 = arith.constant 0.000000e+00 : f32
    %30 = vector.broadcast %cst_13 : f32 to vector<2x18x18x32xf32>
    %c0_14 = arith.constant 0 : index
    %c0_15 = arith.constant 0 : index
    %c0_16 = arith.constant 0 : index
    %c0_17 = arith.constant 0 : index
    %31 = vector.load %arg15[%c0_14, %c0_15, %c0_16, %c0_17] : memref<2x18x18x32xf32, #tpu.memory_space<vmem>>, vector<2x18x18x32xf32>
    tpu.vector_store %arg15[%c0_14, %c0_15, %c0_16, %c0_17], %30 {strides = array<i32>} : memref<2x18x18x32xf32, #tpu.memory_space<vmem>>, vector<2x18x18x32xf32>,
    %32 = vector.shape_cast %29 : vector<512x32xf32> to vector<2x16x16x32xf32>
    %c0_18 = arith.constant 0 : index
    %c1 = arith.constant 1 : index
    %c1_19 = arith.constant 1 : index
    %c0_20 = arith.constant 0 : index
    %33 = vector.load %arg15[%c0_18, %c1, %c1_19, %c0_20] : memref<2x18x18x32xf32, #tpu.memory_space<vmem>>, vector<2x16x16x32xf32>
    tpu.vector_store %arg15[%c0_18, %c1, %c1_19, %c0_20], %32 {strides = array<i32>} : memref<2x18x18x32xf32, #tpu.memory_space<vmem>>, vector<2x16x16x32xf32>,
    %cst_21 = arith.constant 0.000000e+00 : f32
    %34 = vector.broadcast %cst_21 : f32 to vector<512x32xf32>
    %c0_22 = arith.constant 0 : index
    %c0_23 = arith.constant 0 : index
    %c0_24 = arith.constant 0 : index
    %c0_25 = arith.constant 0 : index
    %35 = vector.load %arg15[%c0_22, %c0_23, %c0_24, %c0_25] : memref<2x18x18x32xf32, #tpu.memory_space<vmem>>, vector<2x16x16x32xf32>
    %36 = vector.shape_cast %35 : vector<2x16x16x32xf32> to vector<512x32xf32>
    %37 = arith.truncf %36 : vector<512x32xf32> to vector<512x32xbf16>
    %c0_26 = arith.constant 0 : index
    %c0_27 = arith.constant 0 : index
    %c0_28 = arith.constant 0 : index
    %38 = vector.load %arg3[%c0_26, %c0_27, %c0_28] : memref<9x32x32xbf16, #tpu.memory_space<vmem>>, vector<1x32x32xbf16>
    %39 = vector.shape_cast %38 : vector<1x32x32xbf16> to vector<32x32xbf16>
    %cst_29 = arith.constant dense<0.000000e+00> : vector<512x32xf32>
    %40 = tpu.matmul %37, %39, %cst_29 {dimension_numbers = #tpu.dot_dimension_numbers<[1], [0], [0], [1], [0, 0, 1, 1], [], []>} : vector<512x32xbf16>, vector<32x32xbf16>, vector<512x32xf32> -> vector<512x32xf32>
    %41 = arith.addf %34, %40 : vector<512x32xf32>
    %c0_30 = arith.constant 0 : index
    %c0_31 = arith.constant 0 : index
    %c1_32 = arith.constant 1 : index
    %c0_33 = arith.constant 0 : index
    %42 = vector.load %arg15[%c0_30, %c0_31, %c1_32, %c0_33] : memref<2x18x18x32xf32, #tpu.memory_space<vmem>>, vector<2x16x16x32xf32>
    %43 = vector.shape_cast %42 : vector<2x16x16x32xf32> to vector<512x32xf32>
    %44 = arith.truncf %43 : vector<512x32xf32> to vector<512x32xbf16>
    %c1_34 = arith.constant 1 : index
    %c0_35 = arith.constant 0 : index
    %c0_36 = arith.constant 0 : index
    %45 = vector.load %arg3[%c1_34, %c0_35, %c0_36] : memref<9x32x32xbf16, #tpu.memory_space<vmem>>, vector<1x32x32xbf16>
    %46 = vector.shape_cast %45 : vector<1x32x32xbf16> to vector<32x32xbf16>
    %cst_37 = arith.constant dense<0.000000e+00> : vector<512x32xf32>
    %47 = tpu.matmul %44, %46, %cst_37 {dimension_numbers = #tpu.dot_dimension_numbers<[1], [0], [0], [1], [0, 0, 1, 1], [], []>} : vector<512x32xbf16>, vector<32x32xbf16>, vector<512x32xf32> -> vector<512x32xf32>
    %48 = arith.addf %41, %47 : vector<512x32xf32>
    %c0_38 = arith.constant 0 : index
    %c0_39 = arith.constant 0 : index
    %c2 = arith.constant 2 : index
    %c0_40 = arith.constant 0 : index
    %49 = vector.load %arg15[%c0_38, %c0_39, %c2, %c0_40] : memref<2x18x18x32xf32, #tpu.memory_space<vmem>>, vector<2x16x16x32xf32>
    %50 = vector.shape_cast %49 : vector<2x16x16x32xf32> to vector<512x32xf32>
    %51 = arith.truncf %50 : vector<512x32xf32> to vector<512x32xbf16>
    %c2_41 = arith.constant 2 : index
    %c0_42 = arith.constant 0 : index
    %c0_43 = arith.constant 0 : index
    %52 = vector.load %arg3[%c2_41, %c0_42, %c0_43] : memref<9x32x32xbf16, #tpu.memory_space<vmem>>, vector<1x32x32xbf16>
    %53 = vector.shape_cast %52 : vector<1x32x32xbf16> to vector<32x32xbf16>
    %cst_44 = arith.constant dense<0.000000e+00> : vector<512x32xf32>
    %54 = tpu.matmul %51, %53, %cst_44 {dimension_numbers = #tpu.dot_dimension_numbers<[1], [0], [0], [1], [0, 0, 1, 1], [], []>} : vector<512x32xbf16>, vector<32x32xbf16>, vector<512x32xf32> -> vector<512x32xf32>
    %55 = arith.addf %48, %54 : vector<512x32xf32>
    %c0_45 = arith.constant 0 : index
    %c1_46 = arith.constant 1 : index
    %c0_47 = arith.constant 0 : index
    %c0_48 = arith.constant 0 : index
    %56 = vector.load %arg15[%c0_45, %c1_46, %c0_47, %c0_48] : memref<2x18x18x32xf32, #tpu.memory_space<vmem>>, vector<2x16x16x32xf32>
    %57 = vector.shape_cast %56 : vector<2x16x16x32xf32> to vector<512x32xf32>
    %58 = arith.truncf %57 : vector<512x32xf32> to vector<512x32xbf16>
    %c3 = arith.constant 3 : index
    %c0_49 = arith.constant 0 : index
    %c0_50 = arith.constant 0 : index
    %59 = vector.load %arg3[%c3, %c0_49, %c0_50] : memref<9x32x32xbf16, #tpu.memory_space<vmem>>, vector<1x32x32xbf16>
    %60 = vector.shape_cast %59 : vector<1x32x32xbf16> to vector<32x32xbf16>
    %cst_51 = arith.constant dense<0.000000e+00> : vector<512x32xf32>
    %61 = tpu.matmul %58, %60, %cst_51 {dimension_numbers = #tpu.dot_dimension_numbers<[1], [0], [0], [1], [0, 0, 1, 1], [], []>} : vector<512x32xbf16>, vector<32x32xbf16>, vector<512x32xf32> -> vector<512x32xf32>
    %62 = arith.addf %55, %61 : vector<512x32xf32>
    %c0_52 = arith.constant 0 : index
    %c1_53 = arith.constant 1 : index
    %c1_54 = arith.constant 1 : index
    %c0_55 = arith.constant 0 : index
    %63 = vector.load %arg15[%c0_52, %c1_53, %c1_54, %c0_55] : memref<2x18x18x32xf32, #tpu.memory_space<vmem>>, vector<2x16x16x32xf32>
    %64 = vector.shape_cast %63 : vector<2x16x16x32xf32> to vector<512x32xf32>
    %65 = arith.truncf %64 : vector<512x32xf32> to vector<512x32xbf16>
    %c4 = arith.constant 4 : index
    %c0_56 = arith.constant 0 : index
    %c0_57 = arith.constant 0 : index
    %66 = vector.load %arg3[%c4, %c0_56, %c0_57] : memref<9x32x32xbf16, #tpu.memory_space<vmem>>, vector<1x32x32xbf16>
    %67 = vector.shape_cast %66 : vector<1x32x32xbf16> to vector<32x32xbf16>
    %cst_58 = arith.constant dense<0.000000e+00> : vector<512x32xf32>
    %68 = tpu.matmul %65, %67, %cst_58 {dimension_numbers = #tpu.dot_dimension_numbers<[1], [0], [0], [1], [0, 0, 1, 1], [], []>} : vector<512x32xbf16>, vector<32x32xbf16>, vector<512x32xf32> -> vector<512x32xf32>
    %69 = arith.addf %62, %68 : vector<512x32xf32>
    %c0_59 = arith.constant 0 : index
    %c1_60 = arith.constant 1 : index
    %c2_61 = arith.constant 2 : index
    %c0_62 = arith.constant 0 : index
    %70 = vector.load %arg15[%c0_59, %c1_60, %c2_61, %c0_62] : memref<2x18x18x32xf32, #tpu.memory_space<vmem>>, vector<2x16x16x32xf32>
    %71 = vector.shape_cast %70 : vector<2x16x16x32xf32> to vector<512x32xf32>
    %72 = arith.truncf %71 : vector<512x32xf32> to vector<512x32xbf16>
    %c5 = arith.constant 5 : index
    %c0_63 = arith.constant 0 : index
    %c0_64 = arith.constant 0 : index
    %73 = vector.load %arg3[%c5, %c0_63, %c0_64] : memref<9x32x32xbf16, #tpu.memory_space<vmem>>, vector<1x32x32xbf16>
    %74 = vector.shape_cast %73 : vector<1x32x32xbf16> to vector<32x32xbf16>
    %cst_65 = arith.constant dense<0.000000e+00> : vector<512x32xf32>
    %75 = tpu.matmul %72, %74, %cst_65 {dimension_numbers = #tpu.dot_dimension_numbers<[1], [0], [0], [1], [0, 0, 1, 1], [], []>} : vector<512x32xbf16>, vector<32x32xbf16>, vector<512x32xf32> -> vector<512x32xf32>
    %76 = arith.addf %69, %75 : vector<512x32xf32>
    %c0_66 = arith.constant 0 : index
    %c2_67 = arith.constant 2 : index
    %c0_68 = arith.constant 0 : index
    %c0_69 = arith.constant 0 : index
    %77 = vector.load %arg15[%c0_66, %c2_67, %c0_68, %c0_69] : memref<2x18x18x32xf32, #tpu.memory_space<vmem>>, vector<2x16x16x32xf32>
    %78 = vector.shape_cast %77 : vector<2x16x16x32xf32> to vector<512x32xf32>
    %79 = arith.truncf %78 : vector<512x32xf32> to vector<512x32xbf16>
    %c6 = arith.constant 6 : index
    %c0_70 = arith.constant 0 : index
    %c0_71 = arith.constant 0 : index
    %80 = vector.load %arg3[%c6, %c0_70, %c0_71] : memref<9x32x32xbf16, #tpu.memory_space<vmem>>, vector<1x32x32xbf16>
    %81 = vector.shape_cast %80 : vector<1x32x32xbf16> to vector<32x32xbf16>
    %cst_72 = arith.constant dense<0.000000e+00> : vector<512x32xf32>
    %82 = tpu.matmul %79, %81, %cst_72 {dimension_numbers = #tpu.dot_dimension_numbers<[1], [0], [0], [1], [0, 0, 1, 1], [], []>} : vector<512x32xbf16>, vector<32x32xbf16>, vector<512x32xf32> -> vector<512x32xf32>
    %83 = arith.addf %76, %82 : vector<512x32xf32>
    %c0_73 = arith.constant 0 : index
    %c2_74 = arith.constant 2 : index
    %c1_75 = arith.constant 1 : index
    %c0_76 = arith.constant 0 : index
    %84 = vector.load %arg15[%c0_73, %c2_74, %c1_75, %c0_76] : memref<2x18x18x32xf32, #tpu.memory_space<vmem>>, vector<2x16x16x32xf32>
    %85 = vector.shape_cast %84 : vector<2x16x16x32xf32> to vector<512x32xf32>
    %86 = arith.truncf %85 : vector<512x32xf32> to vector<512x32xbf16>
    %c7 = arith.constant 7 : index
    %c0_77 = arith.constant 0 : index
    %c0_78 = arith.constant 0 : index
    %87 = vector.load %arg3[%c7, %c0_77, %c0_78] : memref<9x32x32xbf16, #tpu.memory_space<vmem>>, vector<1x32x32xbf16>
    %88 = vector.shape_cast %87 : vector<1x32x32xbf16> to vector<32x32xbf16>
    %cst_79 = arith.constant dense<0.000000e+00> : vector<512x32xf32>
    %89 = tpu.matmul %86, %88, %cst_79 {dimension_numbers = #tpu.dot_dimension_numbers<[1], [0], [0], [1], [0, 0, 1, 1], [], []>} : vector<512x32xbf16>, vector<32x32xbf16>, vector<512x32xf32> -> vector<512x32xf32>
    %90 = arith.addf %83, %89 : vector<512x32xf32>
    %c0_80 = arith.constant 0 : index
    %c2_81 = arith.constant 2 : index
    %c2_82 = arith.constant 2 : index
    %c0_83 = arith.constant 0 : index
    %91 = vector.load %arg15[%c0_80, %c2_81, %c2_82, %c0_83] : memref<2x18x18x32xf32, #tpu.memory_space<vmem>>, vector<2x16x16x32xf32>
    %92 = vector.shape_cast %91 : vector<2x16x16x32xf32> to vector<512x32xf32>
    %93 = arith.truncf %92 : vector<512x32xf32> to vector<512x32xbf16>
    %c8 = arith.constant 8 : index
    %c0_84 = arith.constant 0 : index
    %c0_85 = arith.constant 0 : index
    %94 = vector.load %arg3[%c8, %c0_84, %c0_85] : memref<9x32x32xbf16, #tpu.memory_space<vmem>>, vector<1x32x32xbf16>
    %95 = vector.shape_cast %94 : vector<1x32x32xbf16> to vector<32x32xbf16>
    %cst_86 = arith.constant dense<0.000000e+00> : vector<512x32xf32>
    %96 = tpu.matmul %93, %95, %cst_86 {dimension_numbers = #tpu.dot_dimension_numbers<[1], [0], [0], [1], [0, 0, 1, 1], [], []>} : vector<512x32xbf16>, vector<32x32xbf16>, vector<512x32xf32> -> vector<512x32xf32>
    %97 = arith.addf %90, %96 : vector<512x32xf32>
    %c0_87 = arith.constant 0 : index
    %c0_88 = arith.constant 0 : index
    %98 = vector.load %arg8[%c0_87, %c0_88] : memref<1x32xf32, #tpu.memory_space<vmem>>, vector<1x32xf32>
    %c0_89 = arith.constant 0 : index
    %c0_90 = arith.constant 0 : index
    %99 = vector.load %arg9[%c0_89, %c0_90] : memref<1x32xf32, #tpu.memory_space<vmem>>, vector<1x32xf32>
    %cst_91 = arith.constant dense<0.000000e+00> : vector<32xf32>
    %100 = vector.multi_reduction <add>, %97, %cst_91 [0] : vector<512x32xf32> to vector<32xf32>
    %101 = vector.shape_cast %100 : vector<32xf32> to vector<1x32xf32>
    %cst_92 = arith.constant 5.120000e+02 : f32
    %102 = vector.broadcast %cst_92 : f32 to vector<1x32xf32>
    %103 = arith.divf %101, %102 : vector<1x32xf32>
    %104 = vector.broadcast %103 : vector<1x32xf32> to vector<512x32xf32>
    %105 = arith.subf %97, %104 : vector<512x32xf32>
    %106 = arith.mulf %105, %105 : vector<512x32xf32>
    %cst_93 = arith.constant dense<0.000000e+00> : vector<32xf32>
    %107 = vector.multi_reduction <add>, %106, %cst_93 [0] : vector<512x32xf32> to vector<32xf32>
    %108 = vector.shape_cast %107 : vector<32xf32> to vector<1x32xf32>
    %cst_94 = arith.constant 5.120000e+02 : f32
    %109 = vector.broadcast %cst_94 : f32 to vector<1x32xf32>
    %110 = arith.divf %108, %109 : vector<1x32xf32>
    %111 = vector.broadcast %103 : vector<1x32xf32> to vector<512x32xf32>
    %112 = arith.subf %97, %111 : vector<512x32xf32>
    %cst_95 = arith.constant 9.99999974E-6 : f32
    %113 = vector.broadcast %cst_95 : f32 to vector<1x32xf32>
    %114 = arith.addf %110, %113 : vector<1x32xf32>
    %115 = math.rsqrt %114 : vector<1x32xf32>
    %116 = vector.broadcast %115 : vector<1x32xf32> to vector<512x32xf32>
    %117 = arith.mulf %112, %116 : vector<512x32xf32>
    %118 = vector.broadcast %98 : vector<1x32xf32> to vector<512x32xf32>
    %119 = arith.mulf %117, %118 : vector<512x32xf32>
    %120 = vector.broadcast %99 : vector<1x32xf32> to vector<512x32xf32>
    %121 = arith.addf %119, %120 : vector<512x32xf32>
    %cst_96 = arith.constant 0.000000e+00 : f32
    %122 = vector.broadcast %cst_96 : f32 to vector<512x32xf32>
    %123 = arith.maximumf %121, %122 : vector<512x32xf32>
    %124 = arith.truncf %123 : vector<512x32xf32> to vector<512x32xbf16>
    %c0_97 = arith.constant 0 : index
    %c0_98 = arith.constant 0 : index
    %125 = vector.load %arg4[%c0_97, %c0_98] : memref<32x128xbf16, #tpu.memory_space<vmem>>, vector<32x128xbf16>
    %cst_99 = arith.constant dense<0.000000e+00> : vector<512x128xf32>
    %126 = tpu.matmul %124, %125, %cst_99 {dimension_numbers = #tpu.dot_dimension_numbers<[1], [0], [0], [1], [0, 0, 1, 1], [], []>} : vector<512x32xbf16>, vector<32x128xbf16>, vector<512x128xf32> -> vector<512x128xf32>
    %c0_100 = arith.constant 0 : index
    %c0_101 = arith.constant 0 : index
    %127 = vector.load %arg10[%c0_100, %c0_101] : memref<1x128xf32, #tpu.memory_space<vmem>>, vector<1x128xf32>
    %c0_102 = arith.constant 0 : index
    %c0_103 = arith.constant 0 : index
    %128 = vector.load %arg11[%c0_102, %c0_103] : memref<1x128xf32, #tpu.memory_space<vmem>>, vector<1x128xf32>
    %cst_104 = arith.constant dense<0.000000e+00> : vector<128xf32>
    %129 = vector.multi_reduction <add>, %126, %cst_104 [0] : vector<512x128xf32> to vector<128xf32>
    %130 = vector.shape_cast %129 : vector<128xf32> to vector<1x128xf32>
    %cst_105 = arith.constant 5.120000e+02 : f32
    %131 = vector.broadcast %cst_105 : f32 to vector<1x128xf32>
    %132 = arith.divf %130, %131 : vector<1x128xf32>
    %133 = vector.broadcast %132 : vector<1x128xf32> to vector<512x128xf32>
    %134 = arith.subf %126, %133 : vector<512x128xf32>
    %135 = arith.mulf %134, %134 : vector<512x128xf32>
    %cst_106 = arith.constant dense<0.000000e+00> : vector<128xf32>
    %136 = vector.multi_reduction <add>, %135, %cst_106 [0] : vector<512x128xf32> to vector<128xf32>
    %137 = vector.shape_cast %136 : vector<128xf32> to vector<1x128xf32>
    %cst_107 = arith.constant 5.120000e+02 : f32
    %138 = vector.broadcast %cst_107 : f32 to vector<1x128xf32>
    %139 = arith.divf %137, %138 : vector<1x128xf32>
    %140 = vector.broadcast %132 : vector<1x128xf32> to vector<512x128xf32>
    %141 = arith.subf %126, %140 : vector<512x128xf32>
    %cst_108 = arith.constant 9.99999974E-6 : f32
    %142 = vector.broadcast %cst_108 : f32 to vector<1x128xf32>
    %143 = arith.addf %139, %142 : vector<1x128xf32>
    %144 = math.rsqrt %143 : vector<1x128xf32>
    %145 = vector.broadcast %144 : vector<1x128xf32> to vector<512x128xf32>
    %146 = arith.mulf %141, %145 : vector<512x128xf32>
    %147 = vector.broadcast %127 : vector<1x128xf32> to vector<512x128xf32>
    %148 = arith.mulf %146, %147 : vector<512x128xf32>
    %149 = vector.broadcast %128 : vector<1x128xf32> to vector<512x128xf32>
    %150 = arith.addf %148, %149 : vector<512x128xf32>
    %c0_109 = arith.constant 0 : index
    %c0_110 = arith.constant 0 : index
    %151 = vector.load %arg5[%c0_109, %c0_110] : memref<64x128xbf16, #tpu.memory_space<vmem>>, vector<64x128xbf16>
    %cst_111 = arith.constant dense<0.000000e+00> : vector<512x128xf32>
    %152 = tpu.matmul %1, %151, %cst_111 {dimension_numbers = #tpu.dot_dimension_numbers<[1], [0], [0], [1], [0, 0, 1, 1], [], []>} : vector<512x64xbf16>, vector<64x128xbf16>, vector<512x128xf32> -> vector<512x128xf32>
    %c0_112 = arith.constant 0 : index
    %c0_113 = arith.constant 0 : index
    %153 = vector.load %arg12[%c0_112, %c0_113] : memref<1x128xf32, #tpu.memory_space<vmem>>, vector<1x128xf32>
    %c0_114 = arith.constant 0 : index
    %c0_115 = arith.constant 0 : index
    %154 = vector.load %arg13[%c0_114, %c0_115] : memref<1x128xf32, #tpu.memory_space<vmem>>, vector<1x128xf32>
    %cst_116 = arith.constant dense<0.000000e+00> : vector<128xf32>
    %155 = vector.multi_reduction <add>, %152, %cst_116 [0] : vector<512x128xf32> to vector<128xf32>
    %156 = vector.shape_cast %155 : vector<128xf32> to vector<1x128xf32>
    %cst_117 = arith.constant 5.120000e+02 : f32
    %157 = vector.broadcast %cst_117 : f32 to vector<1x128xf32>
    %158 = arith.divf %156, %157 : vector<1x128xf32>
    %159 = vector.broadcast %158 : vector<1x128xf32> to vector<512x128xf32>
    %160 = arith.subf %152, %159 : vector<512x128xf32>
    %161 = arith.mulf %160, %160 : vector<512x128xf32>
    %cst_118 = arith.constant dense<0.000000e+00> : vector<128xf32>
    %162 = vector.multi_reduction <add>, %161, %cst_118 [0] : vector<512x128xf32> to vector<128xf32>
    %163 = vector.shape_cast %162 : vector<128xf32> to vector<1x128xf32>
    %cst_119 = arith.constant 5.120000e+02 : f32
    %164 = vector.broadcast %cst_119 : f32 to vector<1x128xf32>
    %165 = arith.divf %163, %164 : vector<1x128xf32>
    %166 = vector.broadcast %158 : vector<1x128xf32> to vector<512x128xf32>
    %167 = arith.subf %152, %166 : vector<512x128xf32>
    %cst_120 = arith.constant 9.99999974E-6 : f32
    %168 = vector.broadcast %cst_120 : f32 to vector<1x128xf32>
    %169 = arith.addf %165, %168 : vector<1x128xf32>
    %170 = math.rsqrt %169 : vector<1x128xf32>
    %171 = vector.broadcast %170 : vector<1x128xf32> to vector<512x128xf32>
    %172 = arith.mulf %167, %171 : vector<512x128xf32>
    %173 = vector.broadcast %153 : vector<1x128xf32> to vector<512x128xf32>
    %174 = arith.mulf %172, %173 : vector<512x128xf32>
    %175 = vector.broadcast %154 : vector<1x128xf32> to vector<512x128xf32>
    %176 = arith.addf %174, %175 : vector<512x128xf32>
    %177 = arith.addf %150, %176 : vector<512x128xf32>
    %cst_121 = arith.constant 0.000000e+00 : f32
    %178 = vector.broadcast %cst_121 : f32 to vector<512x128xf32>
    %179 = arith.maximumf %177, %178 : vector<512x128xf32>
    %c0_122 = arith.constant 0 : index
    %c0_123 = arith.constant 0 : index
    %180 = vector.load %arg14[%c0_122, %c0_123] : memref<512x128xf32, #tpu.memory_space<vmem>>, vector<512x128xf32>
    tpu.vector_store %arg14[%c0_122, %c0_123], %179 {strides = array<i32>} : memref<512x128xf32, #tpu.memory_space<vmem>>, vector<512x128xf32>,
    return
  }
  func.func @transform_0(%arg0: i32) -> (i32, i32) {
    %c0_i32 = arith.constant 0 : i32
    %c0_i32_0 = arith.constant 0 : i32
    %c0_i32_1 = arith.constant 0 : i32
    return %c0_i32, %c0_i32_0 : i32, i32
  }
  func.func @transform_1(%arg0: i32) -> (i32, i32) {
    %c0_i32 = arith.constant 0 : i32
    %c0_i32_0 = arith.constant 0 : i32
    %c0_i32_1 = arith.constant 0 : i32
    return %c0_i32, %c0_i32_0 : i32, i32
  }
  func.func @transform_2(%arg0: i32) -> (i32, i32, i32) {
    %c0_i32 = arith.constant 0 : i32
    %c0_i32_0 = arith.constant 0 : i32
    %c0_i32_1 = arith.constant 0 : i32
    %c0_i32_2 = arith.constant 0 : i32
    return %c0_i32, %c0_i32_0, %c0_i32_1 : i32, i32, i32
  }
  func.func @transform_3(%arg0: i32) -> (i32, i32) {
    %c0_i32 = arith.constant 0 : i32
    %c0_i32_0 = arith.constant 0 : i32
    %c0_i32_1 = arith.constant 0 : i32
    return %c0_i32, %c0_i32_0 : i32, i32
  }
  func.func @transform_4(%arg0: i32) -> (i32, i32) {
    %c0_i32 = arith.constant 0 : i32
    %c0_i32_0 = arith.constant 0 : i32
    %c0_i32_1 = arith.constant 0 : i32
    return %c0_i32, %c0_i32_0 : i32, i32
  }
  func.func @transform_5(%arg0: i32) -> (i32, i32) {
    %c0_i32 = arith.constant 0 : i32
    %c0_i32_0 = arith.constant 0 : i32
    %c0_i32_1 = arith.constant 0 : i32
    return %c0_i32, %c0_i32_0 : i32, i32
  }
  func.func @transform_6(%arg0: i32) -> (i32, i32) {
    %c0_i32 = arith.constant 0 : i32
    %c0_i32_0 = arith.constant 0 : i32
    %c0_i32_1 = arith.constant 0 : i32
    return %c0_i32, %c0_i32_0 : i32, i32
  }
  func.func @transform_7(%arg0: i32) -> (i32, i32) {
    %c0_i32 = arith.constant 0 : i32
    %c0_i32_0 = arith.constant 0 : i32
    %c0_i32_1 = arith.constant 0 : i32
    return %c0_i32, %c0_i32_0 : i32, i32
  }
  func.func @transform_8(%arg0: i32) -> (i32, i32) {
    %c0_i32 = arith.constant 0 : i32
    %c0_i32_0 = arith.constant 0 : i32
    %c0_i32_1 = arith.constant 0 : i32
    return %c0_i32, %c0_i32_0 : i32, i32
  }
  func.func @transform_9(%arg0: i32) -> (i32, i32) {
    %c0_i32 = arith.constant 0 : i32
    %c0_i32_0 = arith.constant 0 : i32
    %c0_i32_1 = arith.constant 0 : i32
    return %c0_i32, %c0_i32_0 : i32, i32
  }
  func.func @transform_10(%arg0: i32) -> (i32, i32) {
    %c0_i32 = arith.constant 0 : i32
    %c0_i32_0 = arith.constant 0 : i32
    %c0_i32_1 = arith.constant 0 : i32
    return %c0_i32, %c0_i32_0 : i32, i32
  }
  func.func @transform_11(%arg0: i32) -> (i32, i32) {
    %c0_i32 = arith.constant 0 : i32
    %c0_i32_0 = arith.constant 0 : i32
    %c0_i32_1 = arith.constant 0 : i32
    return %c0_i32, %c0_i32_0 : i32, i32
  }
  func.func @transform_12(%arg0: i32) -> (i32, i32) {
    %c0_i32 = arith.constant 0 : i32
    %c0_i32_0 = arith.constant 0 : i32
    %c0_i32_1 = arith.constant 0 : i32
    return %c0_i32, %c0_i32_0 : i32, i32
  }
  func.func @transform_13(%arg0: i32) -> (i32, i32) {
    %c0_i32 = arith.constant 0 : i32
    %c0_i32_0 = arith.constant 0 : i32
    %c0_i32_1 = arith.constant 0 : i32
    return %c0_i32, %c0_i32_0 : i32, i32
  }
}

</mosaic_0001>

<llo_original>
// kernel: tpu_custom_call.1
$region0: #{tpu_custom_call.1}
  #allocation0 [shape = 'u32[]', space=smem, size = 0x4, offset = 0x4, fixed_abs, tag = 'smem constant byte address 0x4 - core index']
  #allocation1 [shape = 'u32[144,128]{1,0:T(1,128)}', space=vmem, size = 0x12000, scoped, tag = 'internal scratch']
  #allocation2 [shape = 'f32[2,18,18,32]{3,2,1,0:T(8,128)}', space=vmem, size = 0x6c000, scoped, tag = 'scratch operand']
  %s0 = inlined_call_operand.vmem [shape: f32[512,64], index: 0, kind: input, shape index: {}]
  %s1 = inlined_call_operand.vmem [shape: bf16[64,32], index: 1, kind: input, shape index: {}]
  %s2 = inlined_call_operand.vmem [shape: bf16[9,32,32], index: 2, kind: input, shape index: {}]
  %s3 = inlined_call_operand.vmem [shape: bf16[32,128], index: 3, kind: input, shape index: {}]
  %s4 = inlined_call_operand.vmem [shape: bf16[64,128], index: 4, kind: input, shape index: {}]
  %s5 = inlined_call_operand.vmem [shape: f32[1,32], index: 5, kind: input, shape index: {}]
  %s6 = inlined_call_operand.vmem [shape: f32[1,32], index: 6, kind: input, shape index: {}]
  %s7 = inlined_call_operand.vmem [shape: f32[1,32], index: 7, kind: input, shape index: {}]
  %s8 = inlined_call_operand.vmem [shape: f32[1,32], index: 8, kind: input, shape index: {}]
  %s9 = inlined_call_operand.vmem [shape: f32[1,128], index: 9, kind: input, shape index: {}]
  %s10 = inlined_call_operand.vmem [shape: f32[1,128], index: 10, kind: input, shape index: {}]
  %s11 = inlined_call_operand.vmem [shape: f32[1,128], index: 11, kind: input, shape index: {}]
  %s12 = inlined_call_operand.vmem [shape: f32[1,128], index: 12, kind: input, shape index: {}]
  %s13 = inlined_call_operand.hbm [shape: f32[512,128], index: 13, kind: output, shape index: {}]
  %s14 = sld [smem:[#allocation0]]
  $region62: #{tpu_custom_call.1} parent=0
    _
  %s16 = ssub.s32 1, %s14
  %s17 = scalar_select 0, %s16, %s14
  $region1: #{tpu_custom_call.1} parent=0
    #allocation3 [shape = 'u8[262144]{0}', space=vmem, size = 0x40000, scoped, tag = 'output window, operand 0, single buffered']
    #allocation4 [shape = 's32[1]{0}', space=sflag, size = 0x4, scoped, tag = 'scoped memory for tpu_custom_call.1']
    %18 = vsyncpa [#allocation4], 0
    // Predicated region
    $region2: #{tpu_custom_call.1} parent=1 // pred_check
      _
    $region3: #{tpu_custom_call.1} parent=1 // pred_check_branch
      %20 = sbr.rel (0) target = $region5
    $region4: #{tpu_custom_call.1} parent=1 // pred_region
      _
    $region5: #{tpu_custom_call.1} parent=1 // pred_fallthru
      _
    // Predicated region
    $region6: #{tpu_custom_call.1} parent=1 // pred_check
      _
    $region7: #{tpu_custom_call.1} parent=1 // pred_check_branch
      %22 = sbr.rel (0) target = $region9
    $region8: #{tpu_custom_call.1} parent=1 // pred_region
      _
    $region9: #{tpu_custom_call.1} parent=1 // pred_fallthru
      _
    // Predicated region
    $region10: #{tpu_custom_call.1} parent=1 // pred_check
      _
    $region11: #{tpu_custom_call.1} parent=1 // pred_check_branch
      %24 = sbr.rel (0) target = $region13
    $region12: #{tpu_custom_call.1} parent=1 // pred_region
      _
    $region13: #{tpu_custom_call.1} parent=1 // pred_fallthru
      _
    // Predicated region
    $region14: #{tpu_custom_call.1} parent=1 // pred_check
      _
    $region15: #{tpu_custom_call.1} parent=1 // pred_check_branch
      %26 = sbr.rel (0) target = $region17
    $region16: #{tpu_custom_call.1} parent=1 // pred_region
      _
    $region17: #{tpu_custom_call.1} parent=1 // pred_fallthru
      _
    // Predicated region
    $region18: #{tpu_custom_call.1} parent=1 // pred_check
      _
    $region19: #{tpu_custom_call.1} parent=1 // pred_check_branch
      %28 = sbr.rel (0) target = $region21
    $region20: #{tpu_custom_call.1} parent=1 // pred_region
      _
    $region21: #{tpu_custom_call.1} parent=1 // pred_fallthru
      _
    // Predicated region
    $region22: #{tpu_custom_call.1} parent=1 // pred_check
      _
    $region23: #{tpu_custom_call.1} parent=1 // pred_check_branch
      %30 = sbr.rel (0) target = $region25
    $region24: #{tpu_custom_call.1} parent=1 // pred_region
      _
    $region25: #{tpu_custom_call.1} parent=1 // pred_fallthru
      _
    // Predicated region
    $region26: #{tpu_custom_call.1} parent=1 // pred_check
      _
    $region27: #{tpu_custom_call.1} parent=1 // pred_check_branch
      %32 = sbr.rel (0) target = $region29
    $region28: #{tpu_custom_call.1} parent=1 // pred_region
      _
    $region29: #{tpu_custom_call.1} parent=1 // pred_fallthru
      _
    // Predicated region
    $region30: #{tpu_custom_call.1} parent=1 // pred_check
      _
    $region31: #{tpu_custom_call.1} parent=1 // pred_check_branch
      %34 = sbr.rel (0) target = $region33
    $region32: #{tpu_custom_call.1} parent=1 // pred_region
      _
    $region33: #{tpu_custom_call.1} parent=1 // pred_fallthru
      _
    // Predicated region
    $region34: #{tpu_custom_call.1} parent=1 // pred_check
      _
    $region35: #{tpu_custom_call.1} parent=1 // pred_check_branch
      %36 = sbr.rel (0) target = $region37
    $region36: #{tpu_custom_call.1} parent=1 // pred_region
      _
    $region37: #{tpu_custom_call.1} parent=1 // pred_fallthru
      _
    // Predicated region
    $region38: #{tpu_custom_call.1} parent=1 // pred_check
      _
    $region39: #{tpu_custom_call.1} parent=1 // pred_check_branch
      %38 = sbr.rel (0) target = $region41
    $region40: #{tpu_custom_call.1} parent=1 // pred_region
      _
    $region41: #{tpu_custom_call.1} parent=1 // pred_fallthru
      _
    // Predicated region
    $region42: #{tpu_custom_call.1} parent=1 // pred_check
      _
    $region43: #{tpu_custom_call.1} parent=1 // pred_check_branch
      %40 = sbr.rel (0) target = $region45
    $region44: #{tpu_custom_call.1} parent=1 // pred_region
      _
    $region45: #{tpu_custom_call.1} parent=1 // pred_fallthru
      _
    // Predicated region
    $region46: #{tpu_custom_call.1} parent=1 // pred_check
      _
    $region47: #{tpu_custom_call.1} parent=1 // pred_check_branch
      %42 = sbr.rel (0) target = $region49
    $region48: #{tpu_custom_call.1} parent=1 // pred_region
      _
    $region49: #{tpu_custom_call.1} parent=1 // pred_fallthru
      _
    // Predicated region
    $region50: #{tpu_custom_call.1} parent=1 // pred_check
      _
    $region51: #{tpu_custom_call.1} parent=1 // pred_check_branch
      %44 = sbr.rel (0) target = $region53
    $region52: #{tpu_custom_call.1} parent=1 // pred_region
      _
    $region53: #{tpu_custom_call.1} parent=1 // pred_fallthru
      _
    %v46 = vld [vmem:[%s0] sm:$0xff]
    %v47 = vld [vmem:[%s0 + $0x8] sm:$0xff]
    %v48 = vld [vmem:[%s0 + $0x10] sm:$0xff]
    %v49 = vld [vmem:[%s0 + $0x18] sm:$0xff]
    %v50 = vld [vmem:[%s0 + $0x20] sm:$0xff]
    %v51 = vld [vmem:[%s0 + $0x28] sm:$0xff]
    %v52 = vld [vmem:[%s0 + $0x30] sm:$0xff]
    %v53 = vld [vmem:[%s0 + $0x38] sm:$0xff]
    %v54 = vld [vmem:[%s0 + $0x40] sm:$0xff]
    %v55 = vld [vmem:[%s0 + $0x48] sm:$0xff]
    %v56 = vld [vmem:[%s0 + $0x50] sm:$0xff]
    %v57 = vld [vmem:[%s0 + $0x58] sm:$0xff]
    %v58 = vld [vmem:[%s0 + $0x60] sm:$0xff]
    %v59 = vld [vmem:[%s0 + $0x68] sm:$0xff]
    %v60 = vld [vmem:[%s0 + $0x70] sm:$0xff]
    %v61 = vld [vmem:[%s0 + $0x78] sm:$0xff]
    %v62 = vld [vmem:[%s0 + $0x80] sm:$0xff]
    %v63 = vld [vmem:[%s0 + $0x88] sm:$0xff]
    %v64 = vld [vmem:[%s0 + $0x90] sm:$0xff]
    %v65 = vld [vmem:[%s0 + $0x98] sm:$0xff]
    %v66 = vld [vmem:[%s0 + $0xa0] sm:$0xff]
    %v67 = vld [vmem:[%s0 + $0xa8] sm:$0xff]
    %v68 = vld [vmem:[%s0 + $0xb0] sm:$0xff]
    %v69 = vld [vmem:[%s0 + $0xb8] sm:$0xff]
    %v70 = vld [vmem:[%s0 + $0xc0] sm:$0xff]
    %v71 = vld [vmem:[%s0 + $0xc8] sm:$0xff]
    %v72 = vld [vmem:[%s0 + $0xd0] sm:$0xff]
    %v73 = vld [vmem:[%s0 + $0xd8] sm:$0xff]
    %v74 = vld [vmem:[%s0 + $0xe0] sm:$0xff]
    %v75 = vld [vmem:[%s0 + $0xe8] sm:$0xff]
    %v76 = vld [vmem:[%s0 + $0xf0] sm:$0xff]
    %v77 = vld [vmem:[%s0 + $0xf8] sm:$0xff]
    %v78 = vld [vmem:[%s0 + $0x100] sm:$0xff]
    %v79 = vld [vmem:[%s0 + $0x108] sm:$0xff]
    %v80 = vld [vmem:[%s0 + $0x110] sm:$0xff]
    %v81 = vld [vmem:[%s0 + $0x118] sm:$0xff]
    %v82 = vld [vmem:[%s0 + $0x120] sm:$0xff]
    %v83 = vld [vmem:[%s0 + $0x128] sm:$0xff]
    %v84 = vld [vmem:[%s0 + $0x130] sm:$0xff]
    %v85 = vld [vmem:[%s0 + $0x138] sm:$0xff]
    %v86 = vld [vmem:[%s0 + $0x140] sm:$0xff]
    %v87 = vld [vmem:[%s0 + $0x148] sm:$0xff]
    %v88 = vld [vmem:[%s0 + $0x150] sm:$0xff]
    %v89 = vld [vmem:[%s0 + $0x158] sm:$0xff]
    %v90 = vld [vmem:[%s0 + $0x160] sm:$0xff]
    %v91 = vld [vmem:[%s0 + $0x168] sm:$0xff]
    %v92 = vld [vmem:[%s0 + $0x170] sm:$0xff]
    %v93 = vld [vmem:[%s0 + $0x178] sm:$0xff]
    %v94 = vld [vmem:[%s0 + $0x180] sm:$0xff]
    %v95 = vld [vmem:[%s0 + $0x188] sm:$0xff]
    %v96 = vld [vmem:[%s0 + $0x190] sm:$0xff]
    %v97 = vld [vmem:[%s0 + $0x198] sm:$0xff]
    %v98 = vld [vmem:[%s0 + $0x1a0] sm:$0xff]
    %v99 = vld [vmem:[%s0 + $0x1a8] sm:$0xff]
    %v100 = vld [vmem:[%s0 + $0x1b0] sm:$0xff]
    %v101 = vld [vmem:[%s0 + $0x1b8] sm:$0xff]
    %v102 = vld [vmem:[%s0 + $0x1c0] sm:$0xff]
    %v103 = vld [vmem:[%s0 + $0x1c8] sm:$0xff]
    %v104 = vld [vmem:[%s0 + $0x1d0] sm:$0xff]
    %v105 = vld [vmem:[%s0 + $0x1d8] sm:$0xff]
    %v106 = vld [vmem:[%s0 + $0x1e0] sm:$0xff]
    %v107 = vld [vmem:[%s0 + $0x1e8] sm:$0xff]
    %v108 = vld [vmem:[%s0 + $0x1f0] sm:$0xff]
    %v109 = vld [vmem:[%s0 + $0x1f8] sm:$0xff]
    %v110 = vpack.c.bf16 %v47, %v46
    %v111 = vpack.c.bf16 %v49, %v48
    %v112 = vpack.c.bf16 %v51, %v50
    %v113 = vpack.c.bf16 %v53, %v52
    %v114 = vpack.c.bf16 %v55, %v54
    %v115 = vpack.c.bf16 %v57, %v56
    %v116 = vpack.c.bf16 %v59, %v58
    %v117 = vpack.c.bf16 %v61, %v60
    %v118 = vpack.c.bf16 %v63, %v62
    %v119 = vpack.c.bf16 %v65, %v64
    %v120 = vpack.c.bf16 %v67, %v66
    %v121 = vpack.c.bf16 %v69, %v68
    %v122 = vpack.c.bf16 %v71, %v70
    %v123 = vpack.c.bf16 %v73, %v72
    %v124 = vpack.c.bf16 %v75, %v74
    %v125 = vpack.c.bf16 %v77, %v76
    %v126 = vpack.c.bf16 %v79, %v78
    %v127 = vpack.c.bf16 %v81, %v80
    %v128 = vpack.c.bf16 %v83, %v82
    %v129 = vpack.c.bf16 %v85, %v84
    %v130 = vpack.c.bf16 %v87, %v86
    %v131 = vpack.c.bf16 %v89, %v88
    %v132 = vpack.c.bf16 %v91, %v90
    %v133 = vpack.c.bf16 %v93, %v92
    %v134 = vpack.c.bf16 %v95, %v94
    %v135 = vpack.c.bf16 %v97, %v96
    %v136 = vpack.c.bf16 %v99, %v98
    %v137 = vpack.c.bf16 %v101, %v100
    %v138 = vpack.c.bf16 %v103, %v102
    %v139 = vpack.c.bf16 %v105, %v104
    %v140 = vpack.c.bf16 %v107, %v106
    %v141 = vpack.c.bf16 %v109, %v108
    %v142 = vld [vmem:[%s1] sm:$0xf]
    %v143 = vld [vmem:[%s1 + $0x4] sm:$0xf]
    %v144 = vld [vmem:[%s1 + $0x8] sm:$0xf]
    %v145 = vld [vmem:[%s1 + $0xc] sm:$0xf]
    %v146 = vld [vmem:[%s1 + $0x10] sm:$0xf]
    %v147 = vld [vmem:[%s1 + $0x14] sm:$0xf]
    %v148 = vld [vmem:[%s1 + $0x18] sm:$0xf]
    %v149 = vld [vmem:[%s1 + $0x1c] sm:$0xf]
    %v158 = vunpack.c.l.b16 %v142
    %v159 = vunpack.c.l.b16 %v143
    %v160 = vunpack.c.l.b16 %v144
    %v161 = vunpack.c.l.b16 %v145
    %v162 = vunpack.c.l.b16 %v146
    %v163 = vunpack.c.l.b16 %v147
    %v164 = vunpack.c.l.b16 %v148
    %v165 = vunpack.c.l.b16 %v149
    %v166 = vpack.c.b16 %v159, %v158
    %v167 = vpack.c.b16 %v161, %v160
    %v168 = vpack.c.b16 %v163, %v162
    %v169 = vpack.c.b16 %v165, %v164
    %vm174 = vcmask 523264
    %v176 = vsel %vm174, %v110, 0
    %v179 = vsel %vm174, %v111, 0
    %v182 = vsel %vm174, %v112, 0
    %v185 = vsel %vm174, %v113, 0
    %v188 = vsel %vm174, %v114, 0
    %v191 = vsel %vm174, %v115, 0
    %v194 = vsel %vm174, %v116, 0
    %v197 = vsel %vm174, %v117, 0
    %v200 = vsel %vm174, %v118, 0
    %v203 = vsel %vm174, %v119, 0
    %v206 = vsel %vm174, %v120, 0
    %v209 = vsel %vm174, %v121, 0
    %v212 = vsel %vm174, %v122, 0
    %v215 = vsel %vm174, %v123, 0
    %v218 = vsel %vm174, %v124, 0
    %v221 = vsel %vm174, %v125, 0
    %v224 = vsel %vm174, %v126, 0
    %v227 = vsel %vm174, %v127, 0
    %v230 = vsel %vm174, %v128, 0
    %v233 = vsel %vm174, %v129, 0
    %v236 = vsel %vm174, %v130, 0
    %v239 = vsel %vm174, %v131, 0
    %v242 = vsel %vm174, %v132, 0
    %v245 = vsel %vm174, %v133, 0
    %v248 = vsel %vm174, %v134, 0
    %v251 = vsel %vm174, %v135, 0
    %v254 = vsel %vm174, %v136, 0
    %v257 = vsel %vm174, %v137, 0
    %v260 = vsel %vm174, %v138, 0
    %v263 = vsel %vm174, %v139, 0
    %v266 = vsel %vm174, %v140, 0
    %v269 = vsel %vm174, %v141, 0
    %271 = vmatprep.subr.bf16.mxu0 0
    %272 = vmatpush1.bf16.msra.mxu0 %v166
    %273 = vmatprep.subr.bf16.mxu0 0
    %274 = vmatpush1.bf16.msra.mxu0 %v167
    %275 = vmatprep.subr.bf16.mxu0 0
    %276 = vmatpush1.bf16.msra.mxu0 %v168
    %277 = vmatprep.subr.bf16.mxu0 0
    %278 = vmatpush1.bf16.msra.mxu0 %v169
    %279 = vmatprep.subr.bf16.mxu0 0
    %280 = vmatpush1.bf16.msra.mxu0 0
    %281 = vmatprep.subr.bf16.mxu0 0
    %282 = vmatpush1.bf16.msra.mxu0 0
    %283 = vmatprep.subr.bf16.mxu0 0
    %284 = vmatpush1.bf16.msra.mxu0 0
    %285 = vmatprep.subr.bf16.mxu0 0
    %286 = vmatpush1.bf16.msra.mxu0 0
    %287 = vmatprep.subr.bf16.mxu0 0
    %288 = vmatpush1.bf16.msra.mxu0 0
    %289 = vmatprep.subr.bf16.mxu0 0
    %290 = vmatpush1.bf16.msra.mxu0 0
    %291 = vmatprep.subr.bf16.mxu0 0
    %292 = vmatpush1.bf16.msra.mxu0 0
    %293 = vmatprep.subr.bf16.mxu0 0
    %294 = vmatpush1.bf16.msra.mxu0 0
    %295 = vmatprep.subr.bf16.mxu0 0
    %296 = vmatpush1.bf16.msra.mxu0 0
    %297 = vmatprep.subr.bf16.mxu0 0
    %298 = vmatpush1.bf16.msra.mxu0 0
    %299 = vmatprep.subr.bf16.mxu0 0
    %300 = vmatpush1.bf16.msra.mxu0 0
    %301 = vmatprep.subr.bf16.mxu0 0
    %302 = vmatpush1.bf16.msra.mxu0 0
    %303 = vmatprep.mubr.bf16.mxu0 0
    %304 = vmatmul.mubr.bf16.gmra.mrb[0].mxu0 %v176
    %v305 = vpop.f32.mrb[0].mxu0
    %v306 = vadd.f32 0.0, %v305
    %v307 = vpop.f32.mrb[0].mxu0
    %v308 = vpop.f32.mrb[0].mxu0
    %v309 = vadd.f32 0.0, %v308
    %v310 = vpop.f32.mrb[0].mxu0
    %311 = vmatprep.mubr.bf16.mxu0 0
    %312 = vmatmul.mubr.bf16.gmra.mrb[0].mxu0 %v179
    %v313 = vpop.f32.mrb[0].mxu0
    %v314 = vadd.f32 0.0, %v313
    %v315 = vpop.f32.mrb[0].mxu0
    %v316 = vpop.f32.mrb[0].mxu0
    %v317 = vadd.f32 0.0, %v316
    %v318 = vpop.f32.mrb[0].mxu0
    %319 = vmatprep.mubr.bf16.mxu0 0
    %320 = vmatmul.mubr.bf16.gmra.mrb[0].mxu0 %v182
    %v321 = vpop.f32.mrb[0].mxu0
    %v322 = vadd.f32 0.0, %v321
    %v323 = vpop.f32.mrb[0].mxu0
    %v324 = vpop.f32.mrb[0].mxu0
    %v325 = vadd.f32 0.0, %v324
    %v326 = vpop.f32.mrb[0].mxu0
    %327 = vmatprep.mubr.bf16.mxu0 0
    %328 = vmatmul.mubr.bf16.gmra.mrb[0].mxu0 %v185
    %v329 = vpop.f32.mrb[0].mxu0
    %v330 = vadd.f32 0.0, %v329
    %v331 = vpop.f32.mrb[0].mxu0
    %v332 = vpop.f32.mrb[0].mxu0
    %v333 = vadd.f32 0.0, %v332
    %v334 = vpop.f32.mrb[0].mxu0
    %335 = vmatprep.mubr.bf16.mxu0 0
    %336 = vmatmul.mubr.bf16.gmra.mrb[0].mxu0 %v188
    %v337 = vpop.f32.mrb[0].mxu0
    %v338 = vadd.f32 0.0, %v337
    %v339 = vpop.f32.mrb[0].mxu0
    %v340 = vpop.f32.mrb[0].mxu0
    %v341 = vadd.f32 0.0, %v340
    %v342 = vpop.f32.mrb[0].mxu0
    %343 = vmatprep.mubr.bf16.mxu0 0
    %344 = vmatmul.mubr.bf16.gmra.mrb[0].mxu0 %v191
    %v345 = vpop.f32.mrb[0].mxu0
    %v346 = vadd.f32 0.0, %v345
    %v347 = vpop.f32.mrb[0].mxu0
    %v348 = vpop.f32.mrb[0].mxu0
    %v349 = vadd.f32 0.0, %v348
    %v350 = vpop.f32.mrb[0].mxu0
    %351 = vmatprep.mubr.bf16.mxu0 0
    %352 = vmatmul.mubr.bf16.gmra.mrb[0].mxu0 %v194
    %v353 = vpop.f32.mrb[0].mxu0
    %v354 = vadd.f32 0.0, %v353
    %v355 = vpop.f32.mrb[0].mxu0
    %v356 = vpop.f32.mrb[0].mxu0
    %v357 = vadd.f32 0.0, %v356
    %v358 = vpop.f32.mrb[0].mxu0
    %359 = vmatprep.mubr.bf16.mxu0 0
    %360 = vmatmul.mubr.bf16.gmra.mrb[0].mxu0 %v197
    %v361 = vpop.f32.mrb[0].mxu0
    %v362 = vadd.f32 0.0, %v361
    %v363 = vpop.f32.mrb[0].mxu0
    %v364 = vpop.f32.mrb[0].mxu0
    %v365 = vadd.f32 0.0, %v364
    %v366 = vpop.f32.mrb[0].mxu0
    %367 = vmatprep.mubr.bf16.mxu0 0
    %368 = vmatmul.mubr.bf16.gmra.mrb[0].mxu0 %v200
    %v369 = vpop.f32.mrb[0].mxu0
    %v370 = vadd.f32 0.0, %v369
    %v371 = vpop.f32.mrb[0].mxu0
    %v372 = vpop.f32.mrb[0].mxu0
    %v373 = vadd.f32 0.0, %v372
    %v374 = vpop.f32.mrb[0].mxu0
    %375 = vmatprep.mubr.bf16.mxu0 0
    %376 = vmatmul.mubr.bf16.gmra.mrb[0].mxu0 %v203
    %v377 = vpop.f32.mrb[0].mxu0
    %v378 = vadd.f32 0.0, %v377
    %v379 = vpop.f32.mrb[0].mxu0
    %v380 = vpop.f32.mrb[0].mxu0
    %v381 = vadd.f32 0.0, %v380
    %v382 = vpop.f32.mrb[0].mxu0
    %383 = vmatprep.mubr.bf16.mxu0 0
    %384 = vmatmul.mubr.bf16.gmra.mrb[0].mxu0 %v206
    %v385 = vpop.f32.mrb[0].mxu0
    %v386 = vadd.f32 0.0, %v385
    %v387 = vpop.f32.mrb[0].mxu0
    %v388 = vpop.f32.mrb[0].mxu0
    %v389 = vadd.f32 0.0, %v388
    %v390 = vpop.f32.mrb[0].mxu0
    %391 = vmatprep.mubr.bf16.mxu0 0
    %392 = vmatmul.mubr.bf16.gmra.mrb[0].mxu0 %v209
    %v393 = vpop.f32.mrb[0].mxu0
    %v394 = vadd.f32 0.0, %v393
    %v395 = vpop.f32.mrb[0].mxu0
    %v396 = vpop.f32.mrb[0].mxu0
    %v397 = vadd.f32 0.0, %v396
    %v398 = vpop.f32.mrb[0].mxu0
    %399 = vmatprep.mubr.bf16.mxu0 0
    %400 = vmatmul.mubr.bf16.gmra.mrb[0].mxu0 %v212
    %v401 = vpop.f32.mrb[0].mxu0
    %v402 = vadd.f32 0.0, %v401
    %v403 = vpop.f32.mrb[0].mxu0
    %v404 = vpop.f32.mrb[0].mxu0
    %v405 = vadd.f32 0.0, %v404
    %v406 = vpop.f32.mrb[0].mxu0
    %407 = vmatprep.mubr.bf16.mxu0 0
    %408 = vmatmul.mubr.bf16.gmra.mrb[0].mxu0 %v215
    %v409 = vpop.f32.mrb[0].mxu0
    %v410 = vadd.f32 0.0, %v409
    %v411 = vpop.f32.mrb[0].mxu0
    %v412 = vpop.f32.mrb[0].mxu0
    %v413 = vadd.f32 0.0, %v412
    %v414 = vpop.f32.mrb[0].mxu0
    %415 = vmatprep.mubr.bf16.mxu0 0
    %416 = vmatmul.mubr.bf16.gmra.mrb[0].mxu0 %v218
    %v417 = vpop.f32.mrb[0].mxu0
    %v418 = vadd.f32 0.0, %v417
    %v419 = vpop.f32.mrb[0].mxu0
    %v420 = vpop.f32.mrb[0].mxu0
    %v421 = vadd.f32 0.0, %v420
    %v422 = vpop.f32.mrb[0].mxu0
    %423 = vmatprep.mubr.bf16.mxu0 0
    %424 = vmatmul.mubr.bf16.gmra.mrb[0].mxu0 %v221
    %v425 = vpop.f32.mrb[0].mxu0
    %v426 = vadd.f32 0.0, %v425
    %v427 = vpop.f32.mrb[0].mxu0
    %v428 = vpop.f32.mrb[0].mxu0
    %v429 = vadd.f32 0.0, %v428
    %v430 = vpop.f32.mrb[0].mxu0
    %431 = vmatprep.mubr.bf16.mxu0 0
    %432 = vmatmul.mubr.bf16.gmra.mrb[0].mxu0 %v224
    %v433 = vpop.f32.mrb[0].mxu0
    %v434 = vadd.f32 0.0, %v433
    %v435 = vpop.f32.mrb[0].mxu0
    %v436 = vpop.f32.mrb[0].mxu0
    %v437 = vadd.f32 0.0, %v436
    %v438 = vpop.f32.mrb[0].mxu0
    %439 = vmatprep.mubr.bf16.mxu0 0
    %440 = vmatmul.mubr.bf16.gmra.mrb[0].mxu0 %v227
    %v441 = vpop.f32.mrb[0].mxu0
    %v442 = vadd.f32 0.0, %v441
    %v443 = vpop.f32.mrb[0].mxu0
    %v444 = vpop.f32.mrb[0].mxu0
    %v445 = vadd.f32 0.0, %v444
    %v446 = vpop.f32.mrb[0].mxu0
    %447 = vmatprep.mubr.bf16.mxu0 0
    %448 = vmatmul.mubr.bf16.gmra.mrb[0].mxu0 %v230
    %v449 = vpop.f32.mrb[0].mxu0
    %v450 = vadd.f32 0.0, %v449
    %v451 = vpop.f32.mrb[0].mxu0
    %v452 = vpop.f32.mrb[0].mxu0
    %v453 = vadd.f32 0.0, %v452
    %v454 = vpop.f32.mrb[0].mxu0
    %455 = vmatprep.mubr.bf16.mxu0 0
    %456 = vmatmul.mubr.bf16.gmra.mrb[0].mxu0 %v233
    %v457 = vpop.f32.mrb[0].mxu0
    %v458 = vadd.f32 0.0, %v457
    %v459 = vpop.f32.mrb[0].mxu0
    %v460 = vpop.f32.mrb[0].mxu0
    %v461 = vadd.f32 0.0, %v460
    %v462 = vpop.f32.mrb[0].mxu0
    %463 = vmatprep.mubr.bf16.mxu0 0
    %464 = vmatmul.mubr.bf16.gmra.mrb[0].mxu0 %v236
    %v465 = vpop.f32.mrb[0].mxu0
    %v466 = vadd.f32 0.0, %v465
    %v467 = vpop.f32.mrb[0].mxu0
    %v468 = vpop.f32.mrb[0].mxu0
    %v469 = vadd.f32 0.0, %v468
    %v470 = vpop.f32.mrb[0].mxu0
    %471 = vmatprep.mubr.bf16.mxu0 0
    %472 = vmatmul.mubr.bf16.gmra.mrb[0].mxu0 %v239
    %v473 = vpop.f32.mrb[0].mxu0
    %v474 = vadd.f32 0.0, %v473
    %v475 = vpop.f32.mrb[0].mxu0
    %v476 = vpop.f32.mrb[0].mxu0
    %v477 = vadd.f32 0.0, %v476
    %v478 = vpop.f32.mrb[0].mxu0
    %479 = vmatprep.mubr.bf16.mxu0 0
    %480 = vmatmul.mubr.bf16.gmra.mrb[0].mxu0 %v242
    %v481 = vpop.f32.mrb[0].mxu0
    %v482 = vadd.f32 0.0, %v481
    %v483 = vpop.f32.mrb[0].mxu0
    %v484 = vpop.f32.mrb[0].mxu0
    %v485 = vadd.f32 0.0, %v484
    %v486 = vpop.f32.mrb[0].mxu0
    %487 = vmatprep.mubr.bf16.mxu0 0
    %488 = vmatmul.mubr.bf16.gmra.mrb[0].mxu0 %v245
    %v489 = vpop.f32.mrb[0].mxu0
    %v490 = vadd.f32 0.0, %v489
    %v491 = vpop.f32.mrb[0].mxu0
    %v492 = vpop.f32.mrb[0].mxu0
    %v493 = vadd.f32 0.0, %v492
    %v494 = vpop.f32.mrb[0].mxu0
    %495 = vmatprep.mubr.bf16.mxu0 0
    %496 = vmatmul.mubr.bf16.gmra.mrb[0].mxu0 %v248
    %v497 = vpop.f32.mrb[0].mxu0
    %v498 = vadd.f32 0.0, %v497
    %v499 = vpop.f32.mrb[0].mxu0
    %v500 = vpop.f32.mrb[0].mxu0
    %v501 = vadd.f32 0.0, %v500
    %v502 = vpop.f32.mrb[0].mxu0
    %503 = vmatprep.mubr.bf16.mxu0 0
    %504 = vmatmul.mubr.bf16.gmra.mrb[0].mxu0 %v251
    %v505 = vpop.f32.mrb[0].mxu0
    %v506 = vadd.f32 0.0, %v505
    %v507 = vpop.f32.mrb[0].mxu0
    %v508 = vpop.f32.mrb[0].mxu0
    %v509 = vadd.f32 0.0, %v508
    %v510 = vpop.f32.mrb[0].mxu0
    %511 = vmatprep.mubr.bf16.mxu0 0
    %512 = vmatmul.mubr.bf16.gmra.mrb[0].mxu0 %v254
    %v513 = vpop.f32.mrb[0].mxu0
    %v514 = vadd.f32 0.0, %v513
    %v515 = vpop.f32.mrb[0].mxu0
    %v516 = vpop.f32.mrb[0].mxu0
    %v517 = vadd.f32 0.0, %v516
    %v518 = vpop.f32.mrb[0].mxu0
    %519 = vmatprep.mubr.bf16.mxu0 0
    %520 = vmatmul.mubr.bf16.gmra.mrb[0].mxu0 %v257
    %v521 = vpop.f32.mrb[0].mxu0
    %v522 = vadd.f32 0.0, %v521
    %v523 = vpop.f32.mrb[0].mxu0
    %v524 = vpop.f32.mrb[0].mxu0
    %v525 = vadd.f32 0.0, %v524
    %v526 = vpop.f32.mrb[0].mxu0
    %527 = vmatprep.mubr.bf16.mxu0 0
    %528 = vmatmul.mubr.bf16.gmra.mrb[0].mxu0 %v260
    %v529 = vpop.f32.mrb[0].mxu0
    %v530 = vadd.f32 0.0, %v529
    %v531 = vpop.f32.mrb[0].mxu0
    %v532 = vpop.f32.mrb[0].mxu0
    %v533 = vadd.f32 0.0, %v532
    %v534 = vpop.f32.mrb[0].mxu0
    %535 = vmatprep.mubr.bf16.mxu0 0
    %536 = vmatmul.mubr.bf16.gmra.mrb[0].mxu0 %v263
    %v537 = vpop.f32.mrb[0].mxu0
    %v538 = vadd.f32 0.0, %v537
    %v539 = vpop.f32.mrb[0].mxu0
    %v540 = vpop.f32.mrb[0].mxu0
    %v541 = vadd.f32 0.0, %v540
    %v542 = vpop.f32.mrb[0].mxu0
    %543 = vmatprep.mubr.bf16.mxu0 0
    %544 = vmatmul.mubr.bf16.gmra.mrb[0].mxu0 %v266
    %v545 = vpop.f32.mrb[0].mxu0
    %v546 = vadd.f32 0.0, %v545
    %v547 = vpop.f32.mrb[0].mxu0
    %v548 = vpop.f32.mrb[0].mxu0
    %v549 = vadd.f32 0.0, %v548
    %v550 = vpop.f32.mrb[0].mxu0
    %551 = vmatprep.mubr.bf16.mxu0 0
    %552 = vmatmul.mubr.bf16.gmra.mrb[0].mxu0 %v269
    %v553 = vpop.f32.mrb[0].mxu0
    %v554 = vadd.f32 0.0, %v553
    %v555 = vpop.f32.mrb[0].mxu0
    %v556 = vpop.f32.mrb[0].mxu0
    %v557 = vadd.f32 0.0, %v556
    %v558 = vpop.f32.mrb[0].mxu0
    %559 = vdwg.mxu0
    %v560 = vld [vmem:[%s5] sm:$0x1]
    %v561 = vld [vmem:[%s6] sm:$0x1]
    %vm562 = vcmask 261120
    %v563 = vsel %vm562, %v306, 0.0
    %v564 = vsel %vm562, %v309, 0.0
    %v565 = vadd.f32 %v563, %v564
    %v566 = vsel %vm562, %v314, 0.0
    %v567 = vadd.f32 %v565, %v566
    %v568 = vsel %vm562, %v317, 0.0
    %v569 = vadd.f32 %v567, %v568
    %v570 = vsel %vm562, %v322, 0.0
    %v571 = vadd.f32 %v569, %v570
    %v572 = vsel %vm562, %v325, 0.0
    %v573 = vadd.f32 %v571, %v572
    %v574 = vsel %vm562, %v330, 0.0
    %v575 = vadd.f32 %v573, %v574
    %v576 = vsel %vm562, %v333, 0.0
    %v577 = vadd.f32 %v575, %v576
    %v578 = vsel %vm562, %v338, 0.0
    %v579 = vadd.f32 %v577, %v578
    %v580 = vsel %vm562, %v341, 0.0
    %v581 = vadd.f32 %v579, %v580
    %v582 = vsel %vm562, %v346, 0.0
    %v583 = vadd.f32 %v581, %v582
    %v584 = vsel %vm562, %v349, 0.0
    %v585 = vadd.f32 %v583, %v584
    %v586 = vsel %vm562, %v354, 0.0
    %v587 = vadd.f32 %v585, %v586
    %v588 = vsel %vm562, %v357, 0.0
    %v589 = vadd.f32 %v587, %v588
    %v590 = vsel %vm562, %v362, 0.0
    %v591 = vadd.f32 %v589, %v590
    %v592 = vsel %vm562, %v365, 0.0
    %v593 = vadd.f32 %v591, %v592
    %v594 = vsel %vm562, %v370, 0.0
    %v595 = vadd.f32 %v593, %v594
    %v596 = vsel %vm562, %v373, 0.0
    %v597 = vadd.f32 %v595, %v596
    %v598 = vsel %vm562, %v378, 0.0
    %v599 = vadd.f32 %v597, %v598
    %v600 = vsel %vm562, %v381, 0.0
    %v601 = vadd.f32 %v599, %v600
    %v602 = vsel %vm562, %v386, 0.0
    %v603 = vadd.f32 %v601, %v602
    %v604 = vsel %vm562, %v389, 0.0
    %v605 = vadd.f32 %v603, %v604
    %v606 = vsel %vm562, %v394, 0.0
    %v607 = vadd.f32 %v605, %v606
    %v608 = vsel %vm562, %v397, 0.0
    %v609 = vadd.f32 %v607, %v608
    %v610 = vsel %vm562, %v402, 0.0
    %v611 = vadd.f32 %v609, %v610
    %v612 = vsel %vm562, %v405, 0.0
    %v613 = vadd.f32 %v611, %v612
    %v614 = vsel %vm562, %v410, 0.0
    %v615 = vadd.f32 %v613, %v614
    %v616 = vsel %vm562, %v413, 0.0
    %v617 = vadd.f32 %v615, %v616
    %v618 = vsel %vm562, %v418, 0.0
    %v619 = vadd.f32 %v617, %v618
    %v620 = vsel %vm562, %v421, 0.0
    %v621 = vadd.f32 %v619, %v620
    %v622 = vsel %vm562, %v426, 0.0
    %v623 = vadd.f32 %v621, %v622
    %v624 = vsel %vm562, %v429, 0.0
    %v625 = vadd.f32 %v623, %v624
    %v626 = vsel %vm562, %v434, 0.0
    %v627 = vadd.f32 %v625, %v626
    %v628 = vsel %vm562, %v437, 0.0
    %v629 = vadd.f32 %v627, %v628
    %v630 = vsel %vm562, %v442, 0.0
    %v631 = vadd.f32 %v629, %v630
    %v632 = vsel %vm562, %v445, 0.0
    %v633 = vadd.f32 %v631, %v632
    %v634 = vsel %vm562, %v450, 0.0
    %v635 = vadd.f32 %v633, %v634
    %v636 = vsel %vm562, %v453, 0.0
    %v637 = vadd.f32 %v635, %v636
    %v638 = vsel %vm562, %v458, 0.0
    %v639 = vadd.f32 %v637, %v638
    %v640 = vsel %vm562, %v461, 0.0
    %v641 = vadd.f32 %v639, %v640
    %v642 = vsel %vm562, %v466, 0.0
    %v643 = vadd.f32 %v641, %v642
    %v644 = vsel %vm562, %v469, 0.0
    %v645 = vadd.f32 %v643, %v644
    %v646 = vsel %vm562, %v474, 0.0
    %v647 = vadd.f32 %v645, %v646
    %v648 = vsel %vm562, %v477, 0.0
    %v649 = vadd.f32 %v647, %v648
    %v650 = vsel %vm562, %v482, 0.0
    %v651 = vadd.f32 %v649, %v650
    %v652 = vsel %vm562, %v485, 0.0
    %v653 = vadd.f32 %v651, %v652
    %v654 = vsel %vm562, %v490, 0.0
    %v655 = vadd.f32 %v653, %v654
    %v656 = vsel %vm562, %v493, 0.0
    %v657 = vadd.f32 %v655, %v656
    %v658 = vsel %vm562, %v498, 0.0
    %v659 = vadd.f32 %v657, %v658
    %v660 = vsel %vm562, %v501, 0.0
    %v661 = vadd.f32 %v659, %v660
    %v662 = vsel %vm562, %v506, 0.0
    %v663 = vadd.f32 %v661, %v662
    %v664 = vsel %vm562, %v509, 0.0
    %v665 = vadd.f32 %v663, %v664
    %v666 = vsel %vm562, %v514, 0.0
    %v667 = vadd.f32 %v665, %v666
    %v668 = vsel %vm562, %v517, 0.0
    %v669 = vadd.f32 %v667, %v668
    %v670 = vsel %vm562, %v522, 0.0
    %v671 = vadd.f32 %v669, %v670
    %v672 = vsel %vm562, %v525, 0.0
    %v673 = vadd.f32 %v671, %v672
    %v674 = vsel %vm562, %v530, 0.0
    %v675 = vadd.f32 %v673, %v674
    %v676 = vsel %vm562, %v533, 0.0
    %v677 = vadd.f32 %v675, %v676
    %v678 = vsel %vm562, %v538, 0.0
    %v679 = vadd.f32 %v677, %v678
    %v680 = vsel %vm562, %v541, 0.0
    %v681 = vadd.f32 %v679, %v680
    %v682 = vsel %vm562, %v546, 0.0
    %v683 = vadd.f32 %v681, %v682
    %v684 = vsel %vm562, %v549, 0.0
    %v685 = vadd.f32 %v683, %v684
    %v686 = vsel %vm562, %v554, 0.0
    %v687 = vadd.f32 %v685, %v686
    %v688 = vsel %vm562, %v557, 0.0
    %v689 = vadd.f32 %v687, %v688
    %v690 = vrot.slane %v689, 4
    %v691 = vadd.f32 %v689, %v690
    %v692 = vrot.slane %v691, 2
    %v693 = vadd.f32 %v691, %v692
    %v694 = vrot.slane %v693, 1
    %v695 = vadd.f32 %v693, %v694
    %v696 = vrcp.pop 512.0
    %v697 = vmul.f32 %v695, %v696
    %v698 = vsub.f32 %v306, %v697
    %v699 = vsub.f32 %v309, %v697
    %v700 = vsub.f32 %v314, %v697
    %v701 = vsub.f32 %v317, %v697
    %v702 = vsub.f32 %v322, %v697
    %v703 = vsub.f32 %v325, %v697
    %v704 = vsub.f32 %v330, %v697
    %v705 = vsub.f32 %v333, %v697
    %v706 = vsub.f32 %v338, %v697
    %v707 = vsub.f32 %v341, %v697
    %v708 = vsub.f32 %v346, %v697
    %v709 = vsub.f32 %v349, %v697
    %v710 = vsub.f32 %v354, %v697
    %v711 = vsub.f32 %v357, %v697
    %v712 = vsub.f32 %v362, %v697
    %v713 = vsub.f32 %v365, %v697
    %v714 = vsub.f32 %v370, %v697
    %v715 = vsub.f32 %v373, %v697
    %v716 = vsub.f32 %v378, %v697
    %v717 = vsub.f32 %v381, %v697
    %v718 = vsub.f32 %v386, %v697
    %v719 = vsub.f32 %v389, %v697
    %v720 = vsub.f32 %v394, %v697
    %v721 = vsub.f32 %v397, %v697
    %v722 = vsub.f32 %v402, %v697
    %v723 = vsub.f32 %v405, %v697
    %v724 = vsub.f32 %v410, %v697
    %v725 = vsub.f32 %v413, %v697
    %v726 = vsub.f32 %v418, %v697
    %v727 = vsub.f32 %v421, %v697
    %v728 = vsub.f32 %v426, %v697
    %v729 = vsub.f32 %v429, %v697
    %v730 = vsub.f32 %v434, %v697
    %v731 = vsub.f32 %v437, %v697
    %v732 = vsub.f32 %v442, %v697
    %v733 = vsub.f32 %v445, %v697
    %v734 = vsub.f32 %v450, %v697
    %v735 = vsub.f32 %v453, %v697
    %v736 = vsub.f32 %v458, %v697
    %v737 = vsub.f32 %v461, %v697
    %v738 = vsub.f32 %v466, %v697
    %v739 = vsub.f32 %v469, %v697
    %v740 = vsub.f32 %v474, %v697
    %v741 = vsub.f32 %v477, %v697
    %v742 = vsub.f32 %v482, %v697
    %v743 = vsub.f32 %v485, %v697
    %v744 = vsub.f32 %v490, %v697
    %v745 = vsub.f32 %v493, %v697
    %v746 = vsub.f32 %v498, %v697
    %v747 = vsub.f32 %v501, %v697
    %v748 = vsub.f32 %v506, %v697
    %v749 = vsub.f32 %v509, %v697
    %v750 = vsub.f32 %v514, %v697
    %v751 = vsub.f32 %v517, %v697
    %v752 = vsub.f32 %v522, %v697
    %v753 = vsub.f32 %v525, %v697
    %v754 = vsub.f32 %v530, %v697
    %v755 = vsub.f32 %v533, %v697
    %v756 = vsub.f32 %v538, %v697
    %v757 = vsub.f32 %v541, %v697
    %v758 = vsub.f32 %v546, %v697
    %v759 = vsub.f32 %v549, %v697
    %v760 = vsub.f32 %v554, %v697
    %v761 = vsub.f32 %v557, %v697
    %v762 = vmul.f32 %v698, %v698
    %v763 = vmul.f32 %v699, %v699
    %v764 = vmul.f32 %v700, %v700
    %v765 = vmul.f32 %v701, %v701
    %v766 = vmul.f32 %v702, %v702
    %v767 = vmul.f32 %v703, %v703
    %v768 = vmul.f32 %v704, %v704
    %v769 = vmul.f32 %v705, %v705
    %v770 = vmul.f32 %v706, %v706
    %v771 = vmul.f32 %v707, %v707
    %v772 = vmul.f32 %v708, %v708
    %v773 = vmul.f32 %v709, %v709
    %v774 = vmul.f32 %v710, %v710
    %v775 = vmul.f32 %v711, %v711
    %v776 = vmul.f32 %v712, %v712
    %v777 = vmul.f32 %v713, %v713
    %v778 = vmul.f32 %v714, %v714
    %v779 = vmul.f32 %v715, %v715
    %v780 = vmul.f32 %v716, %v716
    %v781 = vmul.f32 %v717, %v717
    %v782 = vmul.f32 %v718, %v718
    %v783 = vmul.f32 %v719, %v719
    %v784 = vmul.f32 %v720, %v720
    %v785 = vmul.f32 %v721, %v721
    %v786 = vmul.f32 %v722, %v722
    %v787 = vmul.f32 %v723, %v723
    %v788 = vmul.f32 %v724, %v724
    %v789 = vmul.f32 %v725, %v725
    %v790 = vmul.f32 %v726, %v726
    %v791 = vmul.f32 %v727, %v727
    %v792 = vmul.f32 %v728, %v728
    %v793 = vmul.f32 %v729, %v729
    %v794 = vmul.f32 %v730, %v730
    %v795 = vmul.f32 %v731, %v731
    %v796 = vmul.f32 %v732, %v732
    %v797 = vmul.f32 %v733, %v733
    %v798 = vmul.f32 %v734, %v734
    %v799 = vmul.f32 %v735, %v735
    %v800 = vmul.f32 %v736, %v736
    %v801 = vmul.f32 %v737, %v737
    %v802 = vmul.f32 %v738, %v738
    %v803 = vmul.f32 %v739, %v739
    %v804 = vmul.f32 %v740, %v740
    %v805 = vmul.f32 %v741, %v741
    %v806 = vmul.f32 %v742, %v742
    %v807 = vmul.f32 %v743, %v743
    %v808 = vmul.f32 %v744, %v744
    %v809 = vmul.f32 %v745, %v745
    %v810 = vmul.f32 %v746, %v746
    %v811 = vmul.f32 %v747, %v747
    %v812 = vmul.f32 %v748, %v748
    %v813 = vmul.f32 %v749, %v749
    %v814 = vmul.f32 %v750, %v750
    %v815 = vmul.f32 %v751, %v751
    %v816 = vmul.f32 %v752, %v752
    %v817 = vmul.f32 %v753, %v753
    %v818 = vmul.f32 %v754, %v754
    %v819 = vmul.f32 %v755, %v755
    %v820 = vmul.f32 %v756, %v756
    %v821 = vmul.f32 %v757, %v757
    %v822 = vmul.f32 %v758, %v758
    %v823 = vmul.f32 %v759, %v759
    %v824 = vmul.f32 %v760, %v760
    %v825 = vmul.f32 %v761, %v761
    %v826 = vsel %vm562, %v762, 0.0
    %v827 = vsel %vm562, %v763, 0.0
    %v828 = vadd.f32 %v826, %v827
    %v829 = vsel %vm562, %v764, 0.0
    %v830 = vadd.f32 %v828, %v829
    %v831 = vsel %vm562, %v765, 0.0
    %v832 = vadd.f32 %v830, %v831
    %v833 = vsel %vm562, %v766, 0.0
    %v834 = vadd.f32 %v832, %v833
    %v835 = vsel %vm562, %v767, 0.0
    %v836 = vadd.f32 %v834, %v835
    %v837 = vsel %vm562, %v768, 0.0
    %v838 = vadd.f32 %v836, %v837
    %v839 = vsel %vm562, %v769, 0.0
    %v840 = vadd.f32 %v838, %v839
    %v841 = vsel %vm562, %v770, 0.0
    %v842 = vadd.f32 %v840, %v841
    %v843 = vsel %vm562, %v771, 0.0
    %v844 = vadd.f32 %v842, %v843
    %v845 = vsel %vm562, %v772, 0.0
    %v846 = vadd.f32 %v844, %v845
    %v847 = vsel %vm562, %v773, 0.0
    %v848 = vadd.f32 %v846, %v847
    %v849 = vsel %vm562, %v774, 0.0
    %v850 = vadd.f32 %v848, %v849
    %v851 = vsel %vm562, %v775, 0.0
    %v852 = vadd.f32 %v850, %v851
    %v853 = vsel %vm562, %v776, 0.0
    %v854 = vadd.f32 %v852, %v853
    %v855 = vsel %vm562, %v777, 0.0
    %v856 = vadd.f32 %v854, %v855
    %v857 = vsel %vm562, %v778, 0.0
    %v858 = vadd.f32 %v856, %v857
    %v859 = vsel %vm562, %v779, 0.0
    %v860 = vadd.f32 %v858, %v859
    %v861 = vsel %vm562, %v780, 0.0
    %v862 = vadd.f32 %v860, %v861
    %v863 = vsel %vm562, %v781, 0.0
    %v864 = vadd.f32 %v862, %v863
    %v865 = vsel %vm562, %v782, 0.0
    %v866 = vadd.f32 %v864, %v865
    %v867 = vsel %vm562, %v783, 0.0
    %v868 = vadd.f32 %v866, %v867
    %v869 = vsel %vm562, %v784, 0.0
    %v870 = vadd.f32 %v868, %v869
    %v871 = vsel %vm562, %v785, 0.0
    %v872 = vadd.f32 %v870, %v871
    %v873 = vsel %vm562, %v786, 0.0
    %v874 = vadd.f32 %v872, %v873
    %v875 = vsel %vm562, %v787, 0.0
    %v876 = vadd.f32 %v874, %v875
    %v877 = vsel %vm562, %v788, 0.0
    %v878 = vadd.f32 %v876, %v877
    %v879 = vsel %vm562, %v789, 0.0
    %v880 = vadd.f32 %v878, %v879
    %v881 = vsel %vm562, %v790, 0.0
    %v882 = vadd.f32 %v880, %v881
    %v883 = vsel %vm562, %v791, 0.0
    %v884 = vadd.f32 %v882, %v883
    %v885 = vsel %vm562, %v792, 0.0
    %v886 = vadd.f32 %v884, %v885
    %v887 = vsel %vm562, %v793, 0.0
    %v888 = vadd.f32 %v886, %v887
    %v889 = vsel %vm562, %v794, 0.0
    %v890 = vadd.f32 %v888, %v889
    %v891 = vsel %vm562, %v795, 0.0
    %v892 = vadd.f32 %v890, %v891
    %v893 = vsel %vm562, %v796, 0.0
    %v894 = vadd.f32 %v892, %v893
    %v895 = vsel %vm562, %v797, 0.0
    %v896 = vadd.f32 %v894, %v895
    %v897 = vsel %vm562, %v798, 0.0
    %v898 = vadd.f32 %v896, %v897
    %v899 = vsel %vm562, %v799, 0.0
    %v900 = vadd.f32 %v898, %v899
    %v901 = vsel %vm562, %v800, 0.0
    %v902 = vadd.f32 %v900, %v901
    %v903 = vsel %vm562, %v801, 0.0
    %v904 = vadd.f32 %v902, %v903
    %v905 = vsel %vm562, %v802, 0.0
    %v906 = vadd.f32 %v904, %v905
    %v907 = vsel %vm562, %v803, 0.0
    %v908 = vadd.f32 %v906, %v907
    %v909 = vsel %vm562, %v804, 0.0
    %v910 = vadd.f32 %v908, %v909
    %v911 = vsel %vm562, %v805, 0.0
    %v912 = vadd.f32 %v910, %v911
    %v913 = vsel %vm562, %v806, 0.0
    %v914 = vadd.f32 %v912, %v913
    %v915 = vsel %vm562, %v807, 0.0
    %v916 = vadd.f32 %v914, %v915
    %v917 = vsel %vm562, %v808, 0.0
    %v918 = vadd.f32 %v916, %v917
    %v919 = vsel %vm562, %v809, 0.0
    %v920 = vadd.f32 %v918, %v919
    %v921 = vsel %vm562, %v810, 0.0
    %v922 = vadd.f32 %v920, %v921
    %v923 = vsel %vm562, %v811, 0.0
    %v924 = vadd.f32 %v922, %v923
    %v925 = vsel %vm562, %v812, 0.0
    %v926 = vadd.f32 %v924, %v925
    %v927 = vsel %vm562, %v813, 0.0
    %v928 = vadd.f32 %v926, %v927
    %v929 = vsel %vm562, %v814, 0.0
    %v930 = vadd.f32 %v928, %v929
    %v931 = vsel %vm562, %v815, 0.0
    %v932 = vadd.f32 %v930, %v931
    %v933 = vsel %vm562, %v816, 0.0
    %v934 = vadd.f32 %v932, %v933
    %v935 = vsel %vm562, %v817, 0.0
    %v936 = vadd.f32 %v934, %v935
    %v937 = vsel %vm562, %v818, 0.0
    %v938 = vadd.f32 %v936, %v937
    %v939 = vsel %vm562, %v819, 0.0
    %v940 = vadd.f32 %v938, %v939
    %v941 = vsel %vm562, %v820, 0.0
    %v942 = vadd.f32 %v940, %v941
    %v943 = vsel %vm562, %v821, 0.0
    %v944 = vadd.f32 %v942, %v943
    %v945 = vsel %vm562, %v822, 0.0
    %v946 = vadd.f32 %v944, %v945
    %v947 = vsel %vm562, %v823, 0.0
    %v948 = vadd.f32 %v946, %v947
    %v949 = vsel %vm562, %v824, 0.0
    %v950 = vadd.f32 %v948, %v949
    %v951 = vsel %vm562, %v825, 0.0
    %v952 = vadd.f32 %v950, %v951
    %v953 = vrot.slane %v952, 4
    %v954 = vadd.f32 %v952, %v953
    %v955 = vrot.slane %v954, 2
    %v956 = vadd.f32 %v954, %v955
    %v957 = vrot.slane %v956, 1
    %v958 = vadd.f32 %v956, %v957
    %v959 = vmul.f32 %v958, %v696
    %v960 = vadd.f32 %v959, 1e-05
    %v961 = vrsqrt.pop %v960
    %v962 = vmul.f32 %v698, %v961
    %v963 = vmul.f32 %v699, %v961
    %v964 = vmul.f32 %v700, %v961
    %v965 = vmul.f32 %v701, %v961
    %v966 = vmul.f32 %v702, %v961
    %v967 = vmul.f32 %v703, %v961
    %v968 = vmul.f32 %v704, %v961
    %v969 = vmul.f32 %v705, %v961
    %v970 = vmul.f32 %v706, %v961
    %v971 = vmul.f32 %v707, %v961
    %v972 = vmul.f32 %v708, %v961
    %v973 = vmul.f32 %v709, %v961
    %v974 = vmul.f32 %v710, %v961
    %v975 = vmul.f32 %v711, %v961
    %v976 = vmul.f32 %v712, %v961
    %v977 = vmul.f32 %v713, %v961
    %v978 = vmul.f32 %v714, %v961
    %v979 = vmul.f32 %v715, %v961
    %v980 = vmul.f32 %v716, %v961
    %v981 = vmul.f32 %v717, %v961
    %v982 = vmul.f32 %v718, %v961
    %v983 = vmul.f32 %v719, %v961
    %v984 = vmul.f32 %v720, %v961
    %v985 = vmul.f32 %v721, %v961
    %v986 = vmul.f32 %v722, %v961
    %v987 = vmul.f32 %v723, %v961
    %v988 = vmul.f32 %v724, %v961
    %v989 = vmul.f32 %v725, %v961
    %v990 = vmul.f32 %v726, %v961
    %v991 = vmul.f32 %v727, %v961
    %v992 = vmul.f32 %v728, %v961
    %v993 = vmul.f32 %v729, %v961
    %v994 = vmul.f32 %v730, %v961
    %v995 = vmul.f32 %v731, %v961
    %v996 = vmul.f32 %v732, %v961
    %v997 = vmul.f32 %v733, %v961
    %v998 = vmul.f32 %v734, %v961
    %v999 = vmul.f32 %v735, %v961
    %v1000 = vmul.f32 %v736, %v961
    %v1001 = vmul.f32 %v737, %v961
    %v1002 = vmul.f32 %v738, %v961
    %v1003 = vmul.f32 %v739, %v961
    %v1004 = vmul.f32 %v740, %v961
    %v1005 = vmul.f32 %v741, %v961
    %v1006 = vmul.f32 %v742, %v961
    %v1007 = vmul.f32 %v743, %v961
    %v1008 = vmul.f32 %v744, %v961
    %v1009 = vmul.f32 %v745, %v961
    %v1010 = vmul.f32 %v746, %v961
    %v1011 = vmul.f32 %v747, %v961
    %v1012 = vmul.f32 %v748, %v961
    %v1013 = vmul.f32 %v749, %v961
    %v1014 = vmul.f32 %v750, %v961
    %v1015 = vmul.f32 %v751, %v961
    %v1016 = vmul.f32 %v752, %v961
    %v1017 = vmul.f32 %v753, %v961
    %v1018 = vmul.f32 %v754, %v961
    %v1019 = vmul.f32 %v755, %v961
    %v1020 = vmul.f32 %v756, %v961
    %v1021 = vmul.f32 %v757, %v961
    %v1022 = vmul.f32 %v758, %v961
    %v1023 = vmul.f32 %v759, %v961
    %v1024 = vmul.f32 %v760, %v961
    %v1025 = vmul.f32 %v761, %v961
    %v1027 = vlaneseq
    %v1028 = vshrl.u32 %v1027, 7
    %v1029 = vsub.s32 0, %v1028
    %v1030 = vrot.slane %v560, %v1029
    %v1032 = vmul.f32 %v962, %v1030
    %v1033 = vmul.f32 %v963, %v1030
    %v1034 = vmul.f32 %v964, %v1030
    %v1035 = vmul.f32 %v965, %v1030
    %v1036 = vmul.f32 %v966, %v1030
    %v1037 = vmul.f32 %v967, %v1030
    %v1038 = vmul.f32 %v968, %v1030
    %v1039 = vmul.f32 %v969, %v1030
    %v1040 = vmul.f32 %v970, %v1030
    %v1041 = vmul.f32 %v971, %v1030
    %v1042 = vmul.f32 %v972, %v1030
    %v1043 = vmul.f32 %v973, %v1030
    %v1044 = vmul.f32 %v974, %v1030
    %v1045 = vmul.f32 %v975, %v1030
    %v1046 = vmul.f32 %v976, %v1030
    %v1047 = vmul.f32 %v977, %v1030
    %v1048 = vmul.f32 %v978, %v1030
    %v1049 = vmul.f32 %v979, %v1030
    %v1050 = vmul.f32 %v980, %v1030
    %v1051 = vmul.f32 %v981, %v1030
    %v1052 = vmul.f32 %v982, %v1030
    %v1053 = vmul.f32 %v983, %v1030
    %v1054 = vmul.f32 %v984, %v1030
    %v1055 = vmul.f32 %v985, %v1030
    %v1056 = vmul.f32 %v986, %v1030
    %v1057 = vmul.f32 %v987, %v1030
    %v1058 = vmul.f32 %v988, %v1030
    %v1059 = vmul.f32 %v989, %v1030
    %v1060 = vmul.f32 %v990, %v1030
    %v1061 = vmul.f32 %v991, %v1030
    %v1062 = vmul.f32 %v992, %v1030
    %v1063 = vmul.f32 %v993, %v1030
    %v1064 = vmul.f32 %v994, %v1030
    %v1065 = vmul.f32 %v995, %v1030
    %v1066 = vmul.f32 %v996, %v1030
    %v1067 = vmul.f32 %v997, %v1030
    %v1068 = vmul.f32 %v998, %v1030
    %v1069 = vmul.f32 %v999, %v1030
    %v1070 = vmul.f32 %v1000, %v1030
    %v1071 = vmul.f32 %v1001, %v1030
    %v1072 = vmul.f32 %v1002, %v1030
    %v1073 = vmul.f32 %v1003, %v1030
    %v1074 = vmul.f32 %v1004, %v1030
    %v1075 = vmul.f32 %v1005, %v1030
    %v1076 = vmul.f32 %v1006, %v1030
    %v1077 = vmul.f32 %v1007, %v1030
    %v1078 = vmul.f32 %v1008, %v1030
    %v1079 = vmul.f32 %v1009, %v1030
    %v1080 = vmul.f32 %v1010, %v1030
    %v1081 = vmul.f32 %v1011, %v1030
    %v1082 = vmul.f32 %v1012, %v1030
    %v1083 = vmul.f32 %v1013, %v1030
    %v1084 = vmul.f32 %v1014, %v1030
    %v1085 = vmul.f32 %v1015, %v1030
    %v1086 = vmul.f32 %v1016, %v1030
    %v1087 = vmul.f32 %v1017, %v1030
    %v1088 = vmul.f32 %v1018, %v1030
    %v1089 = vmul.f32 %v1019, %v1030
    %v1090 = vmul.f32 %v1020, %v1030
    %v1091 = vmul.f32 %v1021, %v1030
    %v1092 = vmul.f32 %v1022, %v1030
    %v1093 = vmul.f32 %v1023, %v1030
    %v1094 = vmul.f32 %v1024, %v1030
    %v1095 = vmul.f32 %v1025, %v1030
    %v1097 = vlaneseq
    %v1098 = vshrl.u32 %v1097, 7
    %v1099 = vsub.s32 0, %v1098
    %v1100 = vrot.slane %v561, %v1099
    %v1102 = vadd.f32 %v1032, %v1100
    %v1103 = vadd.f32 %v1033, %v1100
    %v1104 = vadd.f32 %v1034, %v1100
    %v1105 = vadd.f32 %v1035, %v1100
    %v1106 = vadd.f32 %v1036, %v1100
    %v1107 = vadd.f32 %v1037, %v1100
    %v1108 = vadd.f32 %v1038, %v1100
    %v1109 = vadd.f32 %v1039, %v1100
    %v1110 = vadd.f32 %v1040, %v1100
    %v1111 = vadd.f32 %v1041, %v1100
    %v1112 = vadd.f32 %v1042, %v1100
    %v1113 = vadd.f32 %v1043, %v1100
    %v1114 = vadd.f32 %v1044, %v1100
    %v1115 = vadd.f32 %v1045, %v1100
    %v1116 = vadd.f32 %v1046, %v1100
    %v1117 = vadd.f32 %v1047, %v1100
    %v1118 = vadd.f32 %v1048, %v1100
    %v1119 = vadd.f32 %v1049, %v1100
    %v1120 = vadd.f32 %v1050, %v1100
    %v1121 = vadd.f32 %v1051, %v1100
    %v1122 = vadd.f32 %v1052, %v1100
    %v1123 = vadd.f32 %v1053, %v1100
    %v1124 = vadd.f32 %v1054, %v1100
    %v1125 = vadd.f32 %v1055, %v1100
    %v1126 = vadd.f32 %v1056, %v1100
    %v1127 = vadd.f32 %v1057, %v1100
    %v1128 = vadd.f32 %v1058, %v1100
    %v1129 = vadd.f32 %v1059, %v1100
    %v1130 = vadd.f32 %v1060, %v1100
    %v1131 = vadd.f32 %v1061, %v1100
    %v1132 = vadd.f32 %v1062, %v1100
    %v1133 = vadd.f32 %v1063, %v1100
    %v1134 = vadd.f32 %v1064, %v1100
    %v1135 = vadd.f32 %v1065, %v1100
    %v1136 = vadd.f32 %v1066, %v1100
    %v1137 = vadd.f32 %v1067, %v1100
    %v1138 = vadd.f32 %v1068, %v1100
    %v1139 = vadd.f32 %v1069, %v1100
    %v1140 = vadd.f32 %v1070, %v1100
    %v1141 = vadd.f32 %v1071, %v1100
    %v1142 = vadd.f32 %v1072, %v1100
    %v1143 = vadd.f32 %v1073, %v1100
    %v1144 = vadd.f32 %v1074, %v1100
    %v1145 = vadd.f32 %v1075, %v1100
    %v1146 = vadd.f32 %v1076, %v1100
    %v1147 = vadd.f32 %v1077, %v1100
    %v1148 = vadd.f32 %v1078, %v1100
    %v1149 = vadd.f32 %v1079, %v1100
    %v1150 = vadd.f32 %v1080, %v1100
    %v1151 = vadd.f32 %v1081, %v1100
    %v1152 = vadd.f32 %v1082, %v1100
    %v1153 = vadd.f32 %v1083, %v1100
    %v1154 = vadd.f32 %v1084, %v1100
    %v1155 = vadd.f32 %v1085, %v1100
    %v1156 = vadd.f32 %v1086, %v1100
    %v1157 = vadd.f32 %v1087, %v1100
    %v1158 = vadd.f32 %v1088, %v1100
    %v1159 = vadd.f32 %v1089, %v1100
    %v1160 = vadd.f32 %v1090, %v1100
    %v1161 = vadd.f32 %v1091, %v1100
    %v1162 = vadd.f32 %v1092, %v1100
    %v1163 = vadd.f32 %v1093, %v1100
    %v1164 = vadd.f32 %v1094, %v1100
    %v1165 = vadd.f32 %v1095, %v1100
    %v1166 = vmax.f32 %v1102, 0.0
    %v1167 = vmax.f32 %v1103, 0.0
    %v1168 = vmax.f32 %v1104, 0.0
    %v1169 = vmax.f32 %v1105, 0.0
    %v1170 = vmax.f32 %v1106, 0.0
    %v1171 = vmax.f32 %v1107, 0.0
    %v1172 = vmax.f32 %v1108, 0.0
    %v1173 = vmax.f32 %v1109, 0.0
    %v1174 = vmax.f32 %v1110, 0.0
    %v1175 = vmax.f32 %v1111, 0.0
    %v1176 = vmax.f32 %v1112, 0.0
    %v1177 = vmax.f32 %v1113, 0.0
    %v1178 = vmax.f32 %v1114, 0.0
    %v1179 = vmax.f32 %v1115, 0.0
    %v1180 = vmax.f32 %v1116, 0.0
    %v1181 = vmax.f32 %v1117, 0.0
    %v1182 = vmax.f32 %v1118, 0.0
    %v1183 = vmax.f32 %v1119, 0.0
    %v1184 = vmax.f32 %v1120, 0.0
    %v1185 = vmax.f32 %v1121, 0.0
    %v1186 = vmax.f32 %v1122, 0.0
    %v1187 = vmax.f32 %v1123, 0.0
    %v1188 = vmax.f32 %v1124, 0.0
    %v1189 = vmax.f32 %v1125, 0.0
    %v1190 = vmax.f32 %v1126, 0.0
    %v1191 = vmax.f32 %v1127, 0.0
    %v1192 = vmax.f32 %v1128, 0.0
    %v1193 = vmax.f32 %v1129, 0.0
    %v1194 = vmax.f32 %v1130, 0.0
    %v1195 = vmax.f32 %v1131, 0.0
    %v1196 = vmax.f32 %v1132, 0.0
    %v1197 = vmax.f32 %v1133, 0.0
    %v1198 = vmax.f32 %v1134, 0.0
    %v1199 = vmax.f32 %v1135, 0.0
    %v1200 = vmax.f32 %v1136, 0.0
    %v1201 = vmax.f32 %v1137, 0.0
    %v1202 = vmax.f32 %v1138, 0.0
    %v1203 = vmax.f32 %v1139, 0.0
    %v1204 = vmax.f32 %v1140, 0.0
    %v1205 = vmax.f32 %v1141, 0.0
    %v1206 = vmax.f32 %v1142, 0.0
    %v1207 = vmax.f32 %v1143, 0.0
    %v1208 = vmax.f32 %v1144, 0.0
    %v1209 = vmax.f32 %v1145, 0.0
    %v1210 = vmax.f32 %v1146, 0.0
    %v1211 = vmax.f32 %v1147, 0.0
    %v1212 = vmax.f32 %v1148, 0.0
    %v1213 = vmax.f32 %v1149, 0.0
    %v1214 = vmax.f32 %v1150, 0.0
    %v1215 = vmax.f32 %v1151, 0.0
    %v1216 = vmax.f32 %v1152, 0.0
    %v1217 = vmax.f32 %v1153, 0.0
    %v1218 = vmax.f32 %v1154, 0.0
    %v1219 = vmax.f32 %v1155, 0.0
    %v1220 = vmax.f32 %v1156, 0.0
    %v1221 = vmax.f32 %v1157, 0.0
    %v1222 = vmax.f32 %v1158, 0.0
    %v1223 = vmax.f32 %v1159, 0.0
    %v1224 = vmax.f32 %v1160, 0.0
    %v1225 = vmax.f32 %v1161, 0.0
    %v1226 = vmax.f32 %v1162, 0.0
    %v1227 = vmax.f32 %v1163, 0.0
    %v1228 = vmax.f32 %v1164, 0.0
    %v1229 = vmax.f32 %v1165, 0.0
    %1230 = vst.msk [vmem:[#allocation2] sm:$0xff] %vm562, 0.0
    %1231 = vst.msk [vmem:[#allocation2 + $0x8] sm:$0xff] %vm562, 0.0
    %vm1232 = vcmask 254976
    %1233 = vst.msk [vmem:[#allocation2 + $0x10] sm:$0x3] %vm1232, 0.0
    %1234 = vst.msk [vmem:[#allocation2 + $0x18] sm:$0xff] %vm562, 0.0
    %1235 = vst.msk [vmem:[#allocation2 + $0x20] sm:$0xff] %vm562, 0.0
    %1236 = vst.msk [vmem:[#allocation2 + $0x28] sm:$0x3] %vm1232, 0.0
    %1237 = vst.msk [vmem:[#allocation2 + $0x30] sm:$0xff] %vm562, 0.0
    %1238 = vst.msk [vmem:[#allocation2 + $0x38] sm:$0xff] %vm562, 0.0
    %1239 = vst.msk [vmem:[#allocation2 + $0x40] sm:$0x3] %vm1232, 0.0
    %1240 = vst.msk [vmem:[#allocation2 + $0x48] sm:$0xff] %vm562, 0.0
    %1241 = vst.msk [vmem:[#allocation2 + $0x50] sm:$0xff] %vm562, 0.0
    %1242 = vst.msk [vmem:[#allocation2 + $0x58] sm:$0x3] %vm1232, 0.0
    %1243 = vst.msk [vmem:[#allocation2 + $0x60] sm:$0xff] %vm562, 0.0
    %1244 = vst.msk [vmem:[#allocation2 + $0x68] sm:$0xff] %vm562, 0.0
    %1245 = vst.msk [vmem:[#allocation2 + $0x70] sm:$0x3] %vm1232, 0.0
    %1246 = vst.msk [vmem:[#allocation2 + $0x78] sm:$0xff] %vm562, 0.0
    %1247 = vst.msk [vmem:[#allocation2 + $0x80] sm:$0xff] %vm562, 0.0
    %1248 = vst.msk [vmem:[#allocation2 + $0x88] sm:$0x3] %vm1232, 0.0
    %1249 = vst.msk [vmem:[#allocation2 + $0x90] sm:$0xff] %vm562, 0.0
    %1250 = vst.msk [vmem:[#allocation2 + $0x98] sm:$0xff] %vm562, 0.0
    %1251 = vst.msk [vmem:[#allocation2 + $0xa0] sm:$0x3] %vm1232, 0.0
    %1252 = vst.msk [vmem:[#allocation2 + $0xa8] sm:$0xff] %vm562, 0.0
    %1253 = vst.msk [vmem:[#allocation2 + $0xb0] sm:$0xff] %vm562, 0.0
    %1254 = vst.msk [vmem:[#allocation2 + $0xb8] sm:$0x3] %vm1232, 0.0
    %1255 = vst.msk [vmem:[#allocation2 + $0xc0] sm:$0xff] %vm562, 0.0
    %1256 = vst.msk [vmem:[#allocation2 + $0xc8] sm:$0xff] %vm562, 0.0
    %1257 = vst.msk [vmem:[#allocation2 + $0xd0] sm:$0x3] %vm1232, 0.0
    %1258 = vst.msk [vmem:[#allocation2 + $0xd8] sm:$0xff] %vm562, 0.0
    %1259 = vst.msk [vmem:[#allocation2 + $0xe0] sm:$0xff] %vm562, 0.0
    %1260 = vst.msk [vmem:[#allocation2 + $0xe8] sm:$0x3] %vm1232, 0.0
    %1261 = vst.msk [vmem:[#allocation2 + $0xf0] sm:$0xff] %vm562, 0.0
    %1262 = vst.msk [vmem:[#allocation2 + $0xf8] sm:$0xff] %vm562, 0.0
    %1263 = vst.msk [vmem:[#allocation2 + $0x100] sm:$0x3] %vm1232, 0.0
    %1264 = vst.msk [vmem:[#allocation2 + $0x108] sm:$0xff] %vm562, 0.0
    %1265 = vst.msk [vmem:[#allocation2 + $0x110] sm:$0xff] %vm562, 0.0
    %1266 = vst.msk [vmem:[#allocation2 + $0x118] sm:$0x3] %vm1232, 0.0
    %1267 = vst.msk [vmem:[#allocation2 + $0x120] sm:$0xff] %vm562, 0.0
    %1268 = vst.msk [vmem:[#allocation2 + $0x128] sm:$0xff] %vm562, 0.0
    %1269 = vst.msk [vmem:[#allocation2 + $0x130] sm:$0x3] %vm1232, 0.0
    %1270 = vst.msk [vmem:[#allocation2 + $0x138] sm:$0xff] %vm562, 0.0
    %1271 = vst.msk [vmem:[#allocation2 + $0x140] sm:$0xff] %vm562, 0.0
    %1272 = vst.msk [vmem:[#allocation2 + $0x148] sm:$0x3] %vm1232, 0.0
    %1273 = vst.msk [vmem:[#allocation2 + $0x150] sm:$0xff] %vm562, 0.0
    %1274 = vst.msk [vmem:[#allocation2 + $0x158] sm:$0xff] %vm562, 0.0
    %1275 = vst.msk [vmem:[#allocation2 + $0x160] sm:$0x3] %vm1232, 0.0
    %1276 = vst.msk [vmem:[#allocation2 + $0x168] sm:$0xff] %vm562, 0.0
    %1277 = vst.msk [vmem:[#allocation2 + $0x170] sm:$0xff] %vm562, 0.0
    %1278 = vst.msk [vmem:[#allocation2 + $0x178] sm:$0x3] %vm1232, 0.0
    %1279 = vst.msk [vmem:[#allocation2 + $0x180] sm:$0xff] %vm562, 0.0
    %1280 = vst.msk [vmem:[#allocation2 + $0x188] sm:$0xff] %vm562, 0.0
    %1281 = vst.msk [vmem:[#allocation2 + $0x190] sm:$0x3] %vm1232, 0.0
    %1282 = vst.msk [vmem:[#allocation2 + $0x198] sm:$0xff] %vm562, 0.0
    %1283 = vst.msk [vmem:[#allocation2 + $0x1a0] sm:$0xff] %vm562, 0.0
    %1284 = vst.msk [vmem:[#allocation2 + $0x1a8] sm:$0x3] %vm1232, 0.0
    %1285 = vst.msk [vmem:[#allocation2 + $0x1b0] sm:$0xff] %vm562, 0.0
    %1286 = vst.msk [vmem:[#allocation2 + $0x1b8] sm:$0xff] %vm562, 0.0
    %1287 = vst.msk [vmem:[#allocation2 + $0x1c0] sm:$0x3] %vm1232, 0.0
    %1288 = vst.msk [vmem:[#allocation2 + $0x1c8] sm:$0xff] %vm562, 0.0
    %1289 = vst.msk [vmem:[#allocation2 + $0x1d0] sm:$0xff] %vm562, 0.0
    %1290 = vst.msk [vmem:[#allocation2 + $0x1d8] sm:$0x3] %vm1232, 0.0
    %1291 = vst.msk [vmem:[#allocation2 + $0x1e0] sm:$0xff] %vm562, 0.0
    %1292 = vst.msk [vmem:[#allocation2 + $0x1e8] sm:$0xff] %vm562, 0.0
    %1293 = vst.msk [vmem:[#allocation2 + $0x1f0] sm:$0x3] %vm1232, 0.0
    %1294 = vst.msk [vmem:[#allocation2 + $0x1f8] sm:$0xff] %vm562, 0.0
    %1295 = vst.msk [vmem:[#allocation2 + $0x200] sm:$0xff] %vm562, 0.0
    %1296 = vst.msk [vmem:[#allocation2 + $0x208] sm:$0x3] %vm1232, 0.0
    %1297 = vst.msk [vmem:[#allocation2 + $0x210] sm:$0xff] %vm562, 0.0
    %1298 = vst.msk [vmem:[#allocation2 + $0x218] sm:$0xff] %vm562, 0.0
    %1299 = vst.msk [vmem:[#allocation2 + $0x220] sm:$0x3] %vm1232, 0.0
    %1300 = vst.msk [vmem:[#allocation2 + $0x228] sm:$0xff] %vm562, 0.0
    %1301 = vst.msk [vmem:[#allocation2 + $0x230] sm:$0xff] %vm562, 0.0
    %1302 = vst.msk [vmem:[#allocation2 + $0x238] sm:$0x3] %vm1232, 0.0
    %1303 = vst.msk [vmem:[#allocation2 + $0x240] sm:$0xff] %vm562, 0.0
    %1304 = vst.msk [vmem:[#allocation2 + $0x248] sm:$0xff] %vm562, 0.0
    %1305 = vst.msk [vmem:[#allocation2 + $0x250] sm:$0x3] %vm1232, 0.0
    %1306 = vst.msk [vmem:[#allocation2 + $0x258] sm:$0xff] %vm562, 0.0
    %1307 = vst.msk [vmem:[#allocation2 + $0x260] sm:$0xff] %vm562, 0.0
    %1308 = vst.msk [vmem:[#allocation2 + $0x268] sm:$0x3] %vm1232, 0.0
    %1309 = vst.msk [vmem:[#allocation2 + $0x270] sm:$0xff] %vm562, 0.0
    %1310 = vst.msk [vmem:[#allocation2 + $0x278] sm:$0xff] %vm562, 0.0
    %1311 = vst.msk [vmem:[#allocation2 + $0x280] sm:$0x3] %vm1232, 0.0
    %1312 = vst.msk [vmem:[#allocation2 + $0x288] sm:$0xff] %vm562, 0.0
    %1313 = vst.msk [vmem:[#allocation2 + $0x290] sm:$0xff] %vm562, 0.0
    %1314 = vst.msk [vmem:[#allocation2 + $0x298] sm:$0x3] %vm1232, 0.0
    %1315 = vst.msk [vmem:[#allocation2 + $0x2a0] sm:$0xff] %vm562, 0.0
    %1316 = vst.msk [vmem:[#allocation2 + $0x2a8] sm:$0xff] %vm562, 0.0
    %1317 = vst.msk [vmem:[#allocation2 + $0x2b0] sm:$0x3] %vm1232, 0.0
    %1318 = vst.msk [vmem:[#allocation2 + $0x2b8] sm:$0xff] %vm562, 0.0
    %1319 = vst.msk [vmem:[#allocation2 + $0x2c0] sm:$0xff] %vm562, 0.0
    %1320 = vst.msk [vmem:[#allocation2 + $0x2c8] sm:$0x3] %vm1232, 0.0
    %1321 = vst.msk [vmem:[#allocation2 + $0x2d0] sm:$0xff] %vm562, 0.0
    %1322 = vst.msk [vmem:[#allocation2 + $0x2d8] sm:$0xff] %vm562, 0.0
    %1323 = vst.msk [vmem:[#allocation2 + $0x2e0] sm:$0x3] %vm1232, 0.0
    %1324 = vst.msk [vmem:[#allocation2 + $0x2e8] sm:$0xff] %vm562, 0.0
    %1325 = vst.msk [vmem:[#allocation2 + $0x2f0] sm:$0xff] %vm562, 0.0
    %1326 = vst.msk [vmem:[#allocation2 + $0x2f8] sm:$0x3] %vm1232, 0.0
    %1327 = vst.msk [vmem:[#allocation2 + $0x300] sm:$0xff] %vm562, 0.0
    %1328 = vst.msk [vmem:[#allocation2 + $0x308] sm:$0xff] %vm562, 0.0
    %1329 = vst.msk [vmem:[#allocation2 + $0x310] sm:$0x3] %vm1232, 0.0
    %1330 = vst.msk [vmem:[#allocation2 + $0x318] sm:$0xff] %vm562, 0.0
    %1331 = vst.msk [vmem:[#allocation2 + $0x320] sm:$0xff] %vm562, 0.0
    %1332 = vst.msk [vmem:[#allocation2 + $0x328] sm:$0x3] %vm1232, 0.0
    %1333 = vst.msk [vmem:[#allocation2 + $0x330] sm:$0xff] %vm562, 0.0
    %1334 = vst.msk [vmem:[#allocation2 + $0x338] sm:$0xff] %vm562, 0.0
    %1335 = vst.msk [vmem:[#allocation2 + $0x340] sm:$0x3] %vm1232, 0.0
    %1336 = vst.msk [vmem:[#allocation2 + $0x348] sm:$0xff] %vm562, 0.0
    %1337 = vst.msk [vmem:[#allocation2 + $0x350] sm:$0xff] %vm562, 0.0
    %1338 = vst.msk [vmem:[#allocation2 + $0x358] sm:$0x3] %vm1232, 0.0
    %s1339 = scalar_lea.vmem [#allocation2], 24
    %1340 = vst.msk [vmem:[%s1339 + $0x1] sm:$0xff] %vm562, %v1166
    %1341 = vst.msk [vmem:[%s1339 + $0x9] sm:$0xff] %vm562, %v1167
    %1342 = vst.msk [vmem:[%s1339 + $0x19] sm:$0xff] %vm562, %v1168
    %1343 = vst.msk [vmem:[%s1339 + $0x21] sm:$0xff] %vm562, %v1169
    %1344 = vst.msk [vmem:[%s1339 + $0x31] sm:$0xff] %vm562, %v1170
    %1345 = vst.msk [vmem:[%s1339 + $0x39] sm:$0xff] %vm562, %v1171
    %1346 = vst.msk [vmem:[%s1339 + $0x49] sm:$0xff] %vm562, %v1172
    %1347 = vst.msk [vmem:[%s1339 + $0x51] sm:$0xff] %vm562, %v1173
    %1348 = vst.msk [vmem:[%s1339 + $0x61] sm:$0xff] %vm562, %v1174
    %1349 = vst.msk [vmem:[%s1339 + $0x69] sm:$0xff] %vm562, %v1175
    %1350 = vst.msk [vmem:[%s1339 + $0x79] sm:$0xff] %vm562, %v1176
    %1351 = vst.msk [vmem:[%s1339 + $0x81] sm:$0xff] %vm562, %v1177
    %1352 = vst.msk [vmem:[%s1339 + $0x91] sm:$0xff] %vm562, %v1178
    %1353 = vst.msk [vmem:[%s1339 + $0x99] sm:$0xff] %vm562, %v1179
    %1354 = vst.msk [vmem:[%s1339 + $0xa9] sm:$0xff] %vm562, %v1180
    %1355 = vst.msk [vmem:[%s1339 + $0xb1] sm:$0xff] %vm562, %v1181
    %1356 = vst.msk [vmem:[%s1339 + $0xc1] sm:$0xff] %vm562, %v1182
    %1357 = vst.msk [vmem:[%s1339 + $0xc9] sm:$0xff] %vm562, %v1183
    %1358 = vst.msk [vmem:[%s1339 + $0xd9] sm:$0xff] %vm562, %v1184
    %1359 = vst.msk [vmem:[%s1339 + $0xe1] sm:$0xff] %vm562, %v1185
    %1360 = vst.msk [vmem:[%s1339 + $0xf1] sm:$0xff] %vm562, %v1186
    %1361 = vst.msk [vmem:[%s1339 + $0xf9] sm:$0xff] %vm562, %v1187
    %1362 = vst.msk [vmem:[%s1339 + $0x109] sm:$0xff] %vm562, %v1188
    %1363 = vst.msk [vmem:[%s1339 + $0x111] sm:$0xff] %vm562, %v1189
    %1364 = vst.msk [vmem:[%s1339 + $0x121] sm:$0xff] %vm562, %v1190
    %1365 = vst.msk [vmem:[%s1339 + $0x129] sm:$0xff] %vm562, %v1191
    %1366 = vst.msk [vmem:[%s1339 + $0x139] sm:$0xff] %vm562, %v1192
    %1367 = vst.msk [vmem:[%s1339 + $0x141] sm:$0xff] %vm562, %v1193
    %1368 = vst.msk [vmem:[%s1339 + $0x151] sm:$0xff] %vm562, %v1194
    %1369 = vst.msk [vmem:[%s1339 + $0x159] sm:$0xff] %vm562, %v1195
    %1370 = vst.msk [vmem:[%s1339 + $0x169] sm:$0xff] %vm562, %v1196
    %1371 = vst.msk [vmem:[%s1339 + $0x171] sm:$0xff] %vm562, %v1197
    %1372 = vst.msk [vmem:[%s1339 + $0x1b1] sm:$0xff] %vm562, %v1198
    %1373 = vst.msk [vmem:[%s1339 + $0x1b9] sm:$0xff] %vm562, %v1199
    %1374 = vst.msk [vmem:[%s1339 + $0x1c9] sm:$0xff] %vm562, %v1200
    %1375 = vst.msk [vmem:[%s1339 + $0x1d1] sm:$0xff] %vm562, %v1201
    %1376 = vst.msk [vmem:[%s1339 + $0x1e1] sm:$0xff] %vm562, %v1202
    %1377 = vst.msk [vmem:[%s1339 + $0x1e9] sm:$0xff] %vm562, %v1203
    %1378 = vst.msk [vmem:[%s1339 + $0x1f9] sm:$0xff] %vm562, %v1204
    %1379 = vst.msk [vmem:[%s1339 + $0x201] sm:$0xff] %vm562, %v1205
    %1380 = vst.msk [vmem:[%s1339 + $0x211] sm:$0xff] %vm562, %v1206
    %1381 = vst.msk [vmem:[%s1339 + $0x219] sm:$0xff] %vm562, %v1207
    %1382 = vst.msk [vmem:[%s1339 + $0x229] sm:$0xff] %vm562, %v1208
    %1383 = vst.msk [vmem:[%s1339 + $0x231] sm:$0xff] %vm562, %v1209
    %1384 = vst.msk [vmem:[%s1339 + $0x241] sm:$0xff] %vm562, %v1210
    %1385 = vst.msk [vmem:[%s1339 + $0x249] sm:$0xff] %vm562, %v1211
    %1386 = vst.msk [vmem:[%s1339 + $0x259] sm:$0xff] %vm562, %v1212
    %1387 = vst.msk [vmem:[%s1339 + $0x261] sm:$0xff] %vm562, %v1213
    %1388 = vst.msk [vmem:[%s1339 + $0x271] sm:$0xff] %vm562, %v1214
    %1389 = vst.msk [vmem:[%s1339 + $0x279] sm:$0xff] %vm562, %v1215
    %1390 = vst.msk [vmem:[%s1339 + $0x289] sm:$0xff] %vm562, %v1216
    %1391 = vst.msk [vmem:[%s1339 + $0x291] sm:$0xff] %vm562, %v1217
    %1392 = vst.msk [vmem:[%s1339 + $0x2a1] sm:$0xff] %vm562, %v1218
    %1393 = vst.msk [vmem:[%s1339 + $0x2a9] sm:$0xff] %vm562, %v1219
    %1394 = vst.msk [vmem:[%s1339 + $0x2b9] sm:$0xff] %vm562, %v1220
    %1395 = vst.msk [vmem:[%s1339 + $0x2c1] sm:$0xff] %vm562, %v1221
    %1396 = vst.msk [vmem:[%s1339 + $0x2d1] sm:$0xff] %vm562, %v1222
    %1397 = vst.msk [vmem:[%s1339 + $0x2d9] sm:$0xff] %vm562, %v1223
    %1398 = vst.msk [vmem:[%s1339 + $0x2e9] sm:$0xff] %vm562, %v1224
    %1399 = vst.msk [vmem:[%s1339 + $0x2f1] sm:$0xff] %vm562, %v1225
    %1400 = vst.msk [vmem:[%s1339 + $0x301] sm:$0xff] %vm562, %v1226
    %1401 = vst.msk [vmem:[%s1339 + $0x309] sm:$0xff] %vm562, %v1227
    %1402 = vst.msk [vmem:[%s1339 + $0x319] sm:$0xff] %vm562, %v1228
    %1403 = vst.msk [vmem:[%s1339 + $0x321] sm:$0xff] %vm562, %v1229
    %v1404 = vld [vmem:[#allocation2] sm:$0xff]
    %v1405 = vld [vmem:[#allocation2 + $0x8] sm:$0xff]
    %v1406 = vld [vmem:[#allocation2 + $0x18] sm:$0xff]
    %v1407 = vld [vmem:[#allocation2 + $0x20] sm:$0xff]
    %v1408 = vld [vmem:[#allocation2 + $0x30] sm:$0xff]
    %v1409 = vld [vmem:[#allocation2 + $0x38] sm:$0xff]
    %v1410 = vld [vmem:[#allocation2 + $0x48] sm:$0xff]
    %v1411 = vld [vmem:[#allocation2 + $0x50] sm:$0xff]
    %v1412 = vld [vmem:[#allocation2 + $0x60] sm:$0xff]
    %v1413 = vld [vmem:[#allocation2 + $0x68] sm:$0xff]
    %v1414 = vld [vmem:[#allocation2 + $0x78] sm:$0xff]
    %v1415 = vld [vmem:[#allocation2 + $0x80] sm:$0xff]
    %v1416 = vld [vmem:[#allocation2 + $0x90] sm:$0xff]
    %v1417 = vld [vmem:[#allocation2 + $0x98] sm:$0xff]
    %v1418 = vld [vmem:[#allocation2 + $0xa8] sm:$0xff]
    %v1419 = vld [vmem:[#allocation2 + $0xb0] sm:$0xff]
    %v1420 = vld [vmem:[#allocation2 + $0xc0] sm:$0xff]
    %v1421 = vld [vmem:[#allocation2 + $0xc8] sm:$0xff]
    %v1422 = vld [vmem:[#allocation2 + $0xd8] sm:$0xff]
    %v1423 = vld [vmem:[#allocation2 + $0xe0] sm:$0xff]
    %v1424 = vld [vmem:[#allocation2 + $0xf0] sm:$0xff]
    %v1425 = vld [vmem:[#allocation2 + $0xf8] sm:$0xff]
    %v1426 = vld [vmem:[#allocation2 + $0x108] sm:$0xff]
    %v1427 = vld [vmem:[#allocation2 + $0x110] sm:$0xff]
    %v1428 = vld [vmem:[#allocation2 + $0x120] sm:$0xff]
    %v1429 = vld [vmem:[#allocation2 + $0x128] sm:$0xff]
    %v1430 = vld [vmem:[#allocation2 + $0x138] sm:$0xff]
    %v1431 = vld [vmem:[#allocation2 + $0x140] sm:$0xff]
    %v1432 = vld [vmem:[#allocation2 + $0x150] sm:$0xff]
    %v1433 = vld [vmem:[#allocation2 + $0x158] sm:$0xff]
    %v1434 = vld [vmem:[#allocation2 + $0x168] sm:$0xff]
    %v1435 = vld [vmem:[#allocation2 + $0x170] sm:$0xff]
    %v1436 = vld [vmem:[#allocation2 + $0x1b0] sm:$0xff]
    %v1437 = vld [vmem:[#allocation2 + $0x1b8] sm:$0xff]
    %v1438 = vld [vmem:[#allocation2 + $0x1c8] sm:$0xff]
    %v1439 = vld [vmem:[#allocation2 + $0x1d0] sm:$0xff]
    %v1440 = vld [vmem:[#allocation2 + $0x1e0] sm:$0xff]
    %v1441 = vld [vmem:[#allocation2 + $0x1e8] sm:$0xff]
    %v1442 = vld [vmem:[#allocation2 + $0x1f8] sm:$0xff]
    %v1443 = vld [vmem:[#allocation2 + $0x200] sm:$0xff]
    %v1444 = vld [vmem:[#allocation2 + $0x210] sm:$0xff]
    %v1445 = vld [vmem:[#allocation2 + $0x218] sm:$0xff]
    %v1446 = vld [vmem:[#allocation2 + $0x228] sm:$0xff]
    %v1447 = vld [vmem:[#allocation2 + $0x230] sm:$0xff]
    %v1448 = vld [vmem:[#allocation2 + $0x240] sm:$0xff]
    %v1449 = vld [vmem:[#allocation2 + $0x248] sm:$0xff]
    %v1450 = vld [vmem:[#allocation2 + $0x258] sm:$0xff]
    %v1451 = vld [vmem:[#allocation2 + $0x260] sm:$0xff]
    %v1452 = vld [vmem:[#allocation2 + $0x270] sm:$0xff]
    %v1453 = vld [vmem:[#allocation2 + $0x278] sm:$0xff]
    %v1454 = vld [vmem:[#allocation2 + $0x288] sm:$0xff]
    %v1455 = vld [vmem:[#allocation2 + $0x290] sm:$0xff]
    %v1456 = vld [vmem:[#allocation2 + $0x2a0] sm:$0xff]
    %v1457 = vld [vmem:[#allocation2 + $0x2a8] sm:$0xff]
    %v1458 = vld [vmem:[#allocation2 + $0x2b8] sm:$0xff]
    %v1459 = vld [vmem:[#allocation2 + $0x2c0] sm:$0xff]
    %v1460 = vld [vmem:[#allocation2 + $0x2d0] sm:$0xff]
    %v1461 = vld [vmem:[#allocation2 + $0x2d8] sm:$0xff]
    %v1462 = vld [vmem:[#allocation2 + $0x2e8] sm:$0xff]
    %v1463 = vld [vmem:[#allocation2 + $0x2f0] sm:$0xff]
    %v1464 = vld [vmem:[#allocation2 + $0x300] sm:$0xff]
    %v1465 = vld [vmem:[#allocation2 + $0x308] sm:$0xff]
    %v1466 = vld [vmem:[#allocation2 + $0x318] sm:$0xff]
    %v1467 = vld [vmem:[#allocation2 + $0x320] sm:$0xff]
    %v1468 = vpack.c.bf16 %v1405, %v1404
    %v1469 = vpack.c.bf16 %v1407, %v1406
    %v1470 = vpack.c.bf16 %v1409, %v1408
    %v1471 = vpack.c.bf16 %v1411, %v1410
    %v1472 = vpack.c.bf16 %v1413, %v1412
    %v1473 = vpack.c.bf16 %v1415, %v1414
    %v1474 = vpack.c.bf16 %v1417, %v1416
    %v1475 = vpack.c.bf16 %v1419, %v1418
    %v1476 = vpack.c.bf16 %v1421, %v1420
    %v1477 = vpack.c.bf16 %v1423, %v1422
    %v1478 = vpack.c.bf16 %v1425, %v1424
    %v1479 = vpack.c.bf16 %v1427, %v1426
    %v1480 = vpack.c.bf16 %v1429, %v1428
    %v1481 = vpack.c.bf16 %v1431, %v1430
    %v1482 = vpack.c.bf16 %v1433, %v1432
    %v1483 = vpack.c.bf16 %v1435, %v1434
    %v1484 = vpack.c.bf16 %v1437, %v1436
    %v1485 = vpack.c.bf16 %v1439, %v1438
    %v1486 = vpack.c.bf16 %v1441, %v1440
    %v1487 = vpack.c.bf16 %v1443, %v1442
    %v1488 = vpack.c.bf16 %v1445, %v1444
    %v1489 = vpack.c.bf16 %v1447, %v1446
    %v1490 = vpack.c.bf16 %v1449, %v1448
    %v1491 = vpack.c.bf16 %v1451, %v1450
    %v1492 = vpack.c.bf16 %v1453, %v1452
    %v1493 = vpack.c.bf16 %v1455, %v1454
    %v1494 = vpack.c.bf16 %v1457, %v1456
    %v1495 = vpack.c.bf16 %v1459, %v1458
    %v1496 = vpack.c.bf16 %v1461, %v1460
    %v1497 = vpack.c.bf16 %v1463, %v1462
    %v1498 = vpack.c.bf16 %v1465, %v1464
    %v1499 = vpack.c.bf16 %v1467, %v1466
    %v1500 = vld [vmem:[%s2] sm:$0xf]
    %v1501 = vld [vmem:[%s2 + $0x4] sm:$0xf]
    %v1502 = vld [vmem:[%s2 + $0x8] sm:$0xf]
    %v1503 = vld [vmem:[%s2 + $0xc] sm:$0xf]
    %v1504 = vld [vmem:[#allocation2 + $0x1] sm:$0xff]
    %v1505 = vld [vmem:[#allocation2 + $0x9] sm:$0xff]
    %v1506 = vld [vmem:[#allocation2 + $0x19] sm:$0xff]
    %v1507 = vld [vmem:[#allocation2 + $0x21] sm:$0xff]
    %v1508 = vld [vmem:[#allocation2 + $0x31] sm:$0xff]
    %v1509 = vld [vmem:[#allocation2 + $0x39] sm:$0xff]
    %v1510 = vld [vmem:[#allocation2 + $0x49] sm:$0xff]
    %v1511 = vld [vmem:[#allocation2 + $0x51] sm:$0xff]
    %v1512 = vld [vmem:[#allocation2 + $0x61] sm:$0xff]
    %v1513 = vld [vmem:[#allocation2 + $0x69] sm:$0xff]
    %v1514 = vld [vmem:[#allocation2 + $0x79] sm:$0xff]
    %v1515 = vld [vmem:[#allocation2 + $0x81] sm:$0xff]
    %v1516 = vld [vmem:[#allocation2 + $0x91] sm:$0xff]
    %v1517 = vld [vmem:[#allocation2 + $0x99] sm:$0xff]
    %v1518 = vld [vmem:[#allocation2 + $0xa9] sm:$0xff]
    %v1519 = vld [vmem:[#allocation2 + $0xb1] sm:$0xff]
    %v1520 = vld [vmem:[#allocation2 + $0xc1] sm:$0xff]
    %v1521 = vld [vmem:[#allocation2 + $0xc9] sm:$0xff]
    %v1522 = vld [vmem:[#allocation2 + $0xd9] sm:$0xff]
    %v1523 = vld [vmem:[#allocation2 + $0xe1] sm:$0xff]
    %v1524 = vld [vmem:[#allocation2 + $0xf1] sm:$0xff]
    %v1525 = vld [vmem:[#allocation2 + $0xf9] sm:$0xff]
    %v1526 = vld [vmem:[#allocation2 + $0x109] sm:$0xff]
    %v1527 = vld [vmem:[#allocation2 + $0x111] sm:$0xff]
    %v1528 = vld [vmem:[#allocation2 + $0x121] sm:$0xff]
    %v1529 = vld [vmem:[#allocation2 + $0x129] sm:$0xff]
    %v1530 = vld [vmem:[#allocation2 + $0x139] sm:$0xff]
    %v1531 = vld [vmem:[#allocation2 + $0x141] sm:$0xff]
    %v1532 = vld [vmem:[#allocation2 + $0x151] sm:$0xff]
    %v1533 = vld [vmem:[#allocation2 + $0x159] sm:$0xff]
    %v1534 = vld [vmem:[#allocation2 + $0x169] sm:$0xff]
    %v1535 = vld [vmem:[#allocation2 + $0x171] sm:$0xff]
    %v1536 = vld [vmem:[#allocation2 + $0x1b1] sm:$0xff]
    %v1537 = vld [vmem:[#allocation2 + $0x1b9] sm:$0xff]
    %v1538 = vld [vmem:[#allocation2 + $0x1c9] sm:$0xff]
    %v1539 = vld [vmem:[#allocation2 + $0x1d1] sm:$0xff]
    %v1540 = vld [vmem:[#allocation2 + $0x1e1] sm:$0xff]
    %v1541 = vld [vmem:[#allocation2 + $0x1e9] sm:$0xff]
    %v1542 = vld [vmem:[#allocation2 + $0x1f9] sm:$0xff]
    %v1543 = vld [vmem:[#allocation2 + $0x201] sm:$0xff]
    %v1544 = vld [vmem:[#allocation2 + $0x211] sm:$0xff]
    %v1545 = vld [vmem:[#allocation2 + $0x219] sm:$0xff]
    %v1546 = vld [vmem:[#allocation2 + $0x229] sm:$0xff]
    %v1547 = vld [vmem:[#allocation2 + $0x231] sm:$0xff]
    %v1548 = vld [vmem:[#allocation2 + $0x241] sm:$0xff]
    %v1549 = vld [vmem:[#allocation2 + $0x249] sm:$0xff]
    %v1550 = vld [vmem:[#allocation2 + $0x259] sm:$0xff]
    %v1551 = vld [vmem:[#allocation2 + $0x261] sm:$0xff]
    %v1552 = vld [vmem:[#allocation2 + $0x271] sm:$0xff]
    %v1553 = vld [vmem:[#allocation2 + $0x279] sm:$0xff]
    %v1554 = vld [vmem:[#allocation2 + $0x289] sm:$0xff]
    %v1555 = vld [vmem:[#allocation2 + $0x291] sm:$0xff]
    %v1556 = vld [vmem:[#allocation2 + $0x2a1] sm:$0xff]
    %v1557 = vld [vmem:[#allocation2 + $0x2a9] sm:$0xff]
    %v1558 = vld [vmem:[#allocation2 + $0x2b9] sm:$0xff]
    %v1559 = vld [vmem:[#allocation2 + $0x2c1] sm:$0xff]
    %v1560 = vld [vmem:[#allocation2 + $0x2d1] sm:$0xff]
    %v1561 = vld [vmem:[#allocation2 + $0x2d9] sm:$0xff]
    %v1562 = vld [vmem:[#allocation2 + $0x2e9] sm:$0xff]
    %v1563 = vld [vmem:[#allocation2 + $0x2f1] sm:$0xff]
    %v1564 = vld [vmem:[#allocation2 + $0x301] sm:$0xff]
    %v1565 = vld [vmem:[#allocation2 + $0x309] sm:$0xff]
    %v1566 = vld [vmem:[#allocation2 + $0x319] sm:$0xff]
    %v1567 = vld [vmem:[#allocation2 + $0x321] sm:$0xff]
    %v1568 = vpack.c.bf16 %v1505, %v1504
    %v1569 = vpack.c.bf16 %v1507, %v1506
    %v1570 = vpack.c.bf16 %v1509, %v1508
    %v1571 = vpack.c.bf16 %v1511, %v1510
    %v1572 = vpack.c.bf16 %v1513, %v1512
    %v1573 = vpack.c.bf16 %v1515, %v1514
    %v1574 = vpack.c.bf16 %v1517, %v1516
    %v1575 = vpack.c.bf16 %v1519, %v1518
    %v1576 = vpack.c.bf16 %v1521, %v1520
    %v1577 = vpack.c.bf16 %v1523, %v1522
    %v1578 = vpack.c.bf16 %v1525, %v1524
    %v1579 = vpack.c.bf16 %v1527, %v1526
    %v1580 = vpack.c.bf16 %v1529, %v1528
    %v1581 = vpack.c.bf16 %v1531, %v1530
    %v1582 = vpack.c.bf16 %v1533, %v1532
    %v1583 = vpack.c.bf16 %v1535, %v1534
    %v1584 = vpack.c.bf16 %v1537, %v1536
    %v1585 = vpack.c.bf16 %v1539, %v1538
    %v1586 = vpack.c.bf16 %v1541, %v1540
    %v1587 = vpack.c.bf16 %v1543, %v1542
    %v1588 = vpack.c.bf16 %v1545, %v1544
    %v1589 = vpack.c.bf16 %v1547, %v1546
    %v1590 = vpack.c.bf16 %v1549, %v1548
    %v1591 = vpack.c.bf16 %v1551, %v1550
    %v1592 = vpack.c.bf16 %v1553, %v1552
    %v1593 = vpack.c.bf16 %v1555, %v1554
    %v1594 = vpack.c.bf16 %v1557, %v1556
    %v1595 = vpack.c.bf16 %v1559, %v1558
    %v1596 = vpack.c.bf16 %v1561, %v1560
    %v1597 = vpack.c.bf16 %v1563, %v1562
    %v1598 = vpack.c.bf16 %v1565, %v1564
    %v1599 = vpack.c.bf16 %v1567, %v1566
    %s1600 = scalar_lea.vmem %s2, 16
    %v1601 = vld [vmem:[%s1600] sm:$0xf]
    %v1602 = vld [vmem:[%s1600 + $0x4] sm:$0xf]
    %v1603 = vld [vmem:[%s1600 + $0x8] sm:$0xf]
    %v1604 = vld [vmem:[%s1600 + $0xc] sm:$0xf]
    %v1609 = vunpack.c.l.b16 %v1601
    %v1610 = vunpack.c.l.b16 %v1602
    %v1611 = vunpack.c.l.b16 %v1603
    %v1612 = vunpack.c.l.b16 %v1604
    %v1613 = vpack.c.b16 %v1610, %v1609
    %v1614 = vpack.c.b16 %v1612, %v1611
    %v1618 = vsel %vm562, %v1568, 0
    %v1621 = vsel %vm562, %v1569, 0
    %v1624 = vsel %vm562, %v1570, 0
    %v1627 = vsel %vm562, %v1571, 0
    %v1630 = vsel %vm562, %v1572, 0
    %v1633 = vsel %vm562, %v1573, 0
    %v1636 = vsel %vm562, %v1574, 0
    %v1639 = vsel %vm562, %v1575, 0
    %v1642 = vsel %vm562, %v1576, 0
    %v1645 = vsel %vm562, %v1577, 0
    %v1648 = vsel %vm562, %v1578, 0
    %v1651 = vsel %vm562, %v1579, 0
    %v1654 = vsel %vm562, %v1580, 0
    %v1657 = vsel %vm562, %v1581, 0
    %v1660 = vsel %vm562, %v1582, 0
    %v1663 = vsel %vm562, %v1583, 0
    %v1666 = vsel %vm562, %v1584, 0
    %v1669 = vsel %vm562, %v1585, 0
    %v1672 = vsel %vm562, %v1586, 0
    %v1675 = vsel %vm562, %v1587, 0
    %v1678 = vsel %vm562, %v1588, 0
    %v1681 = vsel %vm562, %v1589, 0
    %v1684 = vsel %vm562, %v1590, 0
    %v1687 = vsel %vm562, %v1591, 0
    %v1690 = vsel %vm562, %v1592, 0
    %v1693 = vsel %vm562, %v1593, 0
    %v1696 = vsel %vm562, %v1594, 0
    %v1699 = vsel %vm562, %v1595, 0
    %v1702 = vsel %vm562, %v1596, 0
    %v1705 = vsel %vm562, %v1597, 0
    %v1708 = vsel %vm562, %v1598, 0
    %v1711 = vsel %vm562, %v1599, 0
    %1713 = vmatprep.subr.bf16.mxu0 0
    %1714 = vmatpush1.bf16.msra.mxu0 %v1613
    %1715 = vmatprep.subr.bf16.mxu0 0
    %1716 = vmatpush1.bf16.msra.mxu0 %v1614
    %1717 = vmatprep.subr.bf16.mxu0 0
    %1718 = vmatpush1.bf16.msra.mxu0 0
    %1719 = vmatprep.subr.bf16.mxu0 0
    %1720 = vmatpush1.bf16.msra.mxu0 0
    %1721 = vmatprep.subr.bf16.mxu0 0
    %1722 = vmatpush1.bf16.msra.mxu0 0
    %1723 = vmatprep.subr.bf16.mxu0 0
    %1724 = vmatpush1.bf16.msra.mxu0 0
    %1725 = vmatprep.subr.bf16.mxu0 0
    %1726 = vmatpush1.bf16.msra.mxu0 0
    %1727 = vmatprep.subr.bf16.mxu0 0
    %1728 = vmatpush1.bf16.msra.mxu0 0
    %1729 = vmatprep.subr.bf16.mxu0 0
    %1730 = vmatpush1.bf16.msra.mxu0 0
    %1731 = vmatprep.subr.bf16.mxu0 0
    %1732 = vmatpush1.bf16.msra.mxu0 0
    %1733 = vmatprep.subr.bf16.mxu0 0
    %1734 = vmatpush1.bf16.msra.mxu0 0
    %1735 = vmatprep.subr.bf16.mxu0 0
    %1736 = vmatpush1.bf16.msra.mxu0 0
    %1737 = vmatprep.subr.bf16.mxu0 0
    %1738 = vmatpush1.bf16.msra.mxu0 0
    %1739 = vmatprep.subr.bf16.mxu0 0
    %1740 = vmatpush1.bf16.msra.mxu0 0
    %1741 = vmatprep.subr.bf16.mxu0 0
    %1742 = vmatpush1.bf16.msra.mxu0 0
    %1743 = vmatprep.subr.bf16.mxu0 0
    %1744 = vmatpush1.bf16.msra.mxu0 0
    %1745 = vmatprep.mubr.bf16.mxu0 0
    %1746 = vmatmul.mubr.bf16.gmra.mrb[0].mxu0 %v1618
    %v1747 = vpop.f32.mrb[0].mxu0
    %v1748 = vadd.f32 0.0, %v1747
    %v1749 = vpop.f32.mrb[0].mxu0
    %v1750 = vpop.f32.mrb[0].mxu0
    %v1751 = vadd.f32 0.0, %v1750
    %v1752 = vpop.f32.mrb[0].mxu0
    %1753 = vmatprep.mubr.bf16.mxu0 0
    %1754 = vmatmul.mubr.bf16.gmra.mrb[0].mxu0 %v1621
    %v1755 = vpop.f32.mrb[0].mxu0
    %v1756 = vadd.f32 0.0, %v1755
    %v1757 = vpop.f32.mrb[0].mxu0
    %v1758 = vpop.f32.mrb[0].mxu0
    %v1759 = vadd.f32 0.0, %v1758
    %v1760 = vpop.f32.mrb[0].mxu0
    %1761 = vmatprep.mubr.bf16.mxu0 0
    %1762 = vmatmul.mubr.bf16.gmra.mrb[0].mxu0 %v1624
    %v1763 = vpop.f32.mrb[0].mxu0
    %v1764 = vadd.f32 0.0, %v1763
    %v1765 = vpop.f32.mrb[0].mxu0
    %v1766 = vpop.f32.mrb[0].mxu0
    %v1767 = vadd.f32 0.0, %v1766
    %v1768 = vpop.f32.mrb[0].mxu0
    %1769 = vmatprep.mubr.bf16.mxu0 0
    %1770 = vmatmul.mubr.bf16.gmra.mrb[0].mxu0 %v1627
    %v1771 = vpop.f32.mrb[0].mxu0
    %v1772 = vadd.f32 0.0, %v1771
    %v1773 = vpop.f32.mrb[0].mxu0
    %v1774 = vpop.f32.mrb[0].mxu0
    %v1775 = vadd.f32 0.0, %v1774
    %v1776 = vpop.f32.mrb[0].mxu0
    %1777 = vmatprep.mubr.bf16.mxu0 0
    %1778 = vmatmul.mubr.bf16.gmra.mrb[0].mxu0 %v1630
    %v1779 = vpop.f32.mrb[0].mxu0
    %v1780 = vadd.f32 0.0, %v1779
    %v1781 = vpop.f32.mrb[0].mxu0
    %v1782 = vpop.f32.mrb[0].mxu0
    %v1783 = vadd.f32 0.0, %v1782
    %v1784 = vpop.f32.mrb[0].mxu0
    %1785 = vmatprep.mubr.bf16.mxu0 0
    %1786 = vmatmul.mubr.bf16.gmra.mrb[0].mxu0 %v1633
    %v1787 = vpop.f32.mrb[0].mxu0
    %v1788 = vadd.f32 0.0, %v1787
    %v1789 = vpop.f32.mrb[0].mxu0
    %v1790 = vpop.f32.mrb[0].mxu0
    %v1791 = vadd.f32 0.0, %v1790
    %v1792 = vpop.f32.mrb[0].mxu0
    %1793 = vmatprep.mubr.bf16.mxu0 0
    %1794 = vmatmul.mubr.bf16.gmra.mrb[0].mxu0 %v1636
    %v1795 = vpop.f32.mrb[0].mxu0
    %v1796 = vadd.f32 0.0, %v1795
    %v1797 = vpop.f32.mrb[0].mxu0
    %v1798 = vpop.f32.mrb[0].mxu0
    %v1799 = vadd.f32 0.0, %v1798
    %v1800 = vpop.f32.mrb[0].mxu0
    %1801 = vmatprep.mubr.bf16.mxu0 0
    %1802 = vmatmul.mubr.bf16.gmra.mrb[0].mxu0 %v1639
    %v1803 = vpop.f32.mrb[0].mxu0
    %v1804 = vadd.f32 0.0, %v1803
    %v1805 = vpop.f32.mrb[0].mxu0
    %v1806 = vpop.f32.mrb[0].mxu0
    %v1807 = vadd.f32 0.0, %v1806
    %v1808 = vpop.f32.mrb[0].mxu0
    %1809 = vmatprep.mubr.bf16.mxu0 0
    %1810 = vmatmul.mubr.bf16.gmra.mrb[0].mxu0 %v1642
    %v1811 = vpop.f32.mrb[0].mxu0
    %v1812 = vadd.f32 0.0, %v1811
    %v1813 = vpop.f32.mrb[0].mxu0
    %v1814 = vpop.f32.mrb[0].mxu0
    %v1815 = vadd.f32 0.0, %v1814
    %v1816 = vpop.f32.mrb[0].mxu0
    %1817 = vmatprep.mubr.bf16.mxu0 0
    %1818 = vmatmul.mubr.bf16.gmra.mrb[0].mxu0 %v1645
    %v1819 = vpop.f32.mrb[0].mxu0
    %v1820 = vadd.f32 0.0, %v1819
    %v1821 = vpop.f32.mrb[0].mxu0
    %v1822 = vpop.f32.mrb[0].mxu0
    %v1823 = vadd.f32 0.0, %v1822
    %v1824 = vpop.f32.mrb[0].mxu0
    %1825 = vmatprep.mubr.bf16.mxu0 0
    %1826 = vmatmul.mubr.bf16.gmra.mrb[0].mxu0 %v1648
    %v1827 = vpop.f32.mrb[0].mxu0
    %v1828 = vadd.f32 0.0, %v1827
    %v1829 = vpop.f32.mrb[0].mxu0
    %v1830 = vpop.f32.mrb[0].mxu0
    %v1831 = vadd.f32 0.0, %v1830
    %v1832 = vpop.f32.mrb[0].mxu0
    %1833 = vmatprep.mubr.bf16.mxu0 0
    %1834 = vmatmul.mubr.bf16.gmra.mrb[0].mxu0 %v1651
    %v1835 = vpop.f32.mrb[0].mxu0
    %v1836 = vadd.f32 0.0, %v1835
    %v1837 = vpop.f32.mrb[0].mxu0
    %v1838 = vpop.f32.mrb[0].mxu0
    %v1839 = vadd.f32 0.0, %v1838
    %v1840 = vpop.f32.mrb[0].mxu0
    %1841 = vmatprep.mubr.bf16.mxu0 0
    %1842 = vmatmul.mubr.bf16.gmra.mrb[0].mxu0 %v1654
    %v1843 = vpop.f32.mrb[0].mxu0
    %v1844 = vadd.f32 0.0, %v1843
    %v1845 = vpop.f32.mrb[0].mxu0
    %v1846 = vpop.f32.mrb[0].mxu0
    %v1847 = vadd.f32 0.0, %v1846
    %v1848 = vpop.f32.mrb[0].mxu0
    %1849 = vmatprep.mubr.bf16.mxu0 0
    %1850 = vmatmul.mubr.bf16.gmra.mrb[0].mxu0 %v1657
    %v1851 = vpop.f32.mrb[0].mxu0
    %v1852 = vadd.f32 0.0, %v1851
    %v1853 = vpop.f32.mrb[0].mxu0
    %v1854 = vpop.f32.mrb[0].mxu0
    %v1855 = vadd.f32 0.0, %v1854
    %v1856 = vpop.f32.mrb[0].mxu0
    %1857 = vmatprep.mubr.bf16.mxu0 0
    %1858 = vmatmul.mubr.bf16.gmra.mrb[0].mxu0 %v1660
    %v1859 = vpop.f32.mrb[0].mxu0
    %v1860 = vadd.f32 0.0, %v1859
    %v1861 = vpop.f32.mrb[0].mxu0
    %v1862 = vpop.f32.mrb[0].mxu0
    %v1863 = vadd.f32 0.0, %v1862
    %v1864 = vpop.f32.mrb[0].mxu0
    %1865 = vmatprep.mubr.bf16.mxu0 0
    %1866 = vmatmul.mubr.bf16.gmra.mrb[0].mxu0 %v1663
    %v1867 = vpop.f32.mrb[0].mxu0
    %v1868 = vadd.f32 0.0, %v1867
    %v1869 = vpop.f32.mrb[0].mxu0
    %v1870 = vpop.f32.mrb[0].mxu0
    %v1871 = vadd.f32 0.0, %v1870
    %v1872 = vpop.f32.mrb[0].mxu0
    %1873 = vmatprep.mubr.bf16.mxu0 0
    %1874 = vmatmul.mubr.bf16.gmra.mrb[0].mxu0 %v1666
    %v1875 = vpop.f32.mrb[0].mxu0
    %v1876 = vadd.f32 0.0, %v1875
    %v1877 = vpop.f32.mrb[0].mxu0
    %v1878 = vpop.f32.mrb[0].mxu0
    %v1879 = vadd.f32 0.0, %v1878
    %v1880 = vpop.f32.mrb[0].mxu0
    %1881 = vmatprep.mubr.bf16.mxu0 0
    %1882 = vmatmul.mubr.bf16.gmra.mrb[0].mxu0 %v1669
    %v1883 = vpop.f32.mrb[0].mxu0
    %v1884 = vadd.f32 0.0, %v1883
    %v1885 = vpop.f32.mrb[0].mxu0
    %v1886 = vpop.f32.mrb[0].mxu0
    %v1887 = vadd.f32 0.0, %v1886
    %v1888 = vpop.f32.mrb[0].mxu0
    %1889 = vmatprep.mubr.bf16.mxu0 0
    %1890 = vmatmul.mubr.bf16.gmra.mrb[0].mxu0 %v1672
    %v1891 = vpop.f32.mrb[0].mxu0
    %v1892 = vadd.f32 0.0, %v1891
    %v1893 = vpop.f32.mrb[0].mxu0
    %v1894 = vpop.f32.mrb[0].mxu0
    %v1895 = vadd.f32 0.0, %v1894
    %v1896 = vpop.f32.mrb[0].mxu0
    %1897 = vmatprep.mubr.bf16.mxu0 0
    %1898 = vmatmul.mubr.bf16.gmra.mrb[0].mxu0 %v1675
    %v1899 = vpop.f32.mrb[0].mxu0
    %v1900 = vadd.f32 0.0, %v1899
    %v1901 = vpop.f32.mrb[0].mxu0
    %v1902 = vpop.f32.mrb[0].mxu0
    %v1903 = vadd.f32 0.0, %v1902
    %v1904 = vpop.f32.mrb[0].mxu0
    %1905 = vmatprep.mubr.bf16.mxu0 0
    %1906 = vmatmul.mubr.bf16.gmra.mrb[0].mxu0 %v1678
    %v1907 = vpop.f32.mrb[0].mxu0
    %v1908 = vadd.f32 0.0, %v1907
    %v1909 = vpop.f32.mrb[0].mxu0
    %v1910 = vpop.f32.mrb[0].mxu0
    %v1911 = vadd.f32 0.0, %v1910
    %v1912 = vpop.f32.mrb[0].mxu0
    %1913 = vmatprep.mubr.bf16.mxu0 0
    %1914 = vmatmul.mubr.bf16.gmra.mrb[0].mxu0 %v1681
    %v1915 = vpop.f32.mrb[0].mxu0
    %v1916 = vadd.f32 0.0, %v1915
    %v1917 = vpop.f32.mrb[0].mxu0
    %v1918 = vpop.f32.mrb[0].mxu0
    %v1919 = vadd.f32 0.0, %v1918
    %v1920 = vpop.f32.mrb[0].mxu0
    %1921 = vmatprep.mubr.bf16.mxu0 0
    %1922 = vmatmul.mubr.bf16.gmra.mrb[0].mxu0 %v1684
    %v1923 = vpop.f32.mrb[0].mxu0
    %v1924 = vadd.f32 0.0, %v1923
    %v1925 = vpop.f32.mrb[0].mxu0
    %v1926 = vpop.f32.mrb[0].mxu0
    %v1927 = vadd.f32 0.0, %v1926
    %v1928 = vpop.f32.mrb[0].mxu0
    %1929 = vmatprep.mubr.bf16.mxu0 0
    %1930 = vmatmul.mubr.bf16.gmra.mrb[0].mxu0 %v1687
    %v1931 = vpop.f32.mrb[0].mxu0
    %v1932 = vadd.f32 0.0, %v1931
    %v1933 = vpop.f32.mrb[0].mxu0
    %v1934 = vpop.f32.mrb[0].mxu0
    %v1935 = vadd.f32 0.0, %v1934
    %v1936 = vpop.f32.mrb[0].mxu0
    %1937 = vmatprep.mubr.bf16.mxu0 0
    %1938 = vmatmul.mubr.bf16.gmra.mrb[0].mxu0 %v1690
    %v1939 = vpop.f32.mrb[0].mxu0
    %v1940 = vadd.f32 0.0, %v1939
    %v1941 = vpop.f32.mrb[0].mxu0
    %v1942 = vpop.f32.mrb[0].mxu0
    %v1943 = vadd.f32 0.0, %v1942
    %v1944 = vpop.f32.mrb[0].mxu0
    %1945 = vmatprep.mubr.bf16.mxu0 0
    %1946 = vmatmul.mubr.bf16.gmra.mrb[0].mxu0 %v1693
    %v1947 = vpop.f32.mrb[0].mxu0
    %v1948 = vadd.f32 0.0, %v1947
    %v1949 = vpop.f32.mrb[0].mxu0
    %v1950 = vpop.f32.mrb[0].mxu0
    %v1951 = vadd.f32 0.0, %v1950
    %v1952 = vpop.f32.mrb[0].mxu0
    %1953 = vmatprep.mubr.bf16.mxu0 0
    %1954 = vmatmul.mubr.bf16.gmra.mrb[0].mxu0 %v1696
    %v1955 = vpop.f32.mrb[0].mxu0
    %v1956 = vadd.f32 0.0, %v1955
    %v1957 = vpop.f32.mrb[0].mxu0
    %v1958 = vpop.f32.mrb[0].mxu0
    %v1959 = vadd.f32 0.0, %v1958
    %v1960 = vpop.f32.mrb[0].mxu0
    %1961 = vmatprep.mubr.bf16.mxu0 0
    %1962 = vmatmul.mubr.bf16.gmra.mrb[0].mxu0 %v1699
    %v1963 = vpop.f32.mrb[0].mxu0
    %v1964 = vadd.f32 0.0, %v1963
    %v1965 = vpop.f32.mrb[0].mxu0
    %v1966 = vpop.f32.mrb[0].mxu0
    %v1967 = vadd.f32 0.0, %v1966
    %v1968 = vpop.f32.mrb[0].mxu0
    %1969 = vmatprep.mubr.bf16.mxu0 0
    %1970 = vmatmul.mubr.bf16.gmra.mrb[0].mxu0 %v1702
    %v1971 = vpop.f32.mrb[0].mxu0
    %v1972 = vadd.f32 0.0, %v1971
    %v1973 = vpop.f32.mrb[0].mxu0
    %v1974 = vpop.f32.mrb[0].mxu0
    %v1975 = vadd.f32 0.0, %v1974
    %v1976 = vpop.f32.mrb[0].mxu0
    %1977 = vmatprep.mubr.bf16.mxu0 0
    %1978 = vmatmul.mubr.bf16.gmra.mrb[0].mxu0 %v1705
    %v1979 = vpop.f32.mrb[0].mxu0
    %v1980 = vadd.f32 0.0, %v1979
    %v1981 = vpop.f32.mrb[0].mxu0
    %v1982 = vpop.f32.mrb[0].mxu0
    %v1983 = vadd.f32 0.0, %v1982
    %v1984 = vpop.f32.mrb[0].mxu0
    %1985 = vmatprep.mubr.bf16.mxu0 0
    %1986 = vmatmul.mubr.bf16.gmra.mrb[0].mxu0 %v1708
    %v1987 = vpop.f32.mrb[0].mxu0
    %v1988 = vadd.f32 0.0, %v1987
    %v1989 = vpop.f32.mrb[0].mxu0
    %v1990 = vpop.f32.mrb[0].mxu0
    %v1991 = vadd.f32 0.0, %v1990
    %v1992 = vpop.f32.mrb[0].mxu0
    %1993 = vmatprep.mubr.bf16.mxu0 0
    %1994 = vmatmul.mubr.bf16.gmra.mrb[0].mxu0 %v1711
    %v1995 = vpop.f32.mrb[0].mxu0
    %v1996 = vadd.f32 0.0, %v1995
    %v1997 = vpop.f32.mrb[0].mxu0
    %v1998 = vpop.f32.mrb[0].mxu0
    %v1999 = vadd.f32 0.0, %v1998
    %v2000 = vpop.f32.mrb[0].mxu0
    %2001 = vdwg.mxu0
    %v2006 = vunpack.c.l.b16 %v1500
    %v2007 = vunpack.c.l.b16 %v1501
    %v2008 = vunpack.c.l.b16 %v1502
    %v2009 = vunpack.c.l.b16 %v1503
    %v2010 = vpack.c.b16 %v2007, %v2006
    %v2011 = vpack.c.b16 %v2009, %v2008
    %v2015 = vsel %vm562, %v1468, 0
    %v2018 = vsel %vm562, %v1469, 0
    %v2021 = vsel %vm562, %v1470, 0
    %v2024 = vsel %vm562, %v1471, 0
    %v2027 = vsel %vm562, %v1472, 0
    %v2030 = vsel %vm562, %v1473, 0
    %v2033 = vsel %vm562, %v1474, 0
    %v2036 = vsel %vm562, %v1475, 0
    %v2039 = vsel %vm562, %v1476, 0
    %v2042 = vsel %vm562, %v1477, 0
    %v2045 = vsel %vm562, %v1478, 0
    %v2048 = vsel %vm562, %v1479, 0
    %v2051 = vsel %vm562, %v1480, 0
    %v2054 = vsel %vm562, %v1481, 0
    %v2057 = vsel %vm562, %v1482, 0
    %v2060 = vsel %vm562, %v1483, 0
    %v2063 = vsel %vm562, %v1484, 0
    %v2066 = vsel %vm562, %v1485, 0
    %v2069 = vsel %vm562, %v1486, 0
    %v2072 = vsel %vm562, %v1487, 0
    %v2075 = vsel %vm562, %v1488, 0
    %v2078 = vsel %vm562, %v1489, 0
    %v2081 = vsel %vm562, %v1490, 0
    %v2084 = vsel %vm562, %v1491, 0
    %v2087 = vsel %vm562, %v1492, 0
    %v2090 = vsel %vm562, %v1493, 0
    %v2093 = vsel %vm562, %v1494, 0
    %v2096 = vsel %vm562, %v1495, 0
    %v2099 = vsel %vm562, %v1496, 0
    %v2102 = vsel %vm562, %v1497, 0
    %v2105 = vsel %vm562, %v1498, 0
    %v2108 = vsel %vm562, %v1499, 0
    %2110 = vmatprep.subr.bf16.mxu0 0
    %2111 = vmatpush1.bf16.msra.mxu0 %v2010
    %2112 = vmatprep.subr.bf16.mxu0 0
    %2113 = vmatpush1.bf16.msra.mxu0 %v2011
    %2114 = vmatprep.subr.bf16.mxu0 0
    %2115 = vmatpush1.bf16.msra.mxu0 0
    %2116 = vmatprep.subr.bf16.mxu0 0
    %2117 = vmatpush1.bf16.msra.mxu0 0
    %2118 = vmatprep.subr.bf16.mxu0 0
    %2119 = vmatpush1.bf16.msra.mxu0 0
    %2120 = vmatprep.subr.bf16.mxu0 0
    %2121 = vmatpush1.bf16.msra.mxu0 0
    %2122 = vmatprep.subr.bf16.mxu0 0
    %2123 = vmatpush1.bf16.msra.mxu0 0
    %2124 = vmatprep.subr.bf16.mxu0 0
    %2125 = vmatpush1.bf16.msra.mxu0 0
    %2126 = vmatprep.subr.bf16.mxu0 0
    %2127 = vmatpush1.bf16.msra.mxu0 0
    %2128 = vmatprep.subr.bf16.mxu0 0
    %2129 = vmatpush1.bf16.msra.mxu0 0
    %2130 = vmatprep.subr.bf16.mxu0 0
    %2131 = vmatpush1.bf16.msra.mxu0 0
    %2132 = vmatprep.subr.bf16.mxu0 0
    %2133 = vmatpush1.bf16.msra.mxu0 0
    %2134 = vmatprep.subr.bf16.mxu0 0
    %2135 = vmatpush1.bf16.msra.mxu0 0
    %2136 = vmatprep.subr.bf16.mxu0 0
    %2137 = vmatpush1.bf16.msra.mxu0 0
    %2138 = vmatprep.subr.bf16.mxu0 0
    %2139 = vmatpush1.bf16.msra.mxu0 0
    %2140 = vmatprep.subr.bf16.mxu0 0
    %2141 = vmatpush1.bf16.msra.mxu0 0
    %2142 = vmatprep.mubr.bf16.mxu0 0
    %2143 = vmatmul.mubr.bf16.gmra.mrb[0].mxu0 %v2015
    %v2144 = vpop.f32.mrb[0].mxu0
    %v2145 = vadd.f32 %v1748, %v2144
    %v2146 = vpop.f32.mrb[0].mxu0
    %v2147 = vpop.f32.mrb[0].mxu0
    %v2148 = vadd.f32 %v1751, %v2147
    %v2149 = vpop.f32.mrb[0].mxu0
    %2150 = vmatprep.mubr.bf16.mxu0 0
    %2151 = vmatmul.mubr.bf16.gmra.mrb[0].mxu0 %v2018
    %v2152 = vpop.f32.mrb[0].mxu0
    %v2153 = vadd.f32 %v1756, %v2152
    %v2154 = vpop.f32.mrb[0].mxu0
    %v2155 = vpop.f32.mrb[0].mxu0
    %v2156 = vadd.f32 %v1759, %v2155
    %v2157 = vpop.f32.mrb[0].mxu0
    %2158 = vmatprep.mubr.bf16.mxu0 0
    %2159 = vmatmul.mubr.bf16.gmra.mrb[0].mxu0 %v2021
    %v2160 = vpop.f32.mrb[0].mxu0
    %v2161 = vadd.f32 %v1764, %v2160
    %v2162 = vpop.f32.mrb[0].mxu0
    %v2163 = vpop.f32.mrb[0].mxu0
    %v2164 = vadd.f32 %v1767, %v2163
    %v2165 = vpop.f32.mrb[0].mxu0
    %2166 = vmatprep.mubr.bf16.mxu0 0
    %2167 = vmatmul.mubr.bf16.gmra.mrb[0].mxu0 %v2024
    %v2168 = vpop.f32.mrb[0].mxu0
    %v2169 = vadd.f32 %v1772, %v2168
    %v2170 = vpop.f32.mrb[0].mxu0
    %v2171 = vpop.f32.mrb[0].mxu0
    %v2172 = vadd.f32 %v1775, %v2171
    %v2173 = vpop.f32.mrb[0].mxu0
    %2174 = vmatprep.mubr.bf16.mxu0 0
    %2175 = vmatmul.mubr.bf16.gmra.mrb[0].mxu0 %v2027
    %v2176 = vpop.f32.mrb[0].mxu0
    %v2177 = vadd.f32 %v1780, %v2176
    %v2178 = vpop.f32.mrb[0].mxu0
    %v2179 = vpop.f32.mrb[0].mxu0
    %v2180 = vadd.f32 %v1783, %v2179
    %v2181 = vpop.f32.mrb[0].mxu0
    %2182 = vmatprep.mubr.bf16.mxu0 0
    %2183 = vmatmul.mubr.bf16.gmra.mrb[0].mxu0 %v2030
    %v2184 = vpop.f32.mrb[0].mxu0
    %v2185 = vadd.f32 %v1788, %v2184
    %v2186 = vpop.f32.mrb[0].mxu0
    %v2187 = vpop.f32.mrb[0].mxu0
    %v2188 = vadd.f32 %v1791, %v2187
    %v2189 = vpop.f32.mrb[0].mxu0
    %2190 = vmatprep.mubr.bf16.mxu0 0
    %2191 = vmatmul.mubr.bf16.gmra.mrb[0].mxu0 %v2033
    %v2192 = vpop.f32.mrb[0].mxu0
    %v2193 = vadd.f32 %v1796, %v2192
    %v2194 = vpop.f32.mrb[0].mxu0
    %v2195 = vpop.f32.mrb[0].mxu0
    %v2196 = vadd.f32 %v1799, %v2195
    %v2197 = vpop.f32.mrb[0].mxu0
    %2198 = vmatprep.mubr.bf16.mxu0 0
    %2199 = vmatmul.mubr.bf16.gmra.mrb[0].mxu0 %v2036
    %v2200 = vpop.f32.mrb[0].mxu0
    %v2201 = vadd.f32 %v1804, %v2200
    %v2202 = vpop.f32.mrb[0].mxu0
    %v2203 = vpop.f32.mrb[0].mxu0
    %v2204 = vadd.f32 %v1807, %v2203
    %v2205 = vpop.f32.mrb[0].mxu0
    %2206 = vmatprep.mubr.bf16.mxu0 0
    %2207 = vmatmul.mubr.bf16.gmra.mrb[0].mxu0 %v2039
    %v2208 = vpop.f32.mrb[0].mxu0
    %v2209 = vadd.f32 %v1812, %v2208
    %v2210 = vpop.f32.mrb[0].mxu0
    %v2211 = vpop.f32.mrb[0].mxu0
    %v2212 = vadd.f32 %v1815, %v2211
    %v2213 = vpop.f32.mrb[0].mxu0
    %2214 = vmatprep.mubr.bf16.mxu0 0
    %2215 = vmatmul.mubr.bf16.gmra.mrb[0].mxu0 %v2042
    %v2216 = vpop.f32.mrb[0].mxu0
    %v2217 = vadd.f32 %v1820, %v2216
    %v2218 = vpop.f32.mrb[0].mxu0
    %v2219 = vpop.f32.mrb[0].mxu0
    %v2220 = vadd.f32 %v1823, %v2219
    %v2221 = vpop.f32.mrb[0].mxu0
    %2222 = vmatprep.mubr.bf16.mxu0 0
    %2223 = vmatmul.mubr.bf16.gmra.mrb[0].mxu0 %v2045
    %v2224 = vpop.f32.mrb[0].mxu0
    %v2225 = vadd.f32 %v1828, %v2224
    %v2226 = vpop.f32.mrb[0].mxu0
    %v2227 = vpop.f32.mrb[0].mxu0
    %v2228 = vadd.f32 %v1831, %v2227
    %v2229 = vpop.f32.mrb[0].mxu0
    %2230 = vmatprep.mubr.bf16.mxu0 0
    %2231 = vmatmul.mubr.bf16.gmra.mrb[0].mxu0 %v2048
    %v2232 = vpop.f32.mrb[0].mxu0
    %v2233 = vadd.f32 %v1836, %v2232
    %v2234 = vpop.f32.mrb[0].mxu0
    %v2235 = vpop.f32.mrb[0].mxu0
    %v2236 = vadd.f32 %v1839, %v2235
    %v2237 = vpop.f32.mrb[0].mxu0
    %2238 = vmatprep.mubr.bf16.mxu0 0
    %2239 = vmatmul.mubr.bf16.gmra.mrb[0].mxu0 %v2051
    %v2240 = vpop.f32.mrb[0].mxu0
    %v2241 = vadd.f32 %v1844, %v2240
    %v2242 = vpop.f32.mrb[0].mxu0
    %v2243 = vpop.f32.mrb[0].mxu0
    %v2244 = vadd.f32 %v1847, %v2243
    %v2245 = vpop.f32.mrb[0].mxu0
    %2246 = vmatprep.mubr.bf16.mxu0 0
    %2247 = vmatmul.mubr.bf16.gmra.mrb[0].mxu0 %v2054
    %v2248 = vpop.f32.mrb[0].mxu0
    %v2249 = vadd.f32 %v1852, %v2248
    %v2250 = vpop.f32.mrb[0].mxu0
    %v2251 = vpop.f32.mrb[0].mxu0
    %v2252 = vadd.f32 %v1855, %v2251
    %v2253 = vpop.f32.mrb[0].mxu0
    %2254 = vmatprep.mubr.bf16.mxu0 0
    %2255 = vmatmul.mubr.bf16.gmra.mrb[0].mxu0 %v2057
    %v2256 = vpop.f32.mrb[0].mxu0
    %v2257 = vadd.f32 %v1860, %v2256
    %v2258 = vpop.f32.mrb[0].mxu0
    %v2259 = vpop.f32.mrb[0].mxu0
    %v2260 = vadd.f32 %v1863, %v2259
    %v2261 = vpop.f32.mrb[0].mxu0
    %2262 = vmatprep.mubr.bf16.mxu0 0
    %2263 = vmatmul.mubr.bf16.gmra.mrb[0].mxu0 %v2060
    %v2264 = vpop.f32.mrb[0].mxu0
    %v2265 = vadd.f32 %v1868, %v2264
    %v2266 = vpop.f32.mrb[0].mxu0
    %v2267 = vpop.f32.mrb[0].mxu0
    %v2268 = vadd.f32 %v1871, %v2267
    %v2269 = vpop.f32.mrb[0].mxu0
    %2270 = vmatprep.mubr.bf16.mxu0 0
    %2271 = vmatmul.mubr.bf16.gmra.mrb[0].mxu0 %v2063
    %v2272 = vpop.f32.mrb[0].mxu0
    %v2273 = vadd.f32 %v1876, %v2272
    %v2274 = vpop.f32.mrb[0].mxu0
    %v2275 = vpop.f32.mrb[0].mxu0
    %v2276 = vadd.f32 %v1879, %v2275
    %v2277 = vpop.f32.mrb[0].mxu0
    %2278 = vmatprep.mubr.bf16.mxu0 0
    %2279 = vmatmul.mubr.bf16.gmra.mrb[0].mxu0 %v2066
    %v2280 = vpop.f32.mrb[0].mxu0
    %v2281 = vadd.f32 %v1884, %v2280
    %v2282 = vpop.f32.mrb[0].mxu0
    %v2283 = vpop.f32.mrb[0].mxu0
    %v2284 = vadd.f32 %v1887, %v2283
    %v2285 = vpop.f32.mrb[0].mxu0
    %2286 = vmatprep.mubr.bf16.mxu0 0
    %2287 = vmatmul.mubr.bf16.gmra.mrb[0].mxu0 %v2069
    %v2288 = vpop.f32.mrb[0].mxu0
    %v2289 = vadd.f32 %v1892, %v2288
    %v2290 = vpop.f32.mrb[0].mxu0
    %v2291 = vpop.f32.mrb[0].mxu0
    %v2292 = vadd.f32 %v1895, %v2291
    %v2293 = vpop.f32.mrb[0].mxu0
    %2294 = vmatprep.mubr.bf16.mxu0 0
    %2295 = vmatmul.mubr.bf16.gmra.mrb[0].mxu0 %v2072
    %v2296 = vpop.f32.mrb[0].mxu0
    %v2297 = vadd.f32 %v1900, %v2296
    %v2298 = vpop.f32.mrb[0].mxu0
    %v2299 = vpop.f32.mrb[0].mxu0
    %v2300 = vadd.f32 %v1903, %v2299
    %v2301 = vpop.f32.mrb[0].mxu0
    %2302 = vmatprep.mubr.bf16.mxu0 0
    %2303 = vmatmul.mubr.bf16.gmra.mrb[0].mxu0 %v2075
    %v2304 = vpop.f32.mrb[0].mxu0
    %v2305 = vadd.f32 %v1908, %v2304
    %v2306 = vpop.f32.mrb[0].mxu0
    %v2307 = vpop.f32.mrb[0].mxu0
    %v2308 = vadd.f32 %v1911, %v2307
    %v2309 = vpop.f32.mrb[0].mxu0
    %2310 = vmatprep.mubr.bf16.mxu0 0
    %2311 = vmatmul.mubr.bf16.gmra.mrb[0].mxu0 %v2078
    %v2312 = vpop.f32.mrb[0].mxu0
    %v2313 = vadd.f32 %v1916, %v2312
    %v2314 = vpop.f32.mrb[0].mxu0
    %v2315 = vpop.f32.mrb[0].mxu0
    %v2316 = vadd.f32 %v1919, %v2315
    %v2317 = vpop.f32.mrb[0].mxu0
    %2318 = vmatprep.mubr.bf16.mxu0 0
    %2319 = vmatmul.mubr.bf16.gmra.mrb[0].mxu0 %v2081
    %v2320 = vpop.f32.mrb[0].mxu0
    %v2321 = vadd.f32 %v1924, %v2320
    %v2322 = vpop.f32.mrb[0].mxu0
    %v2323 = vpop.f32.mrb[0].mxu0
    %v2324 = vadd.f32 %v1927, %v2323
    %v2325 = vpop.f32.mrb[0].mxu0
    %2326 = vmatprep.mubr.bf16.mxu0 0
    %2327 = vmatmul.mubr.bf16.gmra.mrb[0].mxu0 %v2084
    %v2328 = vpop.f32.mrb[0].mxu0
    %v2329 = vadd.f32 %v1932, %v2328
    %v2330 = vpop.f32.mrb[0].mxu0
    %v2331 = vpop.f32.mrb[0].mxu0
    %v2332 = vadd.f32 %v1935, %v2331
    %v2333 = vpop.f32.mrb[0].mxu0
    %2334 = vmatprep.mubr.bf16.mxu0 0
    %2335 = vmatmul.mubr.bf16.gmra.mrb[0].mxu0 %v2087
    %v2336 = vpop.f32.mrb[0].mxu0
    %v2337 = vadd.f32 %v1940, %v2336
    %v2338 = vpop.f32.mrb[0].mxu0
    %v2339 = vpop.f32.mrb[0].mxu0
    %v2340 = vadd.f32 %v1943, %v2339
    %v2341 = vpop.f32.mrb[0].mxu0
    %2342 = vmatprep.mubr.bf16.mxu0 0
    %2343 = vmatmul.mubr.bf16.gmra.mrb[0].mxu0 %v2090
    %v2344 = vpop.f32.mrb[0].mxu0
    %v2345 = vadd.f32 %v1948, %v2344
    %v2346 = vpop.f32.mrb[0].mxu0
    %v2347 = vpop.f32.mrb[0].mxu0
    %v2348 = vadd.f32 %v1951, %v2347
    %v2349 = vpop.f32.mrb[0].mxu0
    %2350 = vmatprep.mubr.bf16.mxu0 0
    %2351 = vmatmul.mubr.bf16.gmra.mrb[0].mxu0 %v2093
    %v2352 = vpop.f32.mrb[0].mxu0
    %v2353 = vadd.f32 %v1956, %v2352
    %v2354 = vpop.f32.mrb[0].mxu0
    %v2355 = vpop.f32.mrb[0].mxu0
    %v2356 = vadd.f32 %v1959, %v2355
    %v2357 = vpop.f32.mrb[0].mxu0
    %2358 = vmatprep.mubr.bf16.mxu0 0
    %2359 = vmatmul.mubr.bf16.gmra.mrb[0].mxu0 %v2096
    %v2360 = vpop.f32.mrb[0].mxu0
    %v2361 = vadd.f32 %v1964, %v2360
    %v2362 = vpop.f32.mrb[0].mxu0
    %v2363 = vpop.f32.mrb[0].mxu0
    %v2364 = vadd.f32 %v1967, %v2363
    %v2365 = vpop.f32.mrb[0].mxu0
    %2366 = vmatprep.mubr.bf16.mxu0 0
    %2367 = vmatmul.mubr.bf16.gmra.mrb[0].mxu0 %v2099
    %v2368 = vpop.f32.mrb[0].mxu0
    %v2369 = vadd.f32 %v1972, %v2368
    %v2370 = vpop.f32.mrb[0].mxu0
    %v2371 = vpop.f32.mrb[0].mxu0
    %v2372 = vadd.f32 %v1975, %v2371
    %v2373 = vpop.f32.mrb[0].mxu0
    %2374 = vmatprep.mubr.bf16.mxu0 0
    %2375 = vmatmul.mubr.bf16.gmra.mrb[0].mxu0 %v2102
    %v2376 = vpop.f32.mrb[0].mxu0
    %v2377 = vadd.f32 %v1980, %v2376
    %v2378 = vpop.f32.mrb[0].mxu0
    %v2379 = vpop.f32.mrb[0].mxu0
    %v2380 = vadd.f32 %v1983, %v2379
    %v2381 = vpop.f32.mrb[0].mxu0
    %2382 = vmatprep.mubr.bf16.mxu0 0
    %2383 = vmatmul.mubr.bf16.gmra.mrb[0].mxu0 %v2105
    %v2384 = vpop.f32.mrb[0].mxu0
    %v2385 = vadd.f32 %v1988, %v2384
    %v2386 = vpop.f32.mrb[0].mxu0
    %v2387 = vpop.f32.mrb[0].mxu0
    %v2388 = vadd.f32 %v1991, %v2387
    %v2389 = vpop.f32.mrb[0].mxu0
    %2390 = vmatprep.mubr.bf16.mxu0 0
    %2391 = vmatmul.mubr.bf16.gmra.mrb[0].mxu0 %v2108
    %v2392 = vpop.f32.mrb[0].mxu0
    %v2393 = vadd.f32 %v1996, %v2392
    %v2394 = vpop.f32.mrb[0].mxu0
    %v2395 = vpop.f32.mrb[0].mxu0
    %v2396 = vadd.f32 %v1999, %v2395
    %v2397 = vpop.f32.mrb[0].mxu0
    %2398 = vdwg.mxu0
    %v2399 = vld [vmem:[#allocation2 + $0x2] sm:$0xff]
    %v2400 = vld [vmem:[#allocation2 + $0xa] sm:$0xff]
    %v2401 = vld [vmem:[#allocation2 + $0x1a] sm:$0xff]
    %v2402 = vld [vmem:[#allocation2 + $0x22] sm:$0xff]
    %v2403 = vld [vmem:[#allocation2 + $0x32] sm:$0xff]
    %v2404 = vld [vmem:[#allocation2 + $0x3a] sm:$0xff]
    %v2405 = vld [vmem:[#allocation2 + $0x4a] sm:$0xff]
    %v2406 = vld [vmem:[#allocation2 + $0x52] sm:$0xff]
    %v2407 = vld [vmem:[#allocation2 + $0x62] sm:$0xff]
    %v2408 = vld [vmem:[#allocation2 + $0x6a] sm:$0xff]
    %v2409 = vld [vmem:[#allocation2 + $0x7a] sm:$0xff]
    %v2410 = vld [vmem:[#allocation2 + $0x82] sm:$0xff]
    %v2411 = vld [vmem:[#allocation2 + $0x92] sm:$0xff]
    %v2412 = vld [vmem:[#allocation2 + $0x9a] sm:$0xff]
    %v2413 = vld [vmem:[#allocation2 + $0xaa] sm:$0xff]
    %v2414 = vld [vmem:[#allocation2 + $0xb2] sm:$0xff]
    %v2415 = vld [vmem:[#allocation2 + $0xc2] sm:$0xff]
    %v2416 = vld [vmem:[#allocation2 + $0xca] sm:$0xff]
    %v2417 = vld [vmem:[#allocation2 + $0xda] sm:$0xff]
    %v2418 = vld [vmem:[#allocation2 + $0xe2] sm:$0xff]
    %v2419 = vld [vmem:[#allocation2 + $0xf2] sm:$0xff]
    %v2420 = vld [vmem:[#allocation2 + $0xfa] sm:$0xff]
    %v2421 = vld [vmem:[#allocation2 + $0x10a] sm:$0xff]
    %v2422 = vld [vmem:[#allocation2 + $0x112] sm:$0xff]
    %v2423 = vld [vmem:[#allocation2 + $0x122] sm:$0xff]
    %v2424 = vld [vmem:[#allocation2 + $0x12a] sm:$0xff]
    %v2425 = vld [vmem:[#allocation2 + $0x13a] sm:$0xff]
    %v2426 = vld [vmem:[#allocation2 + $0x142] sm:$0xff]
    %v2427 = vld [vmem:[#allocation2 + $0x152] sm:$0xff]
    %v2428 = vld [vmem:[#allocation2 + $0x15a] sm:$0xff]
    %v2429 = vld [vmem:[#allocation2 + $0x16a] sm:$0xff]
    %v2430 = vld [vmem:[#allocation2 + $0x172] sm:$0xff]
    %v2431 = vld [vmem:[#allocation2 + $0x1b2] sm:$0xff]
    %v2432 = vld [vmem:[#allocation2 + $0x1ba] sm:$0xff]
    %v2433 = vld [vmem:[#allocation2 + $0x1ca] sm:$0xff]
    %v2434 = vld [vmem:[#allocation2 + $0x1d2] sm:$0xff]
    %v2435 = vld [vmem:[#allocation2 + $0x1e2] sm:$0xff]
    %v2436 = vld [vmem:[#allocation2 + $0x1ea] sm:$0xff]
    %v2437 = vld [vmem:[#allocation2 + $0x1fa] sm:$0xff]
    %v2438 = vld [vmem:[#allocation2 + $0x202] sm:$0xff]
    %v2439 = vld [vmem:[#allocation2 + $0x212] sm:$0xff]
    %v2440 = vld [vmem:[#allocation2 + $0x21a] sm:$0xff]
    %v2441 = vld [vmem:[#allocation2 + $0x22a] sm:$0xff]
    %v2442 = vld [vmem:[#allocation2 + $0x232] sm:$0xff]
    %v2443 = vld [vmem:[#allocation2 + $0x242] sm:$0xff]
    %v2444 = vld [vmem:[#allocation2 + $0x24a] sm:$0xff]
    %v2445 = vld [vmem:[#allocation2 + $0x25a] sm:$0xff]
    %v2446 = vld [vmem:[#allocation2 + $0x262] sm:$0xff]
    %v2447 = vld [vmem:[#allocation2 + $0x272] sm:$0xff]
    %v2448 = vld [vmem:[#allocation2 + $0x27a] sm:$0xff]
    %v2449 = vld [vmem:[#allocation2 + $0x28a] sm:$0xff]
    %v2450 = vld [vmem:[#allocation2 + $0x292] sm:$0xff]
    %v2451 = vld [vmem:[#allocation2 + $0x2a2] sm:$0xff]
    %v2452 = vld [vmem:[#allocation2 + $0x2aa] sm:$0xff]
    %v2453 = vld [vmem:[#allocation2 + $0x2ba] sm:$0xff]
    %v2454 = vld [vmem:[#allocation2 + $0x2c2] sm:$0xff]
    %v2455 = vld [vmem:[#allocation2 + $0x2d2] sm:$0xff]
    %v2456 = vld [vmem:[#allocation2 + $0x2da] sm:$0xff]
    %v2457 = vld [vmem:[#allocation2 + $0x2ea] sm:$0xff]
    %v2458 = vld [vmem:[#allocation2 + $0x2f2] sm:$0xff]
    %v2459 = vld [vmem:[#allocation2 + $0x302] sm:$0xff]
    %v2460 = vld [vmem:[#allocation2 + $0x30a] sm:$0xff]
    %v2461 = vld [vmem:[#allocation2 + $0x31a] sm:$0xff]
    %v2462 = vld [vmem:[#allocation2 + $0x322] sm:$0xff]
    %v2463 = vpack.c.bf16 %v2400, %v2399
    %v2464 = vpack.c.bf16 %v2402, %v2401
    %v2465 = vpack.c.bf16 %v2404, %v2403
    %v2466 = vpack.c.bf16 %v2406, %v2405
    %v2467 = vpack.c.bf16 %v2408, %v2407
    %v2468 = vpack.c.bf16 %v2410, %v2409
    %v2469 = vpack.c.bf16 %v2412, %v2411
    %v2470 = vpack.c.bf16 %v2414, %v2413
    %v2471 = vpack.c.bf16 %v2416, %v2415
    %v2472 = vpack.c.bf16 %v2418, %v2417
    %v2473 = vpack.c.bf16 %v2420, %v2419
    %v2474 = vpack.c.bf16 %v2422, %v2421
    %v2475 = vpack.c.bf16 %v2424, %v2423
    %v2476 = vpack.c.bf16 %v2426, %v2425
    %v2477 = vpack.c.bf16 %v2428, %v2427
    %v2478 = vpack.c.bf16 %v2430, %v2429
    %v2479 = vpack.c.bf16 %v2432, %v2431
    %v2480 = vpack.c.bf16 %v2434, %v2433
    %v2481 = vpack.c.bf16 %v2436, %v2435
    %v2482 = vpack.c.bf16 %v2438, %v2437
    %v2483 = vpack.c.bf16 %v2440, %v2439
    %v2484 = vpack.c.bf16 %v2442, %v2441
    %v2485 = vpack.c.bf16 %v2444, %v2443
    %v2486 = vpack.c.bf16 %v2446, %v2445
    %v2487 = vpack.c.bf16 %v2448, %v2447
    %v2488 = vpack.c.bf16 %v2450, %v2449
    %v2489 = vpack.c.bf16 %v2452, %v2451
    %v2490 = vpack.c.bf16 %v2454, %v2453
    %v2491 = vpack.c.bf16 %v2456, %v2455
    %v2492 = vpack.c.bf16 %v2458, %v2457
    %v2493 = vpack.c.bf16 %v2460, %v2459
    %v2494 = vpack.c.bf16 %v2462, %v2461
    %s2495 = scalar_lea.vmem %s2, 32
    %v2496 = vld [vmem:[%s2495] sm:$0xf]
    %v2497 = vld [vmem:[%s2495 + $0x4] sm:$0xf]
    %v2498 = vld [vmem:[%s2495 + $0x8] sm:$0xf]
    %v2499 = vld [vmem:[%s2495 + $0xc] sm:$0xf]
    %v2504 = vunpack.c.l.b16 %v2496
    %v2505 = vunpack.c.l.b16 %v2497
    %v2506 = vunpack.c.l.b16 %v2498
    %v2507 = vunpack.c.l.b16 %v2499
    %v2508 = vpack.c.b16 %v2505, %v2504
    %v2509 = vpack.c.b16 %v2507, %v2506
    %v2513 = vsel %vm562, %v2463, 0
    %v2516 = vsel %vm562, %v2464, 0
    %v2519 = vsel %vm562, %v2465, 0
    %v2522 = vsel %vm562, %v2466, 0
    %v2525 = vsel %vm562, %v2467, 0
    %v2528 = vsel %vm562, %v2468, 0
    %v2531 = vsel %vm562, %v2469, 0
    %v2534 = vsel %vm562, %v2470, 0
    %v2537 = vsel %vm562, %v2471, 0
    %v2540 = vsel %vm562, %v2472, 0
    %v2543 = vsel %vm562, %v2473, 0
    %v2546 = vsel %vm562, %v2474, 0
    %v2549 = vsel %vm562, %v2475, 0
    %v2552 = vsel %vm562, %v2476, 0
    %v2555 = vsel %vm562, %v2477, 0
    %v2558 = vsel %vm562, %v2478, 0
    %v2561 = vsel %vm562, %v2479, 0
    %v2564 = vsel %vm562, %v2480, 0
    %v2567 = vsel %vm562, %v2481, 0
    %v2570 = vsel %vm562, %v2482, 0
    %v2573 = vsel %vm562, %v2483, 0
    %v2576 = vsel %vm562, %v2484, 0
    %v2579 = vsel %vm562, %v2485, 0
    %v2582 = vsel %vm562, %v2486, 0
    %v2585 = vsel %vm562, %v2487, 0
    %v2588 = vsel %vm562, %v2488, 0
    %v2591 = vsel %vm562, %v2489, 0
    %v2594 = vsel %vm562, %v2490, 0
    %v2597 = vsel %vm562, %v2491, 0
    %v2600 = vsel %vm562, %v2492, 0
    %v2603 = vsel %vm562, %v2493, 0
    %v2606 = vsel %vm562, %v2494, 0
    %2608 = vmatprep.subr.bf16.mxu0 0
    %2609 = vmatpush1.bf16.msra.mxu0 %v2508
    %2610 = vmatprep.subr.bf16.mxu0 0
    %2611 = vmatpush1.bf16.msra.mxu0 %v2509
    %2612 = vmatprep.subr.bf16.mxu0 0
    %2613 = vmatpush1.bf16.msra.mxu0 0
    %2614 = vmatprep.subr.bf16.mxu0 0
    %2615 = vmatpush1.bf16.msra.mxu0 0
    %2616 = vmatprep.subr.bf16.mxu0 0
    %2617 = vmatpush1.bf16.msra.mxu0 0
    %2618 = vmatprep.subr.bf16.mxu0 0
    %2619 = vmatpush1.bf16.msra.mxu0 0
    %2620 = vmatprep.subr.bf16.mxu0 0
    %2621 = vmatpush1.bf16.msra.mxu0 0
    %2622 = vmatprep.subr.bf16.mxu0 0
    %2623 = vmatpush1.bf16.msra.mxu0 0
    %2624 = vmatprep.subr.bf16.mxu0 0
    %2625 = vmatpush1.bf16.msra.mxu0 0
    %2626 = vmatprep.subr.bf16.mxu0 0
    %2627 = vmatpush1.bf16.msra.mxu0 0
    %2628 = vmatprep.subr.bf16.mxu0 0
    %2629 = vmatpush1.bf16.msra.mxu0 0
    %2630 = vmatprep.subr.bf16.mxu0 0
    %2631 = vmatpush1.bf16.msra.mxu0 0
    %2632 = vmatprep.subr.bf16.mxu0 0
    %2633 = vmatpush1.bf16.msra.mxu0 0
    %2634 = vmatprep.subr.bf16.mxu0 0
    %2635 = vmatpush1.bf16.msra.mxu0 0
    %2636 = vmatprep.subr.bf16.mxu0 0
    %2637 = vmatpush1.bf16.msra.mxu0 0
    %2638 = vmatprep.subr.bf16.mxu0 0
    %2639 = vmatpush1.bf16.msra.mxu0 0
    %2640 = vmatprep.mubr.bf16.mxu0 0
    %2641 = vmatmul.mubr.bf16.gmra.mrb[0].mxu0 %v2513
    %v2642 = vpop.f32.mrb[0].mxu0
    %v2643 = vadd.f32 0.0, %v2642
    %v2644 = vpop.f32.mrb[0].mxu0
    %v2645 = vpop.f32.mrb[0].mxu0
    %v2646 = vadd.f32 0.0, %v2645
    %v2647 = vpop.f32.mrb[0].mxu0
    %2648 = vmatprep.mubr.bf16.mxu0 0
    %2649 = vmatmul.mubr.bf16.gmra.mrb[0].mxu0 %v2516
    %v2650 = vpop.f32.mrb[0].mxu0
    %v2651 = vadd.f32 0.0, %v2650
    %v2652 = vpop.f32.mrb[0].mxu0
    %v2653 = vpop.f32.mrb[0].mxu0
    %v2654 = vadd.f32 0.0, %v2653
    %v2655 = vpop.f32.mrb[0].mxu0
    %2656 = vmatprep.mubr.bf16.mxu0 0
    %2657 = vmatmul.mubr.bf16.gmra.mrb[0].mxu0 %v2519
    %v2658 = vpop.f32.mrb[0].mxu0
    %v2659 = vadd.f32 0.0, %v2658
    %v2660 = vpop.f32.mrb[0].mxu0
    %v2661 = vpop.f32.mrb[0].mxu0
    %v2662 = vadd.f32 0.0, %v2661
    %v2663 = vpop.f32.mrb[0].mxu0
    %2664 = vmatprep.mubr.bf16.mxu0 0
    %2665 = vmatmul.mubr.bf16.gmra.mrb[0].mxu0 %v2522
    %v2666 = vpop.f32.mrb[0].mxu0
    %v2667 = vadd.f32 0.0, %v2666
    %v2668 = vpop.f32.mrb[0].mxu0
    %v2669 = vpop.f32.mrb[0].mxu0
    %v2670 = vadd.f32 0.0, %v2669
    %v2671 = vpop.f32.mrb[0].mxu0
    %2672 = vmatprep.mubr.bf16.mxu0 0
    %2673 = vmatmul.mubr.bf16.gmra.mrb[0].mxu0 %v2525
    %v2674 = vpop.f32.mrb[0].mxu0
    %v2675 = vadd.f32 0.0, %v2674
    %v2676 = vpop.f32.mrb[0].mxu0
    %v2677 = vpop.f32.mrb[0].mxu0
    %v2678 = vadd.f32 0.0, %v2677
    %v2679 = vpop.f32.mrb[0].mxu0
    %2680 = vmatprep.mubr.bf16.mxu0 0
    %2681 = vmatmul.mubr.bf16.gmra.mrb[0].mxu0 %v2528
    %v2682 = vpop.f32.mrb[0].mxu0
    %v2683 = vadd.f32 0.0, %v2682
    %v2684 = vpop.f32.mrb[0].mxu0
    %v2685 = vpop.f32.mrb[0].mxu0
    %v2686 = vadd.f32 0.0, %v2685
    %v2687 = vpop.f32.mrb[0].mxu0
    %2688 = vmatprep.mubr.bf16.mxu0 0
    %2689 = vmatmul.mubr.bf16.gmra.mrb[0].mxu0 %v2531
    %v2690 = vpop.f32.mrb[0].mxu0
    %v2691 = vadd.f32 0.0, %v2690
    %v2692 = vpop.f32.mrb[0].mxu0
    %v2693 = vpop.f32.mrb[0].mxu0
    %v2694 = vadd.f32 0.0, %v2693
    %v2695 = vpop.f32.mrb[0].mxu0
    %2696 = vmatprep.mubr.bf16.mxu0 0
    %2697 = vmatmul.mubr.bf16.gmra.mrb[0].mxu0 %v2534
    %v2698 = vpop.f32.mrb[0].mxu0
    %v2699 = vadd.f32 0.0, %v2698
    %v2700 = vpop.f32.mrb[0].mxu0
    %v2701 = vpop.f32.mrb[0].mxu0
    %v2702 = vadd.f32 0.0, %v2701
    %v2703 = vpop.f32.mrb[0].mxu0
    %2704 = vmatprep.mubr.bf16.mxu0 0
    %2705 = vmatmul.mubr.bf16.gmra.mrb[0].mxu0 %v2537
    %v2706 = vpop.f32.mrb[0].mxu0
    %v2707 = vadd.f32 0.0, %v2706
    %v2708 = vpop.f32.mrb[0].mxu0
    %v2709 = vpop.f32.mrb[0].mxu0
    %v2710 = vadd.f32 0.0, %v2709
    %v2711 = vpop.f32.mrb[0].mxu0
    %2712 = vmatprep.mubr.bf16.mxu0 0
    %2713 = vmatmul.mubr.bf16.gmra.mrb[0].mxu0 %v2540
    %v2714 = vpop.f32.mrb[0].mxu0
    %v2715 = vadd.f32 0.0, %v2714
    %v2716 = vpop.f32.mrb[0].mxu0
    %v2717 = vpop.f32.mrb[0].mxu0
    %v2718 = vadd.f32 0.0, %v2717
    %v2719 = vpop.f32.mrb[0].mxu0
    %2720 = vmatprep.mubr.bf16.mxu0 0
    %2721 = vmatmul.mubr.bf16.gmra.mrb[0].mxu0 %v2543
    %v2722 = vpop.f32.mrb[0].mxu0
    %v2723 = vadd.f32 0.0, %v2722
    %v2724 = vpop.f32.mrb[0].mxu0
    %v2725 = vpop.f32.mrb[0].mxu0
    %v2726 = vadd.f32 0.0, %v2725
    %v2727 = vpop.f32.mrb[0].mxu0
    %2728 = vmatprep.mubr.bf16.mxu0 0
    %2729 = vmatmul.mubr.bf16.gmra.mrb[0].mxu0 %v2546
    %v2730 = vpop.f32.mrb[0].mxu0
    %v2731 = vadd.f32 0.0, %v2730
    %v2732 = vpop.f32.mrb[0].mxu0
    %v2733 = vpop.f32.mrb[0].mxu0
    %v2734 = vadd.f32 0.0, %v2733
    %v2735 = vpop.f32.mrb[0].mxu0
    %2736 = vmatprep.mubr.bf16.mxu0 0
    %2737 = vmatmul.mubr.bf16.gmra.mrb[0].mxu0 %v2549
    %v2738 = vpop.f32.mrb[0].mxu0
    %v2739 = vadd.f32 0.0, %v2738
    %v2740 = vpop.f32.mrb[0].mxu0
    %v2741 = vpop.f32.mrb[0].mxu0
    %v2742 = vadd.f32 0.0, %v2741
    %v2743 = vpop.f32.mrb[0].mxu0
    %2744 = vmatprep.mubr.bf16.mxu0 0
    %2745 = vmatmul.mubr.bf16.gmra.mrb[0].mxu0 %v2552
    %v2746 = vpop.f32.mrb[0].mxu0
    %v2747 = vadd.f32 0.0, %v2746
    %v2748 = vpop.f32.mrb[0].mxu0
    %v2749 = vpop.f32.mrb[0].mxu0
    %v2750 = vadd.f32 0.0, %v2749
    %v2751 = vpop.f32.mrb[0].mxu0
    %2752 = vmatprep.mubr.bf16.mxu0 0
    %2753 = vmatmul.mubr.bf16.gmra.mrb[0].mxu0 %v2555
    %v2754 = vpop.f32.mrb[0].mxu0
    %v2755 = vadd.f32 0.0, %v2754
    %v2756 = vpop.f32.mrb[0].mxu0
    %v2757 = vpop.f32.mrb[0].mxu0
    %v2758 = vadd.f32 0.0, %v2757
    %v2759 = vpop.f32.mrb[0].mxu0
    %2760 = vmatprep.mubr.bf16.mxu0 0
    %2761 = vmatmul.mubr.bf16.gmra.mrb[0].mxu0 %v2558
    %v2762 = vpop.f32.mrb[0].mxu0
    %v2763 = vadd.f32 0.0, %v2762
    %v2764 = vpop.f32.mrb[0].mxu0
    %v2765 = vpop.f32.mrb[0].mxu0
    %v2766 = vadd.f32 0.0, %v2765
    %v2767 = vpop.f32.mrb[0].mxu0
    %2768 = vmatprep.mubr.bf16.mxu0 0
    %2769 = vmatmul.mubr.bf16.gmra.mrb[0].mxu0 %v2561
    %v2770 = vpop.f32.mrb[0].mxu0
    %v2771 = vadd.f32 0.0, %v2770
    %v2772 = vpop.f32.mrb[0].mxu0
    %v2773 = vpop.f32.mrb[0].mxu0
    %v2774 = vadd.f32 0.0, %v2773
    %v2775 = vpop.f32.mrb[0].mxu0
    %2776 = vmatprep.mubr.bf16.mxu0 0
    %2777 = vmatmul.mubr.bf16.gmra.mrb[0].mxu0 %v2564
    %v2778 = vpop.f32.mrb[0].mxu0
    %v2779 = vadd.f32 0.0, %v2778
    %v2780 = vpop.f32.mrb[0].mxu0
    %v2781 = vpop.f32.mrb[0].mxu0
    %v2782 = vadd.f32 0.0, %v2781
    %v2783 = vpop.f32.mrb[0].mxu0
    %2784 = vmatprep.mubr.bf16.mxu0 0
    %2785 = vmatmul.mubr.bf16.gmra.mrb[0].mxu0 %v2567
    %v2786 = vpop.f32.mrb[0].mxu0
    %v2787 = vadd.f32 0.0, %v2786
    %v2788 = vpop.f32.mrb[0].mxu0
    %v2789 = vpop.f32.mrb[0].mxu0
    %v2790 = vadd.f32 0.0, %v2789
    %v2791 = vpop.f32.mrb[0].mxu0
    %2792 = vmatprep.mubr.bf16.mxu0 0
    %2793 = vmatmul.mubr.bf16.gmra.mrb[0].mxu0 %v2570
    %v2794 = vpop.f32.mrb[0].mxu0
    %v2795 = vadd.f32 0.0, %v2794
    %v2796 = vpop.f32.mrb[0].mxu0
    %v2797 = vpop.f32.mrb[0].mxu0
    %v2798 = vadd.f32 0.0, %v2797
    %v2799 = vpop.f32.mrb[0].mxu0
    %2800 = vmatprep.mubr.bf16.mxu0 0
    %2801 = vmatmul.mubr.bf16.gmra.mrb[0].mxu0 %v2573
    %v2802 = vpop.f32.mrb[0].mxu0
    %v2803 = vadd.f32 0.0, %v2802
    %v2804 = vpop.f32.mrb[0].mxu0
    %v2805 = vpop.f32.mrb[0].mxu0
    %v2806 = vadd.f32 0.0, %v2805
    %v2807 = vpop.f32.mrb[0].mxu0
    %2808 = vmatprep.mubr.bf16.mxu0 0
    %2809 = vmatmul.mubr.bf16.gmra.mrb[0].mxu0 %v2576
    %v2810 = vpop.f32.mrb[0].mxu0
    %v2811 = vadd.f32 0.0, %v2810
    %v2812 = vpop.f32.mrb[0].mxu0
    %v2813 = vpop.f32.mrb[0].mxu0
    %v2814 = vadd.f32 0.0, %v2813
    %v2815 = vpop.f32.mrb[0].mxu0
    %2816 = vmatprep.mubr.bf16.mxu0 0
    %2817 = vmatmul.mubr.bf16.gmra.mrb[0].mxu0 %v2579
    %v2818 = vpop.f32.mrb[0].mxu0
    %v2819 = vadd.f32 0.0, %v2818
    %v2820 = vpop.f32.mrb[0].mxu0
    %v2821 = vpop.f32.mrb[0].mxu0
    %v2822 = vadd.f32 0.0, %v2821
    %v2823 = vpop.f32.mrb[0].mxu0
    %2824 = vmatprep.mubr.bf16.mxu0 0
    %2825 = vmatmul.mubr.bf16.gmra.mrb[0].mxu0 %v2582
    %v2826 = vpop.f32.mrb[0].mxu0
    %v2827 = vadd.f32 0.0, %v2826
    %v2828 = vpop.f32.mrb[0].mxu0
    %v2829 = vpop.f32.mrb[0].mxu0
    %v2830 = vadd.f32 0.0, %v2829
    %v2831 = vpop.f32.mrb[0].mxu0
    %2832 = vmatprep.mubr.bf16.mxu0 0
    %2833 = vmatmul.mubr.bf16.gmra.mrb[0].mxu0 %v2585
    %v2834 = vpop.f32.mrb[0].mxu0
    %v2835 = vadd.f32 0.0, %v2834
    %v2836 = vpop.f32.mrb[0].mxu0
    %v2837 = vpop.f32.mrb[0].mxu0
    %v2838 = vadd.f32 0.0, %v2837
    %v2839 = vpop.f32.mrb[0].mxu0
    %2840 = vmatprep.mubr.bf16.mxu0 0
    %2841 = vmatmul.mubr.bf16.gmra.mrb[0].mxu0 %v2588
    %v2842 = vpop.f32.mrb[0].mxu0
    %v2843 = vadd.f32 0.0, %v2842
    %v2844 = vpop.f32.mrb[0].mxu0
    %v2845 = vpop.f32.mrb[0].mxu0
    %v2846 = vadd.f32 0.0, %v2845
    %v2847 = vpop.f32.mrb[0].mxu0
    %2848 = vmatprep.mubr.bf16.mxu0 0
    %2849 = vmatmul.mubr.bf16.gmra.mrb[0].mxu0 %v2591
    %v2850 = vpop.f32.mrb[0].mxu0
    %v2851 = vadd.f32 0.0, %v2850
    %v2852 = vpop.f32.mrb[0].mxu0
    %v2853 = vpop.f32.mrb[0].mxu0
    %v2854 = vadd.f32 0.0, %v2853
    %v2855 = vpop.f32.mrb[0].mxu0
    %2856 = vmatprep.mubr.bf16.mxu0 0
    %2857 = vmatmul.mubr.bf16.gmra.mrb[0].mxu0 %v2594
    %v2858 = vpop.f32.mrb[0].mxu0
    %v2859 = vadd.f32 0.0, %v2858
    %v2860 = vpop.f32.mrb[0].mxu0
    %v2861 = vpop.f32.mrb[0].mxu0
    %v2862 = vadd.f32 0.0, %v2861
    %v2863 = vpop.f32.mrb[0].mxu0
    %2864 = vmatprep.mubr.bf16.mxu0 0
    %2865 = vmatmul.mubr.bf16.gmra.mrb[0].mxu0 %v2597
    %v2866 = vpop.f32.mrb[0].mxu0
    %v2867 = vadd.f32 0.0, %v2866
    %v2868 = vpop.f32.mrb[0].mxu0
    %v2869 = vpop.f32.mrb[0].mxu0
    %v2870 = vadd.f32 0.0, %v2869
    %v2871 = vpop.f32.mrb[0].mxu0
    %2872 = vmatprep.mubr.bf16.mxu0 0
    %2873 = vmatmul.mubr.bf16.gmra.mrb[0].mxu0 %v2600
    %v2874 = vpop.f32.mrb[0].mxu0
    %v2875 = vadd.f32 0.0, %v2874
    %v2876 = vpop.f32.mrb[0].mxu0
    %v2877 = vpop.f32.mrb[0].mxu0
    %v2878 = vadd.f32 0.0, %v2877
    %v2879 = vpop.f32.mrb[0].mxu0
    %2880 = vmatprep.mubr.bf16.mxu0 0
    %2881 = vmatmul.mubr.bf16.gmra.mrb[0].mxu0 %v2603
    %v2882 = vpop.f32.mrb[0].mxu0
    %v2883 = vadd.f32 0.0, %v2882
    %v2884 = vpop.f32.mrb[0].mxu0
    %v2885 = vpop.f32.mrb[0].mxu0
    %v2886 = vadd.f32 0.0, %v2885
    %v2887 = vpop.f32.mrb[0].mxu0
    %2888 = vmatprep.mubr.bf16.mxu0 0
    %2889 = vmatmul.mubr.bf16.gmra.mrb[0].mxu0 %v2606
    %v2890 = vpop.f32.mrb[0].mxu0
    %v2891 = vadd.f32 0.0, %v2890
    %v2892 = vpop.f32.mrb[0].mxu0
    %v2893 = vpop.f32.mrb[0].mxu0
    %v2894 = vadd.f32 0.0, %v2893
    %v2895 = vpop.f32.mrb[0].mxu0
    %2896 = vdwg.mxu0
    %v2897 = vadd.f32 %v2145, %v2643
    %v2898 = vadd.f32 %v2148, %v2646
    %v2899 = vadd.f32 %v2153, %v2651
    %v2900 = vadd.f32 %v2156, %v2654
    %v2901 = vadd.f32 %v2161, %v2659
    %v2902 = vadd.f32 %v2164, %v2662
    %v2903 = vadd.f32 %v2169, %v2667
    %v2904 = vadd.f32 %v2172, %v2670
    %v2905 = vadd.f32 %v2177, %v2675
    %v2906 = vadd.f32 %v2180, %v2678
    %v2907 = vadd.f32 %v2185, %v2683
    %v2908 = vadd.f32 %v2188, %v2686
    %v2909 = vadd.f32 %v2193, %v2691
    %v2910 = vadd.f32 %v2196, %v2694
    %v2911 = vadd.f32 %v2201, %v2699
    %v2912 = vadd.f32 %v2204, %v2702
    %v2913 = vadd.f32 %v2209, %v2707
    %v2914 = vadd.f32 %v2212, %v2710
    %v2915 = vadd.f32 %v2217, %v2715
    %v2916 = vadd.f32 %v2220, %v2718
    %v2917 = vadd.f32 %v2225, %v2723
    %v2918 = vadd.f32 %v2228, %v2726
    %v2919 = vadd.f32 %v2233, %v2731
    %v2920 = vadd.f32 %v2236, %v2734
    %v2921 = vadd.f32 %v2241, %v2739
    %v2922 = vadd.f32 %v2244, %v2742
    %v2923 = vadd.f32 %v2249, %v2747
    %v2924 = vadd.f32 %v2252, %v2750
    %v2925 = vadd.f32 %v2257, %v2755
    %v2926 = vadd.f32 %v2260, %v2758
    %v2927 = vadd.f32 %v2265, %v2763
    %v2928 = vadd.f32 %v2268, %v2766
    %v2929 = vadd.f32 %v2273, %v2771
    %v2930 = vadd.f32 %v2276, %v2774
    %v2931 = vadd.f32 %v2281, %v2779
    %v2932 = vadd.f32 %v2284, %v2782
    %v2933 = vadd.f32 %v2289, %v2787
    %v2934 = vadd.f32 %v2292, %v2790
    %v2935 = vadd.f32 %v2297, %v2795
    %v2936 = vadd.f32 %v2300, %v2798
    %v2937 = vadd.f32 %v2305, %v2803
    %v2938 = vadd.f32 %v2308, %v2806
    %v2939 = vadd.f32 %v2313, %v2811
    %v2940 = vadd.f32 %v2316, %v2814
    %v2941 = vadd.f32 %v2321, %v2819
    %v2942 = vadd.f32 %v2324, %v2822
    %v2943 = vadd.f32 %v2329, %v2827
    %v2944 = vadd.f32 %v2332, %v2830
    %v2945 = vadd.f32 %v2337, %v2835
    %v2946 = vadd.f32 %v2340, %v2838
    %v2947 = vadd.f32 %v2345, %v2843
    %v2948 = vadd.f32 %v2348, %v2846
    %v2949 = vadd.f32 %v2353, %v2851
    %v2950 = vadd.f32 %v2356, %v2854
    %v2951 = vadd.f32 %v2361, %v2859
    %v2952 = vadd.f32 %v2364, %v2862
    %v2953 = vadd.f32 %v2369, %v2867
    %v2954 = vadd.f32 %v2372, %v2870
    %v2955 = vadd.f32 %v2377, %v2875
    %v2956 = vadd.f32 %v2380, %v2878
    %v2957 = vadd.f32 %v2385, %v2883
    %v2958 = vadd.f32 %v2388, %v2886
    %v2959 = vadd.f32 %v2393, %v2891
    %v2960 = vadd.f32 %v2396, %v2894
    %v2961 = vld [vmem:[%s1339] sm:$0xff]
    %v2962 = vld [vmem:[%s1339 + $0x8] sm:$0xff]
    %v2963 = vld [vmem:[%s1339 + $0x18] sm:$0xff]
    %v2964 = vld [vmem:[%s1339 + $0x20] sm:$0xff]
    %v2965 = vld [vmem:[%s1339 + $0x30] sm:$0xff]
    %v2966 = vld [vmem:[%s1339 + $0x38] sm:$0xff]
    %v2967 = vld [vmem:[%s1339 + $0x48] sm:$0xff]
    %v2968 = vld [vmem:[%s1339 + $0x50] sm:$0xff]
    %v2969 = vld [vmem:[%s1339 + $0x60] sm:$0xff]
    %v2970 = vld [vmem:[%s1339 + $0x68] sm:$0xff]
    %v2971 = vld [vmem:[%s1339 + $0x78] sm:$0xff]
    %v2972 = vld [vmem:[%s1339 + $0x80] sm:$0xff]
    %v2973 = vld [vmem:[%s1339 + $0x90] sm:$0xff]
    %v2974 = vld [vmem:[%s1339 + $0x98] sm:$0xff]
    %v2975 = vld [vmem:[%s1339 + $0xa8] sm:$0xff]
    %v2976 = vld [vmem:[%s1339 + $0xb0] sm:$0xff]
    %v2977 = vld [vmem:[%s1339 + $0xc0] sm:$0xff]
    %v2978 = vld [vmem:[%s1339 + $0xc8] sm:$0xff]
    %v2979 = vld [vmem:[%s1339 + $0xd8] sm:$0xff]
    %v2980 = vld [vmem:[%s1339 + $0xe0] sm:$0xff]
    %v2981 = vld [vmem:[%s1339 + $0xf0] sm:$0xff]
    %v2982 = vld [vmem:[%s1339 + $0xf8] sm:$0xff]
    %v2983 = vld [vmem:[%s1339 + $0x108] sm:$0xff]
    %v2984 = vld [vmem:[%s1339 + $0x110] sm:$0xff]
    %v2985 = vld [vmem:[%s1339 + $0x120] sm:$0xff]
    %v2986 = vld [vmem:[%s1339 + $0x128] sm:$0xff]
    %v2987 = vld [vmem:[%s1339 + $0x138] sm:$0xff]
    %v2988 = vld [vmem:[%s1339 + $0x140] sm:$0xff]
    %v2989 = vld [vmem:[%s1339 + $0x150] sm:$0xff]
    %v2990 = vld [vmem:[%s1339 + $0x158] sm:$0xff]
    %v2991 = vld [vmem:[%s1339 + $0x168] sm:$0xff]
    %v2992 = vld [vmem:[%s1339 + $0x170] sm:$0xff]
    %v2993 = vld [vmem:[%s1339 + $0x1b0] sm:$0xff]
    %v2994 = vld [vmem:[%s1339 + $0x1b8] sm:$0xff]
    %v2995 = vld [vmem:[%s1339 + $0x1c8] sm:$0xff]
    %v2996 = vld [vmem:[%s1339 + $0x1d0] sm:$0xff]
    %v2997 = vld [vmem:[%s1339 + $0x1e0] sm:$0xff]
    %v2998 = vld [vmem:[%s1339 + $0x1e8] sm:$0xff]
    %v2999 = vld [vmem:[%s1339 + $0x1f8] sm:$0xff]
    %v3000 = vld [vmem:[%s1339 + $0x200] sm:$0xff]
    %v3001 = vld [vmem:[%s1339 + $0x210] sm:$0xff]
    %v3002 = vld [vmem:[%s1339 + $0x218] sm:$0xff]
    %v3003 = vld [vmem:[%s1339 + $0x228] sm:$0xff]
    %v3004 = vld [vmem:[%s1339 + $0x230] sm:$0xff]
    %v3005 = vld [vmem:[%s1339 + $0x240] sm:$0xff]
    %v3006 = vld [vmem:[%s1339 + $0x248] sm:$0xff]
    %v3007 = vld [vmem:[%s1339 + $0x258] sm:$0xff]
    %v3008 = vld [vmem:[%s1339 + $0x260] sm:$0xff]
    %v3009 = vld [vmem:[%s1339 + $0x270] sm:$0xff]
    %v3010 = vld [vmem:[%s1339 + $0x278] sm:$0xff]
    %v3011 = vld [vmem:[%s1339 + $0x288] sm:$0xff]
    %v3012 = vld [vmem:[%s1339 + $0x290] sm:$0xff]
    %v3013 = vld [vmem:[%s1339 + $0x2a0] sm:$0xff]
    %v3014 = vld [vmem:[%s1339 + $0x2a8] sm:$0xff]
    %v3015 = vld [vmem:[%s1339 + $0x2b8] sm:$0xff]
    %v3016 = vld [vmem:[%s1339 + $0x2c0] sm:$0xff]
    %v3017 = vld [vmem:[%s1339 + $0x2d0] sm:$0xff]
    %v3018 = vld [vmem:[%s1339 + $0x2d8] sm:$0xff]
    %v3019 = vld [vmem:[%s1339 + $0x2e8] sm:$0xff]
    %v3020 = vld [vmem:[%s1339 + $0x2f0] sm:$0xff]
    %v3021 = vld [vmem:[%s1339 + $0x300] sm:$0xff]
    %v3022 = vld [vmem:[%s1339 + $0x308] sm:$0xff]
    %v3023 = vld [vmem:[%s1339 + $0x318] sm:$0xff]
    %v3024 = vld [vmem:[%s1339 + $0x320] sm:$0xff]
    %v3025 = vpack.c.bf16 %v2962, %v2961
    %v3026 = vpack.c.bf16 %v2964, %v2963
    %v3027 = vpack.c.bf16 %v2966, %v2965
    %v3028 = vpack.c.bf16 %v2968, %v2967
    %v3029 = vpack.c.bf16 %v2970, %v2969
    %v3030 = vpack.c.bf16 %v2972, %v2971
    %v3031 = vpack.c.bf16 %v2974, %v2973
    %v3032 = vpack.c.bf16 %v2976, %v2975
    %v3033 = vpack.c.bf16 %v2978, %v2977
    %v3034 = vpack.c.bf16 %v2980, %v2979
    %v3035 = vpack.c.bf16 %v2982, %v2981
    %v3036 = vpack.c.bf16 %v2984, %v2983
    %v3037 = vpack.c.bf16 %v2986, %v2985
    %v3038 = vpack.c.bf16 %v2988, %v2987
    %v3039 = vpack.c.bf16 %v2990, %v2989
    %v3040 = vpack.c.bf16 %v2992, %v2991
    %v3041 = vpack.c.bf16 %v2994, %v2993
    %v3042 = vpack.c.bf16 %v2996, %v2995
    %v3043 = vpack.c.bf16 %v2998, %v2997
    %v3044 = vpack.c.bf16 %v3000, %v2999
    %v3045 = vpack.c.bf16 %v3002, %v3001
    %v3046 = vpack.c.bf16 %v3004, %v3003
    %v3047 = vpack.c.bf16 %v3006, %v3005
    %v3048 = vpack.c.bf16 %v3008, %v3007
    %v3049 = vpack.c.bf16 %v3010, %v3009
    %v3050 = vpack.c.bf16 %v3012, %v3011
    %v3051 = vpack.c.bf16 %v3014, %v3013
    %v3052 = vpack.c.bf16 %v3016, %v3015
    %v3053 = vpack.c.bf16 %v3018, %v3017
    %v3054 = vpack.c.bf16 %v3020, %v3019
    %v3055 = vpack.c.bf16 %v3022, %v3021
    %v3056 = vpack.c.bf16 %v3024, %v3023
    %s3057 = scalar_lea.vmem %s2, 48
    %v3058 = vld [vmem:[%s3057] sm:$0xf]
    %v3059 = vld [vmem:[%s3057 + $0x4] sm:$0xf]
    %v3060 = vld [vmem:[%s3057 + $0x8] sm:$0xf]
    %v3061 = vld [vmem:[%s3057 + $0xc] sm:$0xf]
    %v3066 = vunpack.c.l.b16 %v3058
    %v3067 = vunpack.c.l.b16 %v3059
    %v3068 = vunpack.c.l.b16 %v3060
    %v3069 = vunpack.c.l.b16 %v3061
    %v3070 = vpack.c.b16 %v3067, %v3066
    %v3071 = vpack.c.b16 %v3069, %v3068
    %v3075 = vsel %vm562, %v3025, 0
    %v3078 = vsel %vm562, %v3026, 0
    %v3081 = vsel %vm562, %v3027, 0
    %v3084 = vsel %vm562, %v3028, 0
    %v3087 = vsel %vm562, %v3029, 0
    %v3090 = vsel %vm562, %v3030, 0
    %v3093 = vsel %vm562, %v3031, 0
    %v3096 = vsel %vm562, %v3032, 0
    %v3099 = vsel %vm562, %v3033, 0
    %v3102 = vsel %vm562, %v3034, 0
    %v3105 = vsel %vm562, %v3035, 0
    %v3108 = vsel %vm562, %v3036, 0
    %v3111 = vsel %vm562, %v3037, 0
    %v3114 = vsel %vm562, %v3038, 0
    %v3117 = vsel %vm562, %v3039, 0
    %v3120 = vsel %vm562, %v3040, 0
    %v3123 = vsel %vm562, %v3041, 0
    %v3126 = vsel %vm562, %v3042, 0
    %v3129 = vsel %vm562, %v3043, 0
    %v3132 = vsel %vm562, %v3044, 0
    %v3135 = vsel %vm562, %v3045, 0
    %v3138 = vsel %vm562, %v3046, 0
    %v3141 = vsel %vm562, %v3047, 0
    %v3144 = vsel %vm562, %v3048, 0
    %v3147 = vsel %vm562, %v3049, 0
    %v3150 = vsel %vm562, %v3050, 0
    %v3153 = vsel %vm562, %v3051, 0
    %v3156 = vsel %vm562, %v3052, 0
    %v3159 = vsel %vm562, %v3053, 0
    %v3162 = vsel %vm562, %v3054, 0
    %v3165 = vsel %vm562, %v3055, 0
    %v3168 = vsel %vm562, %v3056, 0
    %3170 = vmatprep.subr.bf16.mxu0 0
    %3171 = vmatpush1.bf16.msra.mxu0 %v3070
    %3172 = vmatprep.subr.bf16.mxu0 0
    %3173 = vmatpush1.bf16.msra.mxu0 %v3071
    %3174 = vmatprep.subr.bf16.mxu0 0
    %3175 = vmatpush1.bf16.msra.mxu0 0
    %3176 = vmatprep.subr.bf16.mxu0 0
    %3177 = vmatpush1.bf16.msra.mxu0 0
    %3178 = vmatprep.subr.bf16.mxu0 0
    %3179 = vmatpush1.bf16.msra.mxu0 0
    %3180 = vmatprep.subr.bf16.mxu0 0
    %3181 = vmatpush1.bf16.msra.mxu0 0
    %3182 = vmatprep.subr.bf16.mxu0 0
    %3183 = vmatpush1.bf16.msra.mxu0 0
    %3184 = vmatprep.subr.bf16.mxu0 0
    %3185 = vmatpush1.bf16.msra.mxu0 0
    %3186 = vmatprep.subr.bf16.mxu0 0
    %3187 = vmatpush1.bf16.msra.mxu0 0
    %3188 = vmatprep.subr.bf16.mxu0 0
    %3189 = vmatpush1.bf16.msra.mxu0 0
    %3190 = vmatprep.subr.bf16.mxu0 0
    %3191 = vmatpush1.bf16.msra.mxu0 0
    %3192 = vmatprep.subr.bf16.mxu0 0
    %3193 = vmatpush1.bf16.msra.mxu0 0
    %3194 = vmatprep.subr.bf16.mxu0 0
    %3195 = vmatpush1.bf16.msra.mxu0 0
    %3196 = vmatprep.subr.bf16.mxu0 0
    %3197 = vmatpush1.bf16.msra.mxu0 0
    %3198 = vmatprep.subr.bf16.mxu0 0
    %3199 = vmatpush1.bf16.msra.mxu0 0
    %3200 = vmatprep.subr.bf16.mxu0 0
    %3201 = vmatpush1.bf16.msra.mxu0 0
    %3202 = vmatprep.mubr.bf16.mxu0 0
    %3203 = vmatmul.mubr.bf16.gmra.mrb[0].mxu0 %v3075
    %v3204 = vpop.f32.mrb[0].mxu0
    %v3205 = vadd.f32 0.0, %v3204
    %v3206 = vpop.f32.mrb[0].mxu0
    %v3207 = vpop.f32.mrb[0].mxu0
    %v3208 = vadd.f32 0.0, %v3207
    %v3209 = vpop.f32.mrb[0].mxu0
    %3210 = vmatprep.mubr.bf16.mxu0 0
    %3211 = vmatmul.mubr.bf16.gmra.mrb[0].mxu0 %v3078
    %v3212 = vpop.f32.mrb[0].mxu0
    %v3213 = vadd.f32 0.0, %v3212
    %v3214 = vpop.f32.mrb[0].mxu0
    %v3215 = vpop.f32.mrb[0].mxu0
    %v3216 = vadd.f32 0.0, %v3215
    %v3217 = vpop.f32.mrb[0].mxu0
    %3218 = vmatprep.mubr.bf16.mxu0 0
    %3219 = vmatmul.mubr.bf16.gmra.mrb[0].mxu0 %v3081
    %v3220 = vpop.f32.mrb[0].mxu0
    %v3221 = vadd.f32 0.0, %v3220
    %v3222 = vpop.f32.mrb[0].mxu0
    %v3223 = vpop.f32.mrb[0].mxu0
    %v3224 = vadd.f32 0.0, %v3223
    %v3225 = vpop.f32.mrb[0].mxu0
    %3226 = vmatprep.mubr.bf16.mxu0 0
    %3227 = vmatmul.mubr.bf16.gmra.mrb[0].mxu0 %v3084
    %v3228 = vpop.f32.mrb[0].mxu0
    %v3229 = vadd.f32 0.0, %v3228
    %v3230 = vpop.f32.mrb[0].mxu0
    %v3231 = vpop.f32.mrb[0].mxu0
    %v3232 = vadd.f32 0.0, %v3231
    %v3233 = vpop.f32.mrb[0].mxu0
    %3234 = vmatprep.mubr.bf16.mxu0 0
    %3235 = vmatmul.mubr.bf16.gmra.mrb[0].mxu0 %v3087
    %v3236 = vpop.f32.mrb[0].mxu0
    %v3237 = vadd.f32 0.0, %v3236
    %v3238 = vpop.f32.mrb[0].mxu0
    %v3239 = vpop.f32.mrb[0].mxu0
    %v3240 = vadd.f32 0.0, %v3239
    %v3241 = vpop.f32.mrb[0].mxu0
    %3242 = vmatprep.mubr.bf16.mxu0 0
    %3243 = vmatmul.mubr.bf16.gmra.mrb[0].mxu0 %v3090
    %v3244 = vpop.f32.mrb[0].mxu0
    %v3245 = vadd.f32 0.0, %v3244
    %v3246 = vpop.f32.mrb[0].mxu0
    %v3247 = vpop.f32.mrb[0].mxu0
    %v3248 = vadd.f32 0.0, %v3247
    %v3249 = vpop.f32.mrb[0].mxu0
    %3250 = vmatprep.mubr.bf16.mxu0 0
    %3251 = vmatmul.mubr.bf16.gmra.mrb[0].mxu0 %v3093
    %v3252 = vpop.f32.mrb[0].mxu0
    %v3253 = vadd.f32 0.0, %v3252
    %v3254 = vpop.f32.mrb[0].mxu0
    %v3255 = vpop.f32.mrb[0].mxu0
    %v3256 = vadd.f32 0.0, %v3255
    %v3257 = vpop.f32.mrb[0].mxu0
    %3258 = vmatprep.mubr.bf16.mxu0 0
    %3259 = vmatmul.mubr.bf16.gmra.mrb[0].mxu0 %v3096
    %v3260 = vpop.f32.mrb[0].mxu0
    %v3261 = vadd.f32 0.0, %v3260
    %v3262 = vpop.f32.mrb[0].mxu0
    %v3263 = vpop.f32.mrb[0].mxu0
    %v3264 = vadd.f32 0.0, %v3263
    %v3265 = vpop.f32.mrb[0].mxu0
    %3266 = vmatprep.mubr.bf16.mxu0 0
    %3267 = vmatmul.mubr.bf16.gmra.mrb[0].mxu0 %v3099
    %v3268 = vpop.f32.mrb[0].mxu0
    %v3269 = vadd.f32 0.0, %v3268
    %v3270 = vpop.f32.mrb[0].mxu0
    %v3271 = vpop.f32.mrb[0].mxu0
    %v3272 = vadd.f32 0.0, %v3271
    %v3273 = vpop.f32.mrb[0].mxu0
    %3274 = vmatprep.mubr.bf16.mxu0 0
    %3275 = vmatmul.mubr.bf16.gmra.mrb[0].mxu0 %v3102
    %v3276 = vpop.f32.mrb[0].mxu0
    %v3277 = vadd.f32 0.0, %v3276
    %v3278 = vpop.f32.mrb[0].mxu0
    %v3279 = vpop.f32.mrb[0].mxu0
    %v3280 = vadd.f32 0.0, %v3279
    %v3281 = vpop.f32.mrb[0].mxu0
    %3282 = vmatprep.mubr.bf16.mxu0 0
    %3283 = vmatmul.mubr.bf16.gmra.mrb[0].mxu0 %v3105
    %v3284 = vpop.f32.mrb[0].mxu0
    %v3285 = vadd.f32 0.0, %v3284
    %v3286 = vpop.f32.mrb[0].mxu0
    %v3287 = vpop.f32.mrb[0].mxu0
    %v3288 = vadd.f32 0.0, %v3287
    %v3289 = vpop.f32.mrb[0].mxu0
    %3290 = vmatprep.mubr.bf16.mxu0 0
    %3291 = vmatmul.mubr.bf16.gmra.mrb[0].mxu0 %v3108
    %v3292 = vpop.f32.mrb[0].mxu0
    %v3293 = vadd.f32 0.0, %v3292
    %v3294 = vpop.f32.mrb[0].mxu0
    %v3295 = vpop.f32.mrb[0].mxu0
    %v3296 = vadd.f32 0.0, %v3295
    %v3297 = vpop.f32.mrb[0].mxu0
    %3298 = vmatprep.mubr.bf16.mxu0 0
    %3299 = vmatmul.mubr.bf16.gmra.mrb[0].mxu0 %v3111
    %v3300 = vpop.f32.mrb[0].mxu0
    %v3301 = vadd.f32 0.0, %v3300
    %v3302 = vpop.f32.mrb[0].mxu0
    %v3303 = vpop.f32.mrb[0].mxu0
    %v3304 = vadd.f32 0.0, %v3303
    %v3305 = vpop.f32.mrb[0].mxu0
    %3306 = vmatprep.mubr.bf16.mxu0 0
    %3307 = vmatmul.mubr.bf16.gmra.mrb[0].mxu0 %v3114
    %v3308 = vpop.f32.mrb[0].mxu0
    %v3309 = vadd.f32 0.0, %v3308
    %v3310 = vpop.f32.mrb[0].mxu0
    %v3311 = vpop.f32.mrb[0].mxu0
    %v3312 = vadd.f32 0.0, %v3311
    %v3313 = vpop.f32.mrb[0].mxu0
    %3314 = vmatprep.mubr.bf16.mxu0 0
    %3315 = vmatmul.mubr.bf16.gmra.mrb[0].mxu0 %v3117
    %v3316 = vpop.f32.mrb[0].mxu0
    %v3317 = vadd.f32 0.0, %v3316
    %v3318 = vpop.f32.mrb[0].mxu0
    %v3319 = vpop.f32.mrb[0].mxu0
    %v3320 = vadd.f32 0.0, %v3319
    %v3321 = vpop.f32.mrb[0].mxu0
    %3322 = vmatprep.mubr.bf16.mxu0 0
    %3323 = vmatmul.mubr.bf16.gmra.mrb[0].mxu0 %v3120
    %v3324 = vpop.f32.mrb[0].mxu0
    %v3325 = vadd.f32 0.0, %v3324
    %v3326 = vpop.f32.mrb[0].mxu0
    %v3327 = vpop.f32.mrb[0].mxu0
    %v3328 = vadd.f32 0.0, %v3327
    %v3329 = vpop.f32.mrb[0].mxu0
    %3330 = vmatprep.mubr.bf16.mxu0 0
    %3331 = vmatmul.mubr.bf16.gmra.mrb[0].mxu0 %v3123
    %v3332 = vpop.f32.mrb[0].mxu0
    %v3333 = vadd.f32 0.0, %v3332
    %v3334 = vpop.f32.mrb[0].mxu0
    %v3335 = vpop.f32.mrb[0].mxu0
    %v3336 = vadd.f32 0.0, %v3335
    %v3337 = vpop.f32.mrb[0].mxu0
    %3338 = vmatprep.mubr.bf16.mxu0 0
    %3339 = vmatmul.mubr.bf16.gmra.mrb[0].mxu0 %v3126
    %v3340 = vpop.f32.mrb[0].mxu0
    %v3341 = vadd.f32 0.0, %v3340
    %v3342 = vpop.f32.mrb[0].mxu0
    %v3343 = vpop.f32.mrb[0].mxu0
    %v3344 = vadd.f32 0.0, %v3343
    %v3345 = vpop.f32.mrb[0].mxu0
    %3346 = vmatprep.mubr.bf16.mxu0 0
    %3347 = vmatmul.mubr.bf16.gmra.mrb[0].mxu0 %v3129
    %v3348 = vpop.f32.mrb[0].mxu0
    %v3349 = vadd.f32 0.0, %v3348
    %v3350 = vpop.f32.mrb[0].mxu0
    %v3351 = vpop.f32.mrb[0].mxu0
    %v3352 = vadd.f32 0.0, %v3351
    %v3353 = vpop.f32.mrb[0].mxu0
    %3354 = vmatprep.mubr.bf16.mxu0 0
    %3355 = vmatmul.mubr.bf16.gmra.mrb[0].mxu0 %v3132
    %v3356 = vpop.f32.mrb[0].mxu0
    %v3357 = vadd.f32 0.0, %v3356
    %v3358 = vpop.f32.mrb[0].mxu0
    %v3359 = vpop.f32.mrb[0].mxu0
    %v3360 = vadd.f32 0.0, %v3359
    %v3361 = vpop.f32.mrb[0].mxu0
    %3362 = vmatprep.mubr.bf16.mxu0 0
    %3363 = vmatmul.mubr.bf16.gmra.mrb[0].mxu0 %v3135
    %v3364 = vpop.f32.mrb[0].mxu0
    %v3365 = vadd.f32 0.0, %v3364
    %v3366 = vpop.f32.mrb[0].mxu0
    %v3367 = vpop.f32.mrb[0].mxu0
    %v3368 = vadd.f32 0.0, %v3367
    %v3369 = vpop.f32.mrb[0].mxu0
    %3370 = vmatprep.mubr.bf16.mxu0 0
    %3371 = vmatmul.mubr.bf16.gmra.mrb[0].mxu0 %v3138
    %v3372 = vpop.f32.mrb[0].mxu0
    %v3373 = vadd.f32 0.0, %v3372
    %v3374 = vpop.f32.mrb[0].mxu0
    %v3375 = vpop.f32.mrb[0].mxu0
    %v3376 = vadd.f32 0.0, %v3375
    %v3377 = vpop.f32.mrb[0].mxu0
    %3378 = vmatprep.mubr.bf16.mxu0 0
    %3379 = vmatmul.mubr.bf16.gmra.mrb[0].mxu0 %v3141
    %v3380 = vpop.f32.mrb[0].mxu0
    %v3381 = vadd.f32 0.0, %v3380
    %v3382 = vpop.f32.mrb[0].mxu0
    %v3383 = vpop.f32.mrb[0].mxu0
    %v3384 = vadd.f32 0.0, %v3383
    %v3385 = vpop.f32.mrb[0].mxu0
    %3386 = vmatprep.mubr.bf16.mxu0 0
    %3387 = vmatmul.mubr.bf16.gmra.mrb[0].mxu0 %v3144
    %v3388 = vpop.f32.mrb[0].mxu0
    %v3389 = vadd.f32 0.0, %v3388
    %v3390 = vpop.f32.mrb[0].mxu0
    %v3391 = vpop.f32.mrb[0].mxu0
    %v3392 = vadd.f32 0.0, %v3391
    %v3393 = vpop.f32.mrb[0].mxu0
    %3394 = vmatprep.mubr.bf16.mxu0 0
    %3395 = vmatmul.mubr.bf16.gmra.mrb[0].mxu0 %v3147
    %v3396 = vpop.f32.mrb[0].mxu0
    %v3397 = vadd.f32 0.0, %v3396
    %v3398 = vpop.f32.mrb[0].mxu0
    %v3399 = vpop.f32.mrb[0].mxu0
    %v3400 = vadd.f32 0.0, %v3399
    %v3401 = vpop.f32.mrb[0].mxu0
    %3402 = vmatprep.mubr.bf16.mxu0 0
    %3403 = vmatmul.mubr.bf16.gmra.mrb[0].mxu0 %v3150
    %v3404 = vpop.f32.mrb[0].mxu0
    %v3405 = vadd.f32 0.0, %v3404
    %v3406 = vpop.f32.mrb[0].mxu0
    %v3407 = vpop.f32.mrb[0].mxu0
    %v3408 = vadd.f32 0.0, %v3407
    %v3409 = vpop.f32.mrb[0].mxu0
    %3410 = vmatprep.mubr.bf16.mxu0 0
    %3411 = vmatmul.mubr.bf16.gmra.mrb[0].mxu0 %v3153
    %v3412 = vpop.f32.mrb[0].mxu0
    %v3413 = vadd.f32 0.0, %v3412
    %v3414 = vpop.f32.mrb[0].mxu0
    %v3415 = vpop.f32.mrb[0].mxu0
    %v3416 = vadd.f32 0.0, %v3415
    %v3417 = vpop.f32.mrb[0].mxu0
    %3418 = vmatprep.mubr.bf16.mxu0 0
    %3419 = vmatmul.mubr.bf16.gmra.mrb[0].mxu0 %v3156
    %v3420 = vpop.f32.mrb[0].mxu0
    %v3421 = vadd.f32 0.0, %v3420
    %v3422 = vpop.f32.mrb[0].mxu0
    %v3423 = vpop.f32.mrb[0].mxu0
    %v3424 = vadd.f32 0.0, %v3423
    %v3425 = vpop.f32.mrb[0].mxu0
    %3426 = vmatprep.mubr.bf16.mxu0 0
    %3427 = vmatmul.mubr.bf16.gmra.mrb[0].mxu0 %v3159
    %v3428 = vpop.f32.mrb[0].mxu0
    %v3429 = vadd.f32 0.0, %v3428
    %v3430 = vpop.f32.mrb[0].mxu0
    %v3431 = vpop.f32.mrb[0].mxu0
    %v3432 = vadd.f32 0.0, %v3431
    %v3433 = vpop.f32.mrb[0].mxu0
    %3434 = vmatprep.mubr.bf16.mxu0 0
    %3435 = vmatmul.mubr.bf16.gmra.mrb[0].mxu0 %v3162
    %v3436 = vpop.f32.mrb[0].mxu0
    %v3437 = vadd.f32 0.0, %v3436
    %v3438 = vpop.f32.mrb[0].mxu0
    %v3439 = vpop.f32.mrb[0].mxu0
    %v3440 = vadd.f32 0.0, %v3439
    %v3441 = vpop.f32.mrb[0].mxu0
    %3442 = vmatprep.mubr.bf16.mxu0 0
    %3443 = vmatmul.mubr.bf16.gmra.mrb[0].mxu0 %v3165
    %v3444 = vpop.f32.mrb[0].mxu0
    %v3445 = vadd.f32 0.0, %v3444
    %v3446 = vpop.f32.mrb[0].mxu0
    %v3447 = vpop.f32.mrb[0].mxu0
    %v3448 = vadd.f32 0.0, %v3447
    %v3449 = vpop.f32.mrb[0].mxu0
    %3450 = vmatprep.mubr.bf16.mxu0 0
    %3451 = vmatmul.mubr.bf16.gmra.mrb[0].mxu0 %v3168
    %v3452 = vpop.f32.mrb[0].mxu0
    %v3453 = vadd.f32 0.0, %v3452
    %v3454 = vpop.f32.mrb[0].mxu0
    %v3455 = vpop.f32.mrb[0].mxu0
    %v3456 = vadd.f32 0.0, %v3455
    %v3457 = vpop.f32.mrb[0].mxu0
    %3458 = vdwg.mxu0
    %v3459 = vadd.f32 %v2897, %v3205
    %v3460 = vadd.f32 %v2898, %v3208
    %v3461 = vadd.f32 %v2899, %v3213
    %v3462 = vadd.f32 %v2900, %v3216
    %v3463 = vadd.f32 %v2901, %v3221
    %v3464 = vadd.f32 %v2902, %v3224
    %v3465 = vadd.f32 %v2903, %v3229
    %v3466 = vadd.f32 %v2904, %v3232
    %v3467 = vadd.f32 %v2905, %v3237
    %v3468 = vadd.f32 %v2906, %v3240
    %v3469 = vadd.f32 %v2907, %v3245
    %v3470 = vadd.f32 %v2908, %v3248
    %v3471 = vadd.f32 %v2909, %v3253
    %v3472 = vadd.f32 %v2910, %v3256
    %v3473 = vadd.f32 %v2911, %v3261
    %v3474 = vadd.f32 %v2912, %v3264
    %v3475 = vadd.f32 %v2913, %v3269
    %v3476 = vadd.f32 %v2914, %v3272
    %v3477 = vadd.f32 %v2915, %v3277
    %v3478 = vadd.f32 %v2916, %v3280
    %v3479 = vadd.f32 %v2917, %v3285
    %v3480 = vadd.f32 %v2918, %v3288
    %v3481 = vadd.f32 %v2919, %v3293
    %v3482 = vadd.f32 %v2920, %v3296
    %v3483 = vadd.f32 %v2921, %v3301
    %v3484 = vadd.f32 %v2922, %v3304
    %v3485 = vadd.f32 %v2923, %v3309
    %v3486 = vadd.f32 %v2924, %v3312
    %v3487 = vadd.f32 %v2925, %v3317
    %v3488 = vadd.f32 %v2926, %v3320
    %v3489 = vadd.f32 %v2927, %v3325
    %v3490 = vadd.f32 %v2928, %v3328
    %v3491 = vadd.f32 %v2929, %v3333
    %v3492 = vadd.f32 %v2930, %v3336
    %v3493 = vadd.f32 %v2931, %v3341
    %v3494 = vadd.f32 %v2932, %v3344
    %v3495 = vadd.f32 %v2933, %v3349
    %v3496 = vadd.f32 %v2934, %v3352
    %v3497 = vadd.f32 %v2935, %v3357
    %v3498 = vadd.f32 %v2936, %v3360
    %v3499 = vadd.f32 %v2937, %v3365
    %v3500 = vadd.f32 %v2938, %v3368
    %v3501 = vadd.f32 %v2939, %v3373
    %v3502 = vadd.f32 %v2940, %v3376
    %v3503 = vadd.f32 %v2941, %v3381
    %v3504 = vadd.f32 %v2942, %v3384
    %v3505 = vadd.f32 %v2943, %v3389
    %v3506 = vadd.f32 %v2944, %v3392
    %v3507 = vadd.f32 %v2945, %v3397
    %v3508 = vadd.f32 %v2946, %v3400
    %v3509 = vadd.f32 %v2947, %v3405
    %v3510 = vadd.f32 %v2948, %v3408
    %v3511 = vadd.f32 %v2949, %v3413
    %v3512 = vadd.f32 %v2950, %v3416
    %v3513 = vadd.f32 %v2951, %v3421
    %v3514 = vadd.f32 %v2952, %v3424
    %v3515 = vadd.f32 %v2953, %v3429
    %v3516 = vadd.f32 %v2954, %v3432
    %v3517 = vadd.f32 %v2955, %v3437
    %v3518 = vadd.f32 %v2956, %v3440
    %v3519 = vadd.f32 %v2957, %v3445
    %v3520 = vadd.f32 %v2958, %v3448
    %v3521 = vadd.f32 %v2959, %v3453
    %v3522 = vadd.f32 %v2960, %v3456
    %v3523 = vld [vmem:[%s1339 + $0x1] sm:$0xff]
    %v3524 = vld [vmem:[%s1339 + $0x9] sm:$0xff]
    %v3525 = vld [vmem:[%s1339 + $0x19] sm:$0xff]
    %v3526 = vld [vmem:[%s1339 + $0x21] sm:$0xff]
    %v3527 = vld [vmem:[%s1339 + $0x31] sm:$0xff]
    %v3528 = vld [vmem:[%s1339 + $0x39] sm:$0xff]
    %v3529 = vld [vmem:[%s1339 + $0x49] sm:$0xff]
    %v3530 = vld [vmem:[%s1339 + $0x51] sm:$0xff]
    %v3531 = vld [vmem:[%s1339 + $0x61] sm:$0xff]
    %v3532 = vld [vmem:[%s1339 + $0x69] sm:$0xff]
    %v3533 = vld [vmem:[%s1339 + $0x79] sm:$0xff]
    %v3534 = vld [vmem:[%s1339 + $0x81] sm:$0xff]
    %v3535 = vld [vmem:[%s1339 + $0x91] sm:$0xff]
    %v3536 = vld [vmem:[%s1339 + $0x99] sm:$0xff]
    %v3537 = vld [vmem:[%s1339 + $0xa9] sm:$0xff]
    %v3538 = vld [vmem:[%s1339 + $0xb1] sm:$0xff]
    %v3539 = vld [vmem:[%s1339 + $0xc1] sm:$0xff]
    %v3540 = vld [vmem:[%s1339 + $0xc9] sm:$0xff]
    %v3541 = vld [vmem:[%s1339 + $0xd9] sm:$0xff]
    %v3542 = vld [vmem:[%s1339 + $0xe1] sm:$0xff]
    %v3543 = vld [vmem:[%s1339 + $0xf1] sm:$0xff]
    %v3544 = vld [vmem:[%s1339 + $0xf9] sm:$0xff]
    %v3545 = vld [vmem:[%s1339 + $0x109] sm:$0xff]
    %v3546 = vld [vmem:[%s1339 + $0x111] sm:$0xff]
    %v3547 = vld [vmem:[%s1339 + $0x121] sm:$0xff]
    %v3548 = vld [vmem:[%s1339 + $0x129] sm:$0xff]
    %v3549 = vld [vmem:[%s1339 + $0x139] sm:$0xff]
    %v3550 = vld [vmem:[%s1339 + $0x141] sm:$0xff]
    %v3551 = vld [vmem:[%s1339 + $0x151] sm:$0xff]
    %v3552 = vld [vmem:[%s1339 + $0x159] sm:$0xff]
    %v3553 = vld [vmem:[%s1339 + $0x169] sm:$0xff]
    %v3554 = vld [vmem:[%s1339 + $0x171] sm:$0xff]
    %v3555 = vld [vmem:[%s1339 + $0x1b1] sm:$0xff]
    %v3556 = vld [vmem:[%s1339 + $0x1b9] sm:$0xff]
    %v3557 = vld [vmem:[%s1339 + $0x1c9] sm:$0xff]
    %v3558 = vld [vmem:[%s1339 + $0x1d1] sm:$0xff]
    %v3559 = vld [vmem:[%s1339 + $0x1e1] sm:$0xff]
    %v3560 = vld [vmem:[%s1339 + $0x1e9] sm:$0xff]
    %v3561 = vld [vmem:[%s1339 + $0x1f9] sm:$0xff]
    %v3562 = vld [vmem:[%s1339 + $0x201] sm:$0xff]
    %v3563 = vld [vmem:[%s1339 + $0x211] sm:$0xff]
    %v3564 = vld [vmem:[%s1339 + $0x219] sm:$0xff]
    %v3565 = vld [vmem:[%s1339 + $0x229] sm:$0xff]
    %v3566 = vld [vmem:[%s1339 + $0x231] sm:$0xff]
    %v3567 = vld [vmem:[%s1339 + $0x241] sm:$0xff]
    %v3568 = vld [vmem:[%s1339 + $0x249] sm:$0xff]
    %v3569 = vld [vmem:[%s1339 + $0x259] sm:$0xff]
    %v3570 = vld [vmem:[%s1339 + $0x261] sm:$0xff]
    %v3571 = vld [vmem:[%s1339 + $0x271] sm:$0xff]
    %v3572 = vld [vmem:[%s1339 + $0x279] sm:$0xff]
    %v3573 = vld [vmem:[%s1339 + $0x289] sm:$0xff]
    %v3574 = vld [vmem:[%s1339 + $0x291] sm:$0xff]
    %v3575 = vld [vmem:[%s1339 + $0x2a1] sm:$0xff]
    %v3576 = vld [vmem:[%s1339 + $0x2a9] sm:$0xff]
    %v3577 = vld [vmem:[%s1339 + $0x2b9] sm:$0xff]
    %v3578 = vld [vmem:[%s1339 + $0x2c1] sm:$0xff]
    %v3579 = vld [vmem:[%s1339 + $0x2d1] sm:$0xff]
    %v3580 = vld [vmem:[%s1339 + $0x2d9] sm:$0xff]
    %v3581 = vld [vmem:[%s1339 + $0x2e9] sm:$0xff]
    %v3582 = vld [vmem:[%s1339 + $0x2f1] sm:$0xff]
    %v3583 = vld [vmem:[%s1339 + $0x301] sm:$0xff]
    %v3584 = vld [vmem:[%s1339 + $0x309] sm:$0xff]
    %v3585 = vld [vmem:[%s1339 + $0x319] sm:$0xff]
    %v3586 = vld [vmem:[%s1339 + $0x321] sm:$0xff]
    %v3587 = vpack.c.bf16 %v3524, %v3523
    %v3588 = vpack.c.bf16 %v3526, %v3525
    %v3589 = vpack.c.bf16 %v3528, %v3527
    %v3590 = vpack.c.bf16 %v3530, %v3529
    %v3591 = vpack.c.bf16 %v3532, %v3531
    %v3592 = vpack.c.bf16 %v3534, %v3533
    %v3593 = vpack.c.bf16 %v3536, %v3535
    %v3594 = vpack.c.bf16 %v3538, %v3537
    %v3595 = vpack.c.bf16 %v3540, %v3539
    %v3596 = vpack.c.bf16 %v3542, %v3541
    %v3597 = vpack.c.bf16 %v3544, %v3543
    %v3598 = vpack.c.bf16 %v3546, %v3545
    %v3599 = vpack.c.bf16 %v3548, %v3547
    %v3600 = vpack.c.bf16 %v3550, %v3549
    %v3601 = vpack.c.bf16 %v3552, %v3551
    %v3602 = vpack.c.bf16 %v3554, %v3553
    %v3603 = vpack.c.bf16 %v3556, %v3555
    %v3604 = vpack.c.bf16 %v3558, %v3557
    %v3605 = vpack.c.bf16 %v3560, %v3559
    %v3606 = vpack.c.bf16 %v3562, %v3561
    %v3607 = vpack.c.bf16 %v3564, %v3563
    %v3608 = vpack.c.bf16 %v3566, %v3565
    %v3609 = vpack.c.bf16 %v3568, %v3567
    %v3610 = vpack.c.bf16 %v3570, %v3569
    %v3611 = vpack.c.bf16 %v3572, %v3571
    %v3612 = vpack.c.bf16 %v3574, %v3573
    %v3613 = vpack.c.bf16 %v3576, %v3575
    %v3614 = vpack.c.bf16 %v3578, %v3577
    %v3615 = vpack.c.bf16 %v3580, %v3579
    %v3616 = vpack.c.bf16 %v3582, %v3581
    %v3617 = vpack.c.bf16 %v3584, %v3583
    %v3618 = vpack.c.bf16 %v3586, %v3585
    %s3619 = scalar_lea.vmem %s2, 64
    %v3620 = vld [vmem:[%s3619] sm:$0xf]
    %v3621 = vld [vmem:[%s3619 + $0x4] sm:$0xf]
    %v3622 = vld [vmem:[%s3619 + $0x8] sm:$0xf]
    %v3623 = vld [vmem:[%s3619 + $0xc] sm:$0xf]
    %v3628 = vunpack.c.l.b16 %v3620
    %v3629 = vunpack.c.l.b16 %v3621
    %v3630 = vunpack.c.l.b16 %v3622
    %v3631 = vunpack.c.l.b16 %v3623
    %v3632 = vpack.c.b16 %v3629, %v3628
    %v3633 = vpack.c.b16 %v3631, %v3630
    %v3637 = vsel %vm562, %v3587, 0
    %v3640 = vsel %vm562, %v3588, 0
    %v3643 = vsel %vm562, %v3589, 0
    %v3646 = vsel %vm562, %v3590, 0
    %v3649 = vsel %vm562, %v3591, 0
    %v3652 = vsel %vm562, %v3592, 0
    %v3655 = vsel %vm562, %v3593, 0
    %v3658 = vsel %vm562, %v3594, 0
    %v3661 = vsel %vm562, %v3595, 0
    %v3664 = vsel %vm562, %v3596, 0
    %v3667 = vsel %vm562, %v3597, 0
    %v3670 = vsel %vm562, %v3598, 0
    %v3673 = vsel %vm562, %v3599, 0
    %v3676 = vsel %vm562, %v3600, 0
    %v3679 = vsel %vm562, %v3601, 0
    %v3682 = vsel %vm562, %v3602, 0
    %v3685 = vsel %vm562, %v3603, 0
    %v3688 = vsel %vm562, %v3604, 0
    %v3691 = vsel %vm562, %v3605, 0
    %v3694 = vsel %vm562, %v3606, 0
    %v3697 = vsel %vm562, %v3607, 0
    %v3700 = vsel %vm562, %v3608, 0
    %v3703 = vsel %vm562, %v3609, 0
    %v3706 = vsel %vm562, %v3610, 0
    %v3709 = vsel %vm562, %v3611, 0
    %v3712 = vsel %vm562, %v3612, 0
    %v3715 = vsel %vm562, %v3613, 0
    %v3718 = vsel %vm562, %v3614, 0
    %v3721 = vsel %vm562, %v3615, 0
    %v3724 = vsel %vm562, %v3616, 0
    %v3727 = vsel %vm562, %v3617, 0
    %v3730 = vsel %vm562, %v3618, 0
    %3732 = vmatprep.subr.bf16.mxu0 0
    %3733 = vmatpush1.bf16.msra.mxu0 %v3632
    %3734 = vmatprep.subr.bf16.mxu0 0
    %3735 = vmatpush1.bf16.msra.mxu0 %v3633
    %3736 = vmatprep.subr.bf16.mxu0 0
    %3737 = vmatpush1.bf16.msra.mxu0 0
    %3738 = vmatprep.subr.bf16.mxu0 0
    %3739 = vmatpush1.bf16.msra.mxu0 0
    %3740 = vmatprep.subr.bf16.mxu0 0
    %3741 = vmatpush1.bf16.msra.mxu0 0
    %3742 = vmatprep.subr.bf16.mxu0 0
    %3743 = vmatpush1.bf16.msra.mxu0 0
    %3744 = vmatprep.subr.bf16.mxu0 0
    %3745 = vmatpush1.bf16.msra.mxu0 0
    %3746 = vmatprep.subr.bf16.mxu0 0
    %3747 = vmatpush1.bf16.msra.mxu0 0
    %3748 = vmatprep.subr.bf16.mxu0 0
    %3749 = vmatpush1.bf16.msra.mxu0 0
    %3750 = vmatprep.subr.bf16.mxu0 0
    %3751 = vmatpush1.bf16.msra.mxu0 0
    %3752 = vmatprep.subr.bf16.mxu0 0
    %3753 = vmatpush1.bf16.msra.mxu0 0
    %3754 = vmatprep.subr.bf16.mxu0 0
    %3755 = vmatpush1.bf16.msra.mxu0 0
    %3756 = vmatprep.subr.bf16.mxu0 0
    %3757 = vmatpush1.bf16.msra.mxu0 0
    %3758 = vmatprep.subr.bf16.mxu0 0
    %3759 = vmatpush1.bf16.msra.mxu0 0
    %3760 = vmatprep.subr.bf16.mxu0 0
    %3761 = vmatpush1.bf16.msra.mxu0 0
    %3762 = vmatprep.subr.bf16.mxu0 0
    %3763 = vmatpush1.bf16.msra.mxu0 0
    %3764 = vmatprep.mubr.bf16.mxu0 0
    %3765 = vmatmul.mubr.bf16.gmra.mrb[0].mxu0 %v3637
    %v3766 = vpop.f32.mrb[0].mxu0
    %v3767 = vadd.f32 0.0, %v3766
    %v3768 = vpop.f32.mrb[0].mxu0
    %v3769 = vpop.f32.mrb[0].mxu0
    %v3770 = vadd.f32 0.0, %v3769
    %v3771 = vpop.f32.mrb[0].mxu0
    %3772 = vmatprep.mubr.bf16.mxu0 0
    %3773 = vmatmul.mubr.bf16.gmra.mrb[0].mxu0 %v3640
    %v3774 = vpop.f32.mrb[0].mxu0
    %v3775 = vadd.f32 0.0, %v3774
    %v3776 = vpop.f32.mrb[0].mxu0
    %v3777 = vpop.f32.mrb[0].mxu0
    %v3778 = vadd.f32 0.0, %v3777
    %v3779 = vpop.f32.mrb[0].mxu0
    %3780 = vmatprep.mubr.bf16.mxu0 0
    %3781 = vmatmul.mubr.bf16.gmra.mrb[0].mxu0 %v3643
    %v3782 = vpop.f32.mrb[0].mxu0
    %v3783 = vadd.f32 0.0, %v3782
    %v3784 = vpop.f32.mrb[0].mxu0
    %v3785 = vpop.f32.mrb[0].mxu0
    %v3786 = vadd.f32 0.0, %v3785
    %v3787 = vpop.f32.mrb[0].mxu0
    %3788 = vmatprep.mubr.bf16.mxu0 0
    %3789 = vmatmul.mubr.bf16.gmra.mrb[0].mxu0 %v3646
    %v3790 = vpop.f32.mrb[0].mxu0
    %v3791 = vadd.f32 0.0, %v3790
    %v3792 = vpop.f32.mrb[0].mxu0
    %v3793 = vpop.f32.mrb[0].mxu0
    %v3794 = vadd.f32 0.0, %v3793
    %v3795 = vpop.f32.mrb[0].mxu0
    %3796 = vmatprep.mubr.bf16.mxu0 0
    %3797 = vmatmul.mubr.bf16.gmra.mrb[0].mxu0 %v3649
    %v3798 = vpop.f32.mrb[0].mxu0
    %v3799 = vadd.f32 0.0, %v3798
    %v3800 = vpop.f32.mrb[0].mxu0
    %v3801 = vpop.f32.mrb[0].mxu0
    %v3802 = vadd.f32 0.0, %v3801
    %v3803 = vpop.f32.mrb[0].mxu0
    %3804 = vmatprep.mubr.bf16.mxu0 0
    %3805 = vmatmul.mubr.bf16.gmra.mrb[0].mxu0 %v3652
    %v3806 = vpop.f32.mrb[0].mxu0
    %v3807 = vadd.f32 0.0, %v3806
    %v3808 = vpop.f32.mrb[0].mxu0
    %v3809 = vpop.f32.mrb[0].mxu0
    %v3810 = vadd.f32 0.0, %v3809
    %v3811 = vpop.f32.mrb[0].mxu0
    %3812 = vmatprep.mubr.bf16.mxu0 0
    %3813 = vmatmul.mubr.bf16.gmra.mrb[0].mxu0 %v3655
    %v3814 = vpop.f32.mrb[0].mxu0
    %v3815 = vadd.f32 0.0, %v3814
    %v3816 = vpop.f32.mrb[0].mxu0
    %v3817 = vpop.f32.mrb[0].mxu0
    %v3818 = vadd.f32 0.0, %v3817
    %v3819 = vpop.f32.mrb[0].mxu0
    %3820 = vmatprep.mubr.bf16.mxu0 0
    %3821 = vmatmul.mubr.bf16.gmra.mrb[0].mxu0 %v3658
    %v3822 = vpop.f32.mrb[0].mxu0
    %v3823 = vadd.f32 0.0, %v3822
    %v3824 = vpop.f32.mrb[0].mxu0
    %v3825 = vpop.f32.mrb[0].mxu0
    %v3826 = vadd.f32 0.0, %v3825
    %v3827 = vpop.f32.mrb[0].mxu0
    %3828 = vmatprep.mubr.bf16.mxu0 0
    %3829 = vmatmul.mubr.bf16.gmra.mrb[0].mxu0 %v3661
    %v3830 = vpop.f32.mrb[0].mxu0
    %v3831 = vadd.f32 0.0, %v3830
    %v3832 = vpop.f32.mrb[0].mxu0
    %v3833 = vpop.f32.mrb[0].mxu0
    %v3834 = vadd.f32 0.0, %v3833
    %v3835 = vpop.f32.mrb[0].mxu0
    %3836 = vmatprep.mubr.bf16.mxu0 0
    %3837 = vmatmul.mubr.bf16.gmra.mrb[0].mxu0 %v3664
    %v3838 = vpop.f32.mrb[0].mxu0
    %v3839 = vadd.f32 0.0, %v3838
    %v3840 = vpop.f32.mrb[0].mxu0
    %v3841 = vpop.f32.mrb[0].mxu0
    %v3842 = vadd.f32 0.0, %v3841
    %v3843 = vpop.f32.mrb[0].mxu0
    %3844 = vmatprep.mubr.bf16.mxu0 0
    %3845 = vmatmul.mubr.bf16.gmra.mrb[0].mxu0 %v3667
    %v3846 = vpop.f32.mrb[0].mxu0
    %v3847 = vadd.f32 0.0, %v3846
    %v3848 = vpop.f32.mrb[0].mxu0
    %v3849 = vpop.f32.mrb[0].mxu0
    %v3850 = vadd.f32 0.0, %v3849
    %v3851 = vpop.f32.mrb[0].mxu0
    %3852 = vmatprep.mubr.bf16.mxu0 0
    %3853 = vmatmul.mubr.bf16.gmra.mrb[0].mxu0 %v3670
    %v3854 = vpop.f32.mrb[0].mxu0
    %v3855 = vadd.f32 0.0, %v3854
    %v3856 = vpop.f32.mrb[0].mxu0
    %v3857 = vpop.f32.mrb[0].mxu0
    %v3858 = vadd.f32 0.0, %v3857
    %v3859 = vpop.f32.mrb[0].mxu0
    %3860 = vmatprep.mubr.bf16.mxu0 0
    %3861 = vmatmul.mubr.bf16.gmra.mrb[0].mxu0 %v3673
    %v3862 = vpop.f32.mrb[0].mxu0
    %v3863 = vadd.f32 0.0, %v3862
    %v3864 = vpop.f32.mrb[0].mxu0
    %v3865 = vpop.f32.mrb[0].mxu0
    %v3866 = vadd.f32 0.0, %v3865
    %v3867 = vpop.f32.mrb[0].mxu0
    %3868 = vmatprep.mubr.bf16.mxu0 0
    %3869 = vmatmul.mubr.bf16.gmra.mrb[0].mxu0 %v3676
    %v3870 = vpop.f32.mrb[0].mxu0
    %v3871 = vadd.f32 0.0, %v3870
    %v3872 = vpop.f32.mrb[0].mxu0
    %v3873 = vpop.f32.mrb[0].mxu0
    %v3874 = vadd.f32 0.0, %v3873
    %v3875 = vpop.f32.mrb[0].mxu0
    %3876 = vmatprep.mubr.bf16.mxu0 0
    %3877 = vmatmul.mubr.bf16.gmra.mrb[0].mxu0 %v3679
    %v3878 = vpop.f32.mrb[0].mxu0
    %v3879 = vadd.f32 0.0, %v3878
    %v3880 = vpop.f32.mrb[0].mxu0
    %v3881 = vpop.f32.mrb[0].mxu0
    %v3882 = vadd.f32 0.0, %v3881
    %v3883 = vpop.f32.mrb[0].mxu0
    %3884 = vmatprep.mubr.bf16.mxu0 0
    %3885 = vmatmul.mubr.bf16.gmra.mrb[0].mxu0 %v3682
    %v3886 = vpop.f32.mrb[0].mxu0
    %v3887 = vadd.f32 0.0, %v3886
    %v3888 = vpop.f32.mrb[0].mxu0
    %v3889 = vpop.f32.mrb[0].mxu0
    %v3890 = vadd.f32 0.0, %v3889
    %v3891 = vpop.f32.mrb[0].mxu0
    %3892 = vmatprep.mubr.bf16.mxu0 0
    %3893 = vmatmul.mubr.bf16.gmra.mrb[0].mxu0 %v3685
    %v3894 = vpop.f32.mrb[0].mxu0
    %v3895 = vadd.f32 0.0, %v3894
    %v3896 = vpop.f32.mrb[0].mxu0
    %v3897 = vpop.f32.mrb[0].mxu0
    %v3898 = vadd.f32 0.0, %v3897
    %v3899 = vpop.f32.mrb[0].mxu0
    %3900 = vmatprep.mubr.bf16.mxu0 0
    %3901 = vmatmul.mubr.bf16.gmra.mrb[0].mxu0 %v3688
    %v3902 = vpop.f32.mrb[0].mxu0
    %v3903 = vadd.f32 0.0, %v3902
    %v3904 = vpop.f32.mrb[0].mxu0
    %v3905 = vpop.f32.mrb[0].mxu0
    %v3906 = vadd.f32 0.0, %v3905
    %v3907 = vpop.f32.mrb[0].mxu0
    %3908 = vmatprep.mubr.bf16.mxu0 0
    %3909 = vmatmul.mubr.bf16.gmra.mrb[0].mxu0 %v3691
    %v3910 = vpop.f32.mrb[0].mxu0
    %v3911 = vadd.f32 0.0, %v3910
    %v3912 = vpop.f32.mrb[0].mxu0
    %v3913 = vpop.f32.mrb[0].mxu0
    %v3914 = vadd.f32 0.0, %v3913
    %v3915 = vpop.f32.mrb[0].mxu0
    %3916 = vmatprep.mubr.bf16.mxu0 0
    %3917 = vmatmul.mubr.bf16.gmra.mrb[0].mxu0 %v3694
    %v3918 = vpop.f32.mrb[0].mxu0
    %v3919 = vadd.f32 0.0, %v3918
    %v3920 = vpop.f32.mrb[0].mxu0
    %v3921 = vpop.f32.mrb[0].mxu0
    %v3922 = vadd.f32 0.0, %v3921
    %v3923 = vpop.f32.mrb[0].mxu0
    %3924 = vmatprep.mubr.bf16.mxu0 0
    %3925 = vmatmul.mubr.bf16.gmra.mrb[0].mxu0 %v3697
    %v3926 = vpop.f32.mrb[0].mxu0
    %v3927 = vadd.f32 0.0, %v3926
    %v3928 = vpop.f32.mrb[0].mxu0
    %v3929 = vpop.f32.mrb[0].mxu0
    %v3930 = vadd.f32 0.0, %v3929
    %v3931 = vpop.f32.mrb[0].mxu0
    %3932 = vmatprep.mubr.bf16.mxu0 0
    %3933 = vmatmul.mubr.bf16.gmra.mrb[0].mxu0 %v3700
    %v3934 = vpop.f32.mrb[0].mxu0
    %v3935 = vadd.f32 0.0, %v3934
    %v3936 = vpop.f32.mrb[0].mxu0
    %v3937 = vpop.f32.mrb[0].mxu0
    %v3938 = vadd.f32 0.0, %v3937
    %v3939 = vpop.f32.mrb[0].mxu0
    %3940 = vmatprep.mubr.bf16.mxu0 0
    %3941 = vmatmul.mubr.bf16.gmra.mrb[0].mxu0 %v3703
    %v3942 = vpop.f32.mrb[0].mxu0
    %v3943 = vadd.f32 0.0, %v3942
    %v3944 = vpop.f32.mrb[0].mxu0
    %v3945 = vpop.f32.mrb[0].mxu0
    %v3946 = vadd.f32 0.0, %v3945
    %v3947 = vpop.f32.mrb[0].mxu0
    %3948 = vmatprep.mubr.bf16.mxu0 0
    %3949 = vmatmul.mubr.bf16.gmra.mrb[0].mxu0 %v3706
    %v3950 = vpop.f32.mrb[0].mxu0
    %v3951 = vadd.f32 0.0, %v3950
    %v3952 = vpop.f32.mrb[0].mxu0
    %v3953 = vpop.f32.mrb[0].mxu0
    %v3954 = vadd.f32 0.0, %v3953
    %v3955 = vpop.f32.mrb[0].mxu0
    %3956 = vmatprep.mubr.bf16.mxu0 0
    %3957 = vmatmul.mubr.bf16.gmra.mrb[0].mxu0 %v3709
    %v3958 = vpop.f32.mrb[0].mxu0
    %v3959 = vadd.f32 0.0, %v3958
    %v3960 = vpop.f32.mrb[0].mxu0
    %v3961 = vpop.f32.mrb[0].mxu0
    %v3962 = vadd.f32 0.0, %v3961
    %v3963 = vpop.f32.mrb[0].mxu0
    %3964 = vmatprep.mubr.bf16.mxu0 0
    %3965 = vmatmul.mubr.bf16.gmra.mrb[0].mxu0 %v3712
    %v3966 = vpop.f32.mrb[0].mxu0
    %v3967 = vadd.f32 0.0, %v3966
    %v3968 = vpop.f32.mrb[0].mxu0
    %v3969 = vpop.f32.mrb[0].mxu0
    %v3970 = vadd.f32 0.0, %v3969
    %v3971 = vpop.f32.mrb[0].mxu0
    %3972 = vmatprep.mubr.bf16.mxu0 0
    %3973 = vmatmul.mubr.bf16.gmra.mrb[0].mxu0 %v3715
    %v3974 = vpop.f32.mrb[0].mxu0
    %v3975 = vadd.f32 0.0, %v3974
    %v3976 = vpop.f32.mrb[0].mxu0
    %v3977 = vpop.f32.mrb[0].mxu0
    %v3978 = vadd.f32 0.0, %v3977
    %v3979 = vpop.f32.mrb[0].mxu0
    %3980 = vmatprep.mubr.bf16.mxu0 0
    %3981 = vmatmul.mubr.bf16.gmra.mrb[0].mxu0 %v3718
    %v3982 = vpop.f32.mrb[0].mxu0
    %v3983 = vadd.f32 0.0, %v3982
    %v3984 = vpop.f32.mrb[0].mxu0
    %v3985 = vpop.f32.mrb[0].mxu0
    %v3986 = vadd.f32 0.0, %v3985
    %v3987 = vpop.f32.mrb[0].mxu0
    %3988 = vmatprep.mubr.bf16.mxu0 0
    %3989 = vmatmul.mubr.bf16.gmra.mrb[0].mxu0 %v3721
    %v3990 = vpop.f32.mrb[0].mxu0
    %v3991 = vadd.f32 0.0, %v3990
    %v3992 = vpop.f32.mrb[0].mxu0
    %v3993 = vpop.f32.mrb[0].mxu0
    %v3994 = vadd.f32 0.0, %v3993
    %v3995 = vpop.f32.mrb[0].mxu0
    %3996 = vmatprep.mubr.bf16.mxu0 0
    %3997 = vmatmul.mubr.bf16.gmra.mrb[0].mxu0 %v3724
    %v3998 = vpop.f32.mrb[0].mxu0
    %v3999 = vadd.f32 0.0, %v3998
    %v4000 = vpop.f32.mrb[0].mxu0
    %v4001 = vpop.f32.mrb[0].mxu0
    %v4002 = vadd.f32 0.0, %v4001
    %v4003 = vpop.f32.mrb[0].mxu0
    %4004 = vmatprep.mubr.bf16.mxu0 0
    %4005 = vmatmul.mubr.bf16.gmra.mrb[0].mxu0 %v3727
    %v4006 = vpop.f32.mrb[0].mxu0
    %v4007 = vadd.f32 0.0, %v4006
    %v4008 = vpop.f32.mrb[0].mxu0
    %v4009 = vpop.f32.mrb[0].mxu0
    %v4010 = vadd.f32 0.0, %v4009
    %v4011 = vpop.f32.mrb[0].mxu0
    %4012 = vmatprep.mubr.bf16.mxu0 0
    %4013 = vmatmul.mubr.bf16.gmra.mrb[0].mxu0 %v3730
    %v4014 = vpop.f32.mrb[0].mxu0
    %v4015 = vadd.f32 0.0, %v4014
    %v4016 = vpop.f32.mrb[0].mxu0
    %v4017 = vpop.f32.mrb[0].mxu0
    %v4018 = vadd.f32 0.0, %v4017
    %v4019 = vpop.f32.mrb[0].mxu0
    %4020 = vdwg.mxu0
    %v4021 = vadd.f32 %v3459, %v3767
    %v4022 = vadd.f32 %v3460, %v3770
    %v4023 = vadd.f32 %v3461, %v3775
    %v4024 = vadd.f32 %v3462, %v3778
    %v4025 = vadd.f32 %v3463, %v3783
    %v4026 = vadd.f32 %v3464, %v3786
    %v4027 = vadd.f32 %v3465, %v3791
    %v4028 = vadd.f32 %v3466, %v3794
    %v4029 = vadd.f32 %v3467, %v3799
    %v4030 = vadd.f32 %v3468, %v3802
    %v4031 = vadd.f32 %v3469, %v3807
    %v4032 = vadd.f32 %v3470, %v3810
    %v4033 = vadd.f32 %v3471, %v3815
    %v4034 = vadd.f32 %v3472, %v3818
    %v4035 = vadd.f32 %v3473, %v3823
    %v4036 = vadd.f32 %v3474, %v3826
    %v4037 = vadd.f32 %v3475, %v3831
    %v4038 = vadd.f32 %v3476, %v3834
    %v4039 = vadd.f32 %v3477, %v3839
    %v4040 = vadd.f32 %v3478, %v3842
    %v4041 = vadd.f32 %v3479, %v3847
    %v4042 = vadd.f32 %v3480, %v3850
    %v4043 = vadd.f32 %v3481, %v3855
    %v4044 = vadd.f32 %v3482, %v3858
    %v4045 = vadd.f32 %v3483, %v3863
    %v4046 = vadd.f32 %v3484, %v3866
    %v4047 = vadd.f32 %v3485, %v3871
    %v4048 = vadd.f32 %v3486, %v3874
    %v4049 = vadd.f32 %v3487, %v3879
    %v4050 = vadd.f32 %v3488, %v3882
    %v4051 = vadd.f32 %v3489, %v3887
    %v4052 = vadd.f32 %v3490, %v3890
    %v4053 = vadd.f32 %v3491, %v3895
    %v4054 = vadd.f32 %v3492, %v3898
    %v4055 = vadd.f32 %v3493, %v3903
    %v4056 = vadd.f32 %v3494, %v3906
    %v4057 = vadd.f32 %v3495, %v3911
    %v4058 = vadd.f32 %v3496, %v3914
    %v4059 = vadd.f32 %v3497, %v3919
    %v4060 = vadd.f32 %v3498, %v3922
    %v4061 = vadd.f32 %v3499, %v3927
    %v4062 = vadd.f32 %v3500, %v3930
    %v4063 = vadd.f32 %v3501, %v3935
    %v4064 = vadd.f32 %v3502, %v3938
    %v4065 = vadd.f32 %v3503, %v3943
    %v4066 = vadd.f32 %v3504, %v3946
    %v4067 = vadd.f32 %v3505, %v3951
    %v4068 = vadd.f32 %v3506, %v3954
    %v4069 = vadd.f32 %v3507, %v3959
    %v4070 = vadd.f32 %v3508, %v3962
    %v4071 = vadd.f32 %v3509, %v3967
    %v4072 = vadd.f32 %v3510, %v3970
    %v4073 = vadd.f32 %v3511, %v3975
    %v4074 = vadd.f32 %v3512, %v3978
    %v4075 = vadd.f32 %v3513, %v3983
    %v4076 = vadd.f32 %v3514, %v3986
    %v4077 = vadd.f32 %v3515, %v3991
    %v4078 = vadd.f32 %v3516, %v3994
    %v4079 = vadd.f32 %v3517, %v3999
    %v4080 = vadd.f32 %v3518, %v4002
    %v4081 = vadd.f32 %v3519, %v4007
    %v4082 = vadd.f32 %v3520, %v4010
    %v4083 = vadd.f32 %v3521, %v4015
    %v4084 = vadd.f32 %v3522, %v4018
    %v4085 = vld [vmem:[%s1339 + $0x2] sm:$0xff]
    %v4086 = vld [vmem:[%s1339 + $0xa] sm:$0xff]
    %v4087 = vld [vmem:[%s1339 + $0x1a] sm:$0xff]
    %v4088 = vld [vmem:[%s1339 + $0x22] sm:$0xff]
    %v4089 = vld [vmem:[%s1339 + $0x32] sm:$0xff]
    %v4090 = vld [vmem:[%s1339 + $0x3a] sm:$0xff]
    %v4091 = vld [vmem:[%s1339 + $0x4a] sm:$0xff]
    %v4092 = vld [vmem:[%s1339 + $0x52] sm:$0xff]
    %v4093 = vld [vmem:[%s1339 + $0x62] sm:$0xff]
    %v4094 = vld [vmem:[%s1339 + $0x6a] sm:$0xff]
    %v4095 = vld [vmem:[%s1339 + $0x7a] sm:$0xff]
    %v4096 = vld [vmem:[%s1339 + $0x82] sm:$0xff]
    %v4097 = vld [vmem:[%s1339 + $0x92] sm:$0xff]
    %v4098 = vld [vmem:[%s1339 + $0x9a] sm:$0xff]
    %v4099 = vld [vmem:[%s1339 + $0xaa] sm:$0xff]
    %v4100 = vld [vmem:[%s1339 + $0xb2] sm:$0xff]
    %v4101 = vld [vmem:[%s1339 + $0xc2] sm:$0xff]
    %v4102 = vld [vmem:[%s1339 + $0xca] sm:$0xff]
    %v4103 = vld [vmem:[%s1339 + $0xda] sm:$0xff]
    %v4104 = vld [vmem:[%s1339 + $0xe2] sm:$0xff]
    %v4105 = vld [vmem:[%s1339 + $0xf2] sm:$0xff]
    %v4106 = vld [vmem:[%s1339 + $0xfa] sm:$0xff]
    %v4107 = vld [vmem:[%s1339 + $0x10a] sm:$0xff]
    %v4108 = vld [vmem:[%s1339 + $0x112] sm:$0xff]
    %v4109 = vld [vmem:[%s1339 + $0x122] sm:$0xff]
    %v4110 = vld [vmem:[%s1339 + $0x12a] sm:$0xff]
    %v4111 = vld [vmem:[%s1339 + $0x13a] sm:$0xff]
    %v4112 = vld [vmem:[%s1339 + $0x142] sm:$0xff]
    %v4113 = vld [vmem:[%s1339 + $0x152] sm:$0xff]
    %v4114 = vld [vmem:[%s1339 + $0x15a] sm:$0xff]
    %v4115 = vld [vmem:[%s1339 + $0x16a] sm:$0xff]
    %v4116 = vld [vmem:[%s1339 + $0x172] sm:$0xff]
    %v4117 = vld [vmem:[%s1339 + $0x1b2] sm:$0xff]
    %v4118 = vld [vmem:[%s1339 + $0x1ba] sm:$0xff]
    %v4119 = vld [vmem:[%s1339 + $0x1ca] sm:$0xff]
    %v4120 = vld [vmem:[%s1339 + $0x1d2] sm:$0xff]
    %v4121 = vld [vmem:[%s1339 + $0x1e2] sm:$0xff]
    %v4122 = vld [vmem:[%s1339 + $0x1ea] sm:$0xff]
    %v4123 = vld [vmem:[%s1339 + $0x1fa] sm:$0xff]
    %v4124 = vld [vmem:[%s1339 + $0x202] sm:$0xff]
    %v4125 = vld [vmem:[%s1339 + $0x212] sm:$0xff]
    %v4126 = vld [vmem:[%s1339 + $0x21a] sm:$0xff]
    %v4127 = vld [vmem:[%s1339 + $0x22a] sm:$0xff]
    %v4128 = vld [vmem:[%s1339 + $0x232] sm:$0xff]
    %v4129 = vld [vmem:[%s1339 + $0x242] sm:$0xff]
    %v4130 = vld [vmem:[%s1339 + $0x24a] sm:$0xff]
    %v4131 = vld [vmem:[%s1339 + $0x25a] sm:$0xff]
    %v4132 = vld [vmem:[%s1339 + $0x262] sm:$0xff]
    %v4133 = vld [vmem:[%s1339 + $0x272] sm:$0xff]
    %v4134 = vld [vmem:[%s1339 + $0x27a] sm:$0xff]
    %v4135 = vld [vmem:[%s1339 + $0x28a] sm:$0xff]
    %v4136 = vld [vmem:[%s1339 + $0x292] sm:$0xff]
    %v4137 = vld [vmem:[%s1339 + $0x2a2] sm:$0xff]
    %v4138 = vld [vmem:[%s1339 + $0x2aa] sm:$0xff]
    %v4139 = vld [vmem:[%s1339 + $0x2ba] sm:$0xff]
    %v4140 = vld [vmem:[%s1339 + $0x2c2] sm:$0xff]
    %v4141 = vld [vmem:[%s1339 + $0x2d2] sm:$0xff]
    %v4142 = vld [vmem:[%s1339 + $0x2da] sm:$0xff]
    %v4143 = vld [vmem:[%s1339 + $0x2ea] sm:$0xff]
    %v4144 = vld [vmem:[%s1339 + $0x2f2] sm:$0xff]
    %v4145 = vld [vmem:[%s1339 + $0x302] sm:$0xff]
    %v4146 = vld [vmem:[%s1339 + $0x30a] sm:$0xff]
    %v4147 = vld [vmem:[%s1339 + $0x31a] sm:$0xff]
    %v4148 = vld [vmem:[%s1339 + $0x322] sm:$0xff]
    %v4149 = vpack.c.bf16 %v4086, %v4085
    %v4150 = vpack.c.bf16 %v4088, %v4087
    %v4151 = vpack.c.bf16 %v4090, %v4089
    %v4152 = vpack.c.bf16 %v4092, %v4091
    %v4153 = vpack.c.bf16 %v4094, %v4093
    %v4154 = vpack.c.bf16 %v4096, %v4095
    %v4155 = vpack.c.bf16 %v4098, %v4097
    %v4156 = vpack.c.bf16 %v4100, %v4099
    %v4157 = vpack.c.bf16 %v4102, %v4101
    %v4158 = vpack.c.bf16 %v4104, %v4103
    %v4159 = vpack.c.bf16 %v4106, %v4105
    %v4160 = vpack.c.bf16 %v4108, %v4107
    %v4161 = vpack.c.bf16 %v4110, %v4109
    %v4162 = vpack.c.bf16 %v4112, %v4111
    %v4163 = vpack.c.bf16 %v4114, %v4113
    %v4164 = vpack.c.bf16 %v4116, %v4115
    %v4165 = vpack.c.bf16 %v4118, %v4117
    %v4166 = vpack.c.bf16 %v4120, %v4119
    %v4167 = vpack.c.bf16 %v4122, %v4121
    %v4168 = vpack.c.bf16 %v4124, %v4123
    %v4169 = vpack.c.bf16 %v4126, %v4125
    %v4170 = vpack.c.bf16 %v4128, %v4127
    %v4171 = vpack.c.bf16 %v4130, %v4129
    %v4172 = vpack.c.bf16 %v4132, %v4131
    %v4173 = vpack.c.bf16 %v4134, %v4133
    %v4174 = vpack.c.bf16 %v4136, %v4135
    %v4175 = vpack.c.bf16 %v4138, %v4137
    %v4176 = vpack.c.bf16 %v4140, %v4139
    %v4177 = vpack.c.bf16 %v4142, %v4141
    %v4178 = vpack.c.bf16 %v4144, %v4143
    %v4179 = vpack.c.bf16 %v4146, %v4145
    %v4180 = vpack.c.bf16 %v4148, %v4147
    %s4181 = scalar_lea.vmem %s2, 80
    %v4182 = vld [vmem:[%s4181] sm:$0xf]
    %v4183 = vld [vmem:[%s4181 + $0x4] sm:$0xf]
    %v4184 = vld [vmem:[%s4181 + $0x8] sm:$0xf]
    %v4185 = vld [vmem:[%s4181 + $0xc] sm:$0xf]
    %v4190 = vunpack.c.l.b16 %v4182
    %v4191 = vunpack.c.l.b16 %v4183
    %v4192 = vunpack.c.l.b16 %v4184
    %v4193 = vunpack.c.l.b16 %v4185
    %v4194 = vpack.c.b16 %v4191, %v4190
    %v4195 = vpack.c.b16 %v4193, %v4192
    %v4199 = vsel %vm562, %v4149, 0
    %v4202 = vsel %vm562, %v4150, 0
    %v4205 = vsel %vm562, %v4151, 0
    %v4208 = vsel %vm562, %v4152, 0
    %v4211 = vsel %vm562, %v4153, 0
    %v4214 = vsel %vm562, %v4154, 0
    %v4217 = vsel %vm562, %v4155, 0
    %v4220 = vsel %vm562, %v4156, 0
    %v4223 = vsel %vm562, %v4157, 0
    %v4226 = vsel %vm562, %v4158, 0
    %v4229 = vsel %vm562, %v4159, 0
    %v4232 = vsel %vm562, %v4160, 0
    %v4235 = vsel %vm562, %v4161, 0
    %v4238 = vsel %vm562, %v4162, 0
    %v4241 = vsel %vm562, %v4163, 0
    %v4244 = vsel %vm562, %v4164, 0
    %v4247 = vsel %vm562, %v4165, 0
    %v4250 = vsel %vm562, %v4166, 0
    %v4253 = vsel %vm562, %v4167, 0
    %v4256 = vsel %vm562, %v4168, 0
    %v4259 = vsel %vm562, %v4169, 0
    %v4262 = vsel %vm562, %v4170, 0
    %v4265 = vsel %vm562, %v4171, 0
    %v4268 = vsel %vm562, %v4172, 0
    %v4271 = vsel %vm562, %v4173, 0
    %v4274 = vsel %vm562, %v4174, 0
    %v4277 = vsel %vm562, %v4175, 0
    %v4280 = vsel %vm562, %v4176, 0
    %v4283 = vsel %vm562, %v4177, 0
    %v4286 = vsel %vm562, %v4178, 0
    %v4289 = vsel %vm562, %v4179, 0
    %v4292 = vsel %vm562, %v4180, 0
    %4294 = vmatprep.subr.bf16.mxu0 0
    %4295 = vmatpush1.bf16.msra.mxu0 %v4194
    %4296 = vmatprep.subr.bf16.mxu0 0
    %4297 = vmatpush1.bf16.msra.mxu0 %v4195
    %4298 = vmatprep.subr.bf16.mxu0 0
    %4299 = vmatpush1.bf16.msra.mxu0 0
    %4300 = vmatprep.subr.bf16.mxu0 0
    %4301 = vmatpush1.bf16.msra.mxu0 0
    %4302 = vmatprep.subr.bf16.mxu0 0
    %4303 = vmatpush1.bf16.msra.mxu0 0
    %4304 = vmatprep.subr.bf16.mxu0 0
    %4305 = vmatpush1.bf16.msra.mxu0 0
    %4306 = vmatprep.subr.bf16.mxu0 0
    %4307 = vmatpush1.bf16.msra.mxu0 0
    %4308 = vmatprep.subr.bf16.mxu0 0
    %4309 = vmatpush1.bf16.msra.mxu0 0
    %4310 = vmatprep.subr.bf16.mxu0 0
    %4311 = vmatpush1.bf16.msra.mxu0 0
    %4312 = vmatprep.subr.bf16.mxu0 0
    %4313 = vmatpush1.bf16.msra.mxu0 0
    %4314 = vmatprep.subr.bf16.mxu0 0
    %4315 = vmatpush1.bf16.msra.mxu0 0
    %4316 = vmatprep.subr.bf16.mxu0 0
    %4317 = vmatpush1.bf16.msra.mxu0 0
    %4318 = vmatprep.subr.bf16.mxu0 0
    %4319 = vmatpush1.bf16.msra.mxu0 0
    %4320 = vmatprep.subr.bf16.mxu0 0
    %4321 = vmatpush1.bf16.msra.mxu0 0
    %4322 = vmatprep.subr.bf16.mxu0 0
    %4323 = vmatpush1.bf16.msra.mxu0 0
    %4324 = vmatprep.subr.bf16.mxu0 0
    %4325 = vmatpush1.bf16.msra.mxu0 0
    %4326 = vmatprep.mubr.bf16.mxu0 0
    %4327 = vmatmul.mubr.bf16.gmra.mrb[0].mxu0 %v4199
    %v4328 = vpop.f32.mrb[0].mxu0
    %v4329 = vadd.f32 0.0, %v4328
    %v4330 = vpop.f32.mrb[0].mxu0
    %v4331 = vpop.f32.mrb[0].mxu0
    %v4332 = vadd.f32 0.0, %v4331
    %v4333 = vpop.f32.mrb[0].mxu0
    %4334 = vmatprep.mubr.bf16.mxu0 0
    %4335 = vmatmul.mubr.bf16.gmra.mrb[0].mxu0 %v4202
    %v4336 = vpop.f32.mrb[0].mxu0
    %v4337 = vadd.f32 0.0, %v4336
    %v4338 = vpop.f32.mrb[0].mxu0
    %v4339 = vpop.f32.mrb[0].mxu0
    %v4340 = vadd.f32 0.0, %v4339
    %v4341 = vpop.f32.mrb[0].mxu0
    %4342 = vmatprep.mubr.bf16.mxu0 0
    %4343 = vmatmul.mubr.bf16.gmra.mrb[0].mxu0 %v4205
    %v4344 = vpop.f32.mrb[0].mxu0
    %v4345 = vadd.f32 0.0, %v4344
    %v4346 = vpop.f32.mrb[0].mxu0
    %v4347 = vpop.f32.mrb[0].mxu0
    %v4348 = vadd.f32 0.0, %v4347
    %v4349 = vpop.f32.mrb[0].mxu0
    %4350 = vmatprep.mubr.bf16.mxu0 0
    %4351 = vmatmul.mubr.bf16.gmra.mrb[0].mxu0 %v4208
    %v4352 = vpop.f32.mrb[0].mxu0
    %v4353 = vadd.f32 0.0, %v4352
    %v4354 = vpop.f32.mrb[0].mxu0
    %v4355 = vpop.f32.mrb[0].mxu0
    %v4356 = vadd.f32 0.0, %v4355
    %v4357 = vpop.f32.mrb[0].mxu0
    %4358 = vmatprep.mubr.bf16.mxu0 0
    %4359 = vmatmul.mubr.bf16.gmra.mrb[0].mxu0 %v4211
    %v4360 = vpop.f32.mrb[0].mxu0
    %v4361 = vadd.f32 0.0, %v4360
    %v4362 = vpop.f32.mrb[0].mxu0
    %v4363 = vpop.f32.mrb[0].mxu0
    %v4364 = vadd.f32 0.0, %v4363
    %v4365 = vpop.f32.mrb[0].mxu0
    %4366 = vmatprep.mubr.bf16.mxu0 0
    %4367 = vmatmul.mubr.bf16.gmra.mrb[0].mxu0 %v4214
    %v4368 = vpop.f32.mrb[0].mxu0
    %v4369 = vadd.f32 0.0, %v4368
    %v4370 = vpop.f32.mrb[0].mxu0
    %v4371 = vpop.f32.mrb[0].mxu0
    %v4372 = vadd.f32 0.0, %v4371
    %v4373 = vpop.f32.mrb[0].mxu0
    %4374 = vmatprep.mubr.bf16.mxu0 0
    %4375 = vmatmul.mubr.bf16.gmra.mrb[0].mxu0 %v4217
    %v4376 = vpop.f32.mrb[0].mxu0
    %v4377 = vadd.f32 0.0, %v4376
    %v4378 = vpop.f32.mrb[0].mxu0
    %v4379 = vpop.f32.mrb[0].mxu0
    %v4380 = vadd.f32 0.0, %v4379
    %v4381 = vpop.f32.mrb[0].mxu0
    %4382 = vmatprep.mubr.bf16.mxu0 0
    %4383 = vmatmul.mubr.bf16.gmra.mrb[0].mxu0 %v4220
    %v4384 = vpop.f32.mrb[0].mxu0
    %v4385 = vadd.f32 0.0, %v4384
    %v4386 = vpop.f32.mrb[0].mxu0
    %v4387 = vpop.f32.mrb[0].mxu0
    %v4388 = vadd.f32 0.0, %v4387
    %v4389 = vpop.f32.mrb[0].mxu0
    %4390 = vmatprep.mubr.bf16.mxu0 0
    %4391 = vmatmul.mubr.bf16.gmra.mrb[0].mxu0 %v4223
    %v4392 = vpop.f32.mrb[0].mxu0
    %v4393 = vadd.f32 0.0, %v4392
    %v4394 = vpop.f32.mrb[0].mxu0
    %v4395 = vpop.f32.mrb[0].mxu0
    %v4396 = vadd.f32 0.0, %v4395
    %v4397 = vpop.f32.mrb[0].mxu0
    %4398 = vmatprep.mubr.bf16.mxu0 0
    %4399 = vmatmul.mubr.bf16.gmra.mrb[0].mxu0 %v4226
    %v4400 = vpop.f32.mrb[0].mxu0
    %v4401 = vadd.f32 0.0, %v4400
    %v4402 = vpop.f32.mrb[0].mxu0
    %v4403 = vpop.f32.mrb[0].mxu0
    %v4404 = vadd.f32 0.0, %v4403
    %v4405 = vpop.f32.mrb[0].mxu0
    %4406 = vmatprep.mubr.bf16.mxu0 0
    %4407 = vmatmul.mubr.bf16.gmra.mrb[0].mxu0 %v4229
    %v4408 = vpop.f32.mrb[0].mxu0
    %v4409 = vadd.f32 0.0, %v4408
    %v4410 = vpop.f32.mrb[0].mxu0
    %v4411 = vpop.f32.mrb[0].mxu0
    %v4412 = vadd.f32 0.0, %v4411
    %v4413 = vpop.f32.mrb[0].mxu0
    %4414 = vmatprep.mubr.bf16.mxu0 0
    %4415 = vmatmul.mubr.bf16.gmra.mrb[0].mxu0 %v4232
    %v4416 = vpop.f32.mrb[0].mxu0
    %v4417 = vadd.f32 0.0, %v4416
    %v4418 = vpop.f32.mrb[0].mxu0
    %v4419 = vpop.f32.mrb[0].mxu0
    %v4420 = vadd.f32 0.0, %v4419
    %v4421 = vpop.f32.mrb[0].mxu0
    %4422 = vmatprep.mubr.bf16.mxu0 0
    %4423 = vmatmul.mubr.bf16.gmra.mrb[0].mxu0 %v4235
    %v4424 = vpop.f32.mrb[0].mxu0
    %v4425 = vadd.f32 0.0, %v4424
    %v4426 = vpop.f32.mrb[0].mxu0
    %v4427 = vpop.f32.mrb[0].mxu0
    %v4428 = vadd.f32 0.0, %v4427
    %v4429 = vpop.f32.mrb[0].mxu0
    %4430 = vmatprep.mubr.bf16.mxu0 0
    %4431 = vmatmul.mubr.bf16.gmra.mrb[0].mxu0 %v4238
    %v4432 = vpop.f32.mrb[0].mxu0
    %v4433 = vadd.f32 0.0, %v4432
    %v4434 = vpop.f32.mrb[0].mxu0
    %v4435 = vpop.f32.mrb[0].mxu0
    %v4436 = vadd.f32 0.0, %v4435
    %v4437 = vpop.f32.mrb[0].mxu0
    %4438 = vmatprep.mubr.bf16.mxu0 0
    %4439 = vmatmul.mubr.bf16.gmra.mrb[0].mxu0 %v4241
    %v4440 = vpop.f32.mrb[0].mxu0
    %v4441 = vadd.f32 0.0, %v4440
    %v4442 = vpop.f32.mrb[0].mxu0
    %v4443 = vpop.f32.mrb[0].mxu0
    %v4444 = vadd.f32 0.0, %v4443
    %v4445 = vpop.f32.mrb[0].mxu0
    %4446 = vmatprep.mubr.bf16.mxu0 0
    %4447 = vmatmul.mubr.bf16.gmra.mrb[0].mxu0 %v4244
    %v4448 = vpop.f32.mrb[0].mxu0
    %v4449 = vadd.f32 0.0, %v4448
    %v4450 = vpop.f32.mrb[0].mxu0
    %v4451 = vpop.f32.mrb[0].mxu0
    %v4452 = vadd.f32 0.0, %v4451
    %v4453 = vpop.f32.mrb[0].mxu0
    %4454 = vmatprep.mubr.bf16.mxu0 0
    %4455 = vmatmul.mubr.bf16.gmra.mrb[0].mxu0 %v4247
    %v4456 = vpop.f32.mrb[0].mxu0
    %v4457 = vadd.f32 0.0, %v4456
    %v4458 = vpop.f32.mrb[0].mxu0
    %v4459 = vpop.f32.mrb[0].mxu0
    %v4460 = vadd.f32 0.0, %v4459
    %v4461 = vpop.f32.mrb[0].mxu0
    %4462 = vmatprep.mubr.bf16.mxu0 0
    %4463 = vmatmul.mubr.bf16.gmra.mrb[0].mxu0 %v4250
    %v4464 = vpop.f32.mrb[0].mxu0
    %v4465 = vadd.f32 0.0, %v4464
    %v4466 = vpop.f32.mrb[0].mxu0
    %v4467 = vpop.f32.mrb[0].mxu0
    %v4468 = vadd.f32 0.0, %v4467
    %v4469 = vpop.f32.mrb[0].mxu0
    %4470 = vmatprep.mubr.bf16.mxu0 0
    %4471 = vmatmul.mubr.bf16.gmra.mrb[0].mxu0 %v4253
    %v4472 = vpop.f32.mrb[0].mxu0
    %v4473 = vadd.f32 0.0, %v4472
    %v4474 = vpop.f32.mrb[0].mxu0
    %v4475 = vpop.f32.mrb[0].mxu0
    %v4476 = vadd.f32 0.0, %v4475
    %v4477 = vpop.f32.mrb[0].mxu0
    %4478 = vmatprep.mubr.bf16.mxu0 0
    %4479 = vmatmul.mubr.bf16.gmra.mrb[0].mxu0 %v4256
    %v4480 = vpop.f32.mrb[0].mxu0
    %v4481 = vadd.f32 0.0, %v4480
    %v4482 = vpop.f32.mrb[0].mxu0
    %v4483 = vpop.f32.mrb[0].mxu0
    %v4484 = vadd.f32 0.0, %v4483
    %v4485 = vpop.f32.mrb[0].mxu0
    %4486 = vmatprep.mubr.bf16.mxu0 0
    %4487 = vmatmul.mubr.bf16.gmra.mrb[0].mxu0 %v4259
    %v4488 = vpop.f32.mrb[0].mxu0
    %v4489 = vadd.f32 0.0, %v4488
    %v4490 = vpop.f32.mrb[0].mxu0
    %v4491 = vpop.f32.mrb[0].mxu0
    %v4492 = vadd.f32 0.0, %v4491
    %v4493 = vpop.f32.mrb[0].mxu0
    %4494 = vmatprep.mubr.bf16.mxu0 0
    %4495 = vmatmul.mubr.bf16.gmra.mrb[0].mxu0 %v4262
    %v4496 = vpop.f32.mrb[0].mxu0
    %v4497 = vadd.f32 0.0, %v4496
    %v4498 = vpop.f32.mrb[0].mxu0
    %v4499 = vpop.f32.mrb[0].mxu0
    %v4500 = vadd.f32 0.0, %v4499
    %v4501 = vpop.f32.mrb[0].mxu0
    %4502 = vmatprep.mubr.bf16.mxu0 0
    %4503 = vmatmul.mubr.bf16.gmra.mrb[0].mxu0 %v4265
    %v4504 = vpop.f32.mrb[0].mxu0
    %v4505 = vadd.f32 0.0, %v4504
    %v4506 = vpop.f32.mrb[0].mxu0
    %v4507 = vpop.f32.mrb[0].mxu0
    %v4508 = vadd.f32 0.0, %v4507
    %v4509 = vpop.f32.mrb[0].mxu0
    %4510 = vmatprep.mubr.bf16.mxu0 0
    %4511 = vmatmul.mubr.bf16.gmra.mrb[0].mxu0 %v4268
    %v4512 = vpop.f32.mrb[0].mxu0
    %v4513 = vadd.f32 0.0, %v4512
    %v4514 = vpop.f32.mrb[0].mxu0
    %v4515 = vpop.f32.mrb[0].mxu0
    %v4516 = vadd.f32 0.0, %v4515
    %v4517 = vpop.f32.mrb[0].mxu0
    %4518 = vmatprep.mubr.bf16.mxu0 0
    %4519 = vmatmul.mubr.bf16.gmra.mrb[0].mxu0 %v4271
    %v4520 = vpop.f32.mrb[0].mxu0
    %v4521 = vadd.f32 0.0, %v4520
    %v4522 = vpop.f32.mrb[0].mxu0
    %v4523 = vpop.f32.mrb[0].mxu0
    %v4524 = vadd.f32 0.0, %v4523
    %v4525 = vpop.f32.mrb[0].mxu0
    %4526 = vmatprep.mubr.bf16.mxu0 0
    %4527 = vmatmul.mubr.bf16.gmra.mrb[0].mxu0 %v4274
    %v4528 = vpop.f32.mrb[0].mxu0
    %v4529 = vadd.f32 0.0, %v4528
    %v4530 = vpop.f32.mrb[0].mxu0
    %v4531 = vpop.f32.mrb[0].mxu0
    %v4532 = vadd.f32 0.0, %v4531
    %v4533 = vpop.f32.mrb[0].mxu0
    %4534 = vmatprep.mubr.bf16.mxu0 0
    %4535 = vmatmul.mubr.bf16.gmra.mrb[0].mxu0 %v4277
    %v4536 = vpop.f32.mrb[0].mxu0
    %v4537 = vadd.f32 0.0, %v4536
    %v4538 = vpop.f32.mrb[0].mxu0
    %v4539 = vpop.f32.mrb[0].mxu0
    %v4540 = vadd.f32 0.0, %v4539
    %v4541 = vpop.f32.mrb[0].mxu0
    %4542 = vmatprep.mubr.bf16.mxu0 0
    %4543 = vmatmul.mubr.bf16.gmra.mrb[0].mxu0 %v4280
    %v4544 = vpop.f32.mrb[0].mxu0
    %v4545 = vadd.f32 0.0, %v4544
    %v4546 = vpop.f32.mrb[0].mxu0
    %v4547 = vpop.f32.mrb[0].mxu0
    %v4548 = vadd.f32 0.0, %v4547
    %v4549 = vpop.f32.mrb[0].mxu0
    %4550 = vmatprep.mubr.bf16.mxu0 0
    %4551 = vmatmul.mubr.bf16.gmra.mrb[0].mxu0 %v4283
    %v4552 = vpop.f32.mrb[0].mxu0
    %v4553 = vadd.f32 0.0, %v4552
    %v4554 = vpop.f32.mrb[0].mxu0
    %v4555 = vpop.f32.mrb[0].mxu0
    %v4556 = vadd.f32 0.0, %v4555
    %v4557 = vpop.f32.mrb[0].mxu0
    %4558 = vmatprep.mubr.bf16.mxu0 0
    %4559 = vmatmul.mubr.bf16.gmra.mrb[0].mxu0 %v4286
    %v4560 = vpop.f32.mrb[0].mxu0
    %v4561 = vadd.f32 0.0, %v4560
    %v4562 = vpop.f32.mrb[0].mxu0
    %v4563 = vpop.f32.mrb[0].mxu0
    %v4564 = vadd.f32 0.0, %v4563
    %v4565 = vpop.f32.mrb[0].mxu0
    %4566 = vmatprep.mubr.bf16.mxu0 0
    %4567 = vmatmul.mubr.bf16.gmra.mrb[0].mxu0 %v4289
    %v4568 = vpop.f32.mrb[0].mxu0
    %v4569 = vadd.f32 0.0, %v4568
    %v4570 = vpop.f32.mrb[0].mxu0
    %v4571 = vpop.f32.mrb[0].mxu0
    %v4572 = vadd.f32 0.0, %v4571
    %v4573 = vpop.f32.mrb[0].mxu0
    %4574 = vmatprep.mubr.bf16.mxu0 0
    %4575 = vmatmul.mubr.bf16.gmra.mrb[0].mxu0 %v4292
    %v4576 = vpop.f32.mrb[0].mxu0
    %v4577 = vadd.f32 0.0, %v4576
    %v4578 = vpop.f32.mrb[0].mxu0
    %v4579 = vpop.f32.mrb[0].mxu0
    %v4580 = vadd.f32 0.0, %v4579
    %v4581 = vpop.f32.mrb[0].mxu0
    %4582 = vdwg.mxu0
    %v4583 = vadd.f32 %v4021, %v4329
    %v4584 = vadd.f32 %v4022, %v4332
    %v4585 = vadd.f32 %v4023, %v4337
    %v4586 = vadd.f32 %v4024, %v4340
    %v4587 = vadd.f32 %v4025, %v4345
    %v4588 = vadd.f32 %v4026, %v4348
    %v4589 = vadd.f32 %v4027, %v4353
    %v4590 = vadd.f32 %v4028, %v4356
    %v4591 = vadd.f32 %v4029, %v4361
    %v4592 = vadd.f32 %v4030, %v4364
    %v4593 = vadd.f32 %v4031, %v4369
    %v4594 = vadd.f32 %v4032, %v4372
    %v4595 = vadd.f32 %v4033, %v4377
    %v4596 = vadd.f32 %v4034, %v4380
    %v4597 = vadd.f32 %v4035, %v4385
    %v4598 = vadd.f32 %v4036, %v4388
    %v4599 = vadd.f32 %v4037, %v4393
    %v4600 = vadd.f32 %v4038, %v4396
    %v4601 = vadd.f32 %v4039, %v4401
    %v4602 = vadd.f32 %v4040, %v4404
    %v4603 = vadd.f32 %v4041, %v4409
    %v4604 = vadd.f32 %v4042, %v4412
    %v4605 = vadd.f32 %v4043, %v4417
    %v4606 = vadd.f32 %v4044, %v4420
    %v4607 = vadd.f32 %v4045, %v4425
    %v4608 = vadd.f32 %v4046, %v4428
    %v4609 = vadd.f32 %v4047, %v4433
    %v4610 = vadd.f32 %v4048, %v4436
    %v4611 = vadd.f32 %v4049, %v4441
    %v4612 = vadd.f32 %v4050, %v4444
    %v4613 = vadd.f32 %v4051, %v4449
    %v4614 = vadd.f32 %v4052, %v4452
    %v4615 = vadd.f32 %v4053, %v4457
    %v4616 = vadd.f32 %v4054, %v4460
    %v4617 = vadd.f32 %v4055, %v4465
    %v4618 = vadd.f32 %v4056, %v4468
    %v4619 = vadd.f32 %v4057, %v4473
    %v4620 = vadd.f32 %v4058, %v4476
    %v4621 = vadd.f32 %v4059, %v4481
    %v4622 = vadd.f32 %v4060, %v4484
    %v4623 = vadd.f32 %v4061, %v4489
    %v4624 = vadd.f32 %v4062, %v4492
    %v4625 = vadd.f32 %v4063, %v4497
    %v4626 = vadd.f32 %v4064, %v4500
    %v4627 = vadd.f32 %v4065, %v4505
    %v4628 = vadd.f32 %v4066, %v4508
    %v4629 = vadd.f32 %v4067, %v4513
    %v4630 = vadd.f32 %v4068, %v4516
    %v4631 = vadd.f32 %v4069, %v4521
    %v4632 = vadd.f32 %v4070, %v4524
    %v4633 = vadd.f32 %v4071, %v4529
    %v4634 = vadd.f32 %v4072, %v4532
    %v4635 = vadd.f32 %v4073, %v4537
    %v4636 = vadd.f32 %v4074, %v4540
    %v4637 = vadd.f32 %v4075, %v4545
    %v4638 = vadd.f32 %v4076, %v4548
    %v4639 = vadd.f32 %v4077, %v4553
    %v4640 = vadd.f32 %v4078, %v4556
    %v4641 = vadd.f32 %v4079, %v4561
    %v4642 = vadd.f32 %v4080, %v4564
    %v4643 = vadd.f32 %v4081, %v4569
    %v4644 = vadd.f32 %v4082, %v4572
    %v4645 = vadd.f32 %v4083, %v4577
    %v4646 = vadd.f32 %v4084, %v4580
    %s4647 = scalar_lea.vmem [#allocation2], 48
    %v4648 = vld [vmem:[%s4647] sm:$0xff]
    %v4649 = vld [vmem:[%s4647 + $0x8] sm:$0xff]
    %v4650 = vld [vmem:[%s4647 + $0x18] sm:$0xff]
    %v4651 = vld [vmem:[%s4647 + $0x20] sm:$0xff]
    %v4652 = vld [vmem:[%s4647 + $0x30] sm:$0xff]
    %v4653 = vld [vmem:[%s4647 + $0x38] sm:$0xff]
    %v4654 = vld [vmem:[%s4647 + $0x48] sm:$0xff]
    %v4655 = vld [vmem:[%s4647 + $0x50] sm:$0xff]
    %v4656 = vld [vmem:[%s4647 + $0x60] sm:$0xff]
    %v4657 = vld [vmem:[%s4647 + $0x68] sm:$0xff]
    %v4658 = vld [vmem:[%s4647 + $0x78] sm:$0xff]
    %v4659 = vld [vmem:[%s4647 + $0x80] sm:$0xff]
    %v4660 = vld [vmem:[%s4647 + $0x90] sm:$0xff]
    %v4661 = vld [vmem:[%s4647 + $0x98] sm:$0xff]
    %v4662 = vld [vmem:[%s4647 + $0xa8] sm:$0xff]
    %v4663 = vld [vmem:[%s4647 + $0xb0] sm:$0xff]
    %v4664 = vld [vmem:[%s4647 + $0xc0] sm:$0xff]
    %v4665 = vld [vmem:[%s4647 + $0xc8] sm:$0xff]
    %v4666 = vld [vmem:[%s4647 + $0xd8] sm:$0xff]
    %v4667 = vld [vmem:[%s4647 + $0xe0] sm:$0xff]
    %v4668 = vld [vmem:[%s4647 + $0xf0] sm:$0xff]
    %v4669 = vld [vmem:[%s4647 + $0xf8] sm:$0xff]
    %v4670 = vld [vmem:[%s4647 + $0x108] sm:$0xff]
    %v4671 = vld [vmem:[%s4647 + $0x110] sm:$0xff]
    %v4672 = vld [vmem:[%s4647 + $0x120] sm:$0xff]
    %v4673 = vld [vmem:[%s4647 + $0x128] sm:$0xff]
    %v4674 = vld [vmem:[%s4647 + $0x138] sm:$0xff]
    %v4675 = vld [vmem:[%s4647 + $0x140] sm:$0xff]
    %v4676 = vld [vmem:[%s4647 + $0x150] sm:$0xff]
    %v4677 = vld [vmem:[%s4647 + $0x158] sm:$0xff]
    %v4678 = vld [vmem:[%s4647 + $0x168] sm:$0xff]
    %v4679 = vld [vmem:[%s4647 + $0x170] sm:$0xff]
    %v4680 = vld [vmem:[%s4647 + $0x1b0] sm:$0xff]
    %v4681 = vld [vmem:[%s4647 + $0x1b8] sm:$0xff]
    %v4682 = vld [vmem:[%s4647 + $0x1c8] sm:$0xff]
    %v4683 = vld [vmem:[%s4647 + $0x1d0] sm:$0xff]
    %v4684 = vld [vmem:[%s4647 + $0x1e0] sm:$0xff]
    %v4685 = vld [vmem:[%s4647 + $0x1e8] sm:$0xff]
    %v4686 = vld [vmem:[%s4647 + $0x1f8] sm:$0xff]
    %v4687 = vld [vmem:[%s4647 + $0x200] sm:$0xff]
    %v4688 = vld [vmem:[%s4647 + $0x210] sm:$0xff]
    %v4689 = vld [vmem:[%s4647 + $0x218] sm:$0xff]
    %v4690 = vld [vmem:[%s4647 + $0x228] sm:$0xff]
    %v4691 = vld [vmem:[%s4647 + $0x230] sm:$0xff]
    %v4692 = vld [vmem:[%s4647 + $0x240] sm:$0xff]
    %v4693 = vld [vmem:[%s4647 + $0x248] sm:$0xff]
    %v4694 = vld [vmem:[%s4647 + $0x258] sm:$0xff]
    %v4695 = vld [vmem:[%s4647 + $0x260] sm:$0xff]
    %v4696 = vld [vmem:[%s4647 + $0x270] sm:$0xff]
    %v4697 = vld [vmem:[%s4647 + $0x278] sm:$0xff]
    %v4698 = vld [vmem:[%s4647 + $0x288] sm:$0xff]
    %v4699 = vld [vmem:[%s4647 + $0x290] sm:$0xff]
    %v4700 = vld [vmem:[%s4647 + $0x2a0] sm:$0xff]
    %v4701 = vld [vmem:[%s4647 + $0x2a8] sm:$0xff]
    %v4702 = vld [vmem:[%s4647 + $0x2b8] sm:$0xff]
    %v4703 = vld [vmem:[%s4647 + $0x2c0] sm:$0xff]
    %v4704 = vld [vmem:[%s4647 + $0x2d0] sm:$0xff]
    %v4705 = vld [vmem:[%s4647 + $0x2d8] sm:$0xff]
    %v4706 = vld [vmem:[%s4647 + $0x2e8] sm:$0xff]
    %v4707 = vld [vmem:[%s4647 + $0x2f0] sm:$0xff]
    %v4708 = vld [vmem:[%s4647 + $0x300] sm:$0xff]
    %v4709 = vld [vmem:[%s4647 + $0x308] sm:$0xff]
    %v4710 = vld [vmem:[%s4647 + $0x318] sm:$0xff]
    %v4711 = vld [vmem:[%s4647 + $0x320] sm:$0xff]
    %v4712 = vpack.c.bf16 %v4649, %v4648
    %v4713 = vpack.c.bf16 %v4651, %v4650
    %v4714 = vpack.c.bf16 %v4653, %v4652
    %v4715 = vpack.c.bf16 %v4655, %v4654
    %v4716 = vpack.c.bf16 %v4657, %v4656
    %v4717 = vpack.c.bf16 %v4659, %v4658
    %v4718 = vpack.c.bf16 %v4661, %v4660
    %v4719 = vpack.c.bf16 %v4663, %v4662
    %v4720 = vpack.c.bf16 %v4665, %v4664
    %v4721 = vpack.c.bf16 %v4667, %v4666
    %v4722 = vpack.c.bf16 %v4669, %v4668
    %v4723 = vpack.c.bf16 %v4671, %v4670
    %v4724 = vpack.c.bf16 %v4673, %v4672
    %v4725 = vpack.c.bf16 %v4675, %v4674
    %v4726 = vpack.c.bf16 %v4677, %v4676
    %v4727 = vpack.c.bf16 %v4679, %v4678
    %v4728 = vpack.c.bf16 %v4681, %v4680
    %v4729 = vpack.c.bf16 %v4683, %v4682
    %v4730 = vpack.c.bf16 %v4685, %v4684
    %v4731 = vpack.c.bf16 %v4687, %v4686
    %v4732 = vpack.c.bf16 %v4689, %v4688
    %v4733 = vpack.c.bf16 %v4691, %v4690
    %v4734 = vpack.c.bf16 %v4693, %v4692
    %v4735 = vpack.c.bf16 %v4695, %v4694
    %v4736 = vpack.c.bf16 %v4697, %v4696
    %v4737 = vpack.c.bf16 %v4699, %v4698
    %v4738 = vpack.c.bf16 %v4701, %v4700
    %v4739 = vpack.c.bf16 %v4703, %v4702
    %v4740 = vpack.c.bf16 %v4705, %v4704
    %v4741 = vpack.c.bf16 %v4707, %v4706
    %v4742 = vpack.c.bf16 %v4709, %v4708
    %v4743 = vpack.c.bf16 %v4711, %v4710
    %s4744 = scalar_lea.vmem %s2, 96
    %v4745 = vld [vmem:[%s4744] sm:$0xf]
    %v4746 = vld [vmem:[%s4744 + $0x4] sm:$0xf]
    %v4747 = vld [vmem:[%s4744 + $0x8] sm:$0xf]
    %v4748 = vld [vmem:[%s4744 + $0xc] sm:$0xf]
    %v4753 = vunpack.c.l.b16 %v4745
    %v4754 = vunpack.c.l.b16 %v4746
    %v4755 = vunpack.c.l.b16 %v4747
    %v4756 = vunpack.c.l.b16 %v4748
    %v4757 = vpack.c.b16 %v4754, %v4753
    %v4758 = vpack.c.b16 %v4756, %v4755
    %v4762 = vsel %vm562, %v4712, 0
    %v4765 = vsel %vm562, %v4713, 0
    %v4768 = vsel %vm562, %v4714, 0
    %v4771 = vsel %vm562, %v4715, 0
    %v4774 = vsel %vm562, %v4716, 0
    %v4777 = vsel %vm562, %v4717, 0
    %v4780 = vsel %vm562, %v4718, 0
    %v4783 = vsel %vm562, %v4719, 0
    %v4786 = vsel %vm562, %v4720, 0
    %v4789 = vsel %vm562, %v4721, 0
    %v4792 = vsel %vm562, %v4722, 0
    %v4795 = vsel %vm562, %v4723, 0
    %v4798 = vsel %vm562, %v4724, 0
    %v4801 = vsel %vm562, %v4725, 0
    %v4804 = vsel %vm562, %v4726, 0
    %v4807 = vsel %vm562, %v4727, 0
    %v4810 = vsel %vm562, %v4728, 0
    %v4813 = vsel %vm562, %v4729, 0
    %v4816 = vsel %vm562, %v4730, 0
    %v4819 = vsel %vm562, %v4731, 0
    %v4822 = vsel %vm562, %v4732, 0
    %v4825 = vsel %vm562, %v4733, 0
    %v4828 = vsel %vm562, %v4734, 0
    %v4831 = vsel %vm562, %v4735, 0
    %v4834 = vsel %vm562, %v4736, 0
    %v4837 = vsel %vm562, %v4737, 0
    %v4840 = vsel %vm562, %v4738, 0
    %v4843 = vsel %vm562, %v4739, 0
    %v4846 = vsel %vm562, %v4740, 0
    %v4849 = vsel %vm562, %v4741, 0
    %v4852 = vsel %vm562, %v4742, 0
    %v4855 = vsel %vm562, %v4743, 0
    %4857 = vmatprep.subr.bf16.mxu0 0
    %4858 = vmatpush1.bf16.msra.mxu0 %v4757
    %4859 = vmatprep.subr.bf16.mxu0 0
    %4860 = vmatpush1.bf16.msra.mxu0 %v4758
    %4861 = vmatprep.subr.bf16.mxu0 0
    %4862 = vmatpush1.bf16.msra.mxu0 0
    %4863 = vmatprep.subr.bf16.mxu0 0
    %4864 = vmatpush1.bf16.msra.mxu0 0
    %4865 = vmatprep.subr.bf16.mxu0 0
    %4866 = vmatpush1.bf16.msra.mxu0 0
    %4867 = vmatprep.subr.bf16.mxu0 0
    %4868 = vmatpush1.bf16.msra.mxu0 0
    %4869 = vmatprep.subr.bf16.mxu0 0
    %4870 = vmatpush1.bf16.msra.mxu0 0
    %4871 = vmatprep.subr.bf16.mxu0 0
    %4872 = vmatpush1.bf16.msra.mxu0 0
    %4873 = vmatprep.subr.bf16.mxu0 0
    %4874 = vmatpush1.bf16.msra.mxu0 0
    %4875 = vmatprep.subr.bf16.mxu0 0
    %4876 = vmatpush1.bf16.msra.mxu0 0
    %4877 = vmatprep.subr.bf16.mxu0 0
    %4878 = vmatpush1.bf16.msra.mxu0 0
    %4879 = vmatprep.subr.bf16.mxu0 0
    %4880 = vmatpush1.bf16.msra.mxu0 0
    %4881 = vmatprep.subr.bf16.mxu0 0
    %4882 = vmatpush1.bf16.msra.mxu0 0
    %4883 = vmatprep.subr.bf16.mxu0 0
    %4884 = vmatpush1.bf16.msra.mxu0 0
    %4885 = vmatprep.subr.bf16.mxu0 0
    %4886 = vmatpush1.bf16.msra.mxu0 0
    %4887 = vmatprep.subr.bf16.mxu0 0
    %4888 = vmatpush1.bf16.msra.mxu0 0
    %4889 = vmatprep.mubr.bf16.mxu0 0
    %4890 = vmatmul.mubr.bf16.gmra.mrb[0].mxu0 %v4762
    %v4891 = vpop.f32.mrb[0].mxu0
    %v4892 = vadd.f32 0.0, %v4891
    %v4893 = vpop.f32.mrb[0].mxu0
    %v4894 = vpop.f32.mrb[0].mxu0
    %v4895 = vadd.f32 0.0, %v4894
    %v4896 = vpop.f32.mrb[0].mxu0
    %4897 = vmatprep.mubr.bf16.mxu0 0
    %4898 = vmatmul.mubr.bf16.gmra.mrb[0].mxu0 %v4765
    %v4899 = vpop.f32.mrb[0].mxu0
    %v4900 = vadd.f32 0.0, %v4899
    %v4901 = vpop.f32.mrb[0].mxu0
    %v4902 = vpop.f32.mrb[0].mxu0
    %v4903 = vadd.f32 0.0, %v4902
    %v4904 = vpop.f32.mrb[0].mxu0
    %4905 = vmatprep.mubr.bf16.mxu0 0
    %4906 = vmatmul.mubr.bf16.gmra.mrb[0].mxu0 %v4768
    %v4907 = vpop.f32.mrb[0].mxu0
    %v4908 = vadd.f32 0.0, %v4907
    %v4909 = vpop.f32.mrb[0].mxu0
    %v4910 = vpop.f32.mrb[0].mxu0
    %v4911 = vadd.f32 0.0, %v4910
    %v4912 = vpop.f32.mrb[0].mxu0
    %4913 = vmatprep.mubr.bf16.mxu0 0
    %4914 = vmatmul.mubr.bf16.gmra.mrb[0].mxu0 %v4771
    %v4915 = vpop.f32.mrb[0].mxu0
    %v4916 = vadd.f32 0.0, %v4915
    %v4917 = vpop.f32.mrb[0].mxu0
    %v4918 = vpop.f32.mrb[0].mxu0
    %v4919 = vadd.f32 0.0, %v4918
    %v4920 = vpop.f32.mrb[0].mxu0
    %4921 = vmatprep.mubr.bf16.mxu0 0
    %4922 = vmatmul.mubr.bf16.gmra.mrb[0].mxu0 %v4774
    %v4923 = vpop.f32.mrb[0].mxu0
    %v4924 = vadd.f32 0.0, %v4923
    %v4925 = vpop.f32.mrb[0].mxu0
    %v4926 = vpop.f32.mrb[0].mxu0
    %v4927 = vadd.f32 0.0, %v4926
    %v4928 = vpop.f32.mrb[0].mxu0
    %4929 = vmatprep.mubr.bf16.mxu0 0
    %4930 = vmatmul.mubr.bf16.gmra.mrb[0].mxu0 %v4777
    %v4931 = vpop.f32.mrb[0].mxu0
    %v4932 = vadd.f32 0.0, %v4931
    %v4933 = vpop.f32.mrb[0].mxu0
    %v4934 = vpop.f32.mrb[0].mxu0
    %v4935 = vadd.f32 0.0, %v4934
    %v4936 = vpop.f32.mrb[0].mxu0
    %4937 = vmatprep.mubr.bf16.mxu0 0
    %4938 = vmatmul.mubr.bf16.gmra.mrb[0].mxu0 %v4780
    %v4939 = vpop.f32.mrb[0].mxu0
    %v4940 = vadd.f32 0.0, %v4939
    %v4941 = vpop.f32.mrb[0].mxu0
    %v4942 = vpop.f32.mrb[0].mxu0
    %v4943 = vadd.f32 0.0, %v4942
    %v4944 = vpop.f32.mrb[0].mxu0
    %4945 = vmatprep.mubr.bf16.mxu0 0
    %4946 = vmatmul.mubr.bf16.gmra.mrb[0].mxu0 %v4783
    %v4947 = vpop.f32.mrb[0].mxu0
    %v4948 = vadd.f32 0.0, %v4947
    %v4949 = vpop.f32.mrb[0].mxu0
    %v4950 = vpop.f32.mrb[0].mxu0
    %v4951 = vadd.f32 0.0, %v4950
    %v4952 = vpop.f32.mrb[0].mxu0
    %4953 = vmatprep.mubr.bf16.mxu0 0
    %4954 = vmatmul.mubr.bf16.gmra.mrb[0].mxu0 %v4786
    %v4955 = vpop.f32.mrb[0].mxu0
    %v4956 = vadd.f32 0.0, %v4955
    %v4957 = vpop.f32.mrb[0].mxu0
    %v4958 = vpop.f32.mrb[0].mxu0
    %v4959 = vadd.f32 0.0, %v4958
    %v4960 = vpop.f32.mrb[0].mxu0
    %4961 = vmatprep.mubr.bf16.mxu0 0
    %4962 = vmatmul.mubr.bf16.gmra.mrb[0].mxu0 %v4789
    %v4963 = vpop.f32.mrb[0].mxu0
    %v4964 = vadd.f32 0.0, %v4963
    %v4965 = vpop.f32.mrb[0].mxu0
    %v4966 = vpop.f32.mrb[0].mxu0
    %v4967 = vadd.f32 0.0, %v4966
    %v4968 = vpop.f32.mrb[0].mxu0
    %4969 = vmatprep.mubr.bf16.mxu0 0
    %4970 = vmatmul.mubr.bf16.gmra.mrb[0].mxu0 %v4792
    %v4971 = vpop.f32.mrb[0].mxu0
    %v4972 = vadd.f32 0.0, %v4971
    %v4973 = vpop.f32.mrb[0].mxu0
    %v4974 = vpop.f32.mrb[0].mxu0
    %v4975 = vadd.f32 0.0, %v4974
    %v4976 = vpop.f32.mrb[0].mxu0
    %4977 = vmatprep.mubr.bf16.mxu0 0
    %4978 = vmatmul.mubr.bf16.gmra.mrb[0].mxu0 %v4795
    %v4979 = vpop.f32.mrb[0].mxu0
    %v4980 = vadd.f32 0.0, %v4979
    %v4981 = vpop.f32.mrb[0].mxu0
    %v4982 = vpop.f32.mrb[0].mxu0
    %v4983 = vadd.f32 0.0, %v4982
    %v4984 = vpop.f32.mrb[0].mxu0
    %4985 = vmatprep.mubr.bf16.mxu0 0
    %4986 = vmatmul.mubr.bf16.gmra.mrb[0].mxu0 %v4798
    %v4987 = vpop.f32.mrb[0].mxu0
    %v4988 = vadd.f32 0.0, %v4987
    %v4989 = vpop.f32.mrb[0].mxu0
    %v4990 = vpop.f32.mrb[0].mxu0
    %v4991 = vadd.f32 0.0, %v4990
    %v4992 = vpop.f32.mrb[0].mxu0
    %4993 = vmatprep.mubr.bf16.mxu0 0
    %4994 = vmatmul.mubr.bf16.gmra.mrb[0].mxu0 %v4801
    %v4995 = vpop.f32.mrb[0].mxu0
    %v4996 = vadd.f32 0.0, %v4995
    %v4997 = vpop.f32.mrb[0].mxu0
    %v4998 = vpop.f32.mrb[0].mxu0
    %v4999 = vadd.f32 0.0, %v4998
    %v5000 = vpop.f32.mrb[0].mxu0
    %5001 = vmatprep.mubr.bf16.mxu0 0
    %5002 = vmatmul.mubr.bf16.gmra.mrb[0].mxu0 %v4804
    %v5003 = vpop.f32.mrb[0].mxu0
    %v5004 = vadd.f32 0.0, %v5003
    %v5005 = vpop.f32.mrb[0].mxu0
    %v5006 = vpop.f32.mrb[0].mxu0
    %v5007 = vadd.f32 0.0, %v5006
    %v5008 = vpop.f32.mrb[0].mxu0
    %5009 = vmatprep.mubr.bf16.mxu0 0
    %5010 = vmatmul.mubr.bf16.gmra.mrb[0].mxu0 %v4807
    %v5011 = vpop.f32.mrb[0].mxu0
    %v5012 = vadd.f32 0.0, %v5011
    %v5013 = vpop.f32.mrb[0].mxu0
    %v5014 = vpop.f32.mrb[0].mxu0
    %v5015 = vadd.f32 0.0, %v5014
    %v5016 = vpop.f32.mrb[0].mxu0
    %5017 = vmatprep.mubr.bf16.mxu0 0
    %5018 = vmatmul.mubr.bf16.gmra.mrb[0].mxu0 %v4810
    %v5019 = vpop.f32.mrb[0].mxu0
    %v5020 = vadd.f32 0.0, %v5019
    %v5021 = vpop.f32.mrb[0].mxu0
    %v5022 = vpop.f32.mrb[0].mxu0
    %v5023 = vadd.f32 0.0, %v5022
    %v5024 = vpop.f32.mrb[0].mxu0
    %5025 = vmatprep.mubr.bf16.mxu0 0
    %5026 = vmatmul.mubr.bf16.gmra.mrb[0].mxu0 %v4813
    %v5027 = vpop.f32.mrb[0].mxu0
    %v5028 = vadd.f32 0.0, %v5027
    %v5029 = vpop.f32.mrb[0].mxu0
    %v5030 = vpop.f32.mrb[0].mxu0
    %v5031 = vadd.f32 0.0, %v5030
    %v5032 = vpop.f32.mrb[0].mxu0
    %5033 = vmatprep.mubr.bf16.mxu0 0
    %5034 = vmatmul.mubr.bf16.gmra.mrb[0].mxu0 %v4816
    %v5035 = vpop.f32.mrb[0].mxu0
    %v5036 = vadd.f32 0.0, %v5035
    %v5037 = vpop.f32.mrb[0].mxu0
    %v5038 = vpop.f32.mrb[0].mxu0
    %v5039 = vadd.f32 0.0, %v5038
    %v5040 = vpop.f32.mrb[0].mxu0
    %5041 = vmatprep.mubr.bf16.mxu0 0
    %5042 = vmatmul.mubr.bf16.gmra.mrb[0].mxu0 %v4819
    %v5043 = vpop.f32.mrb[0].mxu0
    %v5044 = vadd.f32 0.0, %v5043
    %v5045 = vpop.f32.mrb[0].mxu0
    %v5046 = vpop.f32.mrb[0].mxu0
    %v5047 = vadd.f32 0.0, %v5046
    %v5048 = vpop.f32.mrb[0].mxu0
    %5049 = vmatprep.mubr.bf16.mxu0 0
    %5050 = vmatmul.mubr.bf16.gmra.mrb[0].mxu0 %v4822
    %v5051 = vpop.f32.mrb[0].mxu0
    %v5052 = vadd.f32 0.0, %v5051
    %v5053 = vpop.f32.mrb[0].mxu0
    %v5054 = vpop.f32.mrb[0].mxu0
    %v5055 = vadd.f32 0.0, %v5054
    %v5056 = vpop.f32.mrb[0].mxu0
    %5057 = vmatprep.mubr.bf16.mxu0 0
    %5058 = vmatmul.mubr.bf16.gmra.mrb[0].mxu0 %v4825
    %v5059 = vpop.f32.mrb[0].mxu0
    %v5060 = vadd.f32 0.0, %v5059
    %v5061 = vpop.f32.mrb[0].mxu0
    %v5062 = vpop.f32.mrb[0].mxu0
    %v5063 = vadd.f32 0.0, %v5062
    %v5064 = vpop.f32.mrb[0].mxu0
    %5065 = vmatprep.mubr.bf16.mxu0 0
    %5066 = vmatmul.mubr.bf16.gmra.mrb[0].mxu0 %v4828
    %v5067 = vpop.f32.mrb[0].mxu0
    %v5068 = vadd.f32 0.0, %v5067
    %v5069 = vpop.f32.mrb[0].mxu0
    %v5070 = vpop.f32.mrb[0].mxu0
    %v5071 = vadd.f32 0.0, %v5070
    %v5072 = vpop.f32.mrb[0].mxu0
    %5073 = vmatprep.mubr.bf16.mxu0 0
    %5074 = vmatmul.mubr.bf16.gmra.mrb[0].mxu0 %v4831
    %v5075 = vpop.f32.mrb[0].mxu0
    %v5076 = vadd.f32 0.0, %v5075
    %v5077 = vpop.f32.mrb[0].mxu0
    %v5078 = vpop.f32.mrb[0].mxu0
    %v5079 = vadd.f32 0.0, %v5078
    %v5080 = vpop.f32.mrb[0].mxu0
    %5081 = vmatprep.mubr.bf16.mxu0 0
    %5082 = vmatmul.mubr.bf16.gmra.mrb[0].mxu0 %v4834
    %v5083 = vpop.f32.mrb[0].mxu0
    %v5084 = vadd.f32 0.0, %v5083
    %v5085 = vpop.f32.mrb[0].mxu0
    %v5086 = vpop.f32.mrb[0].mxu0
    %v5087 = vadd.f32 0.0, %v5086
    %v5088 = vpop.f32.mrb[0].mxu0
    %5089 = vmatprep.mubr.bf16.mxu0 0
    %5090 = vmatmul.mubr.bf16.gmra.mrb[0].mxu0 %v4837
    %v5091 = vpop.f32.mrb[0].mxu0
    %v5092 = vadd.f32 0.0, %v5091
    %v5093 = vpop.f32.mrb[0].mxu0
    %v5094 = vpop.f32.mrb[0].mxu0
    %v5095 = vadd.f32 0.0, %v5094
    %v5096 = vpop.f32.mrb[0].mxu0
    %5097 = vmatprep.mubr.bf16.mxu0 0
    %5098 = vmatmul.mubr.bf16.gmra.mrb[0].mxu0 %v4840
    %v5099 = vpop.f32.mrb[0].mxu0
    %v5100 = vadd.f32 0.0, %v5099
    %v5101 = vpop.f32.mrb[0].mxu0
    %v5102 = vpop.f32.mrb[0].mxu0
    %v5103 = vadd.f32 0.0, %v5102
    %v5104 = vpop.f32.mrb[0].mxu0
    %5105 = vmatprep.mubr.bf16.mxu0 0
    %5106 = vmatmul.mubr.bf16.gmra.mrb[0].mxu0 %v4843
    %v5107 = vpop.f32.mrb[0].mxu0
    %v5108 = vadd.f32 0.0, %v5107
    %v5109 = vpop.f32.mrb[0].mxu0
    %v5110 = vpop.f32.mrb[0].mxu0
    %v5111 = vadd.f32 0.0, %v5110
    %v5112 = vpop.f32.mrb[0].mxu0
    %5113 = vmatprep.mubr.bf16.mxu0 0
    %5114 = vmatmul.mubr.bf16.gmra.mrb[0].mxu0 %v4846
    %v5115 = vpop.f32.mrb[0].mxu0
    %v5116 = vadd.f32 0.0, %v5115
    %v5117 = vpop.f32.mrb[0].mxu0
    %v5118 = vpop.f32.mrb[0].mxu0
    %v5119 = vadd.f32 0.0, %v5118
    %v5120 = vpop.f32.mrb[0].mxu0
    %5121 = vmatprep.mubr.bf16.mxu0 0
    %5122 = vmatmul.mubr.bf16.gmra.mrb[0].mxu0 %v4849
    %v5123 = vpop.f32.mrb[0].mxu0
    %v5124 = vadd.f32 0.0, %v5123
    %v5125 = vpop.f32.mrb[0].mxu0
    %v5126 = vpop.f32.mrb[0].mxu0
    %v5127 = vadd.f32 0.0, %v5126
    %v5128 = vpop.f32.mrb[0].mxu0
    %5129 = vmatprep.mubr.bf16.mxu0 0
    %5130 = vmatmul.mubr.bf16.gmra.mrb[0].mxu0 %v4852
    %v5131 = vpop.f32.mrb[0].mxu0
    %v5132 = vadd.f32 0.0, %v5131
    %v5133 = vpop.f32.mrb[0].mxu0
    %v5134 = vpop.f32.mrb[0].mxu0
    %v5135 = vadd.f32 0.0, %v5134
    %v5136 = vpop.f32.mrb[0].mxu0
    %5137 = vmatprep.mubr.bf16.mxu0 0
    %5138 = vmatmul.mubr.bf16.gmra.mrb[0].mxu0 %v4855
    %v5139 = vpop.f32.mrb[0].mxu0
    %v5140 = vadd.f32 0.0, %v5139
    %v5141 = vpop.f32.mrb[0].mxu0
    %v5142 = vpop.f32.mrb[0].mxu0
    %v5143 = vadd.f32 0.0, %v5142
    %v5144 = vpop.f32.mrb[0].mxu0
    %5145 = vdwg.mxu0
    %v5146 = vadd.f32 %v4583, %v4892
    %v5147 = vadd.f32 %v4584, %v4895
    %v5148 = vadd.f32 %v4585, %v4900
    %v5149 = vadd.f32 %v4586, %v4903
    %v5150 = vadd.f32 %v4587, %v4908
    %v5151 = vadd.f32 %v4588, %v4911
    %v5152 = vadd.f32 %v4589, %v4916
    %v5153 = vadd.f32 %v4590, %v4919
    %v5154 = vadd.f32 %v4591, %v4924
    %v5155 = vadd.f32 %v4592, %v4927
    %v5156 = vadd.f32 %v4593, %v4932
    %v5157 = vadd.f32 %v4594, %v4935
    %v5158 = vadd.f32 %v4595, %v4940
    %v5159 = vadd.f32 %v4596, %v4943
    %v5160 = vadd.f32 %v4597, %v4948
    %v5161 = vadd.f32 %v4598, %v4951
    %v5162 = vadd.f32 %v4599, %v4956
    %v5163 = vadd.f32 %v4600, %v4959
    %v5164 = vadd.f32 %v4601, %v4964
    %v5165 = vadd.f32 %v4602, %v4967
    %v5166 = vadd.f32 %v4603, %v4972
    %v5167 = vadd.f32 %v4604, %v4975
    %v5168 = vadd.f32 %v4605, %v4980
    %v5169 = vadd.f32 %v4606, %v4983
    %v5170 = vadd.f32 %v4607, %v4988
    %v5171 = vadd.f32 %v4608, %v4991
    %v5172 = vadd.f32 %v4609, %v4996
    %v5173 = vadd.f32 %v4610, %v4999
    %v5174 = vadd.f32 %v4611, %v5004
    %v5175 = vadd.f32 %v4612, %v5007
    %v5176 = vadd.f32 %v4613, %v5012
    %v5177 = vadd.f32 %v4614, %v5015
    %v5178 = vadd.f32 %v4615, %v5020
    %v5179 = vadd.f32 %v4616, %v5023
    %v5180 = vadd.f32 %v4617, %v5028
    %v5181 = vadd.f32 %v4618, %v5031
    %v5182 = vadd.f32 %v4619, %v5036
    %v5183 = vadd.f32 %v4620, %v5039
    %v5184 = vadd.f32 %v4621, %v5044
    %v5185 = vadd.f32 %v4622, %v5047
    %v5186 = vadd.f32 %v4623, %v5052
    %v5187 = vadd.f32 %v4624, %v5055
    %v5188 = vadd.f32 %v4625, %v5060
    %v5189 = vadd.f32 %v4626, %v5063
    %v5190 = vadd.f32 %v4627, %v5068
    %v5191 = vadd.f32 %v4628, %v5071
    %v5192 = vadd.f32 %v4629, %v5076
    %v5193 = vadd.f32 %v4630, %v5079
    %v5194 = vadd.f32 %v4631, %v5084
    %v5195 = vadd.f32 %v4632, %v5087
    %v5196 = vadd.f32 %v4633, %v5092
    %v5197 = vadd.f32 %v4634, %v5095
    %v5198 = vadd.f32 %v4635, %v5100
    %v5199 = vadd.f32 %v4636, %v5103
    %v5200 = vadd.f32 %v4637, %v5108
    %v5201 = vadd.f32 %v4638, %v5111
    %v5202 = vadd.f32 %v4639, %v5116
    %v5203 = vadd.f32 %v4640, %v5119
    %v5204 = vadd.f32 %v4641, %v5124
    %v5205 = vadd.f32 %v4642, %v5127
    %v5206 = vadd.f32 %v4643, %v5132
    %v5207 = vadd.f32 %v4644, %v5135
    %v5208 = vadd.f32 %v4645, %v5140
    %v5209 = vadd.f32 %v4646, %v5143
    %v5210 = vld [vmem:[%s4647 + $0x1] sm:$0xff]
    %v5211 = vld [vmem:[%s4647 + $0x9] sm:$0xff]
    %v5212 = vld [vmem:[%s4647 + $0x19] sm:$0xff]
    %v5213 = vld [vmem:[%s4647 + $0x21] sm:$0xff]
    %v5214 = vld [vmem:[%s4647 + $0x31] sm:$0xff]
    %v5215 = vld [vmem:[%s4647 + $0x39] sm:$0xff]
    %v5216 = vld [vmem:[%s4647 + $0x49] sm:$0xff]
    %v5217 = vld [vmem:[%s4647 + $0x51] sm:$0xff]
    %v5218 = vld [vmem:[%s4647 + $0x61] sm:$0xff]
    %v5219 = vld [vmem:[%s4647 + $0x69] sm:$0xff]
    %v5220 = vld [vmem:[%s4647 + $0x79] sm:$0xff]
    %v5221 = vld [vmem:[%s4647 + $0x81] sm:$0xff]
    %v5222 = vld [vmem:[%s4647 + $0x91] sm:$0xff]
    %v5223 = vld [vmem:[%s4647 + $0x99] sm:$0xff]
    %v5224 = vld [vmem:[%s4647 + $0xa9] sm:$0xff]
    %v5225 = vld [vmem:[%s4647 + $0xb1] sm:$0xff]
    %v5226 = vld [vmem:[%s4647 + $0xc1] sm:$0xff]
    %v5227 = vld [vmem:[%s4647 + $0xc9] sm:$0xff]
    %v5228 = vld [vmem:[%s4647 + $0xd9] sm:$0xff]
    %v5229 = vld [vmem:[%s4647 + $0xe1] sm:$0xff]
    %v5230 = vld [vmem:[%s4647 + $0xf1] sm:$0xff]
    %v5231 = vld [vmem:[%s4647 + $0xf9] sm:$0xff]
    %v5232 = vld [vmem:[%s4647 + $0x109] sm:$0xff]
    %v5233 = vld [vmem:[%s4647 + $0x111] sm:$0xff]
    %v5234 = vld [vmem:[%s4647 + $0x121] sm:$0xff]
    %v5235 = vld [vmem:[%s4647 + $0x129] sm:$0xff]
    %v5236 = vld [vmem:[%s4647 + $0x139] sm:$0xff]
    %v5237 = vld [vmem:[%s4647 + $0x141] sm:$0xff]
    %v5238 = vld [vmem:[%s4647 + $0x151] sm:$0xff]
    %v5239 = vld [vmem:[%s4647 + $0x159] sm:$0xff]
    %v5240 = vld [vmem:[%s4647 + $0x169] sm:$0xff]
    %v5241 = vld [vmem:[%s4647 + $0x171] sm:$0xff]
    %v5242 = vld [vmem:[%s4647 + $0x1b1] sm:$0xff]
    %v5243 = vld [vmem:[%s4647 + $0x1b9] sm:$0xff]
    %v5244 = vld [vmem:[%s4647 + $0x1c9] sm:$0xff]
    %v5245 = vld [vmem:[%s4647 + $0x1d1] sm:$0xff]
    %v5246 = vld [vmem:[%s4647 + $0x1e1] sm:$0xff]
    %v5247 = vld [vmem:[%s4647 + $0x1e9] sm:$0xff]
    %v5248 = vld [vmem:[%s4647 + $0x1f9] sm:$0xff]
    %v5249 = vld [vmem:[%s4647 + $0x201] sm:$0xff]
    %v5250 = vld [vmem:[%s4647 + $0x211] sm:$0xff]
    %v5251 = vld [vmem:[%s4647 + $0x219] sm:$0xff]
    %v5252 = vld [vmem:[%s4647 + $0x229] sm:$0xff]
    %v5253 = vld [vmem:[%s4647 + $0x231] sm:$0xff]
    %v5254 = vld [vmem:[%s4647 + $0x241] sm:$0xff]
    %v5255 = vld [vmem:[%s4647 + $0x249] sm:$0xff]
    %v5256 = vld [vmem:[%s4647 + $0x259] sm:$0xff]
    %v5257 = vld [vmem:[%s4647 + $0x261] sm:$0xff]
    %v5258 = vld [vmem:[%s4647 + $0x271] sm:$0xff]
    %v5259 = vld [vmem:[%s4647 + $0x279] sm:$0xff]
    %v5260 = vld [vmem:[%s4647 + $0x289] sm:$0xff]
    %v5261 = vld [vmem:[%s4647 + $0x291] sm:$0xff]
    %v5262 = vld [vmem:[%s4647 + $0x2a1] sm:$0xff]
    %v5263 = vld [vmem:[%s4647 + $0x2a9] sm:$0xff]
    %v5264 = vld [vmem:[%s4647 + $0x2b9] sm:$0xff]
    %v5265 = vld [vmem:[%s4647 + $0x2c1] sm:$0xff]
    %v5266 = vld [vmem:[%s4647 + $0x2d1] sm:$0xff]
    %v5267 = vld [vmem:[%s4647 + $0x2d9] sm:$0xff]
    %v5268 = vld [vmem:[%s4647 + $0x2e9] sm:$0xff]
    %v5269 = vld [vmem:[%s4647 + $0x2f1] sm:$0xff]
    %v5270 = vld [vmem:[%s4647 + $0x301] sm:$0xff]
    %v5271 = vld [vmem:[%s4647 + $0x309] sm:$0xff]
    %v5272 = vld [vmem:[%s4647 + $0x319] sm:$0xff]
    %v5273 = vld [vmem:[%s4647 + $0x321] sm:$0xff]
    %v5274 = vpack.c.bf16 %v5211, %v5210
    %v5275 = vpack.c.bf16 %v5213, %v5212
    %v5276 = vpack.c.bf16 %v5215, %v5214
    %v5277 = vpack.c.bf16 %v5217, %v5216
    %v5278 = vpack.c.bf16 %v5219, %v5218
    %v5279 = vpack.c.bf16 %v5221, %v5220
    %v5280 = vpack.c.bf16 %v5223, %v5222
    %v5281 = vpack.c.bf16 %v5225, %v5224
    %v5282 = vpack.c.bf16 %v5227, %v5226
    %v5283 = vpack.c.bf16 %v5229, %v5228
    %v5284 = vpack.c.bf16 %v5231, %v5230
    %v5285 = vpack.c.bf16 %v5233, %v5232
    %v5286 = vpack.c.bf16 %v5235, %v5234
    %v5287 = vpack.c.bf16 %v5237, %v5236
    %v5288 = vpack.c.bf16 %v5239, %v5238
    %v5289 = vpack.c.bf16 %v5241, %v5240
    %v5290 = vpack.c.bf16 %v5243, %v5242
    %v5291 = vpack.c.bf16 %v5245, %v5244
    %v5292 = vpack.c.bf16 %v5247, %v5246
    %v5293 = vpack.c.bf16 %v5249, %v5248
    %v5294 = vpack.c.bf16 %v5251, %v5250
    %v5295 = vpack.c.bf16 %v5253, %v5252
    %v5296 = vpack.c.bf16 %v5255, %v5254
    %v5297 = vpack.c.bf16 %v5257, %v5256
    %v5298 = vpack.c.bf16 %v5259, %v5258
    %v5299 = vpack.c.bf16 %v5261, %v5260
    %v5300 = vpack.c.bf16 %v5263, %v5262
    %v5301 = vpack.c.bf16 %v5265, %v5264
    %v5302 = vpack.c.bf16 %v5267, %v5266
    %v5303 = vpack.c.bf16 %v5269, %v5268
    %v5304 = vpack.c.bf16 %v5271, %v5270
    %v5305 = vpack.c.bf16 %v5273, %v5272
    %s5306 = scalar_lea.vmem %s2, 112
    %v5307 = vld [vmem:[%s5306] sm:$0xf]
    %v5308 = vld [vmem:[%s5306 + $0x4] sm:$0xf]
    %v5309 = vld [vmem:[%s5306 + $0x8] sm:$0xf]
    %v5310 = vld [vmem:[%s5306 + $0xc] sm:$0xf]
    %v5315 = vunpack.c.l.b16 %v5307
    %v5316 = vunpack.c.l.b16 %v5308
    %v5317 = vunpack.c.l.b16 %v5309
    %v5318 = vunpack.c.l.b16 %v5310
    %v5319 = vpack.c.b16 %v5316, %v5315
    %v5320 = vpack.c.b16 %v5318, %v5317
    %v5324 = vsel %vm562, %v5274, 0
    %v5327 = vsel %vm562, %v5275, 0
    %v5330 = vsel %vm562, %v5276, 0
    %v5333 = vsel %vm562, %v5277, 0
    %v5336 = vsel %vm562, %v5278, 0
    %v5339 = vsel %vm562, %v5279, 0
    %v5342 = vsel %vm562, %v5280, 0
    %v5345 = vsel %vm562, %v5281, 0
    %v5348 = vsel %vm562, %v5282, 0
    %v5351 = vsel %vm562, %v5283, 0
    %v5354 = vsel %vm562, %v5284, 0
    %v5357 = vsel %vm562, %v5285, 0
    %v5360 = vsel %vm562, %v5286, 0
    %v5363 = vsel %vm562, %v5287, 0
    %v5366 = vsel %vm562, %v5288, 0
    %v5369 = vsel %vm562, %v5289, 0
    %v5372 = vsel %vm562, %v5290, 0
    %v5375 = vsel %vm562, %v5291, 0
    %v5378 = vsel %vm562, %v5292, 0
    %v5381 = vsel %vm562, %v5293, 0
    %v5384 = vsel %vm562, %v5294, 0
    %v5387 = vsel %vm562, %v5295, 0
    %v5390 = vsel %vm562, %v5296, 0
    %v5393 = vsel %vm562, %v5297, 0
    %v5396 = vsel %vm562, %v5298, 0
    %v5399 = vsel %vm562, %v5299, 0
    %v5402 = vsel %vm562, %v5300, 0
    %v5405 = vsel %vm562, %v5301, 0
    %v5408 = vsel %vm562, %v5302, 0
    %v5411 = vsel %vm562, %v5303, 0
    %v5414 = vsel %vm562, %v5304, 0
    %v5417 = vsel %vm562, %v5305, 0
    %5419 = vmatprep.subr.bf16.mxu0 0
    %5420 = vmatpush1.bf16.msra.mxu0 %v5319
    %5421 = vmatprep.subr.bf16.mxu0 0
    %5422 = vmatpush1.bf16.msra.mxu0 %v5320
    %5423 = vmatprep.subr.bf16.mxu0 0
    %5424 = vmatpush1.bf16.msra.mxu0 0
    %5425 = vmatprep.subr.bf16.mxu0 0
    %5426 = vmatpush1.bf16.msra.mxu0 0
    %5427 = vmatprep.subr.bf16.mxu0 0
    %5428 = vmatpush1.bf16.msra.mxu0 0
    %5429 = vmatprep.subr.bf16.mxu0 0
    %5430 = vmatpush1.bf16.msra.mxu0 0
    %5431 = vmatprep.subr.bf16.mxu0 0
    %5432 = vmatpush1.bf16.msra.mxu0 0
    %5433 = vmatprep.subr.bf16.mxu0 0
    %5434 = vmatpush1.bf16.msra.mxu0 0
    %5435 = vmatprep.subr.bf16.mxu0 0
    %5436 = vmatpush1.bf16.msra.mxu0 0
    %5437 = vmatprep.subr.bf16.mxu0 0
    %5438 = vmatpush1.bf16.msra.mxu0 0
    %5439 = vmatprep.subr.bf16.mxu0 0
    %5440 = vmatpush1.bf16.msra.mxu0 0
    %5441 = vmatprep.subr.bf16.mxu0 0
    %5442 = vmatpush1.bf16.msra.mxu0 0
    %5443 = vmatprep.subr.bf16.mxu0 0
    %5444 = vmatpush1.bf16.msra.mxu0 0
    %5445 = vmatprep.subr.bf16.mxu0 0
    %5446 = vmatpush1.bf16.msra.mxu0 0
    %5447 = vmatprep.subr.bf16.mxu0 0
    %5448 = vmatpush1.bf16.msra.mxu0 0
    %5449 = vmatprep.subr.bf16.mxu0 0
    %5450 = vmatpush1.bf16.msra.mxu0 0
    %5451 = vmatprep.mubr.bf16.mxu0 0
    %5452 = vmatmul.mubr.bf16.gmra.mrb[0].mxu0 %v5324
    %v5453 = vpop.f32.mrb[0].mxu0
    %v5454 = vadd.f32 0.0, %v5453
    %v5455 = vpop.f32.mrb[0].mxu0
    %v5456 = vpop.f32.mrb[0].mxu0
    %v5457 = vadd.f32 0.0, %v5456
    %v5458 = vpop.f32.mrb[0].mxu0
    %5459 = vmatprep.mubr.bf16.mxu0 0
    %5460 = vmatmul.mubr.bf16.gmra.mrb[0].mxu0 %v5327
    %v5461 = vpop.f32.mrb[0].mxu0
    %v5462 = vadd.f32 0.0, %v5461
    %v5463 = vpop.f32.mrb[0].mxu0
    %v5464 = vpop.f32.mrb[0].mxu0
    %v5465 = vadd.f32 0.0, %v5464
    %v5466 = vpop.f32.mrb[0].mxu0
    %5467 = vmatprep.mubr.bf16.mxu0 0
    %5468 = vmatmul.mubr.bf16.gmra.mrb[0].mxu0 %v5330
    %v5469 = vpop.f32.mrb[0].mxu0
    %v5470 = vadd.f32 0.0, %v5469
    %v5471 = vpop.f32.mrb[0].mxu0
    %v5472 = vpop.f32.mrb[0].mxu0
    %v5473 = vadd.f32 0.0, %v5472
    %v5474 = vpop.f32.mrb[0].mxu0
    %5475 = vmatprep.mubr.bf16.mxu0 0
    %5476 = vmatmul.mubr.bf16.gmra.mrb[0].mxu0 %v5333
    %v5477 = vpop.f32.mrb[0].mxu0
    %v5478 = vadd.f32 0.0, %v5477
    %v5479 = vpop.f32.mrb[0].mxu0
    %v5480 = vpop.f32.mrb[0].mxu0
    %v5481 = vadd.f32 0.0, %v5480
    %v5482 = vpop.f32.mrb[0].mxu0
    %5483 = vmatprep.mubr.bf16.mxu0 0
    %5484 = vmatmul.mubr.bf16.gmra.mrb[0].mxu0 %v5336
    %v5485 = vpop.f32.mrb[0].mxu0
    %v5486 = vadd.f32 0.0, %v5485
    %v5487 = vpop.f32.mrb[0].mxu0
    %v5488 = vpop.f32.mrb[0].mxu0
    %v5489 = vadd.f32 0.0, %v5488
    %v5490 = vpop.f32.mrb[0].mxu0
    %5491 = vmatprep.mubr.bf16.mxu0 0
    %5492 = vmatmul.mubr.bf16.gmra.mrb[0].mxu0 %v5339
    %v5493 = vpop.f32.mrb[0].mxu0
    %v5494 = vadd.f32 0.0, %v5493
    %v5495 = vpop.f32.mrb[0].mxu0
    %v5496 = vpop.f32.mrb[0].mxu0
    %v5497 = vadd.f32 0.0, %v5496
    %v5498 = vpop.f32.mrb[0].mxu0
    %5499 = vmatprep.mubr.bf16.mxu0 0
    %5500 = vmatmul.mubr.bf16.gmra.mrb[0].mxu0 %v5342
    %v5501 = vpop.f32.mrb[0].mxu0
    %v5502 = vadd.f32 0.0, %v5501
    %v5503 = vpop.f32.mrb[0].mxu0
    %v5504 = vpop.f32.mrb[0].mxu0
    %v5505 = vadd.f32 0.0, %v5504
    %v5506 = vpop.f32.mrb[0].mxu0
    %5507 = vmatprep.mubr.bf16.mxu0 0
    %5508 = vmatmul.mubr.bf16.gmra.mrb[0].mxu0 %v5345
    %v5509 = vpop.f32.mrb[0].mxu0
    %v5510 = vadd.f32 0.0, %v5509
    %v5511 = vpop.f32.mrb[0].mxu0
    %v5512 = vpop.f32.mrb[0].mxu0
    %v5513 = vadd.f32 0.0, %v5512
    %v5514 = vpop.f32.mrb[0].mxu0
    %5515 = vmatprep.mubr.bf16.mxu0 0
    %5516 = vmatmul.mubr.bf16.gmra.mrb[0].mxu0 %v5348
    %v5517 = vpop.f32.mrb[0].mxu0
    %v5518 = vadd.f32 0.0, %v5517
    %v5519 = vpop.f32.mrb[0].mxu0
    %v5520 = vpop.f32.mrb[0].mxu0
    %v5521 = vadd.f32 0.0, %v5520
    %v5522 = vpop.f32.mrb[0].mxu0
    %5523 = vmatprep.mubr.bf16.mxu0 0
    %5524 = vmatmul.mubr.bf16.gmra.mrb[0].mxu0 %v5351
    %v5525 = vpop.f32.mrb[0].mxu0
    %v5526 = vadd.f32 0.0, %v5525
    %v5527 = vpop.f32.mrb[0].mxu0
    %v5528 = vpop.f32.mrb[0].mxu0
    %v5529 = vadd.f32 0.0, %v5528
    %v5530 = vpop.f32.mrb[0].mxu0
    %5531 = vmatprep.mubr.bf16.mxu0 0
    %5532 = vmatmul.mubr.bf16.gmra.mrb[0].mxu0 %v5354
    %v5533 = vpop.f32.mrb[0].mxu0
    %v5534 = vadd.f32 0.0, %v5533
    %v5535 = vpop.f32.mrb[0].mxu0
    %v5536 = vpop.f32.mrb[0].mxu0
    %v5537 = vadd.f32 0.0, %v5536
    %v5538 = vpop.f32.mrb[0].mxu0
    %5539 = vmatprep.mubr.bf16.mxu0 0
    %5540 = vmatmul.mubr.bf16.gmra.mrb[0].mxu0 %v5357
    %v5541 = vpop.f32.mrb[0].mxu0
    %v5542 = vadd.f32 0.0, %v5541
    %v5543 = vpop.f32.mrb[0].mxu0
    %v5544 = vpop.f32.mrb[0].mxu0
    %v5545 = vadd.f32 0.0, %v5544
    %v5546 = vpop.f32.mrb[0].mxu0
    %5547 = vmatprep.mubr.bf16.mxu0 0
    %5548 = vmatmul.mubr.bf16.gmra.mrb[0].mxu0 %v5360
    %v5549 = vpop.f32.mrb[0].mxu0
    %v5550 = vadd.f32 0.0, %v5549
    %v5551 = vpop.f32.mrb[0].mxu0
    %v5552 = vpop.f32.mrb[0].mxu0
    %v5553 = vadd.f32 0.0, %v5552
    %v5554 = vpop.f32.mrb[0].mxu0
    %5555 = vmatprep.mubr.bf16.mxu0 0
    %5556 = vmatmul.mubr.bf16.gmra.mrb[0].mxu0 %v5363
    %v5557 = vpop.f32.mrb[0].mxu0
    %v5558 = vadd.f32 0.0, %v5557
    %v5559 = vpop.f32.mrb[0].mxu0
    %v5560 = vpop.f32.mrb[0].mxu0
    %v5561 = vadd.f32 0.0, %v5560
    %v5562 = vpop.f32.mrb[0].mxu0
    %5563 = vmatprep.mubr.bf16.mxu0 0
    %5564 = vmatmul.mubr.bf16.gmra.mrb[0].mxu0 %v5366
    %v5565 = vpop.f32.mrb[0].mxu0
    %v5566 = vadd.f32 0.0, %v5565
    %v5567 = vpop.f32.mrb[0].mxu0
    %v5568 = vpop.f32.mrb[0].mxu0
    %v5569 = vadd.f32 0.0, %v5568
    %v5570 = vpop.f32.mrb[0].mxu0
    %5571 = vmatprep.mubr.bf16.mxu0 0
    %5572 = vmatmul.mubr.bf16.gmra.mrb[0].mxu0 %v5369
    %v5573 = vpop.f32.mrb[0].mxu0
    %v5574 = vadd.f32 0.0, %v5573
    %v5575 = vpop.f32.mrb[0].mxu0
    %v5576 = vpop.f32.mrb[0].mxu0
    %v5577 = vadd.f32 0.0, %v5576
    %v5578 = vpop.f32.mrb[0].mxu0
    %5579 = vmatprep.mubr.bf16.mxu0 0
    %5580 = vmatmul.mubr.bf16.gmra.mrb[0].mxu0 %v5372
    %v5581 = vpop.f32.mrb[0].mxu0
    %v5582 = vadd.f32 0.0, %v5581
    %v5583 = vpop.f32.mrb[0].mxu0
    %v5584 = vpop.f32.mrb[0].mxu0
    %v5585 = vadd.f32 0.0, %v5584
    %v5586 = vpop.f32.mrb[0].mxu0
    %5587 = vmatprep.mubr.bf16.mxu0 0
    %5588 = vmatmul.mubr.bf16.gmra.mrb[0].mxu0 %v5375
    %v5589 = vpop.f32.mrb[0].mxu0
    %v5590 = vadd.f32 0.0, %v5589
    %v5591 = vpop.f32.mrb[0].mxu0
    %v5592 = vpop.f32.mrb[0].mxu0
    %v5593 = vadd.f32 0.0, %v5592
    %v5594 = vpop.f32.mrb[0].mxu0
    %5595 = vmatprep.mubr.bf16.mxu0 0
    %5596 = vmatmul.mubr.bf16.gmra.mrb[0].mxu0 %v5378
    %v5597 = vpop.f32.mrb[0].mxu0
    %v5598 = vadd.f32 0.0, %v5597
    %v5599 = vpop.f32.mrb[0].mxu0
    %v5600 = vpop.f32.mrb[0].mxu0
    %v5601 = vadd.f32 0.0, %v5600
    %v5602 = vpop.f32.mrb[0].mxu0
    %5603 = vmatprep.mubr.bf16.mxu0 0
    %5604 = vmatmul.mubr.bf16.gmra.mrb[0].mxu0 %v5381
    %v5605 = vpop.f32.mrb[0].mxu0
    %v5606 = vadd.f32 0.0, %v5605
    %v5607 = vpop.f32.mrb[0].mxu0
    %v5608 = vpop.f32.mrb[0].mxu0
    %v5609 = vadd.f32 0.0, %v5608
    %v5610 = vpop.f32.mrb[0].mxu0
    %5611 = vmatprep.mubr.bf16.mxu0 0
    %5612 = vmatmul.mubr.bf16.gmra.mrb[0].mxu0 %v5384
    %v5613 = vpop.f32.mrb[0].mxu0
    %v5614 = vadd.f32 0.0, %v5613
    %v5615 = vpop.f32.mrb[0].mxu0
    %v5616 = vpop.f32.mrb[0].mxu0
    %v5617 = vadd.f32 0.0, %v5616
    %v5618 = vpop.f32.mrb[0].mxu0
    %5619 = vmatprep.mubr.bf16.mxu0 0
    %5620 = vmatmul.mubr.bf16.gmra.mrb[0].mxu0 %v5387
    %v5621 = vpop.f32.mrb[0].mxu0
    %v5622 = vadd.f32 0.0, %v5621
    %v5623 = vpop.f32.mrb[0].mxu0
    %v5624 = vpop.f32.mrb[0].mxu0
    %v5625 = vadd.f32 0.0, %v5624
    %v5626 = vpop.f32.mrb[0].mxu0
    %5627 = vmatprep.mubr.bf16.mxu0 0
    %5628 = vmatmul.mubr.bf16.gmra.mrb[0].mxu0 %v5390
    %v5629 = vpop.f32.mrb[0].mxu0
    %v5630 = vadd.f32 0.0, %v5629
    %v5631 = vpop.f32.mrb[0].mxu0
    %v5632 = vpop.f32.mrb[0].mxu0
    %v5633 = vadd.f32 0.0, %v5632
    %v5634 = vpop.f32.mrb[0].mxu0
    %5635 = vmatprep.mubr.bf16.mxu0 0
    %5636 = vmatmul.mubr.bf16.gmra.mrb[0].mxu0 %v5393
    %v5637 = vpop.f32.mrb[0].mxu0
    %v5638 = vadd.f32 0.0, %v5637
    %v5639 = vpop.f32.mrb[0].mxu0
    %v5640 = vpop.f32.mrb[0].mxu0
    %v5641 = vadd.f32 0.0, %v5640
    %v5642 = vpop.f32.mrb[0].mxu0
    %5643 = vmatprep.mubr.bf16.mxu0 0
    %5644 = vmatmul.mubr.bf16.gmra.mrb[0].mxu0 %v5396
    %v5645 = vpop.f32.mrb[0].mxu0
    %v5646 = vadd.f32 0.0, %v5645
    %v5647 = vpop.f32.mrb[0].mxu0
    %v5648 = vpop.f32.mrb[0].mxu0
    %v5649 = vadd.f32 0.0, %v5648
    %v5650 = vpop.f32.mrb[0].mxu0
    %5651 = vmatprep.mubr.bf16.mxu0 0
    %5652 = vmatmul.mubr.bf16.gmra.mrb[0].mxu0 %v5399
    %v5653 = vpop.f32.mrb[0].mxu0
    %v5654 = vadd.f32 0.0, %v5653
    %v5655 = vpop.f32.mrb[0].mxu0
    %v5656 = vpop.f32.mrb[0].mxu0
    %v5657 = vadd.f32 0.0, %v5656
    %v5658 = vpop.f32.mrb[0].mxu0
    %5659 = vmatprep.mubr.bf16.mxu0 0
    %5660 = vmatmul.mubr.bf16.gmra.mrb[0].mxu0 %v5402
    %v5661 = vpop.f32.mrb[0].mxu0
    %v5662 = vadd.f32 0.0, %v5661
    %v5663 = vpop.f32.mrb[0].mxu0
    %v5664 = vpop.f32.mrb[0].mxu0
    %v5665 = vadd.f32 0.0, %v5664
    %v5666 = vpop.f32.mrb[0].mxu0
    %5667 = vmatprep.mubr.bf16.mxu0 0
    %5668 = vmatmul.mubr.bf16.gmra.mrb[0].mxu0 %v5405
    %v5669 = vpop.f32.mrb[0].mxu0
    %v5670 = vadd.f32 0.0, %v5669
    %v5671 = vpop.f32.mrb[0].mxu0
    %v5672 = vpop.f32.mrb[0].mxu0
    %v5673 = vadd.f32 0.0, %v5672
    %v5674 = vpop.f32.mrb[0].mxu0
    %5675 = vmatprep.mubr.bf16.mxu0 0
    %5676 = vmatmul.mubr.bf16.gmra.mrb[0].mxu0 %v5408
    %v5677 = vpop.f32.mrb[0].mxu0
    %v5678 = vadd.f32 0.0, %v5677
    %v5679 = vpop.f32.mrb[0].mxu0
    %v5680 = vpop.f32.mrb[0].mxu0
    %v5681 = vadd.f32 0.0, %v5680
    %v5682 = vpop.f32.mrb[0].mxu0
    %5683 = vmatprep.mubr.bf16.mxu0 0
    %5684 = vmatmul.mubr.bf16.gmra.mrb[0].mxu0 %v5411
    %v5685 = vpop.f32.mrb[0].mxu0
    %v5686 = vadd.f32 0.0, %v5685
    %v5687 = vpop.f32.mrb[0].mxu0
    %v5688 = vpop.f32.mrb[0].mxu0
    %v5689 = vadd.f32 0.0, %v5688
    %v5690 = vpop.f32.mrb[0].mxu0
    %5691 = vmatprep.mubr.bf16.mxu0 0
    %5692 = vmatmul.mubr.bf16.gmra.mrb[0].mxu0 %v5414
    %v5693 = vpop.f32.mrb[0].mxu0
    %v5694 = vadd.f32 0.0, %v5693
    %v5695 = vpop.f32.mrb[0].mxu0
    %v5696 = vpop.f32.mrb[0].mxu0
    %v5697 = vadd.f32 0.0, %v5696
    %v5698 = vpop.f32.mrb[0].mxu0
    %5699 = vmatprep.mubr.bf16.mxu0 0
    %5700 = vmatmul.mubr.bf16.gmra.mrb[0].mxu0 %v5417
    %v5701 = vpop.f32.mrb[0].mxu0
    %v5702 = vadd.f32 0.0, %v5701
    %v5703 = vpop.f32.mrb[0].mxu0
    %v5704 = vpop.f32.mrb[0].mxu0
    %v5705 = vadd.f32 0.0, %v5704
    %v5706 = vpop.f32.mrb[0].mxu0
    %5707 = vdwg.mxu0
    %v5708 = vadd.f32 %v5146, %v5454
    %v5709 = vadd.f32 %v5147, %v5457
    %v5710 = vadd.f32 %v5148, %v5462
    %v5711 = vadd.f32 %v5149, %v5465
    %v5712 = vadd.f32 %v5150, %v5470
    %v5713 = vadd.f32 %v5151, %v5473
    %v5714 = vadd.f32 %v5152, %v5478
    %v5715 = vadd.f32 %v5153, %v5481
    %v5716 = vadd.f32 %v5154, %v5486
    %v5717 = vadd.f32 %v5155, %v5489
    %v5718 = vadd.f32 %v5156, %v5494
    %v5719 = vadd.f32 %v5157, %v5497
    %v5720 = vadd.f32 %v5158, %v5502
    %v5721 = vadd.f32 %v5159, %v5505
    %v5722 = vadd.f32 %v5160, %v5510
    %v5723 = vadd.f32 %v5161, %v5513
    %v5724 = vadd.f32 %v5162, %v5518
    %v5725 = vadd.f32 %v5163, %v5521
    %v5726 = vadd.f32 %v5164, %v5526
    %v5727 = vadd.f32 %v5165, %v5529
    %v5728 = vadd.f32 %v5166, %v5534
    %v5729 = vadd.f32 %v5167, %v5537
    %v5730 = vadd.f32 %v5168, %v5542
    %v5731 = vadd.f32 %v5169, %v5545
    %v5732 = vadd.f32 %v5170, %v5550
    %v5733 = vadd.f32 %v5171, %v5553
    %v5734 = vadd.f32 %v5172, %v5558
    %v5735 = vadd.f32 %v5173, %v5561
    %v5736 = vadd.f32 %v5174, %v5566
    %v5737 = vadd.f32 %v5175, %v5569
    %v5738 = vadd.f32 %v5176, %v5574
    %v5739 = vadd.f32 %v5177, %v5577
    %v5740 = vadd.f32 %v5178, %v5582
    %v5741 = vadd.f32 %v5179, %v5585
    %v5742 = vadd.f32 %v5180, %v5590
    %v5743 = vadd.f32 %v5181, %v5593
    %v5744 = vadd.f32 %v5182, %v5598
    %v5745 = vadd.f32 %v5183, %v5601
    %v5746 = vadd.f32 %v5184, %v5606
    %v5747 = vadd.f32 %v5185, %v5609
    %v5748 = vadd.f32 %v5186, %v5614
    %v5749 = vadd.f32 %v5187, %v5617
    %v5750 = vadd.f32 %v5188, %v5622
    %v5751 = vadd.f32 %v5189, %v5625
    %v5752 = vadd.f32 %v5190, %v5630
    %v5753 = vadd.f32 %v5191, %v5633
    %v5754 = vadd.f32 %v5192, %v5638
    %v5755 = vadd.f32 %v5193, %v5641
    %v5756 = vadd.f32 %v5194, %v5646
    %v5757 = vadd.f32 %v5195, %v5649
    %v5758 = vadd.f32 %v5196, %v5654
    %v5759 = vadd.f32 %v5197, %v5657
    %v5760 = vadd.f32 %v5198, %v5662
    %v5761 = vadd.f32 %v5199, %v5665
    %v5762 = vadd.f32 %v5200, %v5670
    %v5763 = vadd.f32 %v5201, %v5673
    %v5764 = vadd.f32 %v5202, %v5678
    %v5765 = vadd.f32 %v5203, %v5681
    %v5766 = vadd.f32 %v5204, %v5686
    %v5767 = vadd.f32 %v5205, %v5689
    %v5768 = vadd.f32 %v5206, %v5694
    %v5769 = vadd.f32 %v5207, %v5697
    %v5770 = vadd.f32 %v5208, %v5702
    %v5771 = vadd.f32 %v5209, %v5705
    %v5772 = vld [vmem:[%s4647 + $0x2] sm:$0xff]
    %v5773 = vld [vmem:[%s4647 + $0xa] sm:$0xff]
    %v5774 = vld [vmem:[%s4647 + $0x1a] sm:$0xff]
    %v5775 = vld [vmem:[%s4647 + $0x22] sm:$0xff]
    %v5776 = vld [vmem:[%s4647 + $0x32] sm:$0xff]
    %v5777 = vld [vmem:[%s4647 + $0x3a] sm:$0xff]
    %v5778 = vld [vmem:[%s4647 + $0x4a] sm:$0xff]
    %v5779 = vld [vmem:[%s4647 + $0x52] sm:$0xff]
    %v5780 = vld [vmem:[%s4647 + $0x62] sm:$0xff]
    %v5781 = vld [vmem:[%s4647 + $0x6a] sm:$0xff]
    %v5782 = vld [vmem:[%s4647 + $0x7a] sm:$0xff]
    %v5783 = vld [vmem:[%s4647 + $0x82] sm:$0xff]
    %v5784 = vld [vmem:[%s4647 + $0x92] sm:$0xff]
    %v5785 = vld [vmem:[%s4647 + $0x9a] sm:$0xff]
    %v5786 = vld [vmem:[%s4647 + $0xaa] sm:$0xff]
    %v5787 = vld [vmem:[%s4647 + $0xb2] sm:$0xff]
    %v5788 = vld [vmem:[%s4647 + $0xc2] sm:$0xff]
    %v5789 = vld [vmem:[%s4647 + $0xca] sm:$0xff]
    %v5790 = vld [vmem:[%s4647 + $0xda] sm:$0xff]
    %v5791 = vld [vmem:[%s4647 + $0xe2] sm:$0xff]
    %v5792 = vld [vmem:[%s4647 + $0xf2] sm:$0xff]
    %v5793 = vld [vmem:[%s4647 + $0xfa] sm:$0xff]
    %v5794 = vld [vmem:[%s4647 + $0x10a] sm:$0xff]
    %v5795 = vld [vmem:[%s4647 + $0x112] sm:$0xff]
    %v5796 = vld [vmem:[%s4647 + $0x122] sm:$0xff]
    %v5797 = vld [vmem:[%s4647 + $0x12a] sm:$0xff]
    %v5798 = vld [vmem:[%s4647 + $0x13a] sm:$0xff]
    %v5799 = vld [vmem:[%s4647 + $0x142] sm:$0xff]
    %v5800 = vld [vmem:[%s4647 + $0x152] sm:$0xff]
    %v5801 = vld [vmem:[%s4647 + $0x15a] sm:$0xff]
    %v5802 = vld [vmem:[%s4647 + $0x16a] sm:$0xff]
    %v5803 = vld [vmem:[%s4647 + $0x172] sm:$0xff]
    %v5804 = vld [vmem:[%s4647 + $0x1b2] sm:$0xff]
    %v5805 = vld [vmem:[%s4647 + $0x1ba] sm:$0xff]
    %v5806 = vld [vmem:[%s4647 + $0x1ca] sm:$0xff]
    %v5807 = vld [vmem:[%s4647 + $0x1d2] sm:$0xff]
    %v5808 = vld [vmem:[%s4647 + $0x1e2] sm:$0xff]
    %v5809 = vld [vmem:[%s4647 + $0x1ea] sm:$0xff]
    %v5810 = vld [vmem:[%s4647 + $0x1fa] sm:$0xff]
    %v5811 = vld [vmem:[%s4647 + $0x202] sm:$0xff]
    %v5812 = vld [vmem:[%s4647 + $0x212] sm:$0xff]
    %v5813 = vld [vmem:[%s4647 + $0x21a] sm:$0xff]
    %v5814 = vld [vmem:[%s4647 + $0x22a] sm:$0xff]
    %v5815 = vld [vmem:[%s4647 + $0x232] sm:$0xff]
    %v5816 = vld [vmem:[%s4647 + $0x242] sm:$0xff]
    %v5817 = vld [vmem:[%s4647 + $0x24a] sm:$0xff]
    %v5818 = vld [vmem:[%s4647 + $0x25a] sm:$0xff]
    %v5819 = vld [vmem:[%s4647 + $0x262] sm:$0xff]
    %v5820 = vld [vmem:[%s4647 + $0x272] sm:$0xff]
    %v5821 = vld [vmem:[%s4647 + $0x27a] sm:$0xff]
    %v5822 = vld [vmem:[%s4647 + $0x28a] sm:$0xff]
    %v5823 = vld [vmem:[%s4647 + $0x292] sm:$0xff]
    %v5824 = vld [vmem:[%s4647 + $0x2a2] sm:$0xff]
    %v5825 = vld [vmem:[%s4647 + $0x2aa] sm:$0xff]
    %v5826 = vld [vmem:[%s4647 + $0x2ba] sm:$0xff]
    %v5827 = vld [vmem:[%s4647 + $0x2c2] sm:$0xff]
    %v5828 = vld [vmem:[%s4647 + $0x2d2] sm:$0xff]
    %v5829 = vld [vmem:[%s4647 + $0x2da] sm:$0xff]
    %v5830 = vld [vmem:[%s4647 + $0x2ea] sm:$0xff]
    %v5831 = vld [vmem:[%s4647 + $0x2f2] sm:$0xff]
    %v5832 = vld [vmem:[%s4647 + $0x302] sm:$0xff]
    %v5833 = vld [vmem:[%s4647 + $0x30a] sm:$0xff]
    %v5834 = vld [vmem:[%s4647 + $0x31a] sm:$0xff]
    %v5835 = vld [vmem:[%s4647 + $0x322] sm:$0xff]
    %v5836 = vpack.c.bf16 %v5773, %v5772
    %v5837 = vpack.c.bf16 %v5775, %v5774
    %v5838 = vpack.c.bf16 %v5777, %v5776
    %v5839 = vpack.c.bf16 %v5779, %v5778
    %v5840 = vpack.c.bf16 %v5781, %v5780
    %v5841 = vpack.c.bf16 %v5783, %v5782
    %v5842 = vpack.c.bf16 %v5785, %v5784
    %v5843 = vpack.c.bf16 %v5787, %v5786
    %v5844 = vpack.c.bf16 %v5789, %v5788
    %v5845 = vpack.c.bf16 %v5791, %v5790
    %v5846 = vpack.c.bf16 %v5793, %v5792
    %v5847 = vpack.c.bf16 %v5795, %v5794
    %v5848 = vpack.c.bf16 %v5797, %v5796
    %v5849 = vpack.c.bf16 %v5799, %v5798
    %v5850 = vpack.c.bf16 %v5801, %v5800
    %v5851 = vpack.c.bf16 %v5803, %v5802
    %v5852 = vpack.c.bf16 %v5805, %v5804
    %v5853 = vpack.c.bf16 %v5807, %v5806
    %v5854 = vpack.c.bf16 %v5809, %v5808
    %v5855 = vpack.c.bf16 %v5811, %v5810
    %v5856 = vpack.c.bf16 %v5813, %v5812
    %v5857 = vpack.c.bf16 %v5815, %v5814
    %v5858 = vpack.c.bf16 %v5817, %v5816
    %v5859 = vpack.c.bf16 %v5819, %v5818
    %v5860 = vpack.c.bf16 %v5821, %v5820
    %v5861 = vpack.c.bf16 %v5823, %v5822
    %v5862 = vpack.c.bf16 %v5825, %v5824
    %v5863 = vpack.c.bf16 %v5827, %v5826
    %v5864 = vpack.c.bf16 %v5829, %v5828
    %v5865 = vpack.c.bf16 %v5831, %v5830
    %v5866 = vpack.c.bf16 %v5833, %v5832
    %v5867 = vpack.c.bf16 %v5835, %v5834
    %s5868 = scalar_lea.vmem %s2, 128
    %v5869 = vld [vmem:[%s5868] sm:$0xf]
    %v5870 = vld [vmem:[%s5868 + $0x4] sm:$0xf]
    %v5871 = vld [vmem:[%s5868 + $0x8] sm:$0xf]
    %v5872 = vld [vmem:[%s5868 + $0xc] sm:$0xf]
    %v5877 = vunpack.c.l.b16 %v5869
    %v5878 = vunpack.c.l.b16 %v5870
    %v5879 = vunpack.c.l.b16 %v5871
    %v5880 = vunpack.c.l.b16 %v5872
    %v5881 = vpack.c.b16 %v5878, %v5877
    %v5882 = vpack.c.b16 %v5880, %v5879
    %v5886 = vsel %vm562, %v5836, 0
    %v5889 = vsel %vm562, %v5837, 0
    %v5892 = vsel %vm562, %v5838, 0
    %v5895 = vsel %vm562, %v5839, 0
    %v5898 = vsel %vm562, %v5840, 0
    %v5901 = vsel %vm562, %v5841, 0
    %v5904 = vsel %vm562, %v5842, 0
    %v5907 = vsel %vm562, %v5843, 0
    %v5910 = vsel %vm562, %v5844, 0
    %v5913 = vsel %vm562, %v5845, 0
    %v5916 = vsel %vm562, %v5846, 0
    %v5919 = vsel %vm562, %v5847, 0
    %v5922 = vsel %vm562, %v5848, 0
    %v5925 = vsel %vm562, %v5849, 0
    %v5928 = vsel %vm562, %v5850, 0
    %v5931 = vsel %vm562, %v5851, 0
    %v5934 = vsel %vm562, %v5852, 0
    %v5937 = vsel %vm562, %v5853, 0
    %v5940 = vsel %vm562, %v5854, 0
    %v5943 = vsel %vm562, %v5855, 0
    %v5946 = vsel %vm562, %v5856, 0
    %v5949 = vsel %vm562, %v5857, 0
    %v5952 = vsel %vm562, %v5858, 0
    %v5955 = vsel %vm562, %v5859, 0
    %v5958 = vsel %vm562, %v5860, 0
    %v5961 = vsel %vm562, %v5861, 0
    %v5964 = vsel %vm562, %v5862, 0
    %v5967 = vsel %vm562, %v5863, 0
    %v5970 = vsel %vm562, %v5864, 0
    %v5973 = vsel %vm562, %v5865, 0
    %v5976 = vsel %vm562, %v5866, 0
    %v5979 = vsel %vm562, %v5867, 0
    %5981 = vmatprep.subr.bf16.mxu0 0
    %5982 = vmatpush1.bf16.msra.mxu0 %v5881
    %5983 = vmatprep.subr.bf16.mxu0 0
    %5984 = vmatpush1.bf16.msra.mxu0 %v5882
    %5985 = vmatprep.subr.bf16.mxu0 0
    %5986 = vmatpush1.bf16.msra.mxu0 0
    %5987 = vmatprep.subr.bf16.mxu0 0
    %5988 = vmatpush1.bf16.msra.mxu0 0
    %5989 = vmatprep.subr.bf16.mxu0 0
    %5990 = vmatpush1.bf16.msra.mxu0 0
    %5991 = vmatprep.subr.bf16.mxu0 0
    %5992 = vmatpush1.bf16.msra.mxu0 0
    %5993 = vmatprep.subr.bf16.mxu0 0
    %5994 = vmatpush1.bf16.msra.mxu0 0
    %5995 = vmatprep.subr.bf16.mxu0 0
    %5996 = vmatpush1.bf16.msra.mxu0 0
    %5997 = vmatprep.subr.bf16.mxu0 0
    %5998 = vmatpush1.bf16.msra.mxu0 0
    %5999 = vmatprep.subr.bf16.mxu0 0
    %6000 = vmatpush1.bf16.msra.mxu0 0
    %6001 = vmatprep.subr.bf16.mxu0 0
    %6002 = vmatpush1.bf16.msra.mxu0 0
    %6003 = vmatprep.subr.bf16.mxu0 0
    %6004 = vmatpush1.bf16.msra.mxu0 0
    %6005 = vmatprep.subr.bf16.mxu0 0
    %6006 = vmatpush1.bf16.msra.mxu0 0
    %6007 = vmatprep.subr.bf16.mxu0 0
    %6008 = vmatpush1.bf16.msra.mxu0 0
    %6009 = vmatprep.subr.bf16.mxu0 0
    %6010 = vmatpush1.bf16.msra.mxu0 0
    %6011 = vmatprep.subr.bf16.mxu0 0
    %6012 = vmatpush1.bf16.msra.mxu0 0
    %6013 = vmatprep.mubr.bf16.mxu0 0
    %6014 = vmatmul.mubr.bf16.gmra.mrb[0].mxu0 %v5886
    %v6015 = vpop.f32.mrb[0].mxu0
    %v6016 = vadd.f32 0.0, %v6015
    %v6017 = vpop.f32.mrb[0].mxu0
    %v6018 = vpop.f32.mrb[0].mxu0
    %v6019 = vadd.f32 0.0, %v6018
    %v6020 = vpop.f32.mrb[0].mxu0
    %6021 = vmatprep.mubr.bf16.mxu0 0
    %6022 = vmatmul.mubr.bf16.gmra.mrb[0].mxu0 %v5889
    %v6023 = vpop.f32.mrb[0].mxu0
    %v6024 = vadd.f32 0.0, %v6023
    %v6025 = vpop.f32.mrb[0].mxu0
    %v6026 = vpop.f32.mrb[0].mxu0
    %v6027 = vadd.f32 0.0, %v6026
    %v6028 = vpop.f32.mrb[0].mxu0
    %6029 = vmatprep.mubr.bf16.mxu0 0
    %6030 = vmatmul.mubr.bf16.gmra.mrb[0].mxu0 %v5892
    %v6031 = vpop.f32.mrb[0].mxu0
    %v6032 = vadd.f32 0.0, %v6031
    %v6033 = vpop.f32.mrb[0].mxu0
    %v6034 = vpop.f32.mrb[0].mxu0
    %v6035 = vadd.f32 0.0, %v6034
    %v6036 = vpop.f32.mrb[0].mxu0
    %6037 = vmatprep.mubr.bf16.mxu0 0
    %6038 = vmatmul.mubr.bf16.gmra.mrb[0].mxu0 %v5895
    %v6039 = vpop.f32.mrb[0].mxu0
    %v6040 = vadd.f32 0.0, %v6039
    %v6041 = vpop.f32.mrb[0].mxu0
    %v6042 = vpop.f32.mrb[0].mxu0
    %v6043 = vadd.f32 0.0, %v6042
    %v6044 = vpop.f32.mrb[0].mxu0
    %6045 = vmatprep.mubr.bf16.mxu0 0
    %6046 = vmatmul.mubr.bf16.gmra.mrb[0].mxu0 %v5898
    %v6047 = vpop.f32.mrb[0].mxu0
    %v6048 = vadd.f32 0.0, %v6047
    %v6049 = vpop.f32.mrb[0].mxu0
    %v6050 = vpop.f32.mrb[0].mxu0
    %v6051 = vadd.f32 0.0, %v6050
    %v6052 = vpop.f32.mrb[0].mxu0
    %6053 = vmatprep.mubr.bf16.mxu0 0
    %6054 = vmatmul.mubr.bf16.gmra.mrb[0].mxu0 %v5901
    %v6055 = vpop.f32.mrb[0].mxu0
    %v6056 = vadd.f32 0.0, %v6055
    %v6057 = vpop.f32.mrb[0].mxu0
    %v6058 = vpop.f32.mrb[0].mxu0
    %v6059 = vadd.f32 0.0, %v6058
    %v6060 = vpop.f32.mrb[0].mxu0
    %6061 = vmatprep.mubr.bf16.mxu0 0
    %6062 = vmatmul.mubr.bf16.gmra.mrb[0].mxu0 %v5904
    %v6063 = vpop.f32.mrb[0].mxu0
    %v6064 = vadd.f32 0.0, %v6063
    %v6065 = vpop.f32.mrb[0].mxu0
    %v6066 = vpop.f32.mrb[0].mxu0
    %v6067 = vadd.f32 0.0, %v6066
    %v6068 = vpop.f32.mrb[0].mxu0
    %6069 = vmatprep.mubr.bf16.mxu0 0
    %6070 = vmatmul.mubr.bf16.gmra.mrb[0].mxu0 %v5907
    %v6071 = vpop.f32.mrb[0].mxu0
    %v6072 = vadd.f32 0.0, %v6071
    %v6073 = vpop.f32.mrb[0].mxu0
    %v6074 = vpop.f32.mrb[0].mxu0
    %v6075 = vadd.f32 0.0, %v6074
    %v6076 = vpop.f32.mrb[0].mxu0
    %6077 = vmatprep.mubr.bf16.mxu0 0
    %6078 = vmatmul.mubr.bf16.gmra.mrb[0].mxu0 %v5910
    %v6079 = vpop.f32.mrb[0].mxu0
    %v6080 = vadd.f32 0.0, %v6079
    %v6081 = vpop.f32.mrb[0].mxu0
    %v6082 = vpop.f32.mrb[0].mxu0
    %v6083 = vadd.f32 0.0, %v6082
    %v6084 = vpop.f32.mrb[0].mxu0
    %6085 = vmatprep.mubr.bf16.mxu0 0
    %6086 = vmatmul.mubr.bf16.gmra.mrb[0].mxu0 %v5913
    %v6087 = vpop.f32.mrb[0].mxu0
    %v6088 = vadd.f32 0.0, %v6087
    %v6089 = vpop.f32.mrb[0].mxu0
    %v6090 = vpop.f32.mrb[0].mxu0
    %v6091 = vadd.f32 0.0, %v6090
    %v6092 = vpop.f32.mrb[0].mxu0
    %6093 = vmatprep.mubr.bf16.mxu0 0
    %6094 = vmatmul.mubr.bf16.gmra.mrb[0].mxu0 %v5916
    %v6095 = vpop.f32.mrb[0].mxu0
    %v6096 = vadd.f32 0.0, %v6095
    %v6097 = vpop.f32.mrb[0].mxu0
    %v6098 = vpop.f32.mrb[0].mxu0
    %v6099 = vadd.f32 0.0, %v6098
    %v6100 = vpop.f32.mrb[0].mxu0
    %6101 = vmatprep.mubr.bf16.mxu0 0
    %6102 = vmatmul.mubr.bf16.gmra.mrb[0].mxu0 %v5919
    %v6103 = vpop.f32.mrb[0].mxu0
    %v6104 = vadd.f32 0.0, %v6103
    %v6105 = vpop.f32.mrb[0].mxu0
    %v6106 = vpop.f32.mrb[0].mxu0
    %v6107 = vadd.f32 0.0, %v6106
    %v6108 = vpop.f32.mrb[0].mxu0
    %6109 = vmatprep.mubr.bf16.mxu0 0
    %6110 = vmatmul.mubr.bf16.gmra.mrb[0].mxu0 %v5922
    %v6111 = vpop.f32.mrb[0].mxu0
    %v6112 = vadd.f32 0.0, %v6111
    %v6113 = vpop.f32.mrb[0].mxu0
    %v6114 = vpop.f32.mrb[0].mxu0
    %v6115 = vadd.f32 0.0, %v6114
    %v6116 = vpop.f32.mrb[0].mxu0
    %6117 = vmatprep.mubr.bf16.mxu0 0
    %6118 = vmatmul.mubr.bf16.gmra.mrb[0].mxu0 %v5925
    %v6119 = vpop.f32.mrb[0].mxu0
    %v6120 = vadd.f32 0.0, %v6119
    %v6121 = vpop.f32.mrb[0].mxu0
    %v6122 = vpop.f32.mrb[0].mxu0
    %v6123 = vadd.f32 0.0, %v6122
    %v6124 = vpop.f32.mrb[0].mxu0
    %6125 = vmatprep.mubr.bf16.mxu0 0
    %6126 = vmatmul.mubr.bf16.gmra.mrb[0].mxu0 %v5928
    %v6127 = vpop.f32.mrb[0].mxu0
    %v6128 = vadd.f32 0.0, %v6127
    %v6129 = vpop.f32.mrb[0].mxu0
    %v6130 = vpop.f32.mrb[0].mxu0
    %v6131 = vadd.f32 0.0, %v6130
    %v6132 = vpop.f32.mrb[0].mxu0
    %6133 = vmatprep.mubr.bf16.mxu0 0
    %6134 = vmatmul.mubr.bf16.gmra.mrb[0].mxu0 %v5931
    %v6135 = vpop.f32.mrb[0].mxu0
    %v6136 = vadd.f32 0.0, %v6135
    %v6137 = vpop.f32.mrb[0].mxu0
    %v6138 = vpop.f32.mrb[0].mxu0
    %v6139 = vadd.f32 0.0, %v6138
    %v6140 = vpop.f32.mrb[0].mxu0
    %6141 = vmatprep.mubr.bf16.mxu0 0
    %6142 = vmatmul.mubr.bf16.gmra.mrb[0].mxu0 %v5934
    %v6143 = vpop.f32.mrb[0].mxu0
    %v6144 = vadd.f32 0.0, %v6143
    %v6145 = vpop.f32.mrb[0].mxu0
    %v6146 = vpop.f32.mrb[0].mxu0
    %v6147 = vadd.f32 0.0, %v6146
    %v6148 = vpop.f32.mrb[0].mxu0
    %6149 = vmatprep.mubr.bf16.mxu0 0
    %6150 = vmatmul.mubr.bf16.gmra.mrb[0].mxu0 %v5937
    %v6151 = vpop.f32.mrb[0].mxu0
    %v6152 = vadd.f32 0.0, %v6151
    %v6153 = vpop.f32.mrb[0].mxu0
    %v6154 = vpop.f32.mrb[0].mxu0
    %v6155 = vadd.f32 0.0, %v6154
    %v6156 = vpop.f32.mrb[0].mxu0
    %6157 = vmatprep.mubr.bf16.mxu0 0
    %6158 = vmatmul.mubr.bf16.gmra.mrb[0].mxu0 %v5940
    %v6159 = vpop.f32.mrb[0].mxu0
    %v6160 = vadd.f32 0.0, %v6159
    %v6161 = vpop.f32.mrb[0].mxu0
    %v6162 = vpop.f32.mrb[0].mxu0
    %v6163 = vadd.f32 0.0, %v6162
    %v6164 = vpop.f32.mrb[0].mxu0
    %6165 = vmatprep.mubr.bf16.mxu0 0
    %6166 = vmatmul.mubr.bf16.gmra.mrb[0].mxu0 %v5943
    %v6167 = vpop.f32.mrb[0].mxu0
    %v6168 = vadd.f32 0.0, %v6167
    %v6169 = vpop.f32.mrb[0].mxu0
    %v6170 = vpop.f32.mrb[0].mxu0
    %v6171 = vadd.f32 0.0, %v6170
    %v6172 = vpop.f32.mrb[0].mxu0
    %6173 = vmatprep.mubr.bf16.mxu0 0
    %6174 = vmatmul.mubr.bf16.gmra.mrb[0].mxu0 %v5946
    %v6175 = vpop.f32.mrb[0].mxu0
    %v6176 = vadd.f32 0.0, %v6175
    %v6177 = vpop.f32.mrb[0].mxu0
    %v6178 = vpop.f32.mrb[0].mxu0
    %v6179 = vadd.f32 0.0, %v6178
    %v6180 = vpop.f32.mrb[0].mxu0
    %6181 = vmatprep.mubr.bf16.mxu0 0
    %6182 = vmatmul.mubr.bf16.gmra.mrb[0].mxu0 %v5949
    %v6183 = vpop.f32.mrb[0].mxu0
    %v6184 = vadd.f32 0.0, %v6183
    %v6185 = vpop.f32.mrb[0].mxu0
    %v6186 = vpop.f32.mrb[0].mxu0
    %v6187 = vadd.f32 0.0, %v6186
    %v6188 = vpop.f32.mrb[0].mxu0
    %6189 = vmatprep.mubr.bf16.mxu0 0
    %6190 = vmatmul.mubr.bf16.gmra.mrb[0].mxu0 %v5952
    %v6191 = vpop.f32.mrb[0].mxu0
    %v6192 = vadd.f32 0.0, %v6191
    %v6193 = vpop.f32.mrb[0].mxu0
    %v6194 = vpop.f32.mrb[0].mxu0
    %v6195 = vadd.f32 0.0, %v6194
    %v6196 = vpop.f32.mrb[0].mxu0
    %6197 = vmatprep.mubr.bf16.mxu0 0
    %6198 = vmatmul.mubr.bf16.gmra.mrb[0].mxu0 %v5955
    %v6199 = vpop.f32.mrb[0].mxu0
    %v6200 = vadd.f32 0.0, %v6199
    %v6201 = vpop.f32.mrb[0].mxu0
    %v6202 = vpop.f32.mrb[0].mxu0
    %v6203 = vadd.f32 0.0, %v6202
    %v6204 = vpop.f32.mrb[0].mxu0
    %6205 = vmatprep.mubr.bf16.mxu0 0
    %6206 = vmatmul.mubr.bf16.gmra.mrb[0].mxu0 %v5958
    %v6207 = vpop.f32.mrb[0].mxu0
    %v6208 = vadd.f32 0.0, %v6207
    %v6209 = vpop.f32.mrb[0].mxu0
    %v6210 = vpop.f32.mrb[0].mxu0
    %v6211 = vadd.f32 0.0, %v6210
    %v6212 = vpop.f32.mrb[0].mxu0
    %6213 = vmatprep.mubr.bf16.mxu0 0
    %6214 = vmatmul.mubr.bf16.gmra.mrb[0].mxu0 %v5961
    %v6215 = vpop.f32.mrb[0].mxu0
    %v6216 = vadd.f32 0.0, %v6215
    %v6217 = vpop.f32.mrb[0].mxu0
    %v6218 = vpop.f32.mrb[0].mxu0
    %v6219 = vadd.f32 0.0, %v6218
    %v6220 = vpop.f32.mrb[0].mxu0
    %6221 = vmatprep.mubr.bf16.mxu0 0
    %6222 = vmatmul.mubr.bf16.gmra.mrb[0].mxu0 %v5964
    %v6223 = vpop.f32.mrb[0].mxu0
    %v6224 = vadd.f32 0.0, %v6223
    %v6225 = vpop.f32.mrb[0].mxu0
    %v6226 = vpop.f32.mrb[0].mxu0
    %v6227 = vadd.f32 0.0, %v6226
    %v6228 = vpop.f32.mrb[0].mxu0
    %6229 = vmatprep.mubr.bf16.mxu0 0
    %6230 = vmatmul.mubr.bf16.gmra.mrb[0].mxu0 %v5967
    %v6231 = vpop.f32.mrb[0].mxu0
    %v6232 = vadd.f32 0.0, %v6231
    %v6233 = vpop.f32.mrb[0].mxu0
    %v6234 = vpop.f32.mrb[0].mxu0
    %v6235 = vadd.f32 0.0, %v6234
    %v6236 = vpop.f32.mrb[0].mxu0
    %6237 = vmatprep.mubr.bf16.mxu0 0
    %6238 = vmatmul.mubr.bf16.gmra.mrb[0].mxu0 %v5970
    %v6239 = vpop.f32.mrb[0].mxu0
    %v6240 = vadd.f32 0.0, %v6239
    %v6241 = vpop.f32.mrb[0].mxu0
    %v6242 = vpop.f32.mrb[0].mxu0
    %v6243 = vadd.f32 0.0, %v6242
    %v6244 = vpop.f32.mrb[0].mxu0
    %6245 = vmatprep.mubr.bf16.mxu0 0
    %6246 = vmatmul.mubr.bf16.gmra.mrb[0].mxu0 %v5973
    %v6247 = vpop.f32.mrb[0].mxu0
    %v6248 = vadd.f32 0.0, %v6247
    %v6249 = vpop.f32.mrb[0].mxu0
    %v6250 = vpop.f32.mrb[0].mxu0
    %v6251 = vadd.f32 0.0, %v6250
    %v6252 = vpop.f32.mrb[0].mxu0
    %6253 = vmatprep.mubr.bf16.mxu0 0
    %6254 = vmatmul.mubr.bf16.gmra.mrb[0].mxu0 %v5976
    %v6255 = vpop.f32.mrb[0].mxu0
    %v6256 = vadd.f32 0.0, %v6255
    %v6257 = vpop.f32.mrb[0].mxu0
    %v6258 = vpop.f32.mrb[0].mxu0
    %v6259 = vadd.f32 0.0, %v6258
    %v6260 = vpop.f32.mrb[0].mxu0
    %6261 = vmatprep.mubr.bf16.mxu0 0
    %6262 = vmatmul.mubr.bf16.gmra.mrb[0].mxu0 %v5979
    %v6263 = vpop.f32.mrb[0].mxu0
    %v6264 = vadd.f32 0.0, %v6263
    %v6265 = vpop.f32.mrb[0].mxu0
    %v6266 = vpop.f32.mrb[0].mxu0
    %v6267 = vadd.f32 0.0, %v6266
    %v6268 = vpop.f32.mrb[0].mxu0
    %6269 = vdwg.mxu0
    %v6270 = vadd.f32 %v5708, %v6016
    %v6271 = vadd.f32 %v5709, %v6019
    %v6272 = vadd.f32 %v5710, %v6024
    %v6273 = vadd.f32 %v5711, %v6027
    %v6274 = vadd.f32 %v5712, %v6032
    %v6275 = vadd.f32 %v5713, %v6035
    %v6276 = vadd.f32 %v5714, %v6040
    %v6277 = vadd.f32 %v5715, %v6043
    %v6278 = vadd.f32 %v5716, %v6048
    %v6279 = vadd.f32 %v5717, %v6051
    %v6280 = vadd.f32 %v5718, %v6056
    %v6281 = vadd.f32 %v5719, %v6059
    %v6282 = vadd.f32 %v5720, %v6064
    %v6283 = vadd.f32 %v5721, %v6067
    %v6284 = vadd.f32 %v5722, %v6072
    %v6285 = vadd.f32 %v5723, %v6075
    %v6286 = vadd.f32 %v5724, %v6080
    %v6287 = vadd.f32 %v5725, %v6083
    %v6288 = vadd.f32 %v5726, %v6088
    %v6289 = vadd.f32 %v5727, %v6091
    %v6290 = vadd.f32 %v5728, %v6096
    %v6291 = vadd.f32 %v5729, %v6099
    %v6292 = vadd.f32 %v5730, %v6104
    %v6293 = vadd.f32 %v5731, %v6107
    %v6294 = vadd.f32 %v5732, %v6112
    %v6295 = vadd.f32 %v5733, %v6115
    %v6296 = vadd.f32 %v5734, %v6120
    %v6297 = vadd.f32 %v5735, %v6123
    %v6298 = vadd.f32 %v5736, %v6128
    %v6299 = vadd.f32 %v5737, %v6131
    %v6300 = vadd.f32 %v5738, %v6136
    %v6301 = vadd.f32 %v5739, %v6139
    %v6302 = vadd.f32 %v5740, %v6144
    %v6303 = vadd.f32 %v5741, %v6147
    %v6304 = vadd.f32 %v5742, %v6152
    %v6305 = vadd.f32 %v5743, %v6155
    %v6306 = vadd.f32 %v5744, %v6160
    %v6307 = vadd.f32 %v5745, %v6163
    %v6308 = vadd.f32 %v5746, %v6168
    %v6309 = vadd.f32 %v5747, %v6171
    %v6310 = vadd.f32 %v5748, %v6176
    %v6311 = vadd.f32 %v5749, %v6179
    %v6312 = vadd.f32 %v5750, %v6184
    %v6313 = vadd.f32 %v5751, %v6187
    %v6314 = vadd.f32 %v5752, %v6192
    %v6315 = vadd.f32 %v5753, %v6195
    %v6316 = vadd.f32 %v5754, %v6200
    %v6317 = vadd.f32 %v5755, %v6203
    %v6318 = vadd.f32 %v5756, %v6208
    %v6319 = vadd.f32 %v5757, %v6211
    %v6320 = vadd.f32 %v5758, %v6216
    %v6321 = vadd.f32 %v5759, %v6219
    %v6322 = vadd.f32 %v5760, %v6224
    %v6323 = vadd.f32 %v5761, %v6227
    %v6324 = vadd.f32 %v5762, %v6232
    %v6325 = vadd.f32 %v5763, %v6235
    %v6326 = vadd.f32 %v5764, %v6240
    %v6327 = vadd.f32 %v5765, %v6243
    %v6328 = vadd.f32 %v5766, %v6248
    %v6329 = vadd.f32 %v5767, %v6251
    %v6330 = vadd.f32 %v5768, %v6256
    %v6331 = vadd.f32 %v5769, %v6259
    %v6332 = vadd.f32 %v5770, %v6264
    %v6333 = vadd.f32 %v5771, %v6267
    %v6334 = vld [vmem:[%s7] sm:$0x1]
    %v6335 = vld [vmem:[%s8] sm:$0x1]
    %v6336 = vsel %vm562, %v6270, 0.0
    %v6337 = vsel %vm562, %v6271, 0.0
    %v6338 = vadd.f32 %v6336, %v6337
    %v6339 = vsel %vm562, %v6272, 0.0
    %v6340 = vadd.f32 %v6338, %v6339
    %v6341 = vsel %vm562, %v6273, 0.0
    %v6342 = vadd.f32 %v6340, %v6341
    %v6343 = vsel %vm562, %v6274, 0.0
    %v6344 = vadd.f32 %v6342, %v6343
    %v6345 = vsel %vm562, %v6275, 0.0
    %v6346 = vadd.f32 %v6344, %v6345
    %v6347 = vsel %vm562, %v6276, 0.0
    %v6348 = vadd.f32 %v6346, %v6347
    %v6349 = vsel %vm562, %v6277, 0.0
    %v6350 = vadd.f32 %v6348, %v6349
    %v6351 = vsel %vm562, %v6278, 0.0
    %v6352 = vadd.f32 %v6350, %v6351
    %v6353 = vsel %vm562, %v6279, 0.0
    %v6354 = vadd.f32 %v6352, %v6353
    %v6355 = vsel %vm562, %v6280, 0.0
    %v6356 = vadd.f32 %v6354, %v6355
    %v6357 = vsel %vm562, %v6281, 0.0
    %v6358 = vadd.f32 %v6356, %v6357
    %v6359 = vsel %vm562, %v6282, 0.0
    %v6360 = vadd.f32 %v6358, %v6359
    %v6361 = vsel %vm562, %v6283, 0.0
    %v6362 = vadd.f32 %v6360, %v6361
    %v6363 = vsel %vm562, %v6284, 0.0
    %v6364 = vadd.f32 %v6362, %v6363
    %v6365 = vsel %vm562, %v6285, 0.0
    %v6366 = vadd.f32 %v6364, %v6365
    %v6367 = vsel %vm562, %v6286, 0.0
    %v6368 = vadd.f32 %v6366, %v6367
    %v6369 = vsel %vm562, %v6287, 0.0
    %v6370 = vadd.f32 %v6368, %v6369
    %v6371 = vsel %vm562, %v6288, 0.0
    %v6372 = vadd.f32 %v6370, %v6371
    %v6373 = vsel %vm562, %v6289, 0.0
    %v6374 = vadd.f32 %v6372, %v6373
    %v6375 = vsel %vm562, %v6290, 0.0
    %v6376 = vadd.f32 %v6374, %v6375
    %v6377 = vsel %vm562, %v6291, 0.0
    %v6378 = vadd.f32 %v6376, %v6377
    %v6379 = vsel %vm562, %v6292, 0.0
    %v6380 = vadd.f32 %v6378, %v6379
    %v6381 = vsel %vm562, %v6293, 0.0
    %v6382 = vadd.f32 %v6380, %v6381
    %v6383 = vsel %vm562, %v6294, 0.0
    %v6384 = vadd.f32 %v6382, %v6383
    %v6385 = vsel %vm562, %v6295, 0.0
    %v6386 = vadd.f32 %v6384, %v6385
    %v6387 = vsel %vm562, %v6296, 0.0
    %v6388 = vadd.f32 %v6386, %v6387
    %v6389 = vsel %vm562, %v6297, 0.0
    %v6390 = vadd.f32 %v6388, %v6389
    %v6391 = vsel %vm562, %v6298, 0.0
    %v6392 = vadd.f32 %v6390, %v6391
    %v6393 = vsel %vm562, %v6299, 0.0
    %v6394 = vadd.f32 %v6392, %v6393
    %v6395 = vsel %vm562, %v6300, 0.0
    %v6396 = vadd.f32 %v6394, %v6395
    %v6397 = vsel %vm562, %v6301, 0.0
    %v6398 = vadd.f32 %v6396, %v6397
    %v6399 = vsel %vm562, %v6302, 0.0
    %v6400 = vadd.f32 %v6398, %v6399
    %v6401 = vsel %vm562, %v6303, 0.0
    %v6402 = vadd.f32 %v6400, %v6401
    %v6403 = vsel %vm562, %v6304, 0.0
    %v6404 = vadd.f32 %v6402, %v6403
    %v6405 = vsel %vm562, %v6305, 0.0
    %v6406 = vadd.f32 %v6404, %v6405
    %v6407 = vsel %vm562, %v6306, 0.0
    %v6408 = vadd.f32 %v6406, %v6407
    %v6409 = vsel %vm562, %v6307, 0.0
    %v6410 = vadd.f32 %v6408, %v6409
    %v6411 = vsel %vm562, %v6308, 0.0
    %v6412 = vadd.f32 %v6410, %v6411
    %v6413 = vsel %vm562, %v6309, 0.0
    %v6414 = vadd.f32 %v6412, %v6413
    %v6415 = vsel %vm562, %v6310, 0.0
    %v6416 = vadd.f32 %v6414, %v6415
    %v6417 = vsel %vm562, %v6311, 0.0
    %v6418 = vadd.f32 %v6416, %v6417
    %v6419 = vsel %vm562, %v6312, 0.0
    %v6420 = vadd.f32 %v6418, %v6419
    %v6421 = vsel %vm562, %v6313, 0.0
    %v6422 = vadd.f32 %v6420, %v6421
    %v6423 = vsel %vm562, %v6314, 0.0
    %v6424 = vadd.f32 %v6422, %v6423
    %v6425 = vsel %vm562, %v6315, 0.0
    %v6426 = vadd.f32 %v6424, %v6425
    %v6427 = vsel %vm562, %v6316, 0.0
    %v6428 = vadd.f32 %v6426, %v6427
    %v6429 = vsel %vm562, %v6317, 0.0
    %v6430 = vadd.f32 %v6428, %v6429
    %v6431 = vsel %vm562, %v6318, 0.0
    %v6432 = vadd.f32 %v6430, %v6431
    %v6433 = vsel %vm562, %v6319, 0.0
    %v6434 = vadd.f32 %v6432, %v6433
    %v6435 = vsel %vm562, %v6320, 0.0
    %v6436 = vadd.f32 %v6434, %v6435
    %v6437 = vsel %vm562, %v6321, 0.0
    %v6438 = vadd.f32 %v6436, %v6437
    %v6439 = vsel %vm562, %v6322, 0.0
    %v6440 = vadd.f32 %v6438, %v6439
    %v6441 = vsel %vm562, %v6323, 0.0
    %v6442 = vadd.f32 %v6440, %v6441
    %v6443 = vsel %vm562, %v6324, 0.0
    %v6444 = vadd.f32 %v6442, %v6443
    %v6445 = vsel %vm562, %v6325, 0.0
    %v6446 = vadd.f32 %v6444, %v6445
    %v6447 = vsel %vm562, %v6326, 0.0
    %v6448 = vadd.f32 %v6446, %v6447
    %v6449 = vsel %vm562, %v6327, 0.0
    %v6450 = vadd.f32 %v6448, %v6449
    %v6451 = vsel %vm562, %v6328, 0.0
    %v6452 = vadd.f32 %v6450, %v6451
    %v6453 = vsel %vm562, %v6329, 0.0
    %v6454 = vadd.f32 %v6452, %v6453
    %v6455 = vsel %vm562, %v6330, 0.0
    %v6456 = vadd.f32 %v6454, %v6455
    %v6457 = vsel %vm562, %v6331, 0.0
    %v6458 = vadd.f32 %v6456, %v6457
    %v6459 = vsel %vm562, %v6332, 0.0
    %v6460 = vadd.f32 %v6458, %v6459
    %v6461 = vsel %vm562, %v6333, 0.0
    %v6462 = vadd.f32 %v6460, %v6461
    %v6463 = vrot.slane %v6462, 4
    %v6464 = vadd.f32 %v6462, %v6463
    %v6465 = vrot.slane %v6464, 2
    %v6466 = vadd.f32 %v6464, %v6465
    %v6467 = vrot.slane %v6466, 1
    %v6468 = vadd.f32 %v6466, %v6467
    %v6469 = vmul.f32 %v6468, %v696
    %v6470 = vsub.f32 %v6270, %v6469
    %v6471 = vsub.f32 %v6271, %v6469
    %v6472 = vsub.f32 %v6272, %v6469
    %v6473 = vsub.f32 %v6273, %v6469
    %v6474 = vsub.f32 %v6274, %v6469
    %v6475 = vsub.f32 %v6275, %v6469
    %v6476 = vsub.f32 %v6276, %v6469
    %v6477 = vsub.f32 %v6277, %v6469
    %v6478 = vsub.f32 %v6278, %v6469
    %v6479 = vsub.f32 %v6279, %v6469
    %v6480 = vsub.f32 %v6280, %v6469
    %v6481 = vsub.f32 %v6281, %v6469
    %v6482 = vsub.f32 %v6282, %v6469
    %v6483 = vsub.f32 %v6283, %v6469
    %v6484 = vsub.f32 %v6284, %v6469
    %v6485 = vsub.f32 %v6285, %v6469
    %v6486 = vsub.f32 %v6286, %v6469
    %v6487 = vsub.f32 %v6287, %v6469
    %v6488 = vsub.f32 %v6288, %v6469
    %v6489 = vsub.f32 %v6289, %v6469
    %v6490 = vsub.f32 %v6290, %v6469
    %v6491 = vsub.f32 %v6291, %v6469
    %v6492 = vsub.f32 %v6292, %v6469
    %v6493 = vsub.f32 %v6293, %v6469
    %v6494 = vsub.f32 %v6294, %v6469
    %v6495 = vsub.f32 %v6295, %v6469
    %v6496 = vsub.f32 %v6296, %v6469
    %v6497 = vsub.f32 %v6297, %v6469
    %v6498 = vsub.f32 %v6298, %v6469
    %v6499 = vsub.f32 %v6299, %v6469
    %v6500 = vsub.f32 %v6300, %v6469
    %v6501 = vsub.f32 %v6301, %v6469
    %v6502 = vsub.f32 %v6302, %v6469
    %v6503 = vsub.f32 %v6303, %v6469
    %v6504 = vsub.f32 %v6304, %v6469
    %v6505 = vsub.f32 %v6305, %v6469
    %v6506 = vsub.f32 %v6306, %v6469
    %v6507 = vsub.f32 %v6307, %v6469
    %v6508 = vsub.f32 %v6308, %v6469
    %v6509 = vsub.f32 %v6309, %v6469
    %v6510 = vsub.f32 %v6310, %v6469
    %v6511 = vsub.f32 %v6311, %v6469
    %v6512 = vsub.f32 %v6312, %v6469
    %v6513 = vsub.f32 %v6313, %v6469
    %v6514 = vsub.f32 %v6314, %v6469
    %v6515 = vsub.f32 %v6315, %v6469
    %v6516 = vsub.f32 %v6316, %v6469
    %v6517 = vsub.f32 %v6317, %v6469
    %v6518 = vsub.f32 %v6318, %v6469
    %v6519 = vsub.f32 %v6319, %v6469
    %v6520 = vsub.f32 %v6320, %v6469
    %v6521 = vsub.f32 %v6321, %v6469
    %v6522 = vsub.f32 %v6322, %v6469
    %v6523 = vsub.f32 %v6323, %v6469
    %v6524 = vsub.f32 %v6324, %v6469
    %v6525 = vsub.f32 %v6325, %v6469
    %v6526 = vsub.f32 %v6326, %v6469
    %v6527 = vsub.f32 %v6327, %v6469
    %v6528 = vsub.f32 %v6328, %v6469
    %v6529 = vsub.f32 %v6329, %v6469
    %v6530 = vsub.f32 %v6330, %v6469
    %v6531 = vsub.f32 %v6331, %v6469
    %v6532 = vsub.f32 %v6332, %v6469
    %v6533 = vsub.f32 %v6333, %v6469
    %v6534 = vmul.f32 %v6470, %v6470
    %v6535 = vmul.f32 %v6471, %v6471
    %v6536 = vmul.f32 %v6472, %v6472
    %v6537 = vmul.f32 %v6473, %v6473
    %v6538 = vmul.f32 %v6474, %v6474
    %v6539 = vmul.f32 %v6475, %v6475
    %v6540 = vmul.f32 %v6476, %v6476
    %v6541 = vmul.f32 %v6477, %v6477
    %v6542 = vmul.f32 %v6478, %v6478
    %v6543 = vmul.f32 %v6479, %v6479
    %v6544 = vmul.f32 %v6480, %v6480
    %v6545 = vmul.f32 %v6481, %v6481
    %v6546 = vmul.f32 %v6482, %v6482
    %v6547 = vmul.f32 %v6483, %v6483
    %v6548 = vmul.f32 %v6484, %v6484
    %v6549 = vmul.f32 %v6485, %v6485
    %v6550 = vmul.f32 %v6486, %v6486
    %v6551 = vmul.f32 %v6487, %v6487
    %v6552 = vmul.f32 %v6488, %v6488
    %v6553 = vmul.f32 %v6489, %v6489
    %v6554 = vmul.f32 %v6490, %v6490
    %v6555 = vmul.f32 %v6491, %v6491
    %v6556 = vmul.f32 %v6492, %v6492
    %v6557 = vmul.f32 %v6493, %v6493
    %v6558 = vmul.f32 %v6494, %v6494
    %v6559 = vmul.f32 %v6495, %v6495
    %v6560 = vmul.f32 %v6496, %v6496
    %v6561 = vmul.f32 %v6497, %v6497
    %v6562 = vmul.f32 %v6498, %v6498
    %v6563 = vmul.f32 %v6499, %v6499
    %v6564 = vmul.f32 %v6500, %v6500
    %v6565 = vmul.f32 %v6501, %v6501
    %v6566 = vmul.f32 %v6502, %v6502
    %v6567 = vmul.f32 %v6503, %v6503
    %v6568 = vmul.f32 %v6504, %v6504
    %v6569 = vmul.f32 %v6505, %v6505
    %v6570 = vmul.f32 %v6506, %v6506
    %v6571 = vmul.f32 %v6507, %v6507
    %v6572 = vmul.f32 %v6508, %v6508
    %v6573 = vmul.f32 %v6509, %v6509
    %v6574 = vmul.f32 %v6510, %v6510
    %v6575 = vmul.f32 %v6511, %v6511
    %v6576 = vmul.f32 %v6512, %v6512
    %v6577 = vmul.f32 %v6513, %v6513
    %v6578 = vmul.f32 %v6514, %v6514
    %v6579 = vmul.f32 %v6515, %v6515
    %v6580 = vmul.f32 %v6516, %v6516
    %v6581 = vmul.f32 %v6517, %v6517
    %v6582 = vmul.f32 %v6518, %v6518
    %v6583 = vmul.f32 %v6519, %v6519
    %v6584 = vmul.f32 %v6520, %v6520
    %v6585 = vmul.f32 %v6521, %v6521
    %v6586 = vmul.f32 %v6522, %v6522
    %v6587 = vmul.f32 %v6523, %v6523
    %v6588 = vmul.f32 %v6524, %v6524
    %v6589 = vmul.f32 %v6525, %v6525
    %v6590 = vmul.f32 %v6526, %v6526
    %v6591 = vmul.f32 %v6527, %v6527
    %v6592 = vmul.f32 %v6528, %v6528
    %v6593 = vmul.f32 %v6529, %v6529
    %v6594 = vmul.f32 %v6530, %v6530
    %v6595 = vmul.f32 %v6531, %v6531
    %v6596 = vmul.f32 %v6532, %v6532
    %v6597 = vmul.f32 %v6533, %v6533
    %v6598 = vsel %vm562, %v6534, 0.0
    %v6599 = vsel %vm562, %v6535, 0.0
    %v6600 = vadd.f32 %v6598, %v6599
    %v6601 = vsel %vm562, %v6536, 0.0
    %v6602 = vadd.f32 %v6600, %v6601
    %v6603 = vsel %vm562, %v6537, 0.0
    %v6604 = vadd.f32 %v6602, %v6603
    %v6605 = vsel %vm562, %v6538, 0.0
    %v6606 = vadd.f32 %v6604, %v6605
    %v6607 = vsel %vm562, %v6539, 0.0
    %v6608 = vadd.f32 %v6606, %v6607
    %v6609 = vsel %vm562, %v6540, 0.0
    %v6610 = vadd.f32 %v6608, %v6609
    %v6611 = vsel %vm562, %v6541, 0.0
    %v6612 = vadd.f32 %v6610, %v6611
    %v6613 = vsel %vm562, %v6542, 0.0
    %v6614 = vadd.f32 %v6612, %v6613
    %v6615 = vsel %vm562, %v6543, 0.0
    %v6616 = vadd.f32 %v6614, %v6615
    %v6617 = vsel %vm562, %v6544, 0.0
    %v6618 = vadd.f32 %v6616, %v6617
    %v6619 = vsel %vm562, %v6545, 0.0
    %v6620 = vadd.f32 %v6618, %v6619
    %v6621 = vsel %vm562, %v6546, 0.0
    %v6622 = vadd.f32 %v6620, %v6621
    %v6623 = vsel %vm562, %v6547, 0.0
    %v6624 = vadd.f32 %v6622, %v6623
    %v6625 = vsel %vm562, %v6548, 0.0
    %v6626 = vadd.f32 %v6624, %v6625
    %v6627 = vsel %vm562, %v6549, 0.0
    %v6628 = vadd.f32 %v6626, %v6627
    %v6629 = vsel %vm562, %v6550, 0.0
    %v6630 = vadd.f32 %v6628, %v6629
    %v6631 = vsel %vm562, %v6551, 0.0
    %v6632 = vadd.f32 %v6630, %v6631
    %v6633 = vsel %vm562, %v6552, 0.0
    %v6634 = vadd.f32 %v6632, %v6633
    %v6635 = vsel %vm562, %v6553, 0.0
    %v6636 = vadd.f32 %v6634, %v6635
    %v6637 = vsel %vm562, %v6554, 0.0
    %v6638 = vadd.f32 %v6636, %v6637
    %v6639 = vsel %vm562, %v6555, 0.0
    %v6640 = vadd.f32 %v6638, %v6639
    %v6641 = vsel %vm562, %v6556, 0.0
    %v6642 = vadd.f32 %v6640, %v6641
    %v6643 = vsel %vm562, %v6557, 0.0
    %v6644 = vadd.f32 %v6642, %v6643
    %v6645 = vsel %vm562, %v6558, 0.0
    %v6646 = vadd.f32 %v6644, %v6645
    %v6647 = vsel %vm562, %v6559, 0.0
    %v6648 = vadd.f32 %v6646, %v6647
    %v6649 = vsel %vm562, %v6560, 0.0
    %v6650 = vadd.f32 %v6648, %v6649
    %v6651 = vsel %vm562, %v6561, 0.0
    %v6652 = vadd.f32 %v6650, %v6651
    %v6653 = vsel %vm562, %v6562, 0.0
    %v6654 = vadd.f32 %v6652, %v6653
    %v6655 = vsel %vm562, %v6563, 0.0
    %v6656 = vadd.f32 %v6654, %v6655
    %v6657 = vsel %vm562, %v6564, 0.0
    %v6658 = vadd.f32 %v6656, %v6657
    %v6659 = vsel %vm562, %v6565, 0.0
    %v6660 = vadd.f32 %v6658, %v6659
    %v6661 = vsel %vm562, %v6566, 0.0
    %v6662 = vadd.f32 %v6660, %v6661
    %v6663 = vsel %vm562, %v6567, 0.0
    %v6664 = vadd.f32 %v6662, %v6663
    %v6665 = vsel %vm562, %v6568, 0.0
    %v6666 = vadd.f32 %v6664, %v6665
    %v6667 = vsel %vm562, %v6569, 0.0
    %v6668 = vadd.f32 %v6666, %v6667
    %v6669 = vsel %vm562, %v6570, 0.0
    %v6670 = vadd.f32 %v6668, %v6669
    %v6671 = vsel %vm562, %v6571, 0.0
    %v6672 = vadd.f32 %v6670, %v6671
    %v6673 = vsel %vm562, %v6572, 0.0
    %v6674 = vadd.f32 %v6672, %v6673
    %v6675 = vsel %vm562, %v6573, 0.0
    %v6676 = vadd.f32 %v6674, %v6675
    %v6677 = vsel %vm562, %v6574, 0.0
    %v6678 = vadd.f32 %v6676, %v6677
    %v6679 = vsel %vm562, %v6575, 0.0
    %v6680 = vadd.f32 %v6678, %v6679
    %v6681 = vsel %vm562, %v6576, 0.0
    %v6682 = vadd.f32 %v6680, %v6681
    %v6683 = vsel %vm562, %v6577, 0.0
    %v6684 = vadd.f32 %v6682, %v6683
    %v6685 = vsel %vm562, %v6578, 0.0
    %v6686 = vadd.f32 %v6684, %v6685
    %v6687 = vsel %vm562, %v6579, 0.0
    %v6688 = vadd.f32 %v6686, %v6687
    %v6689 = vsel %vm562, %v6580, 0.0
    %v6690 = vadd.f32 %v6688, %v6689
    %v6691 = vsel %vm562, %v6581, 0.0
    %v6692 = vadd.f32 %v6690, %v6691
    %v6693 = vsel %vm562, %v6582, 0.0
    %v6694 = vadd.f32 %v6692, %v6693
    %v6695 = vsel %vm562, %v6583, 0.0
    %v6696 = vadd.f32 %v6694, %v6695
    %v6697 = vsel %vm562, %v6584, 0.0
    %v6698 = vadd.f32 %v6696, %v6697
    %v6699 = vsel %vm562, %v6585, 0.0
    %v6700 = vadd.f32 %v6698, %v6699
    %v6701 = vsel %vm562, %v6586, 0.0
    %v6702 = vadd.f32 %v6700, %v6701
    %v6703 = vsel %vm562, %v6587, 0.0
    %v6704 = vadd.f32 %v6702, %v6703
    %v6705 = vsel %vm562, %v6588, 0.0
    %v6706 = vadd.f32 %v6704, %v6705
    %v6707 = vsel %vm562, %v6589, 0.0
    %v6708 = vadd.f32 %v6706, %v6707
    %v6709 = vsel %vm562, %v6590, 0.0
    %v6710 = vadd.f32 %v6708, %v6709
    %v6711 = vsel %vm562, %v6591, 0.0
    %v6712 = vadd.f32 %v6710, %v6711
    %v6713 = vsel %vm562, %v6592, 0.0
    %v6714 = vadd.f32 %v6712, %v6713
    %v6715 = vsel %vm562, %v6593, 0.0
    %v6716 = vadd.f32 %v6714, %v6715
    %v6717 = vsel %vm562, %v6594, 0.0
    %v6718 = vadd.f32 %v6716, %v6717
    %v6719 = vsel %vm562, %v6595, 0.0
    %v6720 = vadd.f32 %v6718, %v6719
    %v6721 = vsel %vm562, %v6596, 0.0
    %v6722 = vadd.f32 %v6720, %v6721
    %v6723 = vsel %vm562, %v6597, 0.0
    %v6724 = vadd.f32 %v6722, %v6723
    %v6725 = vrot.slane %v6724, 4
    %v6726 = vadd.f32 %v6724, %v6725
    %v6727 = vrot.slane %v6726, 2
    %v6728 = vadd.f32 %v6726, %v6727
    %v6729 = vrot.slane %v6728, 1
    %v6730 = vadd.f32 %v6728, %v6729
    %v6731 = vmul.f32 %v6730, %v696
    %v6732 = vadd.f32 %v6731, 1e-05
    %v6733 = vrsqrt.pop %v6732
    %v6734 = vmul.f32 %v6470, %v6733
    %v6735 = vmul.f32 %v6471, %v6733
    %v6736 = vmul.f32 %v6472, %v6733
    %v6737 = vmul.f32 %v6473, %v6733
    %v6738 = vmul.f32 %v6474, %v6733
    %v6739 = vmul.f32 %v6475, %v6733
    %v6740 = vmul.f32 %v6476, %v6733
    %v6741 = vmul.f32 %v6477, %v6733
    %v6742 = vmul.f32 %v6478, %v6733
    %v6743 = vmul.f32 %v6479, %v6733
    %v6744 = vmul.f32 %v6480, %v6733
    %v6745 = vmul.f32 %v6481, %v6733
    %v6746 = vmul.f32 %v6482, %v6733
    %v6747 = vmul.f32 %v6483, %v6733
    %v6748 = vmul.f32 %v6484, %v6733
    %v6749 = vmul.f32 %v6485, %v6733
    %v6750 = vmul.f32 %v6486, %v6733
    %v6751 = vmul.f32 %v6487, %v6733
    %v6752 = vmul.f32 %v6488, %v6733
    %v6753 = vmul.f32 %v6489, %v6733
    %v6754 = vmul.f32 %v6490, %v6733
    %v6755 = vmul.f32 %v6491, %v6733
    %v6756 = vmul.f32 %v6492, %v6733
    %v6757 = vmul.f32 %v6493, %v6733
    %v6758 = vmul.f32 %v6494, %v6733
    %v6759 = vmul.f32 %v6495, %v6733
    %v6760 = vmul.f32 %v6496, %v6733
    %v6761 = vmul.f32 %v6497, %v6733
    %v6762 = vmul.f32 %v6498, %v6733
    %v6763 = vmul.f32 %v6499, %v6733
    %v6764 = vmul.f32 %v6500, %v6733
    %v6765 = vmul.f32 %v6501, %v6733
    %v6766 = vmul.f32 %v6502, %v6733
    %v6767 = vmul.f32 %v6503, %v6733
    %v6768 = vmul.f32 %v6504, %v6733
    %v6769 = vmul.f32 %v6505, %v6733
    %v6770 = vmul.f32 %v6506, %v6733
    %v6771 = vmul.f32 %v6507, %v6733
    %v6772 = vmul.f32 %v6508, %v6733
    %v6773 = vmul.f32 %v6509, %v6733
    %v6774 = vmul.f32 %v6510, %v6733
    %v6775 = vmul.f32 %v6511, %v6733
    %v6776 = vmul.f32 %v6512, %v6733
    %v6777 = vmul.f32 %v6513, %v6733
    %v6778 = vmul.f32 %v6514, %v6733
    %v6779 = vmul.f32 %v6515, %v6733
    %v6780 = vmul.f32 %v6516, %v6733
    %v6781 = vmul.f32 %v6517, %v6733
    %v6782 = vmul.f32 %v6518, %v6733
    %v6783 = vmul.f32 %v6519, %v6733
    %v6784 = vmul.f32 %v6520, %v6733
    %v6785 = vmul.f32 %v6521, %v6733
    %v6786 = vmul.f32 %v6522, %v6733
    %v6787 = vmul.f32 %v6523, %v6733
    %v6788 = vmul.f32 %v6524, %v6733
    %v6789 = vmul.f32 %v6525, %v6733
    %v6790 = vmul.f32 %v6526, %v6733
    %v6791 = vmul.f32 %v6527, %v6733
    %v6792 = vmul.f32 %v6528, %v6733
    %v6793 = vmul.f32 %v6529, %v6733
    %v6794 = vmul.f32 %v6530, %v6733
    %v6795 = vmul.f32 %v6531, %v6733
    %v6796 = vmul.f32 %v6532, %v6733
    %v6797 = vmul.f32 %v6533, %v6733
    %v6799 = vlaneseq
    %v6800 = vshrl.u32 %v6799, 7
    %v6801 = vsub.s32 0, %v6800
    %v6802 = vrot.slane %v6334, %v6801
    %v6804 = vmul.f32 %v6734, %v6802
    %v6805 = vmul.f32 %v6735, %v6802
    %v6806 = vmul.f32 %v6736, %v6802
    %v6807 = vmul.f32 %v6737, %v6802
    %v6808 = vmul.f32 %v6738, %v6802
    %v6809 = vmul.f32 %v6739, %v6802
    %v6810 = vmul.f32 %v6740, %v6802
    %v6811 = vmul.f32 %v6741, %v6802
    %v6812 = vmul.f32 %v6742, %v6802
    %v6813 = vmul.f32 %v6743, %v6802
    %v6814 = vmul.f32 %v6744, %v6802
    %v6815 = vmul.f32 %v6745, %v6802
    %v6816 = vmul.f32 %v6746, %v6802
    %v6817 = vmul.f32 %v6747, %v6802
    %v6818 = vmul.f32 %v6748, %v6802
    %v6819 = vmul.f32 %v6749, %v6802
    %v6820 = vmul.f32 %v6750, %v6802
    %v6821 = vmul.f32 %v6751, %v6802
    %v6822 = vmul.f32 %v6752, %v6802
    %v6823 = vmul.f32 %v6753, %v6802
    %v6824 = vmul.f32 %v6754, %v6802
    %v6825 = vmul.f32 %v6755, %v6802
    %v6826 = vmul.f32 %v6756, %v6802
    %v6827 = vmul.f32 %v6757, %v6802
    %v6828 = vmul.f32 %v6758, %v6802
    %v6829 = vmul.f32 %v6759, %v6802
    %v6830 = vmul.f32 %v6760, %v6802
    %v6831 = vmul.f32 %v6761, %v6802
    %v6832 = vmul.f32 %v6762, %v6802
    %v6833 = vmul.f32 %v6763, %v6802
    %v6834 = vmul.f32 %v6764, %v6802
    %v6835 = vmul.f32 %v6765, %v6802
    %v6836 = vmul.f32 %v6766, %v6802
    %v6837 = vmul.f32 %v6767, %v6802
    %v6838 = vmul.f32 %v6768, %v6802
    %v6839 = vmul.f32 %v6769, %v6802
    %v6840 = vmul.f32 %v6770, %v6802
    %v6841 = vmul.f32 %v6771, %v6802
    %v6842 = vmul.f32 %v6772, %v6802
    %v6843 = vmul.f32 %v6773, %v6802
    %v6844 = vmul.f32 %v6774, %v6802
    %v6845 = vmul.f32 %v6775, %v6802
    %v6846 = vmul.f32 %v6776, %v6802
    %v6847 = vmul.f32 %v6777, %v6802
    %v6848 = vmul.f32 %v6778, %v6802
    %v6849 = vmul.f32 %v6779, %v6802
    %v6850 = vmul.f32 %v6780, %v6802
    %v6851 = vmul.f32 %v6781, %v6802
    %v6852 = vmul.f32 %v6782, %v6802
    %v6853 = vmul.f32 %v6783, %v6802
    %v6854 = vmul.f32 %v6784, %v6802
    %v6855 = vmul.f32 %v6785, %v6802
    %v6856 = vmul.f32 %v6786, %v6802
    %v6857 = vmul.f32 %v6787, %v6802
    %v6858 = vmul.f32 %v6788, %v6802
    %v6859 = vmul.f32 %v6789, %v6802
    %v6860 = vmul.f32 %v6790, %v6802
    %v6861 = vmul.f32 %v6791, %v6802
    %v6862 = vmul.f32 %v6792, %v6802
    %v6863 = vmul.f32 %v6793, %v6802
    %v6864 = vmul.f32 %v6794, %v6802
    %v6865 = vmul.f32 %v6795, %v6802
    %v6866 = vmul.f32 %v6796, %v6802
    %v6867 = vmul.f32 %v6797, %v6802
    %v6869 = vlaneseq
    %v6870 = vshrl.u32 %v6869, 7
    %v6871 = vsub.s32 0, %v6870
    %v6872 = vrot.slane %v6335, %v6871
    %v6874 = vadd.f32 %v6804, %v6872
    %v6875 = vadd.f32 %v6805, %v6872
    %v6876 = vadd.f32 %v6806, %v6872
    %v6877 = vadd.f32 %v6807, %v6872
    %v6878 = vadd.f32 %v6808, %v6872
    %v6879 = vadd.f32 %v6809, %v6872
    %v6880 = vadd.f32 %v6810, %v6872
    %v6881 = vadd.f32 %v6811, %v6872
    %v6882 = vadd.f32 %v6812, %v6872
    %v6883 = vadd.f32 %v6813, %v6872
    %v6884 = vadd.f32 %v6814, %v6872
    %v6885 = vadd.f32 %v6815, %v6872
    %v6886 = vadd.f32 %v6816, %v6872
    %v6887 = vadd.f32 %v6817, %v6872
    %v6888 = vadd.f32 %v6818, %v6872
    %v6889 = vadd.f32 %v6819, %v6872
    %v6890 = vadd.f32 %v6820, %v6872
    %v6891 = vadd.f32 %v6821, %v6872
    %v6892 = vadd.f32 %v6822, %v6872
    %v6893 = vadd.f32 %v6823, %v6872
    %v6894 = vadd.f32 %v6824, %v6872
    %v6895 = vadd.f32 %v6825, %v6872
    %v6896 = vadd.f32 %v6826, %v6872
    %v6897 = vadd.f32 %v6827, %v6872
    %v6898 = vadd.f32 %v6828, %v6872
    %v6899 = vadd.f32 %v6829, %v6872
    %v6900 = vadd.f32 %v6830, %v6872
    %v6901 = vadd.f32 %v6831, %v6872
    %v6902 = vadd.f32 %v6832, %v6872
    %v6903 = vadd.f32 %v6833, %v6872
    %v6904 = vadd.f32 %v6834, %v6872
    %v6905 = vadd.f32 %v6835, %v6872
    %v6906 = vadd.f32 %v6836, %v6872
    %v6907 = vadd.f32 %v6837, %v6872
    %v6908 = vadd.f32 %v6838, %v6872
    %v6909 = vadd.f32 %v6839, %v6872
    %v6910 = vadd.f32 %v6840, %v6872
    %v6911 = vadd.f32 %v6841, %v6872
    %v6912 = vadd.f32 %v6842, %v6872
    %v6913 = vadd.f32 %v6843, %v6872
    %v6914 = vadd.f32 %v6844, %v6872
    %v6915 = vadd.f32 %v6845, %v6872
    %v6916 = vadd.f32 %v6846, %v6872
    %v6917 = vadd.f32 %v6847, %v6872
    %v6918 = vadd.f32 %v6848, %v6872
    %v6919 = vadd.f32 %v6849, %v6872
    %v6920 = vadd.f32 %v6850, %v6872
    %v6921 = vadd.f32 %v6851, %v6872
    %v6922 = vadd.f32 %v6852, %v6872
    %v6923 = vadd.f32 %v6853, %v6872
    %v6924 = vadd.f32 %v6854, %v6872
    %v6925 = vadd.f32 %v6855, %v6872
    %v6926 = vadd.f32 %v6856, %v6872
    %v6927 = vadd.f32 %v6857, %v6872
    %v6928 = vadd.f32 %v6858, %v6872
    %v6929 = vadd.f32 %v6859, %v6872
    %v6930 = vadd.f32 %v6860, %v6872
    %v6931 = vadd.f32 %v6861, %v6872
    %v6932 = vadd.f32 %v6862, %v6872
    %v6933 = vadd.f32 %v6863, %v6872
    %v6934 = vadd.f32 %v6864, %v6872
    %v6935 = vadd.f32 %v6865, %v6872
    %v6936 = vadd.f32 %v6866, %v6872
    %v6937 = vadd.f32 %v6867, %v6872
    %v6938 = vmax.f32 %v6874, 0.0
    %v6939 = vmax.f32 %v6875, 0.0
    %v6940 = vmax.f32 %v6876, 0.0
    %v6941 = vmax.f32 %v6877, 0.0
    %v6942 = vmax.f32 %v6878, 0.0
    %v6943 = vmax.f32 %v6879, 0.0
    %v6944 = vmax.f32 %v6880, 0.0
    %v6945 = vmax.f32 %v6881, 0.0
    %v6946 = vmax.f32 %v6882, 0.0
    %v6947 = vmax.f32 %v6883, 0.0
    %v6948 = vmax.f32 %v6884, 0.0
    %v6949 = vmax.f32 %v6885, 0.0
    %v6950 = vmax.f32 %v6886, 0.0
    %v6951 = vmax.f32 %v6887, 0.0
    %v6952 = vmax.f32 %v6888, 0.0
    %v6953 = vmax.f32 %v6889, 0.0
    %v6954 = vmax.f32 %v6890, 0.0
    %v6955 = vmax.f32 %v6891, 0.0
    %v6956 = vmax.f32 %v6892, 0.0
    %v6957 = vmax.f32 %v6893, 0.0
    %v6958 = vmax.f32 %v6894, 0.0
    %v6959 = vmax.f32 %v6895, 0.0
    %v6960 = vmax.f32 %v6896, 0.0
    %v6961 = vmax.f32 %v6897, 0.0
    %v6962 = vmax.f32 %v6898, 0.0
    %v6963 = vmax.f32 %v6899, 0.0
    %v6964 = vmax.f32 %v6900, 0.0
    %v6965 = vmax.f32 %v6901, 0.0
    %v6966 = vmax.f32 %v6902, 0.0
    %v6967 = vmax.f32 %v6903, 0.0
    %v6968 = vmax.f32 %v6904, 0.0
    %v6969 = vmax.f32 %v6905, 0.0
    %v6970 = vmax.f32 %v6906, 0.0
    %v6971 = vmax.f32 %v6907, 0.0
    %v6972 = vmax.f32 %v6908, 0.0
    %v6973 = vmax.f32 %v6909, 0.0
    %v6974 = vmax.f32 %v6910, 0.0
    %v6975 = vmax.f32 %v6911, 0.0
    %v6976 = vmax.f32 %v6912, 0.0
    %v6977 = vmax.f32 %v6913, 0.0
    %v6978 = vmax.f32 %v6914, 0.0
    %v6979 = vmax.f32 %v6915, 0.0
    %v6980 = vmax.f32 %v6916, 0.0
    %v6981 = vmax.f32 %v6917, 0.0
    %v6982 = vmax.f32 %v6918, 0.0
    %v6983 = vmax.f32 %v6919, 0.0
    %v6984 = vmax.f32 %v6920, 0.0
    %v6985 = vmax.f32 %v6921, 0.0
    %v6986 = vmax.f32 %v6922, 0.0
    %v6987 = vmax.f32 %v6923, 0.0
    %v6988 = vmax.f32 %v6924, 0.0
    %v6989 = vmax.f32 %v6925, 0.0
    %v6990 = vmax.f32 %v6926, 0.0
    %v6991 = vmax.f32 %v6927, 0.0
    %v6992 = vmax.f32 %v6928, 0.0
    %v6993 = vmax.f32 %v6929, 0.0
    %v6994 = vmax.f32 %v6930, 0.0
    %v6995 = vmax.f32 %v6931, 0.0
    %v6996 = vmax.f32 %v6932, 0.0
    %v6997 = vmax.f32 %v6933, 0.0
    %v6998 = vmax.f32 %v6934, 0.0
    %v6999 = vmax.f32 %v6935, 0.0
    %v7000 = vmax.f32 %v6936, 0.0
    %v7001 = vmax.f32 %v6937, 0.0
    %v7002 = vpack.c.bf16 %v6939, %v6938
    %v7003 = vpack.c.bf16 %v6941, %v6940
    %v7004 = vpack.c.bf16 %v6943, %v6942
    %v7005 = vpack.c.bf16 %v6945, %v6944
    %v7006 = vpack.c.bf16 %v6947, %v6946
    %v7007 = vpack.c.bf16 %v6949, %v6948
    %v7008 = vpack.c.bf16 %v6951, %v6950
    %v7009 = vpack.c.bf16 %v6953, %v6952
    %v7010 = vpack.c.bf16 %v6955, %v6954
    %v7011 = vpack.c.bf16 %v6957, %v6956
    %v7012 = vpack.c.bf16 %v6959, %v6958
    %v7013 = vpack.c.bf16 %v6961, %v6960
    %v7014 = vpack.c.bf16 %v6963, %v6962
    %v7015 = vpack.c.bf16 %v6965, %v6964
    %v7016 = vpack.c.bf16 %v6967, %v6966
    %v7017 = vpack.c.bf16 %v6969, %v6968
    %v7018 = vpack.c.bf16 %v6971, %v6970
    %v7019 = vpack.c.bf16 %v6973, %v6972
    %v7020 = vpack.c.bf16 %v6975, %v6974
    %v7021 = vpack.c.bf16 %v6977, %v6976
    %v7022 = vpack.c.bf16 %v6979, %v6978
    %v7023 = vpack.c.bf16 %v6981, %v6980
    %v7024 = vpack.c.bf16 %v6983, %v6982
    %v7025 = vpack.c.bf16 %v6985, %v6984
    %v7026 = vpack.c.bf16 %v6987, %v6986
    %v7027 = vpack.c.bf16 %v6989, %v6988
    %v7028 = vpack.c.bf16 %v6991, %v6990
    %v7029 = vpack.c.bf16 %v6993, %v6992
    %v7030 = vpack.c.bf16 %v6995, %v6994
    %v7031 = vpack.c.bf16 %v6997, %v6996
    %v7032 = vpack.c.bf16 %v6999, %v6998
    %v7033 = vpack.c.bf16 %v7001, %v7000
    %v7034 = vld [vmem:[%s3] sm:$0xf]
    %v7035 = vld [vmem:[%s3 + $0x4] sm:$0xf]
    %v7036 = vld [vmem:[%s3 + $0x8] sm:$0xf]
    %v7037 = vld [vmem:[%s3 + $0xc] sm:$0xf]
    %v7042 = vunpack.c.l.b16 %v7034
    %v7043 = vunpack.c.l.b16 %v7035
    %v7044 = vunpack.c.l.b16 %v7036
    %v7045 = vunpack.c.l.b16 %v7037
    %v7046 = vpack.c.b16 %v7043, %v7042
    %v7047 = vpack.c.b16 %v7045, %v7044
    %v7051 = vsel %vm562, %v7002, 0
    %v7054 = vsel %vm562, %v7003, 0
    %v7057 = vsel %vm562, %v7004, 0
    %v7060 = vsel %vm562, %v7005, 0
    %v7063 = vsel %vm562, %v7006, 0
    %v7066 = vsel %vm562, %v7007, 0
    %v7069 = vsel %vm562, %v7008, 0
    %v7072 = vsel %vm562, %v7009, 0
    %v7075 = vsel %vm562, %v7010, 0
    %v7078 = vsel %vm562, %v7011, 0
    %v7081 = vsel %vm562, %v7012, 0
    %v7084 = vsel %vm562, %v7013, 0
    %v7087 = vsel %vm562, %v7014, 0
    %v7090 = vsel %vm562, %v7015, 0
    %v7093 = vsel %vm562, %v7016, 0
    %v7096 = vsel %vm562, %v7017, 0
    %v7099 = vsel %vm562, %v7018, 0
    %v7102 = vsel %vm562, %v7019, 0
    %v7105 = vsel %vm562, %v7020, 0
    %v7108 = vsel %vm562, %v7021, 0
    %v7111 = vsel %vm562, %v7022, 0
    %v7114 = vsel %vm562, %v7023, 0
    %v7117 = vsel %vm562, %v7024, 0
    %v7120 = vsel %vm562, %v7025, 0
    %v7123 = vsel %vm562, %v7026, 0
    %v7126 = vsel %vm562, %v7027, 0
    %v7129 = vsel %vm562, %v7028, 0
    %v7132 = vsel %vm562, %v7029, 0
    %v7135 = vsel %vm562, %v7030, 0
    %v7138 = vsel %vm562, %v7031, 0
    %v7141 = vsel %vm562, %v7032, 0
    %v7144 = vsel %vm562, %v7033, 0
    %7146 = vmatprep.subr.bf16.mxu0 0
    %7147 = vmatpush1.bf16.msra.mxu0 %v7046
    %7148 = vmatprep.subr.bf16.mxu0 0
    %7149 = vmatpush1.bf16.msra.mxu0 %v7047
    %7150 = vmatprep.subr.bf16.mxu0 0
    %7151 = vmatpush1.bf16.msra.mxu0 0
    %7152 = vmatprep.subr.bf16.mxu0 0
    %7153 = vmatpush1.bf16.msra.mxu0 0
    %7154 = vmatprep.subr.bf16.mxu0 0
    %7155 = vmatpush1.bf16.msra.mxu0 0
    %7156 = vmatprep.subr.bf16.mxu0 0
    %7157 = vmatpush1.bf16.msra.mxu0 0
    %7158 = vmatprep.subr.bf16.mxu0 0
    %7159 = vmatpush1.bf16.msra.mxu0 0
    %7160 = vmatprep.subr.bf16.mxu0 0
    %7161 = vmatpush1.bf16.msra.mxu0 0
    %7162 = vmatprep.subr.bf16.mxu0 0
    %7163 = vmatpush1.bf16.msra.mxu0 0
    %7164 = vmatprep.subr.bf16.mxu0 0
    %7165 = vmatpush1.bf16.msra.mxu0 0
    %7166 = vmatprep.subr.bf16.mxu0 0
    %7167 = vmatpush1.bf16.msra.mxu0 0
    %7168 = vmatprep.subr.bf16.mxu0 0
    %7169 = vmatpush1.bf16.msra.mxu0 0
    %7170 = vmatprep.subr.bf16.mxu0 0
    %7171 = vmatpush1.bf16.msra.mxu0 0
    %7172 = vmatprep.subr.bf16.mxu0 0
    %7173 = vmatpush1.bf16.msra.mxu0 0
    %7174 = vmatprep.subr.bf16.mxu0 0
    %7175 = vmatpush1.bf16.msra.mxu0 0
    %7176 = vmatprep.subr.bf16.mxu0 0
    %7177 = vmatpush1.bf16.msra.mxu0 0
    %7178 = vmatprep.mubr.bf16.mxu0 0
    %7179 = vmatmul.mubr.bf16.gmra.mrb[0].mxu0 %v7051
    %v7180 = vpop.f32.mrb[0].mxu0
    %v7181 = vadd.f32 0.0, %v7180
    %v7182 = vpop.f32.mrb[0].mxu0
    %v7183 = vpop.f32.mrb[0].mxu0
    %v7184 = vadd.f32 0.0, %v7183
    %v7185 = vpop.f32.mrb[0].mxu0
    %7186 = vmatprep.mubr.bf16.mxu0 0
    %7187 = vmatmul.mubr.bf16.gmra.mrb[0].mxu0 %v7054
    %v7188 = vpop.f32.mrb[0].mxu0
    %v7189 = vadd.f32 0.0, %v7188
    %v7190 = vpop.f32.mrb[0].mxu0
    %v7191 = vpop.f32.mrb[0].mxu0
    %v7192 = vadd.f32 0.0, %v7191
    %v7193 = vpop.f32.mrb[0].mxu0
    %7194 = vmatprep.mubr.bf16.mxu0 0
    %7195 = vmatmul.mubr.bf16.gmra.mrb[0].mxu0 %v7057
    %v7196 = vpop.f32.mrb[0].mxu0
    %v7197 = vadd.f32 0.0, %v7196
    %v7198 = vpop.f32.mrb[0].mxu0
    %v7199 = vpop.f32.mrb[0].mxu0
    %v7200 = vadd.f32 0.0, %v7199
    %v7201 = vpop.f32.mrb[0].mxu0
    %7202 = vmatprep.mubr.bf16.mxu0 0
    %7203 = vmatmul.mubr.bf16.gmra.mrb[0].mxu0 %v7060
    %v7204 = vpop.f32.mrb[0].mxu0
    %v7205 = vadd.f32 0.0, %v7204
    %v7206 = vpop.f32.mrb[0].mxu0
    %v7207 = vpop.f32.mrb[0].mxu0
    %v7208 = vadd.f32 0.0, %v7207
    %v7209 = vpop.f32.mrb[0].mxu0
    %7210 = vmatprep.mubr.bf16.mxu0 0
    %7211 = vmatmul.mubr.bf16.gmra.mrb[0].mxu0 %v7063
    %v7212 = vpop.f32.mrb[0].mxu0
    %v7213 = vadd.f32 0.0, %v7212
    %v7214 = vpop.f32.mrb[0].mxu0
    %v7215 = vpop.f32.mrb[0].mxu0
    %v7216 = vadd.f32 0.0, %v7215
    %v7217 = vpop.f32.mrb[0].mxu0
    %7218 = vmatprep.mubr.bf16.mxu0 0
    %7219 = vmatmul.mubr.bf16.gmra.mrb[0].mxu0 %v7066
    %v7220 = vpop.f32.mrb[0].mxu0
    %v7221 = vadd.f32 0.0, %v7220
    %v7222 = vpop.f32.mrb[0].mxu0
    %v7223 = vpop.f32.mrb[0].mxu0
    %v7224 = vadd.f32 0.0, %v7223
    %v7225 = vpop.f32.mrb[0].mxu0
    %7226 = vmatprep.mubr.bf16.mxu0 0
    %7227 = vmatmul.mubr.bf16.gmra.mrb[0].mxu0 %v7069
    %v7228 = vpop.f32.mrb[0].mxu0
    %v7229 = vadd.f32 0.0, %v7228
    %v7230 = vpop.f32.mrb[0].mxu0
    %v7231 = vpop.f32.mrb[0].mxu0
    %v7232 = vadd.f32 0.0, %v7231
    %v7233 = vpop.f32.mrb[0].mxu0
    %7234 = vmatprep.mubr.bf16.mxu0 0
    %7235 = vmatmul.mubr.bf16.gmra.mrb[0].mxu0 %v7072
    %v7236 = vpop.f32.mrb[0].mxu0
    %v7237 = vadd.f32 0.0, %v7236
    %v7238 = vpop.f32.mrb[0].mxu0
    %v7239 = vpop.f32.mrb[0].mxu0
    %v7240 = vadd.f32 0.0, %v7239
    %v7241 = vpop.f32.mrb[0].mxu0
    %7242 = vmatprep.mubr.bf16.mxu0 0
    %7243 = vmatmul.mubr.bf16.gmra.mrb[0].mxu0 %v7075
    %v7244 = vpop.f32.mrb[0].mxu0
    %v7245 = vadd.f32 0.0, %v7244
    %v7246 = vpop.f32.mrb[0].mxu0
    %v7247 = vpop.f32.mrb[0].mxu0
    %v7248 = vadd.f32 0.0, %v7247
    %v7249 = vpop.f32.mrb[0].mxu0
    %7250 = vmatprep.mubr.bf16.mxu0 0
    %7251 = vmatmul.mubr.bf16.gmra.mrb[0].mxu0 %v7078
    %v7252 = vpop.f32.mrb[0].mxu0
    %v7253 = vadd.f32 0.0, %v7252
    %v7254 = vpop.f32.mrb[0].mxu0
    %v7255 = vpop.f32.mrb[0].mxu0
    %v7256 = vadd.f32 0.0, %v7255
    %v7257 = vpop.f32.mrb[0].mxu0
    %7258 = vmatprep.mubr.bf16.mxu0 0
    %7259 = vmatmul.mubr.bf16.gmra.mrb[0].mxu0 %v7081
    %v7260 = vpop.f32.mrb[0].mxu0
    %v7261 = vadd.f32 0.0, %v7260
    %v7262 = vpop.f32.mrb[0].mxu0
    %v7263 = vpop.f32.mrb[0].mxu0
    %v7264 = vadd.f32 0.0, %v7263
    %v7265 = vpop.f32.mrb[0].mxu0
    %7266 = vmatprep.mubr.bf16.mxu0 0
    %7267 = vmatmul.mubr.bf16.gmra.mrb[0].mxu0 %v7084
    %v7268 = vpop.f32.mrb[0].mxu0
    %v7269 = vadd.f32 0.0, %v7268
    %v7270 = vpop.f32.mrb[0].mxu0
    %v7271 = vpop.f32.mrb[0].mxu0
    %v7272 = vadd.f32 0.0, %v7271
    %v7273 = vpop.f32.mrb[0].mxu0
    %7274 = vmatprep.mubr.bf16.mxu0 0
    %7275 = vmatmul.mubr.bf16.gmra.mrb[0].mxu0 %v7087
    %v7276 = vpop.f32.mrb[0].mxu0
    %v7277 = vadd.f32 0.0, %v7276
    %v7278 = vpop.f32.mrb[0].mxu0
    %v7279 = vpop.f32.mrb[0].mxu0
    %v7280 = vadd.f32 0.0, %v7279
    %v7281 = vpop.f32.mrb[0].mxu0
    %7282 = vmatprep.mubr.bf16.mxu0 0
    %7283 = vmatmul.mubr.bf16.gmra.mrb[0].mxu0 %v7090
    %v7284 = vpop.f32.mrb[0].mxu0
    %v7285 = vadd.f32 0.0, %v7284
    %v7286 = vpop.f32.mrb[0].mxu0
    %v7287 = vpop.f32.mrb[0].mxu0
    %v7288 = vadd.f32 0.0, %v7287
    %v7289 = vpop.f32.mrb[0].mxu0
    %7290 = vmatprep.mubr.bf16.mxu0 0
    %7291 = vmatmul.mubr.bf16.gmra.mrb[0].mxu0 %v7093
    %v7292 = vpop.f32.mrb[0].mxu0
    %v7293 = vadd.f32 0.0, %v7292
    %v7294 = vpop.f32.mrb[0].mxu0
    %v7295 = vpop.f32.mrb[0].mxu0
    %v7296 = vadd.f32 0.0, %v7295
    %v7297 = vpop.f32.mrb[0].mxu0
    %7298 = vmatprep.mubr.bf16.mxu0 0
    %7299 = vmatmul.mubr.bf16.gmra.mrb[0].mxu0 %v7096
    %v7300 = vpop.f32.mrb[0].mxu0
    %v7301 = vadd.f32 0.0, %v7300
    %v7302 = vpop.f32.mrb[0].mxu0
    %v7303 = vpop.f32.mrb[0].mxu0
    %v7304 = vadd.f32 0.0, %v7303
    %v7305 = vpop.f32.mrb[0].mxu0
    %7306 = vmatprep.mubr.bf16.mxu0 0
    %7307 = vmatmul.mubr.bf16.gmra.mrb[0].mxu0 %v7099
    %v7308 = vpop.f32.mrb[0].mxu0
    %v7309 = vadd.f32 0.0, %v7308
    %v7310 = vpop.f32.mrb[0].mxu0
    %v7311 = vpop.f32.mrb[0].mxu0
    %v7312 = vadd.f32 0.0, %v7311
    %v7313 = vpop.f32.mrb[0].mxu0
    %7314 = vmatprep.mubr.bf16.mxu0 0
    %7315 = vmatmul.mubr.bf16.gmra.mrb[0].mxu0 %v7102
    %v7316 = vpop.f32.mrb[0].mxu0
    %v7317 = vadd.f32 0.0, %v7316
    %v7318 = vpop.f32.mrb[0].mxu0
    %v7319 = vpop.f32.mrb[0].mxu0
    %v7320 = vadd.f32 0.0, %v7319
    %v7321 = vpop.f32.mrb[0].mxu0
    %7322 = vmatprep.mubr.bf16.mxu0 0
    %7323 = vmatmul.mubr.bf16.gmra.mrb[0].mxu0 %v7105
    %v7324 = vpop.f32.mrb[0].mxu0
    %v7325 = vadd.f32 0.0, %v7324
    %v7326 = vpop.f32.mrb[0].mxu0
    %v7327 = vpop.f32.mrb[0].mxu0
    %v7328 = vadd.f32 0.0, %v7327
    %v7329 = vpop.f32.mrb[0].mxu0
    %7330 = vmatprep.mubr.bf16.mxu0 0
    %7331 = vmatmul.mubr.bf16.gmra.mrb[0].mxu0 %v7108
    %v7332 = vpop.f32.mrb[0].mxu0
    %v7333 = vadd.f32 0.0, %v7332
    %v7334 = vpop.f32.mrb[0].mxu0
    %v7335 = vpop.f32.mrb[0].mxu0
    %v7336 = vadd.f32 0.0, %v7335
    %v7337 = vpop.f32.mrb[0].mxu0
    %7338 = vmatprep.mubr.bf16.mxu0 0
    %7339 = vmatmul.mubr.bf16.gmra.mrb[0].mxu0 %v7111
    %v7340 = vpop.f32.mrb[0].mxu0
    %v7341 = vadd.f32 0.0, %v7340
    %v7342 = vpop.f32.mrb[0].mxu0
    %v7343 = vpop.f32.mrb[0].mxu0
    %v7344 = vadd.f32 0.0, %v7343
    %v7345 = vpop.f32.mrb[0].mxu0
    %7346 = vmatprep.mubr.bf16.mxu0 0
    %7347 = vmatmul.mubr.bf16.gmra.mrb[0].mxu0 %v7114
    %v7348 = vpop.f32.mrb[0].mxu0
    %v7349 = vadd.f32 0.0, %v7348
    %v7350 = vpop.f32.mrb[0].mxu0
    %v7351 = vpop.f32.mrb[0].mxu0
    %v7352 = vadd.f32 0.0, %v7351
    %v7353 = vpop.f32.mrb[0].mxu0
    %7354 = vmatprep.mubr.bf16.mxu0 0
    %7355 = vmatmul.mubr.bf16.gmra.mrb[0].mxu0 %v7117
    %v7356 = vpop.f32.mrb[0].mxu0
    %v7357 = vadd.f32 0.0, %v7356
    %v7358 = vpop.f32.mrb[0].mxu0
    %v7359 = vpop.f32.mrb[0].mxu0
    %v7360 = vadd.f32 0.0, %v7359
    %v7361 = vpop.f32.mrb[0].mxu0
    %7362 = vmatprep.mubr.bf16.mxu0 0
    %7363 = vmatmul.mubr.bf16.gmra.mrb[0].mxu0 %v7120
    %v7364 = vpop.f32.mrb[0].mxu0
    %v7365 = vadd.f32 0.0, %v7364
    %v7366 = vpop.f32.mrb[0].mxu0
    %v7367 = vpop.f32.mrb[0].mxu0
    %v7368 = vadd.f32 0.0, %v7367
    %v7369 = vpop.f32.mrb[0].mxu0
    %7370 = vmatprep.mubr.bf16.mxu0 0
    %7371 = vmatmul.mubr.bf16.gmra.mrb[0].mxu0 %v7123
    %v7372 = vpop.f32.mrb[0].mxu0
    %v7373 = vadd.f32 0.0, %v7372
    %v7374 = vpop.f32.mrb[0].mxu0
    %v7375 = vpop.f32.mrb[0].mxu0
    %v7376 = vadd.f32 0.0, %v7375
    %v7377 = vpop.f32.mrb[0].mxu0
    %7378 = vmatprep.mubr.bf16.mxu0 0
    %7379 = vmatmul.mubr.bf16.gmra.mrb[0].mxu0 %v7126
    %v7380 = vpop.f32.mrb[0].mxu0
    %v7381 = vadd.f32 0.0, %v7380
    %v7382 = vpop.f32.mrb[0].mxu0
    %v7383 = vpop.f32.mrb[0].mxu0
    %v7384 = vadd.f32 0.0, %v7383
    %v7385 = vpop.f32.mrb[0].mxu0
    %7386 = vmatprep.mubr.bf16.mxu0 0
    %7387 = vmatmul.mubr.bf16.gmra.mrb[0].mxu0 %v7129
    %v7388 = vpop.f32.mrb[0].mxu0
    %v7389 = vadd.f32 0.0, %v7388
    %v7390 = vpop.f32.mrb[0].mxu0
    %v7391 = vpop.f32.mrb[0].mxu0
    %v7392 = vadd.f32 0.0, %v7391
    %v7393 = vpop.f32.mrb[0].mxu0
    %7394 = vmatprep.mubr.bf16.mxu0 0
    %7395 = vmatmul.mubr.bf16.gmra.mrb[0].mxu0 %v7132
    %v7396 = vpop.f32.mrb[0].mxu0
    %v7397 = vadd.f32 0.0, %v7396
    %v7398 = vpop.f32.mrb[0].mxu0
    %v7399 = vpop.f32.mrb[0].mxu0
    %v7400 = vadd.f32 0.0, %v7399
    %v7401 = vpop.f32.mrb[0].mxu0
    %7402 = vmatprep.mubr.bf16.mxu0 0
    %7403 = vmatmul.mubr.bf16.gmra.mrb[0].mxu0 %v7135
    %v7404 = vpop.f32.mrb[0].mxu0
    %v7405 = vadd.f32 0.0, %v7404
    %v7406 = vpop.f32.mrb[0].mxu0
    %v7407 = vpop.f32.mrb[0].mxu0
    %v7408 = vadd.f32 0.0, %v7407
    %v7409 = vpop.f32.mrb[0].mxu0
    %7410 = vmatprep.mubr.bf16.mxu0 0
    %7411 = vmatmul.mubr.bf16.gmra.mrb[0].mxu0 %v7138
    %v7412 = vpop.f32.mrb[0].mxu0
    %v7413 = vadd.f32 0.0, %v7412
    %v7414 = vpop.f32.mrb[0].mxu0
    %v7415 = vpop.f32.mrb[0].mxu0
    %v7416 = vadd.f32 0.0, %v7415
    %v7417 = vpop.f32.mrb[0].mxu0
    %7418 = vmatprep.mubr.bf16.mxu0 0
    %7419 = vmatmul.mubr.bf16.gmra.mrb[0].mxu0 %v7141
    %v7420 = vpop.f32.mrb[0].mxu0
    %v7421 = vadd.f32 0.0, %v7420
    %v7422 = vpop.f32.mrb[0].mxu0
    %v7423 = vpop.f32.mrb[0].mxu0
    %v7424 = vadd.f32 0.0, %v7423
    %v7425 = vpop.f32.mrb[0].mxu0
    %7426 = vmatprep.mubr.bf16.mxu0 0
    %7427 = vmatmul.mubr.bf16.gmra.mrb[0].mxu0 %v7144
    %v7428 = vpop.f32.mrb[0].mxu0
    %v7429 = vadd.f32 0.0, %v7428
    %v7430 = vpop.f32.mrb[0].mxu0
    %v7431 = vpop.f32.mrb[0].mxu0
    %v7432 = vadd.f32 0.0, %v7431
    %v7433 = vpop.f32.mrb[0].mxu0
    %7434 = vdwg.mxu0
    %v7435 = vld [vmem:[%s9] sm:$0x1]
    %v7436 = vld [vmem:[%s10] sm:$0x1]
    %v7437 = vadd.f32 %v7181, %v7184
    %v7438 = vadd.f32 %v7437, %v7189
    %v7439 = vadd.f32 %v7438, %v7192
    %v7440 = vadd.f32 %v7439, %v7197
    %v7441 = vadd.f32 %v7440, %v7200
    %v7442 = vadd.f32 %v7441, %v7205
    %v7443 = vadd.f32 %v7442, %v7208
    %v7444 = vadd.f32 %v7443, %v7213
    %v7445 = vadd.f32 %v7444, %v7216
    %v7446 = vadd.f32 %v7445, %v7221
    %v7447 = vadd.f32 %v7446, %v7224
    %v7448 = vadd.f32 %v7447, %v7229
    %v7449 = vadd.f32 %v7448, %v7232
    %v7450 = vadd.f32 %v7449, %v7237
    %v7451 = vadd.f32 %v7450, %v7240
    %v7452 = vadd.f32 %v7451, %v7245
    %v7453 = vadd.f32 %v7452, %v7248
    %v7454 = vadd.f32 %v7453, %v7253
    %v7455 = vadd.f32 %v7454, %v7256
    %v7456 = vadd.f32 %v7455, %v7261
    %v7457 = vadd.f32 %v7456, %v7264
    %v7458 = vadd.f32 %v7457, %v7269
    %v7459 = vadd.f32 %v7458, %v7272
    %v7460 = vadd.f32 %v7459, %v7277
    %v7461 = vadd.f32 %v7460, %v7280
    %v7462 = vadd.f32 %v7461, %v7285
    %v7463 = vadd.f32 %v7462, %v7288
    %v7464 = vadd.f32 %v7463, %v7293
    %v7465 = vadd.f32 %v7464, %v7296
    %v7466 = vadd.f32 %v7465, %v7301
    %v7467 = vadd.f32 %v7466, %v7304
    %v7468 = vadd.f32 %v7467, %v7309
    %v7469 = vadd.f32 %v7468, %v7312
    %v7470 = vadd.f32 %v7469, %v7317
    %v7471 = vadd.f32 %v7470, %v7320
    %v7472 = vadd.f32 %v7471, %v7325
    %v7473 = vadd.f32 %v7472, %v7328
    %v7474 = vadd.f32 %v7473, %v7333
    %v7475 = vadd.f32 %v7474, %v7336
    %v7476 = vadd.f32 %v7475, %v7341
    %v7477 = vadd.f32 %v7476, %v7344
    %v7478 = vadd.f32 %v7477, %v7349
    %v7479 = vadd.f32 %v7478, %v7352
    %v7480 = vadd.f32 %v7479, %v7357
    %v7481 = vadd.f32 %v7480, %v7360
    %v7482 = vadd.f32 %v7481, %v7365
    %v7483 = vadd.f32 %v7482, %v7368
    %v7484 = vadd.f32 %v7483, %v7373
    %v7485 = vadd.f32 %v7484, %v7376
    %v7486 = vadd.f32 %v7485, %v7381
    %v7487 = vadd.f32 %v7486, %v7384
    %v7488 = vadd.f32 %v7487, %v7389
    %v7489 = vadd.f32 %v7488, %v7392
    %v7490 = vadd.f32 %v7489, %v7397
    %v7491 = vadd.f32 %v7490, %v7400
    %v7492 = vadd.f32 %v7491, %v7405
    %v7493 = vadd.f32 %v7492, %v7408
    %v7494 = vadd.f32 %v7493, %v7413
    %v7495 = vadd.f32 %v7494, %v7416
    %v7496 = vadd.f32 %v7495, %v7421
    %v7497 = vadd.f32 %v7496, %v7424
    %v7498 = vadd.f32 %v7497, %v7429
    %v7499 = vadd.f32 %v7498, %v7432
    %v7500 = vrot.slane %v7499, 4
    %v7501 = vadd.f32 %v7499, %v7500
    %v7502 = vrot.slane %v7501, 2
    %v7503 = vadd.f32 %v7501, %v7502
    %v7504 = vrot.slane %v7503, 1
    %v7505 = vadd.f32 %v7503, %v7504
    %v7506 = vmul.f32 %v7505, %v696
    %v7507 = vsub.f32 %v7181, %v7506
    %v7508 = vsub.f32 %v7184, %v7506
    %v7509 = vsub.f32 %v7189, %v7506
    %v7510 = vsub.f32 %v7192, %v7506
    %v7511 = vsub.f32 %v7197, %v7506
    %v7512 = vsub.f32 %v7200, %v7506
    %v7513 = vsub.f32 %v7205, %v7506
    %v7514 = vsub.f32 %v7208, %v7506
    %v7515 = vsub.f32 %v7213, %v7506
    %v7516 = vsub.f32 %v7216, %v7506
    %v7517 = vsub.f32 %v7221, %v7506
    %v7518 = vsub.f32 %v7224, %v7506
    %v7519 = vsub.f32 %v7229, %v7506
    %v7520 = vsub.f32 %v7232, %v7506
    %v7521 = vsub.f32 %v7237, %v7506
    %v7522 = vsub.f32 %v7240, %v7506
    %v7523 = vsub.f32 %v7245, %v7506
    %v7524 = vsub.f32 %v7248, %v7506
    %v7525 = vsub.f32 %v7253, %v7506
    %v7526 = vsub.f32 %v7256, %v7506
    %v7527 = vsub.f32 %v7261, %v7506
    %v7528 = vsub.f32 %v7264, %v7506
    %v7529 = vsub.f32 %v7269, %v7506
    %v7530 = vsub.f32 %v7272, %v7506
    %v7531 = vsub.f32 %v7277, %v7506
    %v7532 = vsub.f32 %v7280, %v7506
    %v7533 = vsub.f32 %v7285, %v7506
    %v7534 = vsub.f32 %v7288, %v7506
    %v7535 = vsub.f32 %v7293, %v7506
    %v7536 = vsub.f32 %v7296, %v7506
    %v7537 = vsub.f32 %v7301, %v7506
    %v7538 = vsub.f32 %v7304, %v7506
    %v7539 = vsub.f32 %v7309, %v7506
    %v7540 = vsub.f32 %v7312, %v7506
    %v7541 = vsub.f32 %v7317, %v7506
    %v7542 = vsub.f32 %v7320, %v7506
    %v7543 = vsub.f32 %v7325, %v7506
    %v7544 = vsub.f32 %v7328, %v7506
    %v7545 = vsub.f32 %v7333, %v7506
    %v7546 = vsub.f32 %v7336, %v7506
    %v7547 = vsub.f32 %v7341, %v7506
    %v7548 = vsub.f32 %v7344, %v7506
    %v7549 = vsub.f32 %v7349, %v7506
    %v7550 = vsub.f32 %v7352, %v7506
    %v7551 = vsub.f32 %v7357, %v7506
    %v7552 = vsub.f32 %v7360, %v7506
    %v7553 = vsub.f32 %v7365, %v7506
    %v7554 = vsub.f32 %v7368, %v7506
    %v7555 = vsub.f32 %v7373, %v7506
    %v7556 = vsub.f32 %v7376, %v7506
    %v7557 = vsub.f32 %v7381, %v7506
    %v7558 = vsub.f32 %v7384, %v7506
    %v7559 = vsub.f32 %v7389, %v7506
    %v7560 = vsub.f32 %v7392, %v7506
    %v7561 = vsub.f32 %v7397, %v7506
    %v7562 = vsub.f32 %v7400, %v7506
    %v7563 = vsub.f32 %v7405, %v7506
    %v7564 = vsub.f32 %v7408, %v7506
    %v7565 = vsub.f32 %v7413, %v7506
    %v7566 = vsub.f32 %v7416, %v7506
    %v7567 = vsub.f32 %v7421, %v7506
    %v7568 = vsub.f32 %v7424, %v7506
    %v7569 = vsub.f32 %v7429, %v7506
    %v7570 = vsub.f32 %v7432, %v7506
    %v7571 = vmul.f32 %v7507, %v7507
    %v7572 = vmul.f32 %v7508, %v7508
    %v7573 = vmul.f32 %v7509, %v7509
    %v7574 = vmul.f32 %v7510, %v7510
    %v7575 = vmul.f32 %v7511, %v7511
    %v7576 = vmul.f32 %v7512, %v7512
    %v7577 = vmul.f32 %v7513, %v7513
    %v7578 = vmul.f32 %v7514, %v7514
    %v7579 = vmul.f32 %v7515, %v7515
    %v7580 = vmul.f32 %v7516, %v7516
    %v7581 = vmul.f32 %v7517, %v7517
    %v7582 = vmul.f32 %v7518, %v7518
    %v7583 = vmul.f32 %v7519, %v7519
    %v7584 = vmul.f32 %v7520, %v7520
    %v7585 = vmul.f32 %v7521, %v7521
    %v7586 = vmul.f32 %v7522, %v7522
    %v7587 = vmul.f32 %v7523, %v7523
    %v7588 = vmul.f32 %v7524, %v7524
    %v7589 = vmul.f32 %v7525, %v7525
    %v7590 = vmul.f32 %v7526, %v7526
    %v7591 = vmul.f32 %v7527, %v7527
    %v7592 = vmul.f32 %v7528, %v7528
    %v7593 = vmul.f32 %v7529, %v7529
    %v7594 = vmul.f32 %v7530, %v7530
    %v7595 = vmul.f32 %v7531, %v7531
    %v7596 = vmul.f32 %v7532, %v7532
    %v7597 = vmul.f32 %v7533, %v7533
    %v7598 = vmul.f32 %v7534, %v7534
    %v7599 = vmul.f32 %v7535, %v7535
    %v7600 = vmul.f32 %v7536, %v7536
    %v7601 = vmul.f32 %v7537, %v7537
    %v7602 = vmul.f32 %v7538, %v7538
    %v7603 = vmul.f32 %v7539, %v7539
    %v7604 = vmul.f32 %v7540, %v7540
    %v7605 = vmul.f32 %v7541, %v7541
    %v7606 = vmul.f32 %v7542, %v7542
    %v7607 = vmul.f32 %v7543, %v7543
    %v7608 = vmul.f32 %v7544, %v7544
    %v7609 = vmul.f32 %v7545, %v7545
    %v7610 = vmul.f32 %v7546, %v7546
    %v7611 = vmul.f32 %v7547, %v7547
    %v7612 = vmul.f32 %v7548, %v7548
    %v7613 = vmul.f32 %v7549, %v7549
    %v7614 = vmul.f32 %v7550, %v7550
    %v7615 = vmul.f32 %v7551, %v7551
    %v7616 = vmul.f32 %v7552, %v7552
    %v7617 = vmul.f32 %v7553, %v7553
    %v7618 = vmul.f32 %v7554, %v7554
    %v7619 = vmul.f32 %v7555, %v7555
    %v7620 = vmul.f32 %v7556, %v7556
    %v7621 = vmul.f32 %v7557, %v7557
    %v7622 = vmul.f32 %v7558, %v7558
    %v7623 = vmul.f32 %v7559, %v7559
    %v7624 = vmul.f32 %v7560, %v7560
    %v7625 = vmul.f32 %v7561, %v7561
    %v7626 = vmul.f32 %v7562, %v7562
    %v7627 = vmul.f32 %v7563, %v7563
    %v7628 = vmul.f32 %v7564, %v7564
    %v7629 = vmul.f32 %v7565, %v7565
    %v7630 = vmul.f32 %v7566, %v7566
    %v7631 = vmul.f32 %v7567, %v7567
    %v7632 = vmul.f32 %v7568, %v7568
    %v7633 = vmul.f32 %v7569, %v7569
    %v7634 = vmul.f32 %v7570, %v7570
    %v7635 = vadd.f32 %v7571, %v7572
    %v7636 = vadd.f32 %v7635, %v7573
    %v7637 = vadd.f32 %v7636, %v7574
    %v7638 = vadd.f32 %v7637, %v7575
    %v7639 = vadd.f32 %v7638, %v7576
    %v7640 = vadd.f32 %v7639, %v7577
    %v7641 = vadd.f32 %v7640, %v7578
    %v7642 = vadd.f32 %v7641, %v7579
    %v7643 = vadd.f32 %v7642, %v7580
    %v7644 = vadd.f32 %v7643, %v7581
    %v7645 = vadd.f32 %v7644, %v7582
    %v7646 = vadd.f32 %v7645, %v7583
    %v7647 = vadd.f32 %v7646, %v7584
    %v7648 = vadd.f32 %v7647, %v7585
    %v7649 = vadd.f32 %v7648, %v7586
    %v7650 = vadd.f32 %v7649, %v7587
    %v7651 = vadd.f32 %v7650, %v7588
    %v7652 = vadd.f32 %v7651, %v7589
    %v7653 = vadd.f32 %v7652, %v7590
    %v7654 = vadd.f32 %v7653, %v7591
    %v7655 = vadd.f32 %v7654, %v7592
    %v7656 = vadd.f32 %v7655, %v7593
    %v7657 = vadd.f32 %v7656, %v7594
    %v7658 = vadd.f32 %v7657, %v7595
    %v7659 = vadd.f32 %v7658, %v7596
    %v7660 = vadd.f32 %v7659, %v7597
    %v7661 = vadd.f32 %v7660, %v7598
    %v7662 = vadd.f32 %v7661, %v7599
    %v7663 = vadd.f32 %v7662, %v7600
    %v7664 = vadd.f32 %v7663, %v7601
    %v7665 = vadd.f32 %v7664, %v7602
    %v7666 = vadd.f32 %v7665, %v7603
    %v7667 = vadd.f32 %v7666, %v7604
    %v7668 = vadd.f32 %v7667, %v7605
    %v7669 = vadd.f32 %v7668, %v7606
    %v7670 = vadd.f32 %v7669, %v7607
    %v7671 = vadd.f32 %v7670, %v7608
    %v7672 = vadd.f32 %v7671, %v7609
    %v7673 = vadd.f32 %v7672, %v7610
    %v7674 = vadd.f32 %v7673, %v7611
    %v7675 = vadd.f32 %v7674, %v7612
    %v7676 = vadd.f32 %v7675, %v7613
    %v7677 = vadd.f32 %v7676, %v7614
    %v7678 = vadd.f32 %v7677, %v7615
    %v7679 = vadd.f32 %v7678, %v7616
    %v7680 = vadd.f32 %v7679, %v7617
    %v7681 = vadd.f32 %v7680, %v7618
    %v7682 = vadd.f32 %v7681, %v7619
    %v7683 = vadd.f32 %v7682, %v7620
    %v7684 = vadd.f32 %v7683, %v7621
    %v7685 = vadd.f32 %v7684, %v7622
    %v7686 = vadd.f32 %v7685, %v7623
    %v7687 = vadd.f32 %v7686, %v7624
    %v7688 = vadd.f32 %v7687, %v7625
    %v7689 = vadd.f32 %v7688, %v7626
    %v7690 = vadd.f32 %v7689, %v7627
    %v7691 = vadd.f32 %v7690, %v7628
    %v7692 = vadd.f32 %v7691, %v7629
    %v7693 = vadd.f32 %v7692, %v7630
    %v7694 = vadd.f32 %v7693, %v7631
    %v7695 = vadd.f32 %v7694, %v7632
    %v7696 = vadd.f32 %v7695, %v7633
    %v7697 = vadd.f32 %v7696, %v7634
    %v7698 = vrot.slane %v7697, 4
    %v7699 = vadd.f32 %v7697, %v7698
    %v7700 = vrot.slane %v7699, 2
    %v7701 = vadd.f32 %v7699, %v7700
    %v7702 = vrot.slane %v7701, 1
    %v7703 = vadd.f32 %v7701, %v7702
    %v7704 = vmul.f32 %v7703, %v696
    %v7705 = vadd.f32 %v7704, 1e-05
    %v7706 = vrsqrt.pop %v7705
    %v7707 = vmul.f32 %v7507, %v7706
    %v7708 = vmul.f32 %v7508, %v7706
    %v7709 = vmul.f32 %v7509, %v7706
    %v7710 = vmul.f32 %v7510, %v7706
    %v7711 = vmul.f32 %v7511, %v7706
    %v7712 = vmul.f32 %v7512, %v7706
    %v7713 = vmul.f32 %v7513, %v7706
    %v7714 = vmul.f32 %v7514, %v7706
    %v7715 = vmul.f32 %v7515, %v7706
    %v7716 = vmul.f32 %v7516, %v7706
    %v7717 = vmul.f32 %v7517, %v7706
    %v7718 = vmul.f32 %v7518, %v7706
    %v7719 = vmul.f32 %v7519, %v7706
    %v7720 = vmul.f32 %v7520, %v7706
    %v7721 = vmul.f32 %v7521, %v7706
    %v7722 = vmul.f32 %v7522, %v7706
    %v7723 = vmul.f32 %v7523, %v7706
    %v7724 = vmul.f32 %v7524, %v7706
    %v7725 = vmul.f32 %v7525, %v7706
    %v7726 = vmul.f32 %v7526, %v7706
    %v7727 = vmul.f32 %v7527, %v7706
    %v7728 = vmul.f32 %v7528, %v7706
    %v7729 = vmul.f32 %v7529, %v7706
    %v7730 = vmul.f32 %v7530, %v7706
    %v7731 = vmul.f32 %v7531, %v7706
    %v7732 = vmul.f32 %v7532, %v7706
    %v7733 = vmul.f32 %v7533, %v7706
    %v7734 = vmul.f32 %v7534, %v7706
    %v7735 = vmul.f32 %v7535, %v7706
    %v7736 = vmul.f32 %v7536, %v7706
    %v7737 = vmul.f32 %v7537, %v7706
    %v7738 = vmul.f32 %v7538, %v7706
    %v7739 = vmul.f32 %v7539, %v7706
    %v7740 = vmul.f32 %v7540, %v7706
    %v7741 = vmul.f32 %v7541, %v7706
    %v7742 = vmul.f32 %v7542, %v7706
    %v7743 = vmul.f32 %v7543, %v7706
    %v7744 = vmul.f32 %v7544, %v7706
    %v7745 = vmul.f32 %v7545, %v7706
    %v7746 = vmul.f32 %v7546, %v7706
    %v7747 = vmul.f32 %v7547, %v7706
    %v7748 = vmul.f32 %v7548, %v7706
    %v7749 = vmul.f32 %v7549, %v7706
    %v7750 = vmul.f32 %v7550, %v7706
    %v7751 = vmul.f32 %v7551, %v7706
    %v7752 = vmul.f32 %v7552, %v7706
    %v7753 = vmul.f32 %v7553, %v7706
    %v7754 = vmul.f32 %v7554, %v7706
    %v7755 = vmul.f32 %v7555, %v7706
    %v7756 = vmul.f32 %v7556, %v7706
    %v7757 = vmul.f32 %v7557, %v7706
    %v7758 = vmul.f32 %v7558, %v7706
    %v7759 = vmul.f32 %v7559, %v7706
    %v7760 = vmul.f32 %v7560, %v7706
    %v7761 = vmul.f32 %v7561, %v7706
    %v7762 = vmul.f32 %v7562, %v7706
    %v7763 = vmul.f32 %v7563, %v7706
    %v7764 = vmul.f32 %v7564, %v7706
    %v7765 = vmul.f32 %v7565, %v7706
    %v7766 = vmul.f32 %v7566, %v7706
    %v7767 = vmul.f32 %v7567, %v7706
    %v7768 = vmul.f32 %v7568, %v7706
    %v7769 = vmul.f32 %v7569, %v7706
    %v7770 = vmul.f32 %v7570, %v7706
    %v7772 = vlaneseq
    %v7773 = vshrl.u32 %v7772, 7
    %v7774 = vsub.s32 0, %v7773
    %v7775 = vrot.slane %v7435, %v7774
    %v7777 = vmul.f32 %v7707, %v7775
    %v7778 = vmul.f32 %v7708, %v7775
    %v7779 = vmul.f32 %v7709, %v7775
    %v7780 = vmul.f32 %v7710, %v7775
    %v7781 = vmul.f32 %v7711, %v7775
    %v7782 = vmul.f32 %v7712, %v7775
    %v7783 = vmul.f32 %v7713, %v7775
    %v7784 = vmul.f32 %v7714, %v7775
    %v7785 = vmul.f32 %v7715, %v7775
    %v7786 = vmul.f32 %v7716, %v7775
    %v7787 = vmul.f32 %v7717, %v7775
    %v7788 = vmul.f32 %v7718, %v7775
    %v7789 = vmul.f32 %v7719, %v7775
    %v7790 = vmul.f32 %v7720, %v7775
    %v7791 = vmul.f32 %v7721, %v7775
    %v7792 = vmul.f32 %v7722, %v7775
    %v7793 = vmul.f32 %v7723, %v7775
    %v7794 = vmul.f32 %v7724, %v7775
    %v7795 = vmul.f32 %v7725, %v7775
    %v7796 = vmul.f32 %v7726, %v7775
    %v7797 = vmul.f32 %v7727, %v7775
    %v7798 = vmul.f32 %v7728, %v7775
    %v7799 = vmul.f32 %v7729, %v7775
    %v7800 = vmul.f32 %v7730, %v7775
    %v7801 = vmul.f32 %v7731, %v7775
    %v7802 = vmul.f32 %v7732, %v7775
    %v7803 = vmul.f32 %v7733, %v7775
    %v7804 = vmul.f32 %v7734, %v7775
    %v7805 = vmul.f32 %v7735, %v7775
    %v7806 = vmul.f32 %v7736, %v7775
    %v7807 = vmul.f32 %v7737, %v7775
    %v7808 = vmul.f32 %v7738, %v7775
    %v7809 = vmul.f32 %v7739, %v7775
    %v7810 = vmul.f32 %v7740, %v7775
    %v7811 = vmul.f32 %v7741, %v7775
    %v7812 = vmul.f32 %v7742, %v7775
    %v7813 = vmul.f32 %v7743, %v7775
    %v7814 = vmul.f32 %v7744, %v7775
    %v7815 = vmul.f32 %v7745, %v7775
    %v7816 = vmul.f32 %v7746, %v7775
    %v7817 = vmul.f32 %v7747, %v7775
    %v7818 = vmul.f32 %v7748, %v7775
    %v7819 = vmul.f32 %v7749, %v7775
    %v7820 = vmul.f32 %v7750, %v7775
    %v7821 = vmul.f32 %v7751, %v7775
    %v7822 = vmul.f32 %v7752, %v7775
    %v7823 = vmul.f32 %v7753, %v7775
    %v7824 = vmul.f32 %v7754, %v7775
    %v7825 = vmul.f32 %v7755, %v7775
    %v7826 = vmul.f32 %v7756, %v7775
    %v7827 = vmul.f32 %v7757, %v7775
    %v7828 = vmul.f32 %v7758, %v7775
    %v7829 = vmul.f32 %v7759, %v7775
    %v7830 = vmul.f32 %v7760, %v7775
    %v7831 = vmul.f32 %v7761, %v7775
    %v7832 = vmul.f32 %v7762, %v7775
    %v7833 = vmul.f32 %v7763, %v7775
    %v7834 = vmul.f32 %v7764, %v7775
    %v7835 = vmul.f32 %v7765, %v7775
    %v7836 = vmul.f32 %v7766, %v7775
    %v7837 = vmul.f32 %v7767, %v7775
    %v7838 = vmul.f32 %v7768, %v7775
    %v7839 = vmul.f32 %v7769, %v7775
    %v7840 = vmul.f32 %v7770, %v7775
    %v7842 = vlaneseq
    %v7843 = vshrl.u32 %v7842, 7
    %v7844 = vsub.s32 0, %v7843
    %v7845 = vrot.slane %v7436, %v7844
    %v7847 = vadd.f32 %v7777, %v7845
    %v7848 = vadd.f32 %v7778, %v7845
    %v7849 = vadd.f32 %v7779, %v7845
    %v7850 = vadd.f32 %v7780, %v7845
    %v7851 = vadd.f32 %v7781, %v7845
    %v7852 = vadd.f32 %v7782, %v7845
    %v7853 = vadd.f32 %v7783, %v7845
    %v7854 = vadd.f32 %v7784, %v7845
    %v7855 = vadd.f32 %v7785, %v7845
    %v7856 = vadd.f32 %v7786, %v7845
    %v7857 = vadd.f32 %v7787, %v7845
    %v7858 = vadd.f32 %v7788, %v7845
    %v7859 = vadd.f32 %v7789, %v7845
    %v7860 = vadd.f32 %v7790, %v7845
    %v7861 = vadd.f32 %v7791, %v7845
    %v7862 = vadd.f32 %v7792, %v7845
    %v7863 = vadd.f32 %v7793, %v7845
    %v7864 = vadd.f32 %v7794, %v7845
    %v7865 = vadd.f32 %v7795, %v7845
    %v7866 = vadd.f32 %v7796, %v7845
    %v7867 = vadd.f32 %v7797, %v7845
    %v7868 = vadd.f32 %v7798, %v7845
    %v7869 = vadd.f32 %v7799, %v7845
    %v7870 = vadd.f32 %v7800, %v7845
    %v7871 = vadd.f32 %v7801, %v7845
    %v7872 = vadd.f32 %v7802, %v7845
    %v7873 = vadd.f32 %v7803, %v7845
    %v7874 = vadd.f32 %v7804, %v7845
    %v7875 = vadd.f32 %v7805, %v7845
    %v7876 = vadd.f32 %v7806, %v7845
    %v7877 = vadd.f32 %v7807, %v7845
    %v7878 = vadd.f32 %v7808, %v7845
    %v7879 = vadd.f32 %v7809, %v7845
    %v7880 = vadd.f32 %v7810, %v7845
    %v7881 = vadd.f32 %v7811, %v7845
    %v7882 = vadd.f32 %v7812, %v7845
    %v7883 = vadd.f32 %v7813, %v7845
    %v7884 = vadd.f32 %v7814, %v7845
    %v7885 = vadd.f32 %v7815, %v7845
    %v7886 = vadd.f32 %v7816, %v7845
    %v7887 = vadd.f32 %v7817, %v7845
    %v7888 = vadd.f32 %v7818, %v7845
    %v7889 = vadd.f32 %v7819, %v7845
    %v7890 = vadd.f32 %v7820, %v7845
    %v7891 = vadd.f32 %v7821, %v7845
    %v7892 = vadd.f32 %v7822, %v7845
    %v7893 = vadd.f32 %v7823, %v7845
    %v7894 = vadd.f32 %v7824, %v7845
    %v7895 = vadd.f32 %v7825, %v7845
    %v7896 = vadd.f32 %v7826, %v7845
    %v7897 = vadd.f32 %v7827, %v7845
    %v7898 = vadd.f32 %v7828, %v7845
    %v7899 = vadd.f32 %v7829, %v7845
    %v7900 = vadd.f32 %v7830, %v7845
    %v7901 = vadd.f32 %v7831, %v7845
    %v7902 = vadd.f32 %v7832, %v7845
    %v7903 = vadd.f32 %v7833, %v7845
    %v7904 = vadd.f32 %v7834, %v7845
    %v7905 = vadd.f32 %v7835, %v7845
    %v7906 = vadd.f32 %v7836, %v7845
    %v7907 = vadd.f32 %v7837, %v7845
    %v7908 = vadd.f32 %v7838, %v7845
    %v7909 = vadd.f32 %v7839, %v7845
    %v7910 = vadd.f32 %v7840, %v7845
    %v7911 = vld [vmem:[%s4] sm:$0xf]
    %v7912 = vld [vmem:[%s4 + $0x4] sm:$0xf]
    %v7913 = vld [vmem:[%s4 + $0x8] sm:$0xf]
    %v7914 = vld [vmem:[%s4 + $0xc] sm:$0xf]
    %v7915 = vld [vmem:[%s4 + $0x10] sm:$0xf]
    %v7916 = vld [vmem:[%s4 + $0x14] sm:$0xf]
    %v7917 = vld [vmem:[%s4 + $0x18] sm:$0xf]
    %v7918 = vld [vmem:[%s4 + $0x1c] sm:$0xf]
    %v7927 = vunpack.c.l.b16 %v7911
    %v7928 = vunpack.c.l.b16 %v7912
    %v7929 = vunpack.c.l.b16 %v7913
    %v7930 = vunpack.c.l.b16 %v7914
    %v7931 = vunpack.c.l.b16 %v7915
    %v7932 = vunpack.c.l.b16 %v7916
    %v7933 = vunpack.c.l.b16 %v7917
    %v7934 = vunpack.c.l.b16 %v7918
    %v7935 = vpack.c.b16 %v7928, %v7927
    %v7936 = vpack.c.b16 %v7930, %v7929
    %v7937 = vpack.c.b16 %v7932, %v7931
    %v7938 = vpack.c.b16 %v7934, %v7933
    %7943 = vmatprep.subr.bf16.mxu0 0
    %7944 = vmatpush1.bf16.msra.mxu0 %v7935
    %7945 = vmatprep.subr.bf16.mxu0 0
    %7946 = vmatpush1.bf16.msra.mxu0 %v7936
    %7947 = vmatprep.subr.bf16.mxu0 0
    %7948 = vmatpush1.bf16.msra.mxu0 %v7937
    %7949 = vmatprep.subr.bf16.mxu0 0
    %7950 = vmatpush1.bf16.msra.mxu0 %v7938
    %7951 = vmatprep.subr.bf16.mxu0 0
    %7952 = vmatpush1.bf16.msra.mxu0 0
    %7953 = vmatprep.subr.bf16.mxu0 0
    %7954 = vmatpush1.bf16.msra.mxu0 0
    %7955 = vmatprep.subr.bf16.mxu0 0
    %7956 = vmatpush1.bf16.msra.mxu0 0
    %7957 = vmatprep.subr.bf16.mxu0 0
    %7958 = vmatpush1.bf16.msra.mxu0 0
    %7959 = vmatprep.subr.bf16.mxu0 0
    %7960 = vmatpush1.bf16.msra.mxu0 0
    %7961 = vmatprep.subr.bf16.mxu0 0
    %7962 = vmatpush1.bf16.msra.mxu0 0
    %7963 = vmatprep.subr.bf16.mxu0 0
    %7964 = vmatpush1.bf16.msra.mxu0 0
    %7965 = vmatprep.subr.bf16.mxu0 0
    %7966 = vmatpush1.bf16.msra.mxu0 0
    %7967 = vmatprep.subr.bf16.mxu0 0
    %7968 = vmatpush1.bf16.msra.mxu0 0
    %7969 = vmatprep.subr.bf16.mxu0 0
    %7970 = vmatpush1.bf16.msra.mxu0 0
    %7971 = vmatprep.subr.bf16.mxu0 0
    %7972 = vmatpush1.bf16.msra.mxu0 0
    %7973 = vmatprep.subr.bf16.mxu0 0
    %7974 = vmatpush1.bf16.msra.mxu0 0
    %7975 = vmatprep.mubr.bf16.mxu0 0
    %7976 = vmatmul.mubr.bf16.gmra.mrb[0].mxu0 %v176
    %v7977 = vpop.f32.mrb[0].mxu0
    %v7978 = vadd.f32 0.0, %v7977
    %v7979 = vpop.f32.mrb[0].mxu0
    %v7980 = vpop.f32.mrb[0].mxu0
    %v7981 = vadd.f32 0.0, %v7980
    %v7982 = vpop.f32.mrb[0].mxu0
    %7983 = vmatprep.mubr.bf16.mxu0 0
    %7984 = vmatmul.mubr.bf16.gmra.mrb[0].mxu0 %v179
    %v7985 = vpop.f32.mrb[0].mxu0
    %v7986 = vadd.f32 0.0, %v7985
    %v7987 = vpop.f32.mrb[0].mxu0
    %v7988 = vpop.f32.mrb[0].mxu0
    %v7989 = vadd.f32 0.0, %v7988
    %v7990 = vpop.f32.mrb[0].mxu0
    %7991 = vmatprep.mubr.bf16.mxu0 0
    %7992 = vmatmul.mubr.bf16.gmra.mrb[0].mxu0 %v182
    %v7993 = vpop.f32.mrb[0].mxu0
    %v7994 = vadd.f32 0.0, %v7993
    %v7995 = vpop.f32.mrb[0].mxu0
    %v7996 = vpop.f32.mrb[0].mxu0
    %v7997 = vadd.f32 0.0, %v7996
    %v7998 = vpop.f32.mrb[0].mxu0
    %7999 = vmatprep.mubr.bf16.mxu0 0
    %8000 = vmatmul.mubr.bf16.gmra.mrb[0].mxu0 %v185
    %v8001 = vpop.f32.mrb[0].mxu0
    %v8002 = vadd.f32 0.0, %v8001
    %v8003 = vpop.f32.mrb[0].mxu0
    %v8004 = vpop.f32.mrb[0].mxu0
    %v8005 = vadd.f32 0.0, %v8004
    %v8006 = vpop.f32.mrb[0].mxu0
    %8007 = vmatprep.mubr.bf16.mxu0 0
    %8008 = vmatmul.mubr.bf16.gmra.mrb[0].mxu0 %v188
    %v8009 = vpop.f32.mrb[0].mxu0
    %v8010 = vadd.f32 0.0, %v8009
    %v8011 = vpop.f32.mrb[0].mxu0
    %v8012 = vpop.f32.mrb[0].mxu0
    %v8013 = vadd.f32 0.0, %v8012
    %v8014 = vpop.f32.mrb[0].mxu0
    %8015 = vmatprep.mubr.bf16.mxu0 0
    %8016 = vmatmul.mubr.bf16.gmra.mrb[0].mxu0 %v191
    %v8017 = vpop.f32.mrb[0].mxu0
    %v8018 = vadd.f32 0.0, %v8017
    %v8019 = vpop.f32.mrb[0].mxu0
    %v8020 = vpop.f32.mrb[0].mxu0
    %v8021 = vadd.f32 0.0, %v8020
    %v8022 = vpop.f32.mrb[0].mxu0
    %8023 = vmatprep.mubr.bf16.mxu0 0
    %8024 = vmatmul.mubr.bf16.gmra.mrb[0].mxu0 %v194
    %v8025 = vpop.f32.mrb[0].mxu0
    %v8026 = vadd.f32 0.0, %v8025
    %v8027 = vpop.f32.mrb[0].mxu0
    %v8028 = vpop.f32.mrb[0].mxu0
    %v8029 = vadd.f32 0.0, %v8028
    %v8030 = vpop.f32.mrb[0].mxu0
    %8031 = vmatprep.mubr.bf16.mxu0 0
    %8032 = vmatmul.mubr.bf16.gmra.mrb[0].mxu0 %v197
    %v8033 = vpop.f32.mrb[0].mxu0
    %v8034 = vadd.f32 0.0, %v8033
    %v8035 = vpop.f32.mrb[0].mxu0
    %v8036 = vpop.f32.mrb[0].mxu0
    %v8037 = vadd.f32 0.0, %v8036
    %v8038 = vpop.f32.mrb[0].mxu0
    %8039 = vmatprep.mubr.bf16.mxu0 0
    %8040 = vmatmul.mubr.bf16.gmra.mrb[0].mxu0 %v200
    %v8041 = vpop.f32.mrb[0].mxu0
    %v8042 = vadd.f32 0.0, %v8041
    %v8043 = vpop.f32.mrb[0].mxu0
    %v8044 = vpop.f32.mrb[0].mxu0
    %v8045 = vadd.f32 0.0, %v8044
    %v8046 = vpop.f32.mrb[0].mxu0
    %8047 = vmatprep.mubr.bf16.mxu0 0
    %8048 = vmatmul.mubr.bf16.gmra.mrb[0].mxu0 %v203
    %v8049 = vpop.f32.mrb[0].mxu0
    %v8050 = vadd.f32 0.0, %v8049
    %v8051 = vpop.f32.mrb[0].mxu0
    %v8052 = vpop.f32.mrb[0].mxu0
    %v8053 = vadd.f32 0.0, %v8052
    %v8054 = vpop.f32.mrb[0].mxu0
    %8055 = vmatprep.mubr.bf16.mxu0 0
    %8056 = vmatmul.mubr.bf16.gmra.mrb[0].mxu0 %v206
    %v8057 = vpop.f32.mrb[0].mxu0
    %v8058 = vadd.f32 0.0, %v8057
    %v8059 = vpop.f32.mrb[0].mxu0
    %v8060 = vpop.f32.mrb[0].mxu0
    %v8061 = vadd.f32 0.0, %v8060
    %v8062 = vpop.f32.mrb[0].mxu0
    %8063 = vmatprep.mubr.bf16.mxu0 0
    %8064 = vmatmul.mubr.bf16.gmra.mrb[0].mxu0 %v209
    %v8065 = vpop.f32.mrb[0].mxu0
    %v8066 = vadd.f32 0.0, %v8065
    %v8067 = vpop.f32.mrb[0].mxu0
    %v8068 = vpop.f32.mrb[0].mxu0
    %v8069 = vadd.f32 0.0, %v8068
    %v8070 = vpop.f32.mrb[0].mxu0
    %8071 = vmatprep.mubr.bf16.mxu0 0
    %8072 = vmatmul.mubr.bf16.gmra.mrb[0].mxu0 %v212
    %v8073 = vpop.f32.mrb[0].mxu0
    %v8074 = vadd.f32 0.0, %v8073
    %v8075 = vpop.f32.mrb[0].mxu0
    %v8076 = vpop.f32.mrb[0].mxu0
    %v8077 = vadd.f32 0.0, %v8076
    %v8078 = vpop.f32.mrb[0].mxu0
    %8079 = vmatprep.mubr.bf16.mxu0 0
    %8080 = vmatmul.mubr.bf16.gmra.mrb[0].mxu0 %v215
    %v8081 = vpop.f32.mrb[0].mxu0
    %v8082 = vadd.f32 0.0, %v8081
    %v8083 = vpop.f32.mrb[0].mxu0
    %v8084 = vpop.f32.mrb[0].mxu0
    %v8085 = vadd.f32 0.0, %v8084
    %v8086 = vpop.f32.mrb[0].mxu0
    %8087 = vmatprep.mubr.bf16.mxu0 0
    %8088 = vmatmul.mubr.bf16.gmra.mrb[0].mxu0 %v218
    %v8089 = vpop.f32.mrb[0].mxu0
    %v8090 = vadd.f32 0.0, %v8089
    %v8091 = vpop.f32.mrb[0].mxu0
    %v8092 = vpop.f32.mrb[0].mxu0
    %v8093 = vadd.f32 0.0, %v8092
    %v8094 = vpop.f32.mrb[0].mxu0
    %8095 = vmatprep.mubr.bf16.mxu0 0
    %8096 = vmatmul.mubr.bf16.gmra.mrb[0].mxu0 %v221
    %v8097 = vpop.f32.mrb[0].mxu0
    %v8098 = vadd.f32 0.0, %v8097
    %v8099 = vpop.f32.mrb[0].mxu0
    %v8100 = vpop.f32.mrb[0].mxu0
    %v8101 = vadd.f32 0.0, %v8100
    %v8102 = vpop.f32.mrb[0].mxu0
    %8103 = vmatprep.mubr.bf16.mxu0 0
    %8104 = vmatmul.mubr.bf16.gmra.mrb[0].mxu0 %v224
    %v8105 = vpop.f32.mrb[0].mxu0
    %v8106 = vadd.f32 0.0, %v8105
    %v8107 = vpop.f32.mrb[0].mxu0
    %v8108 = vpop.f32.mrb[0].mxu0
    %v8109 = vadd.f32 0.0, %v8108
    %v8110 = vpop.f32.mrb[0].mxu0
    %8111 = vmatprep.mubr.bf16.mxu0 0
    %8112 = vmatmul.mubr.bf16.gmra.mrb[0].mxu0 %v227
    %v8113 = vpop.f32.mrb[0].mxu0
    %v8114 = vadd.f32 0.0, %v8113
    %v8115 = vpop.f32.mrb[0].mxu0
    %v8116 = vpop.f32.mrb[0].mxu0
    %v8117 = vadd.f32 0.0, %v8116
    %v8118 = vpop.f32.mrb[0].mxu0
    %8119 = vmatprep.mubr.bf16.mxu0 0
    %8120 = vmatmul.mubr.bf16.gmra.mrb[0].mxu0 %v230
    %v8121 = vpop.f32.mrb[0].mxu0
    %v8122 = vadd.f32 0.0, %v8121
    %v8123 = vpop.f32.mrb[0].mxu0
    %v8124 = vpop.f32.mrb[0].mxu0
    %v8125 = vadd.f32 0.0, %v8124
    %v8126 = vpop.f32.mrb[0].mxu0
    %8127 = vmatprep.mubr.bf16.mxu0 0
    %8128 = vmatmul.mubr.bf16.gmra.mrb[0].mxu0 %v233
    %v8129 = vpop.f32.mrb[0].mxu0
    %v8130 = vadd.f32 0.0, %v8129
    %v8131 = vpop.f32.mrb[0].mxu0
    %v8132 = vpop.f32.mrb[0].mxu0
    %v8133 = vadd.f32 0.0, %v8132
    %v8134 = vpop.f32.mrb[0].mxu0
    %8135 = vmatprep.mubr.bf16.mxu0 0
    %8136 = vmatmul.mubr.bf16.gmra.mrb[0].mxu0 %v236
    %v8137 = vpop.f32.mrb[0].mxu0
    %v8138 = vadd.f32 0.0, %v8137
    %v8139 = vpop.f32.mrb[0].mxu0
    %v8140 = vpop.f32.mrb[0].mxu0
    %v8141 = vadd.f32 0.0, %v8140
    %v8142 = vpop.f32.mrb[0].mxu0
    %8143 = vmatprep.mubr.bf16.mxu0 0
    %8144 = vmatmul.mubr.bf16.gmra.mrb[0].mxu0 %v239
    %v8145 = vpop.f32.mrb[0].mxu0
    %v8146 = vadd.f32 0.0, %v8145
    %v8147 = vpop.f32.mrb[0].mxu0
    %v8148 = vpop.f32.mrb[0].mxu0
    %v8149 = vadd.f32 0.0, %v8148
    %v8150 = vpop.f32.mrb[0].mxu0
    %8151 = vmatprep.mubr.bf16.mxu0 0
    %8152 = vmatmul.mubr.bf16.gmra.mrb[0].mxu0 %v242
    %v8153 = vpop.f32.mrb[0].mxu0
    %v8154 = vadd.f32 0.0, %v8153
    %v8155 = vpop.f32.mrb[0].mxu0
    %v8156 = vpop.f32.mrb[0].mxu0
    %v8157 = vadd.f32 0.0, %v8156
    %v8158 = vpop.f32.mrb[0].mxu0
    %8159 = vmatprep.mubr.bf16.mxu0 0
    %8160 = vmatmul.mubr.bf16.gmra.mrb[0].mxu0 %v245
    %v8161 = vpop.f32.mrb[0].mxu0
    %v8162 = vadd.f32 0.0, %v8161
    %v8163 = vpop.f32.mrb[0].mxu0
    %v8164 = vpop.f32.mrb[0].mxu0
    %v8165 = vadd.f32 0.0, %v8164
    %v8166 = vpop.f32.mrb[0].mxu0
    %8167 = vmatprep.mubr.bf16.mxu0 0
    %8168 = vmatmul.mubr.bf16.gmra.mrb[0].mxu0 %v248
    %v8169 = vpop.f32.mrb[0].mxu0
    %v8170 = vadd.f32 0.0, %v8169
    %v8171 = vpop.f32.mrb[0].mxu0
    %v8172 = vpop.f32.mrb[0].mxu0
    %v8173 = vadd.f32 0.0, %v8172
    %v8174 = vpop.f32.mrb[0].mxu0
    %8175 = vmatprep.mubr.bf16.mxu0 0
    %8176 = vmatmul.mubr.bf16.gmra.mrb[0].mxu0 %v251
    %v8177 = vpop.f32.mrb[0].mxu0
    %v8178 = vadd.f32 0.0, %v8177
    %v8179 = vpop.f32.mrb[0].mxu0
    %v8180 = vpop.f32.mrb[0].mxu0
    %v8181 = vadd.f32 0.0, %v8180
    %v8182 = vpop.f32.mrb[0].mxu0
    %8183 = vmatprep.mubr.bf16.mxu0 0
    %8184 = vmatmul.mubr.bf16.gmra.mrb[0].mxu0 %v254
    %v8185 = vpop.f32.mrb[0].mxu0
    %v8186 = vadd.f32 0.0, %v8185
    %v8187 = vpop.f32.mrb[0].mxu0
    %v8188 = vpop.f32.mrb[0].mxu0
    %v8189 = vadd.f32 0.0, %v8188
    %v8190 = vpop.f32.mrb[0].mxu0
    %8191 = vmatprep.mubr.bf16.mxu0 0
    %8192 = vmatmul.mubr.bf16.gmra.mrb[0].mxu0 %v257
    %v8193 = vpop.f32.mrb[0].mxu0
    %v8194 = vadd.f32 0.0, %v8193
    %v8195 = vpop.f32.mrb[0].mxu0
    %v8196 = vpop.f32.mrb[0].mxu0
    %v8197 = vadd.f32 0.0, %v8196
    %v8198 = vpop.f32.mrb[0].mxu0
    %8199 = vmatprep.mubr.bf16.mxu0 0
    %8200 = vmatmul.mubr.bf16.gmra.mrb[0].mxu0 %v260
    %v8201 = vpop.f32.mrb[0].mxu0
    %v8202 = vadd.f32 0.0, %v8201
    %v8203 = vpop.f32.mrb[0].mxu0
    %v8204 = vpop.f32.mrb[0].mxu0
    %v8205 = vadd.f32 0.0, %v8204
    %v8206 = vpop.f32.mrb[0].mxu0
    %8207 = vmatprep.mubr.bf16.mxu0 0
    %8208 = vmatmul.mubr.bf16.gmra.mrb[0].mxu0 %v263
    %v8209 = vpop.f32.mrb[0].mxu0
    %v8210 = vadd.f32 0.0, %v8209
    %v8211 = vpop.f32.mrb[0].mxu0
    %v8212 = vpop.f32.mrb[0].mxu0
    %v8213 = vadd.f32 0.0, %v8212
    %v8214 = vpop.f32.mrb[0].mxu0
    %8215 = vmatprep.mubr.bf16.mxu0 0
    %8216 = vmatmul.mubr.bf16.gmra.mrb[0].mxu0 %v266
    %v8217 = vpop.f32.mrb[0].mxu0
    %v8218 = vadd.f32 0.0, %v8217
    %v8219 = vpop.f32.mrb[0].mxu0
    %v8220 = vpop.f32.mrb[0].mxu0
    %v8221 = vadd.f32 0.0, %v8220
    %v8222 = vpop.f32.mrb[0].mxu0
    %8223 = vmatprep.mubr.bf16.mxu0 0
    %8224 = vmatmul.mubr.bf16.gmra.mrb[0].mxu0 %v269
    %v8225 = vpop.f32.mrb[0].mxu0
    %v8226 = vadd.f32 0.0, %v8225
    %v8227 = vpop.f32.mrb[0].mxu0
    %v8228 = vpop.f32.mrb[0].mxu0
    %v8229 = vadd.f32 0.0, %v8228
    %v8230 = vpop.f32.mrb[0].mxu0
    %8231 = vdwg.mxu0
    %v8232 = vld [vmem:[%s11] sm:$0x1]
    %v8233 = vld [vmem:[%s12] sm:$0x1]
    %v8234 = vadd.f32 %v7978, %v7981
    %v8235 = vadd.f32 %v8234, %v7986
    %v8236 = vadd.f32 %v8235, %v7989
    %v8237 = vadd.f32 %v8236, %v7994
    %v8238 = vadd.f32 %v8237, %v7997
    %v8239 = vadd.f32 %v8238, %v8002
    %v8240 = vadd.f32 %v8239, %v8005
    %v8241 = vadd.f32 %v8240, %v8010
    %v8242 = vadd.f32 %v8241, %v8013
    %v8243 = vadd.f32 %v8242, %v8018
    %v8244 = vadd.f32 %v8243, %v8021
    %v8245 = vadd.f32 %v8244, %v8026
    %v8246 = vadd.f32 %v8245, %v8029
    %v8247 = vadd.f32 %v8246, %v8034
    %v8248 = vadd.f32 %v8247, %v8037
    %v8249 = vadd.f32 %v8248, %v8042
    %v8250 = vadd.f32 %v8249, %v8045
    %v8251 = vadd.f32 %v8250, %v8050
    %v8252 = vadd.f32 %v8251, %v8053
    %v8253 = vadd.f32 %v8252, %v8058
    %v8254 = vadd.f32 %v8253, %v8061
    %v8255 = vadd.f32 %v8254, %v8066
    %v8256 = vadd.f32 %v8255, %v8069
    %v8257 = vadd.f32 %v8256, %v8074
    %v8258 = vadd.f32 %v8257, %v8077
    %v8259 = vadd.f32 %v8258, %v8082
    %v8260 = vadd.f32 %v8259, %v8085
    %v8261 = vadd.f32 %v8260, %v8090
    %v8262 = vadd.f32 %v8261, %v8093
    %v8263 = vadd.f32 %v8262, %v8098
    %v8264 = vadd.f32 %v8263, %v8101
    %v8265 = vadd.f32 %v8264, %v8106
    %v8266 = vadd.f32 %v8265, %v8109
    %v8267 = vadd.f32 %v8266, %v8114
    %v8268 = vadd.f32 %v8267, %v8117
    %v8269 = vadd.f32 %v8268, %v8122
    %v8270 = vadd.f32 %v8269, %v8125
    %v8271 = vadd.f32 %v8270, %v8130
    %v8272 = vadd.f32 %v8271, %v8133
    %v8273 = vadd.f32 %v8272, %v8138
    %v8274 = vadd.f32 %v8273, %v8141
    %v8275 = vadd.f32 %v8274, %v8146
    %v8276 = vadd.f32 %v8275, %v8149
    %v8277 = vadd.f32 %v8276, %v8154
    %v8278 = vadd.f32 %v8277, %v8157
    %v8279 = vadd.f32 %v8278, %v8162
    %v8280 = vadd.f32 %v8279, %v8165
    %v8281 = vadd.f32 %v8280, %v8170
    %v8282 = vadd.f32 %v8281, %v8173
    %v8283 = vadd.f32 %v8282, %v8178
    %v8284 = vadd.f32 %v8283, %v8181
    %v8285 = vadd.f32 %v8284, %v8186
    %v8286 = vadd.f32 %v8285, %v8189
    %v8287 = vadd.f32 %v8286, %v8194
    %v8288 = vadd.f32 %v8287, %v8197
    %v8289 = vadd.f32 %v8288, %v8202
    %v8290 = vadd.f32 %v8289, %v8205
    %v8291 = vadd.f32 %v8290, %v8210
    %v8292 = vadd.f32 %v8291, %v8213
    %v8293 = vadd.f32 %v8292, %v8218
    %v8294 = vadd.f32 %v8293, %v8221
    %v8295 = vadd.f32 %v8294, %v8226
    %v8296 = vadd.f32 %v8295, %v8229
    %v8297 = vrot.slane %v8296, 4
    %v8298 = vadd.f32 %v8296, %v8297
    %v8299 = vrot.slane %v8298, 2
    %v8300 = vadd.f32 %v8298, %v8299
    %v8301 = vrot.slane %v8300, 1
    %v8302 = vadd.f32 %v8300, %v8301
    %v8303 = vmul.f32 %v8302, %v696
    %v8304 = vsub.f32 %v7978, %v8303
    %v8305 = vsub.f32 %v7981, %v8303
    %v8306 = vsub.f32 %v7986, %v8303
    %v8307 = vsub.f32 %v7989, %v8303
    %v8308 = vsub.f32 %v7994, %v8303
    %v8309 = vsub.f32 %v7997, %v8303
    %v8310 = vsub.f32 %v8002, %v8303
    %v8311 = vsub.f32 %v8005, %v8303
    %v8312 = vsub.f32 %v8010, %v8303
    %v8313 = vsub.f32 %v8013, %v8303
    %v8314 = vsub.f32 %v8018, %v8303
    %v8315 = vsub.f32 %v8021, %v8303
    %v8316 = vsub.f32 %v8026, %v8303
    %v8317 = vsub.f32 %v8029, %v8303
    %v8318 = vsub.f32 %v8034, %v8303
    %v8319 = vsub.f32 %v8037, %v8303
    %v8320 = vsub.f32 %v8042, %v8303
    %v8321 = vsub.f32 %v8045, %v8303
    %v8322 = vsub.f32 %v8050, %v8303
    %v8323 = vsub.f32 %v8053, %v8303
    %v8324 = vsub.f32 %v8058, %v8303
    %v8325 = vsub.f32 %v8061, %v8303
    %v8326 = vsub.f32 %v8066, %v8303
    %v8327 = vsub.f32 %v8069, %v8303
    %v8328 = vsub.f32 %v8074, %v8303
    %v8329 = vsub.f32 %v8077, %v8303
    %v8330 = vsub.f32 %v8082, %v8303
    %v8331 = vsub.f32 %v8085, %v8303
    %v8332 = vsub.f32 %v8090, %v8303
    %v8333 = vsub.f32 %v8093, %v8303
    %v8334 = vsub.f32 %v8098, %v8303
    %v8335 = vsub.f32 %v8101, %v8303
    %v8336 = vsub.f32 %v8106, %v8303
    %v8337 = vsub.f32 %v8109, %v8303
    %v8338 = vsub.f32 %v8114, %v8303
    %v8339 = vsub.f32 %v8117, %v8303
    %v8340 = vsub.f32 %v8122, %v8303
    %v8341 = vsub.f32 %v8125, %v8303
    %v8342 = vsub.f32 %v8130, %v8303
    %v8343 = vsub.f32 %v8133, %v8303
    %v8344 = vsub.f32 %v8138, %v8303
    %v8345 = vsub.f32 %v8141, %v8303
    %v8346 = vsub.f32 %v8146, %v8303
    %v8347 = vsub.f32 %v8149, %v8303
    %v8348 = vsub.f32 %v8154, %v8303
    %v8349 = vsub.f32 %v8157, %v8303
    %v8350 = vsub.f32 %v8162, %v8303
    %v8351 = vsub.f32 %v8165, %v8303
    %v8352 = vsub.f32 %v8170, %v8303
    %v8353 = vsub.f32 %v8173, %v8303
    %v8354 = vsub.f32 %v8178, %v8303
    %v8355 = vsub.f32 %v8181, %v8303
    %v8356 = vsub.f32 %v8186, %v8303
    %v8357 = vsub.f32 %v8189, %v8303
    %v8358 = vsub.f32 %v8194, %v8303
    %v8359 = vsub.f32 %v8197, %v8303
    %v8360 = vsub.f32 %v8202, %v8303
    %v8361 = vsub.f32 %v8205, %v8303
    %v8362 = vsub.f32 %v8210, %v8303
    %v8363 = vsub.f32 %v8213, %v8303
    %v8364 = vsub.f32 %v8218, %v8303
    %v8365 = vsub.f32 %v8221, %v8303
    %v8366 = vsub.f32 %v8226, %v8303
    %v8367 = vsub.f32 %v8229, %v8303
    %v8368 = vmul.f32 %v8304, %v8304
    %v8369 = vmul.f32 %v8305, %v8305
    %v8370 = vmul.f32 %v8306, %v8306
    %v8371 = vmul.f32 %v8307, %v8307
    %v8372 = vmul.f32 %v8308, %v8308
    %v8373 = vmul.f32 %v8309, %v8309
    %v8374 = vmul.f32 %v8310, %v8310
    %v8375 = vmul.f32 %v8311, %v8311
    %v8376 = vmul.f32 %v8312, %v8312
    %v8377 = vmul.f32 %v8313, %v8313
    %v8378 = vmul.f32 %v8314, %v8314
    %v8379 = vmul.f32 %v8315, %v8315
    %v8380 = vmul.f32 %v8316, %v8316
    %v8381 = vmul.f32 %v8317, %v8317
    %v8382 = vmul.f32 %v8318, %v8318
    %v8383 = vmul.f32 %v8319, %v8319
    %v8384 = vmul.f32 %v8320, %v8320
    %v8385 = vmul.f32 %v8321, %v8321
    %v8386 = vmul.f32 %v8322, %v8322
    %v8387 = vmul.f32 %v8323, %v8323
    %v8388 = vmul.f32 %v8324, %v8324
    %v8389 = vmul.f32 %v8325, %v8325
    %v8390 = vmul.f32 %v8326, %v8326
    %v8391 = vmul.f32 %v8327, %v8327
    %v8392 = vmul.f32 %v8328, %v8328
    %v8393 = vmul.f32 %v8329, %v8329
    %v8394 = vmul.f32 %v8330, %v8330
    %v8395 = vmul.f32 %v8331, %v8331
    %v8396 = vmul.f32 %v8332, %v8332
    %v8397 = vmul.f32 %v8333, %v8333
    %v8398 = vmul.f32 %v8334, %v8334
    %v8399 = vmul.f32 %v8335, %v8335
    %v8400 = vmul.f32 %v8336, %v8336
    %v8401 = vmul.f32 %v8337, %v8337
    %v8402 = vmul.f32 %v8338, %v8338
    %v8403 = vmul.f32 %v8339, %v8339
    %v8404 = vmul.f32 %v8340, %v8340
    %v8405 = vmul.f32 %v8341, %v8341
    %v8406 = vmul.f32 %v8342, %v8342
    %v8407 = vmul.f32 %v8343, %v8343
    %v8408 = vmul.f32 %v8344, %v8344
    %v8409 = vmul.f32 %v8345, %v8345
    %v8410 = vmul.f32 %v8346, %v8346
    %v8411 = vmul.f32 %v8347, %v8347
    %v8412 = vmul.f32 %v8348, %v8348
    %v8413 = vmul.f32 %v8349, %v8349
    %v8414 = vmul.f32 %v8350, %v8350
    %v8415 = vmul.f32 %v8351, %v8351
    %v8416 = vmul.f32 %v8352, %v8352
    %v8417 = vmul.f32 %v8353, %v8353
    %v8418 = vmul.f32 %v8354, %v8354
    %v8419 = vmul.f32 %v8355, %v8355
    %v8420 = vmul.f32 %v8356, %v8356
    %v8421 = vmul.f32 %v8357, %v8357
    %v8422 = vmul.f32 %v8358, %v8358
    %v8423 = vmul.f32 %v8359, %v8359
    %v8424 = vmul.f32 %v8360, %v8360
    %v8425 = vmul.f32 %v8361, %v8361
    %v8426 = vmul.f32 %v8362, %v8362
    %v8427 = vmul.f32 %v8363, %v8363
    %v8428 = vmul.f32 %v8364, %v8364
    %v8429 = vmul.f32 %v8365, %v8365
    %v8430 = vmul.f32 %v8366, %v8366
    %v8431 = vmul.f32 %v8367, %v8367
    %v8432 = vadd.f32 %v8368, %v8369
    %v8433 = vadd.f32 %v8432, %v8370
    %v8434 = vadd.f32 %v8433, %v8371
    %v8435 = vadd.f32 %v8434, %v8372
    %v8436 = vadd.f32 %v8435, %v8373
    %v8437 = vadd.f32 %v8436, %v8374
    %v8438 = vadd.f32 %v8437, %v8375
    %v8439 = vadd.f32 %v8438, %v8376
    %v8440 = vadd.f32 %v8439, %v8377
    %v8441 = vadd.f32 %v8440, %v8378
    %v8442 = vadd.f32 %v8441, %v8379
    %v8443 = vadd.f32 %v8442, %v8380
    %v8444 = vadd.f32 %v8443, %v8381
    %v8445 = vadd.f32 %v8444, %v8382
    %v8446 = vadd.f32 %v8445, %v8383
    %v8447 = vadd.f32 %v8446, %v8384
    %v8448 = vadd.f32 %v8447, %v8385
    %v8449 = vadd.f32 %v8448, %v8386
    %v8450 = vadd.f32 %v8449, %v8387
    %v8451 = vadd.f32 %v8450, %v8388
    %v8452 = vadd.f32 %v8451, %v8389
    %v8453 = vadd.f32 %v8452, %v8390
    %v8454 = vadd.f32 %v8453, %v8391
    %v8455 = vadd.f32 %v8454, %v8392
    %v8456 = vadd.f32 %v8455, %v8393
    %v8457 = vadd.f32 %v8456, %v8394
    %v8458 = vadd.f32 %v8457, %v8395
    %v8459 = vadd.f32 %v8458, %v8396
    %v8460 = vadd.f32 %v8459, %v8397
    %v8461 = vadd.f32 %v8460, %v8398
    %v8462 = vadd.f32 %v8461, %v8399
    %v8463 = vadd.f32 %v8462, %v8400
    %v8464 = vadd.f32 %v8463, %v8401
    %v8465 = vadd.f32 %v8464, %v8402
    %v8466 = vadd.f32 %v8465, %v8403
    %v8467 = vadd.f32 %v8466, %v8404
    %v8468 = vadd.f32 %v8467, %v8405
    %v8469 = vadd.f32 %v8468, %v8406
    %v8470 = vadd.f32 %v8469, %v8407
    %v8471 = vadd.f32 %v8470, %v8408
    %v8472 = vadd.f32 %v8471, %v8409
    %v8473 = vadd.f32 %v8472, %v8410
    %v8474 = vadd.f32 %v8473, %v8411
    %v8475 = vadd.f32 %v8474, %v8412
    %v8476 = vadd.f32 %v8475, %v8413
    %v8477 = vadd.f32 %v8476, %v8414
    %v8478 = vadd.f32 %v8477, %v8415
    %v8479 = vadd.f32 %v8478, %v8416
    %v8480 = vadd.f32 %v8479, %v8417
    %v8481 = vadd.f32 %v8480, %v8418
    %v8482 = vadd.f32 %v8481, %v8419
    %v8483 = vadd.f32 %v8482, %v8420
    %v8484 = vadd.f32 %v8483, %v8421
    %v8485 = vadd.f32 %v8484, %v8422
    %v8486 = vadd.f32 %v8485, %v8423
    %v8487 = vadd.f32 %v8486, %v8424
    %v8488 = vadd.f32 %v8487, %v8425
    %v8489 = vadd.f32 %v8488, %v8426
    %v8490 = vadd.f32 %v8489, %v8427
    %v8491 = vadd.f32 %v8490, %v8428
    %v8492 = vadd.f32 %v8491, %v8429
    %v8493 = vadd.f32 %v8492, %v8430
    %v8494 = vadd.f32 %v8493, %v8431
    %v8495 = vrot.slane %v8494, 4
    %v8496 = vadd.f32 %v8494, %v8495
    %v8497 = vrot.slane %v8496, 2
    %v8498 = vadd.f32 %v8496, %v8497
    %v8499 = vrot.slane %v8498, 1
    %v8500 = vadd.f32 %v8498, %v8499
    %v8501 = vmul.f32 %v8500, %v696
    %v8502 = vadd.f32 %v8501, 1e-05
    %v8503 = vrsqrt.pop %v8502
    %v8504 = vmul.f32 %v8304, %v8503
    %v8505 = vmul.f32 %v8305, %v8503
    %v8506 = vmul.f32 %v8306, %v8503
    %v8507 = vmul.f32 %v8307, %v8503
    %v8508 = vmul.f32 %v8308, %v8503
    %v8509 = vmul.f32 %v8309, %v8503
    %v8510 = vmul.f32 %v8310, %v8503
    %v8511 = vmul.f32 %v8311, %v8503
    %v8512 = vmul.f32 %v8312, %v8503
    %v8513 = vmul.f32 %v8313, %v8503
    %v8514 = vmul.f32 %v8314, %v8503
    %v8515 = vmul.f32 %v8315, %v8503
    %v8516 = vmul.f32 %v8316, %v8503
    %v8517 = vmul.f32 %v8317, %v8503
    %v8518 = vmul.f32 %v8318, %v8503
    %v8519 = vmul.f32 %v8319, %v8503
    %v8520 = vmul.f32 %v8320, %v8503
    %v8521 = vmul.f32 %v8321, %v8503
    %v8522 = vmul.f32 %v8322, %v8503
    %v8523 = vmul.f32 %v8323, %v8503
    %v8524 = vmul.f32 %v8324, %v8503
    %v8525 = vmul.f32 %v8325, %v8503
    %v8526 = vmul.f32 %v8326, %v8503
    %v8527 = vmul.f32 %v8327, %v8503
    %v8528 = vmul.f32 %v8328, %v8503
    %v8529 = vmul.f32 %v8329, %v8503
    %v8530 = vmul.f32 %v8330, %v8503
    %v8531 = vmul.f32 %v8331, %v8503
    %v8532 = vmul.f32 %v8332, %v8503
    %v8533 = vmul.f32 %v8333, %v8503
    %v8534 = vmul.f32 %v8334, %v8503
    %v8535 = vmul.f32 %v8335, %v8503
    %v8536 = vmul.f32 %v8336, %v8503
    %v8537 = vmul.f32 %v8337, %v8503
    %v8538 = vmul.f32 %v8338, %v8503
    %v8539 = vmul.f32 %v8339, %v8503
    %v8540 = vmul.f32 %v8340, %v8503
    %v8541 = vmul.f32 %v8341, %v8503
    %v8542 = vmul.f32 %v8342, %v8503
    %v8543 = vmul.f32 %v8343, %v8503
    %v8544 = vmul.f32 %v8344, %v8503
    %v8545 = vmul.f32 %v8345, %v8503
    %v8546 = vmul.f32 %v8346, %v8503
    %v8547 = vmul.f32 %v8347, %v8503
    %v8548 = vmul.f32 %v8348, %v8503
    %v8549 = vmul.f32 %v8349, %v8503
    %v8550 = vmul.f32 %v8350, %v8503
    %v8551 = vmul.f32 %v8351, %v8503
    %v8552 = vmul.f32 %v8352, %v8503
    %v8553 = vmul.f32 %v8353, %v8503
    %v8554 = vmul.f32 %v8354, %v8503
    %v8555 = vmul.f32 %v8355, %v8503
    %v8556 = vmul.f32 %v8356, %v8503
    %v8557 = vmul.f32 %v8357, %v8503
    %v8558 = vmul.f32 %v8358, %v8503
    %v8559 = vmul.f32 %v8359, %v8503
    %v8560 = vmul.f32 %v8360, %v8503
    %v8561 = vmul.f32 %v8361, %v8503
    %v8562 = vmul.f32 %v8362, %v8503
    %v8563 = vmul.f32 %v8363, %v8503
    %v8564 = vmul.f32 %v8364, %v8503
    %v8565 = vmul.f32 %v8365, %v8503
    %v8566 = vmul.f32 %v8366, %v8503
    %v8567 = vmul.f32 %v8367, %v8503
    %v8569 = vlaneseq
    %v8570 = vshrl.u32 %v8569, 7
    %v8571 = vsub.s32 0, %v8570
    %v8572 = vrot.slane %v8232, %v8571
    %v8574 = vmul.f32 %v8504, %v8572
    %v8575 = vmul.f32 %v8505, %v8572
    %v8576 = vmul.f32 %v8506, %v8572
    %v8577 = vmul.f32 %v8507, %v8572
    %v8578 = vmul.f32 %v8508, %v8572
    %v8579 = vmul.f32 %v8509, %v8572
    %v8580 = vmul.f32 %v8510, %v8572
    %v8581 = vmul.f32 %v8511, %v8572
    %v8582 = vmul.f32 %v8512, %v8572
    %v8583 = vmul.f32 %v8513, %v8572
    %v8584 = vmul.f32 %v8514, %v8572
    %v8585 = vmul.f32 %v8515, %v8572
    %v8586 = vmul.f32 %v8516, %v8572
    %v8587 = vmul.f32 %v8517, %v8572
    %v8588 = vmul.f32 %v8518, %v8572
    %v8589 = vmul.f32 %v8519, %v8572
    %v8590 = vmul.f32 %v8520, %v8572
    %v8591 = vmul.f32 %v8521, %v8572
    %v8592 = vmul.f32 %v8522, %v8572
    %v8593 = vmul.f32 %v8523, %v8572
    %v8594 = vmul.f32 %v8524, %v8572
    %v8595 = vmul.f32 %v8525, %v8572
    %v8596 = vmul.f32 %v8526, %v8572
    %v8597 = vmul.f32 %v8527, %v8572
    %v8598 = vmul.f32 %v8528, %v8572
    %v8599 = vmul.f32 %v8529, %v8572
    %v8600 = vmul.f32 %v8530, %v8572
    %v8601 = vmul.f32 %v8531, %v8572
    %v8602 = vmul.f32 %v8532, %v8572
    %v8603 = vmul.f32 %v8533, %v8572
    %v8604 = vmul.f32 %v8534, %v8572
    %v8605 = vmul.f32 %v8535, %v8572
    %v8606 = vmul.f32 %v8536, %v8572
    %v8607 = vmul.f32 %v8537, %v8572
    %v8608 = vmul.f32 %v8538, %v8572
    %v8609 = vmul.f32 %v8539, %v8572
    %v8610 = vmul.f32 %v8540, %v8572
    %v8611 = vmul.f32 %v8541, %v8572
    %v8612 = vmul.f32 %v8542, %v8572
    %v8613 = vmul.f32 %v8543, %v8572
    %v8614 = vmul.f32 %v8544, %v8572
    %v8615 = vmul.f32 %v8545, %v8572
    %v8616 = vmul.f32 %v8546, %v8572
    %v8617 = vmul.f32 %v8547, %v8572
    %v8618 = vmul.f32 %v8548, %v8572
    %v8619 = vmul.f32 %v8549, %v8572
    %v8620 = vmul.f32 %v8550, %v8572
    %v8621 = vmul.f32 %v8551, %v8572
    %v8622 = vmul.f32 %v8552, %v8572
    %v8623 = vmul.f32 %v8553, %v8572
    %v8624 = vmul.f32 %v8554, %v8572
    %v8625 = vmul.f32 %v8555, %v8572
    %v8626 = vmul.f32 %v8556, %v8572
    %v8627 = vmul.f32 %v8557, %v8572
    %v8628 = vmul.f32 %v8558, %v8572
    %v8629 = vmul.f32 %v8559, %v8572
    %v8630 = vmul.f32 %v8560, %v8572
    %v8631 = vmul.f32 %v8561, %v8572
    %v8632 = vmul.f32 %v8562, %v8572
    %v8633 = vmul.f32 %v8563, %v8572
    %v8634 = vmul.f32 %v8564, %v8572
    %v8635 = vmul.f32 %v8565, %v8572
    %v8636 = vmul.f32 %v8566, %v8572
    %v8637 = vmul.f32 %v8567, %v8572
    %v8639 = vlaneseq
    %v8640 = vshrl.u32 %v8639, 7
    %v8641 = vsub.s32 0, %v8640
    %v8642 = vrot.slane %v8233, %v8641
    %v8644 = vadd.f32 %v8574, %v8642
    %v8645 = vadd.f32 %v8575, %v8642
    %v8646 = vadd.f32 %v8576, %v8642
    %v8647 = vadd.f32 %v8577, %v8642
    %v8648 = vadd.f32 %v8578, %v8642
    %v8649 = vadd.f32 %v8579, %v8642
    %v8650 = vadd.f32 %v8580, %v8642
    %v8651 = vadd.f32 %v8581, %v8642
    %v8652 = vadd.f32 %v8582, %v8642
    %v8653 = vadd.f32 %v8583, %v8642
    %v8654 = vadd.f32 %v8584, %v8642
    %v8655 = vadd.f32 %v8585, %v8642
    %v8656 = vadd.f32 %v8586, %v8642
    %v8657 = vadd.f32 %v8587, %v8642
    %v8658 = vadd.f32 %v8588, %v8642
    %v8659 = vadd.f32 %v8589, %v8642
    %v8660 = vadd.f32 %v8590, %v8642
    %v8661 = vadd.f32 %v8591, %v8642
    %v8662 = vadd.f32 %v8592, %v8642
    %v8663 = vadd.f32 %v8593, %v8642
    %v8664 = vadd.f32 %v8594, %v8642
    %v8665 = vadd.f32 %v8595, %v8642
    %v8666 = vadd.f32 %v8596, %v8642
    %v8667 = vadd.f32 %v8597, %v8642
    %v8668 = vadd.f32 %v8598, %v8642
    %v8669 = vadd.f32 %v8599, %v8642
    %v8670 = vadd.f32 %v8600, %v8642
    %v8671 = vadd.f32 %v8601, %v8642
    %v8672 = vadd.f32 %v8602, %v8642
    %v8673 = vadd.f32 %v8603, %v8642
    %v8674 = vadd.f32 %v8604, %v8642
    %v8675 = vadd.f32 %v8605, %v8642
    %v8676 = vadd.f32 %v8606, %v8642
    %v8677 = vadd.f32 %v8607, %v8642
    %v8678 = vadd.f32 %v8608, %v8642
    %v8679 = vadd.f32 %v8609, %v8642
    %v8680 = vadd.f32 %v8610, %v8642
    %v8681 = vadd.f32 %v8611, %v8642
    %v8682 = vadd.f32 %v8612, %v8642
    %v8683 = vadd.f32 %v8613, %v8642
    %v8684 = vadd.f32 %v8614, %v8642
    %v8685 = vadd.f32 %v8615, %v8642
    %v8686 = vadd.f32 %v8616, %v8642
    %v8687 = vadd.f32 %v8617, %v8642
    %v8688 = vadd.f32 %v8618, %v8642
    %v8689 = vadd.f32 %v8619, %v8642
    %v8690 = vadd.f32 %v8620, %v8642
    %v8691 = vadd.f32 %v8621, %v8642
    %v8692 = vadd.f32 %v8622, %v8642
    %v8693 = vadd.f32 %v8623, %v8642
    %v8694 = vadd.f32 %v8624, %v8642
    %v8695 = vadd.f32 %v8625, %v8642
    %v8696 = vadd.f32 %v8626, %v8642
    %v8697 = vadd.f32 %v8627, %v8642
    %v8698 = vadd.f32 %v8628, %v8642
    %v8699 = vadd.f32 %v8629, %v8642
    %v8700 = vadd.f32 %v8630, %v8642
    %v8701 = vadd.f32 %v8631, %v8642
    %v8702 = vadd.f32 %v8632, %v8642
    %v8703 = vadd.f32 %v8633, %v8642
    %v8704 = vadd.f32 %v8634, %v8642
    %v8705 = vadd.f32 %v8635, %v8642
    %v8706 = vadd.f32 %v8636, %v8642
    %v8707 = vadd.f32 %v8637, %v8642
    %v8708 = vadd.f32 %v7847, %v8644
    %v8709 = vadd.f32 %v7848, %v8645
    %v8710 = vadd.f32 %v7849, %v8646
    %v8711 = vadd.f32 %v7850, %v8647
    %v8712 = vadd.f32 %v7851, %v8648
    %v8713 = vadd.f32 %v7852, %v8649
    %v8714 = vadd.f32 %v7853, %v8650
    %v8715 = vadd.f32 %v7854, %v8651
    %v8716 = vadd.f32 %v7855, %v8652
    %v8717 = vadd.f32 %v7856, %v8653
    %v8718 = vadd.f32 %v7857, %v8654
    %v8719 = vadd.f32 %v7858, %v8655
    %v8720 = vadd.f32 %v7859, %v8656
    %v8721 = vadd.f32 %v7860, %v8657
    %v8722 = vadd.f32 %v7861, %v8658
    %v8723 = vadd.f32 %v7862, %v8659
    %v8724 = vadd.f32 %v7863, %v8660
    %v8725 = vadd.f32 %v7864, %v8661
    %v8726 = vadd.f32 %v7865, %v8662
    %v8727 = vadd.f32 %v7866, %v8663
    %v8728 = vadd.f32 %v7867, %v8664
    %v8729 = vadd.f32 %v7868, %v8665
    %v8730 = vadd.f32 %v7869, %v8666
    %v8731 = vadd.f32 %v7870, %v8667
    %v8732 = vadd.f32 %v7871, %v8668
    %v8733 = vadd.f32 %v7872, %v8669
    %v8734 = vadd.f32 %v7873, %v8670
    %v8735 = vadd.f32 %v7874, %v8671
    %v8736 = vadd.f32 %v7875, %v8672
    %v8737 = vadd.f32 %v7876, %v8673
    %v8738 = vadd.f32 %v7877, %v8674
    %v8739 = vadd.f32 %v7878, %v8675
    %v8740 = vadd.f32 %v7879, %v8676
    %v8741 = vadd.f32 %v7880, %v8677
    %v8742 = vadd.f32 %v7881, %v8678
    %v8743 = vadd.f32 %v7882, %v8679
    %v8744 = vadd.f32 %v7883, %v8680
    %v8745 = vadd.f32 %v7884, %v8681
    %v8746 = vadd.f32 %v7885, %v8682
    %v8747 = vadd.f32 %v7886, %v8683
    %v8748 = vadd.f32 %v7887, %v8684
    %v8749 = vadd.f32 %v7888, %v8685
    %v8750 = vadd.f32 %v7889, %v8686
    %v8751 = vadd.f32 %v7890, %v8687
    %v8752 = vadd.f32 %v7891, %v8688
    %v8753 = vadd.f32 %v7892, %v8689
    %v8754 = vadd.f32 %v7893, %v8690
    %v8755 = vadd.f32 %v7894, %v8691
    %v8756 = vadd.f32 %v7895, %v8692
    %v8757 = vadd.f32 %v7896, %v8693
    %v8758 = vadd.f32 %v7897, %v8694
    %v8759 = vadd.f32 %v7898, %v8695
    %v8760 = vadd.f32 %v7899, %v8696
    %v8761 = vadd.f32 %v7900, %v8697
    %v8762 = vadd.f32 %v7901, %v8698
    %v8763 = vadd.f32 %v7902, %v8699
    %v8764 = vadd.f32 %v7903, %v8700
    %v8765 = vadd.f32 %v7904, %v8701
    %v8766 = vadd.f32 %v7905, %v8702
    %v8767 = vadd.f32 %v7906, %v8703
    %v8768 = vadd.f32 %v7907, %v8704
    %v8769 = vadd.f32 %v7908, %v8705
    %v8770 = vadd.f32 %v7909, %v8706
    %v8771 = vadd.f32 %v7910, %v8707
    %v8772 = vmax.f32 %v8708, 0.0
    %v8773 = vmax.f32 %v8709, 0.0
    %v8774 = vmax.f32 %v8710, 0.0
    %v8775 = vmax.f32 %v8711, 0.0
    %v8776 = vmax.f32 %v8712, 0.0
    %v8777 = vmax.f32 %v8713, 0.0
    %v8778 = vmax.f32 %v8714, 0.0
    %v8779 = vmax.f32 %v8715, 0.0
    %v8780 = vmax.f32 %v8716, 0.0
    %v8781 = vmax.f32 %v8717, 0.0
    %v8782 = vmax.f32 %v8718, 0.0
    %v8783 = vmax.f32 %v8719, 0.0
    %v8784 = vmax.f32 %v8720, 0.0
    %v8785 = vmax.f32 %v8721, 0.0
    %v8786 = vmax.f32 %v8722, 0.0
    %v8787 = vmax.f32 %v8723, 0.0
    %v8788 = vmax.f32 %v8724, 0.0
    %v8789 = vmax.f32 %v8725, 0.0
    %v8790 = vmax.f32 %v8726, 0.0
    %v8791 = vmax.f32 %v8727, 0.0
    %v8792 = vmax.f32 %v8728, 0.0
    %v8793 = vmax.f32 %v8729, 0.0
    %v8794 = vmax.f32 %v8730, 0.0
    %v8795 = vmax.f32 %v8731, 0.0
    %v8796 = vmax.f32 %v8732, 0.0
    %v8797 = vmax.f32 %v8733, 0.0
    %v8798 = vmax.f32 %v8734, 0.0
    %v8799 = vmax.f32 %v8735, 0.0
    %v8800 = vmax.f32 %v8736, 0.0
    %v8801 = vmax.f32 %v8737, 0.0
    %v8802 = vmax.f32 %v8738, 0.0
    %v8803 = vmax.f32 %v8739, 0.0
    %v8804 = vmax.f32 %v8740, 0.0
    %v8805 = vmax.f32 %v8741, 0.0
    %v8806 = vmax.f32 %v8742, 0.0
    %v8807 = vmax.f32 %v8743, 0.0
    %v8808 = vmax.f32 %v8744, 0.0
    %v8809 = vmax.f32 %v8745, 0.0
    %v8810 = vmax.f32 %v8746, 0.0
    %v8811 = vmax.f32 %v8747, 0.0
    %v8812 = vmax.f32 %v8748, 0.0
    %v8813 = vmax.f32 %v8749, 0.0
    %v8814 = vmax.f32 %v8750, 0.0
    %v8815 = vmax.f32 %v8751, 0.0
    %v8816 = vmax.f32 %v8752, 0.0
    %v8817 = vmax.f32 %v8753, 0.0
    %v8818 = vmax.f32 %v8754, 0.0
    %v8819 = vmax.f32 %v8755, 0.0
    %v8820 = vmax.f32 %v8756, 0.0
    %v8821 = vmax.f32 %v8757, 0.0
    %v8822 = vmax.f32 %v8758, 0.0
    %v8823 = vmax.f32 %v8759, 0.0
    %v8824 = vmax.f32 %v8760, 0.0
    %v8825 = vmax.f32 %v8761, 0.0
    %v8826 = vmax.f32 %v8762, 0.0
    %v8827 = vmax.f32 %v8763, 0.0
    %v8828 = vmax.f32 %v8764, 0.0
    %v8829 = vmax.f32 %v8765, 0.0
    %v8830 = vmax.f32 %v8766, 0.0
    %v8831 = vmax.f32 %v8767, 0.0
    %v8832 = vmax.f32 %v8768, 0.0
    %v8833 = vmax.f32 %v8769, 0.0
    %v8834 = vmax.f32 %v8770, 0.0
    %v8835 = vmax.f32 %v8771, 0.0
    %8836 = vst [vmem:[#allocation3] sm:$0xff] %v8772
    %8837 = vst [vmem:[#allocation3 + $0x8] sm:$0xff] %v8773
    %8838 = vst [vmem:[#allocation3 + $0x10] sm:$0xff] %v8774
    %8839 = vst [vmem:[#allocation3 + $0x18] sm:$0xff] %v8775
    %8840 = vst [vmem:[#allocation3 + $0x20] sm:$0xff] %v8776
    %8841 = vst [vmem:[#allocation3 + $0x28] sm:$0xff] %v8777
    %8842 = vst [vmem:[#allocation3 + $0x30] sm:$0xff] %v8778
    %8843 = vst [vmem:[#allocation3 + $0x38] sm:$0xff] %v8779
    %8844 = vst [vmem:[#allocation3 + $0x40] sm:$0xff] %v8780
    %8845 = vst [vmem:[#allocation3 + $0x48] sm:$0xff] %v8781
    %8846 = vst [vmem:[#allocation3 + $0x50] sm:$0xff] %v8782
    %8847 = vst [vmem:[#allocation3 + $0x58] sm:$0xff] %v8783
    %8848 = vst [vmem:[#allocation3 + $0x60] sm:$0xff] %v8784
    %8849 = vst [vmem:[#allocation3 + $0x68] sm:$0xff] %v8785
    %8850 = vst [vmem:[#allocation3 + $0x70] sm:$0xff] %v8786
    %8851 = vst [vmem:[#allocation3 + $0x78] sm:$0xff] %v8787
    %8852 = vst [vmem:[#allocation3 + $0x80] sm:$0xff] %v8788
    %8853 = vst [vmem:[#allocation3 + $0x88] sm:$0xff] %v8789
    %8854 = vst [vmem:[#allocation3 + $0x90] sm:$0xff] %v8790
    %8855 = vst [vmem:[#allocation3 + $0x98] sm:$0xff] %v8791
    %8856 = vst [vmem:[#allocation3 + $0xa0] sm:$0xff] %v8792
    %8857 = vst [vmem:[#allocation3 + $0xa8] sm:$0xff] %v8793
    %8858 = vst [vmem:[#allocation3 + $0xb0] sm:$0xff] %v8794
    %8859 = vst [vmem:[#allocation3 + $0xb8] sm:$0xff] %v8795
    %8860 = vst [vmem:[#allocation3 + $0xc0] sm:$0xff] %v8796
    %8861 = vst [vmem:[#allocation3 + $0xc8] sm:$0xff] %v8797
    %8862 = vst [vmem:[#allocation3 + $0xd0] sm:$0xff] %v8798
    %8863 = vst [vmem:[#allocation3 + $0xd8] sm:$0xff] %v8799
    %8864 = vst [vmem:[#allocation3 + $0xe0] sm:$0xff] %v8800
    %8865 = vst [vmem:[#allocation3 + $0xe8] sm:$0xff] %v8801
    %8866 = vst [vmem:[#allocation3 + $0xf0] sm:$0xff] %v8802
    %8867 = vst [vmem:[#allocation3 + $0xf8] sm:$0xff] %v8803
    %8868 = vst [vmem:[#allocation3 + $0x100] sm:$0xff] %v8804
    %8869 = vst [vmem:[#allocation3 + $0x108] sm:$0xff] %v8805
    %8870 = vst [vmem:[#allocation3 + $0x110] sm:$0xff] %v8806
    %8871 = vst [vmem:[#allocation3 + $0x118] sm:$0xff] %v8807
    %8872 = vst [vmem:[#allocation3 + $0x120] sm:$0xff] %v8808
    %8873 = vst [vmem:[#allocation3 + $0x128] sm:$0xff] %v8809
    %8874 = vst [vmem:[#allocation3 + $0x130] sm:$0xff] %v8810
    %8875 = vst [vmem:[#allocation3 + $0x138] sm:$0xff] %v8811
    %8876 = vst [vmem:[#allocation3 + $0x140] sm:$0xff] %v8812
    %8877 = vst [vmem:[#allocation3 + $0x148] sm:$0xff] %v8813
    %8878 = vst [vmem:[#allocation3 + $0x150] sm:$0xff] %v8814
    %8879 = vst [vmem:[#allocation3 + $0x158] sm:$0xff] %v8815
    %8880 = vst [vmem:[#allocation3 + $0x160] sm:$0xff] %v8816
    %8881 = vst [vmem:[#allocation3 + $0x168] sm:$0xff] %v8817
    %8882 = vst [vmem:[#allocation3 + $0x170] sm:$0xff] %v8818
    %8883 = vst [vmem:[#allocation3 + $0x178] sm:$0xff] %v8819
    %8884 = vst [vmem:[#allocation3 + $0x180] sm:$0xff] %v8820
    %8885 = vst [vmem:[#allocation3 + $0x188] sm:$0xff] %v8821
    %8886 = vst [vmem:[#allocation3 + $0x190] sm:$0xff] %v8822
    %8887 = vst [vmem:[#allocation3 + $0x198] sm:$0xff] %v8823
    %8888 = vst [vmem:[#allocation3 + $0x1a0] sm:$0xff] %v8824
    %8889 = vst [vmem:[#allocation3 + $0x1a8] sm:$0xff] %v8825
    %8890 = vst [vmem:[#allocation3 + $0x1b0] sm:$0xff] %v8826
    %8891 = vst [vmem:[#allocation3 + $0x1b8] sm:$0xff] %v8827
    %8892 = vst [vmem:[#allocation3 + $0x1c0] sm:$0xff] %v8828
    %8893 = vst [vmem:[#allocation3 + $0x1c8] sm:$0xff] %v8829
    %8894 = vst [vmem:[#allocation3 + $0x1d0] sm:$0xff] %v8830
    %8895 = vst [vmem:[#allocation3 + $0x1d8] sm:$0xff] %v8831
    %8896 = vst [vmem:[#allocation3 + $0x1e0] sm:$0xff] %v8832
    %8897 = vst [vmem:[#allocation3 + $0x1e8] sm:$0xff] %v8833
    %8898 = vst [vmem:[#allocation3 + $0x1f0] sm:$0xff] %v8834
    %8899 = vst [vmem:[#allocation3 + $0x1f8] sm:$0xff] %v8835
    // Predicated region
    $region54: #{tpu_custom_call.1} parent=1 // pred_check
      _
    $region55: #{tpu_custom_call.1} parent=1 // pred_check_branch
      %8901 = sbr.rel (0) target = $region57
    $region56: #{tpu_custom_call.1} parent=1 // pred_region
      %s8903 = ssub.s32 8192, 8192
      %8904 = vsyncadd [#allocation4], %s8903
      %s8905 = sshll.u32 [#allocation3], 4
      %s8906 = int_to_ptr.vmem [resolvable:$true] %s8905
      %8911 = dma.vmem_to_hbm [thread:$0]  %s8906, 8192, %s13, [#allocation4], 128, 128, 8
    $region57: #{tpu_custom_call.1} parent=1 // pred_fallthru
      _
    // Predicated region
    $region58: #{tpu_custom_call.1} parent=1 // pred_check
      _
    $region59: #{tpu_custom_call.1} parent=1 // pred_check_branch
      %8913 = sbr.rel (0) target = $region61
    $region60: #{tpu_custom_call.1} parent=1 // pred_region
      %8914 = dma.done [#allocation4], 8192
    $region61: #{tpu_custom_call.1} parent=1 // pred_fallthru
      _
    %8915 = vsyncpa [#allocation4], 1

</llo_original>
